<compile_context>
chip_gen: v5e
topology: v5e:2x2
jax: 0.10.0
libtpu: 0.0.40
codegen_flags: <defaults>
</compile_context>

<pallas_src>
import functools

import jax
import jax.numpy as jnp
from jax.experimental import pallas as pl
from jax.experimental.pallas import tpu as pltpu

NO_FEATURES = 128   # hidden width F
NPAD = 128          # padded node rows  (MXU-aligned)
EPAD = 128          # padded edge rows  (MXU-aligned)
CPAD = 128          # padded input-channel width


# ----------------------------------------------------------------------------
# Fused kernel: the entire ScoreNetwork forward.
# ----------------------------------------------------------------------------
def _score_network_kernel(
    x0_ref, e0_ref, s_src_ref, s_dst_ref, a_dst_ref, eye_ref,
    nmask_ref, emask_ref,
    conv_wsd_ref, conv_we_ref, conv_b_ref,
    gat_wt_ref, gat_b_ref, head_w_ref, head_b_ref,
    out_ref):
  F = NO_FEATURES
  NP = NPAD
  f32 = jnp.float32

  def dot32(a, b):
    # f32 MXU matmul, f32 accumulation (bf16 operands rejected by the backend).
    return jnp.dot(a, b, preferred_element_type=jnp.float32)

  def row_bcast(col):
    # [NP,1] column -> [NP,NP] matrix whose value varies along lanes (col[j]).
    # K=1 outer product against a ones column -> runs on the (idle) MXU
    # instead of the eye-based VALU/XLU col_to_row of the previous version.
    ones_col = jnp.ones((col.shape[0], 1), f32)
    return jax.lax.dot_general(ones_col, col, (((1,), (1,)), ((), ())),
                               preferred_element_type=jnp.float32)

  nmask0 = nmask_ref[...]          # [NP,1] real-node mask
  emask0 = emask_ref[...]          # [EP,1] real-edge mask

  # ------------- 1 / in-degree, hoisted (one per distinct edge mask) --------
  def inv_degree(emask):
    deg = dot32(a_dst_ref[...], emask)                      # [NP,1] matvec
    return 1.0 / jnp.maximum(deg, 1.0)

  # -------------------------- EdgeConvRot (assumed) --------------------------
  def edge_conv(layer, x, e, emask, inv_deg):
    r0 = layer * CPAD
    w_sd = conv_wsd_ref[r0:r0 + CPAD, :]                    # [CPAD, 2F] src|dst
    w_e = conv_we_ref[r0:r0 + CPAD, :]                      # [CPAD, F]
    b = conv_b_ref[layer:layer + 1, :]                      # [1, F]

    y_sd = dot32(x, w_sd)                                   # [NP, 2F] one 256-wide MXU pass
    gathered = (dot32(s_src_ref[...], y_sd[:, :F]) +        # map node -> edge rows
                dot32(s_dst_ref[...], y_sd[:, F:]))         # [EP, F]
    # edge_raw[e] = W_src x_src(e) + W_dst x_dst(e) + W_e e + b   (dead edges zeroed)
    edge_raw = (gathered + dot32(e, w_e) + b) * emask
    node_raw = dot32(a_dst_ref[...], edge_raw) * inv_deg    # scatter-MEAN onto dst
    return node_raw, edge_raw

  # ----------------------- SAGPooling with GATConv score ---------------------
  def sag_pool(p, x, nmask, emask):
    # Fused GAT projection: columns 8p..8p+2 of gat_wt hold
    # theta, theta*a_src, theta*a_dst  ->  one MXU matmul gives all three.
    proj = dot32(x, gat_wt_ref[...])                        # [NP, 128]
    base = 8 * p
    thx = proj[:, base:base + 1]                            # Theta x          [NP,1]
    asrc = proj[:, base + 1:base + 2]                       # a_src . Theta x  [NP,1]
    adst = proj[:, base + 2:base + 3]                       # a_dst . Theta x  [NP,1]
    gbias = gat_b_ref[p:p + 1, 0:1]                         # [1,1]

    eye = eye_ref[...]                                      # loaded at point of use
    # Dense adjacency with live-edge multiplicities; self loops for alive nodes.
    adj = dot32(a_dst_ref[...], s_src_ref[...] * emask)     # [NP,NP] counts
    adj = adj * (1.0 - eye) + eye * nmask

    z = adst + row_bcast(asrc)                              # z[i,j] = adst_i + asrc_j
    z = jnp.where(z > 0, z, 0.2 * z)                        # LeakyReLU(0.2)
    z = jnp.where(adj > 0, z, -1e30)
    m = jnp.max(z, axis=1, keepdims=True)
    w = adj * jnp.exp(z - m)                                # count-weighted softmax
    # numerator and denominator with one MXU matvec:  w @ [thx | 1]
    nd = dot32(w, jnp.concatenate([thx, jnp.ones_like(thx)], axis=1))  # [NP,2]
    score = nd[:, 0:1] / jnp.maximum(nd[:, 1:2], 1e-12) + gbias        # [NP,1]

    # top-k (ratio = 0.5) among alive nodes via rank; index tie-break keeps
    # exactly k nodes even when scores tie.
    n_alive = jnp.sum(nmask, axis=0, keepdims=True)         # [1,1]
    k = jnp.floor((n_alive + 1.0) * 0.5)                    # ceil(0.5 * n)
    s_row = row_bcast(score)                                # score_j along lanes
    idx_col = jax.lax.broadcasted_iota(jnp.int32, (NP, NP), 0)
    idx_row = jax.lax.broadcasted_iota(jnp.int32, (NP, NP), 1)
    greater = jnp.logical_or(
        s_row > score,
        jnp.logical_and(s_row == score, idx_row < idx_col))
    rank = dot32(greater.astype(f32), nmask)                # [NP,1] MXU matvec
    keep = nmask * (rank < k).astype(f32)

    x_pool = x * jnp.tanh(score) * keep                     # x[perm] * tanh(score)
    src_keep = dot32(s_src_ref[...], keep)                  # [EP,1] (0/1) matvec
    dst_keep = dot32(s_dst_ref[...], keep)
    emask_new = emask * src_keep * dst_keep                 # filter_adj
    return x_pool, keep, emask_new

  # ---------------------- global max / mean pool readout ---------------------
  def readout(x_pool, keep):
    n_keep = jnp.sum(keep, axis=0, keepdims=True)           # [1,1]
    xm = jnp.where(keep > 0, x_pool, -1e30)
    g_max = jnp.max(xm, axis=0, keepdims=True)              # [1,F] gmp
    g_max = jnp.where(n_keep > 0, g_max, 0.0)               # empty-graph guard
    g_mean = jnp.sum(x_pool, axis=0, keepdims=True) / jnp.maximum(n_keep, 1.0)
    return g_max, g_mean

  # ------------------------------- forward -----------------------------------
  x0 = x0_ref[...]
  e0 = e0_ref[...]

  inv_deg0 = inv_degree(emask0)                             # shared by conv1/conv2

  n_raw, e_raw = edge_conv(0, x0, e0, emask0, inv_deg0)     # conv1
  x1 = jnp.maximum(n_raw, 0.0)
  ex1 = jnp.maximum(e_raw, 0.0)

  n_raw, e_raw = edge_conv(1, x1, ex1, emask0, inv_deg0)    # conv2
  x2 = jnp.maximum(n_raw, 0.0)
  ex2 = jnp.maximum(e_raw, 0.0)

  x2p, nmask2, emask2 = sag_pool(0, x2, nmask0, emask0)     # conv2_pooling
  g_max, g_mean = readout(x2p, nmask2)                      # l1
  l_max, l_mean = g_max, g_mean

  inv_deg2 = inv_degree(emask2)
  n_raw, e_raw = edge_conv(2, x2p, ex2, emask2, inv_deg2)   # conv3
  x3 = jnp.maximum(n_raw, 0.0)
  ex3 = jnp.maximum(e_raw, 0.0)

  x3p, nmask3, emask3 = sag_pool(1, x3, nmask2, emask2)     # conv3_pooling
  g_max, g_mean = readout(x3p, nmask3)                      # l2
  l_max, l_mean = l_max + g_max, l_mean + g_mean

  inv_deg3 = inv_degree(emask3)
  n_raw, e_raw = edge_conv(3, x3p, ex3, emask3, inv_deg3)   # conv4
  x4 = jnp.maximum(n_raw, 0.0)
  ex4 = jnp.maximum(e_raw, 0.0)
  del ex4                                                   # unused (last layer)

  x4p, nmask4, _ = sag_pool(2, x4, nmask3, emask3)          # conv4_pooling
  g_max, g_mean = readout(x4p, nmask4)                      # l3
  l_max, l_mean = l_max + g_max, l_mean + g_mean

  # ---- head: lin1(cat[gmp, gap]) -> relu -> dropout(id) -> lin2 -> relu -> lin3
  l_cat = jnp.concatenate([l_max, l_mean], axis=1)          # [1, 2F]
  l_cat8 = jnp.broadcast_to(l_cat, (8, 2 * F))              # lane-dense 8-sublane slab
  w1 = head_w_ref[0:2 * F, :]                               # [2F, F]  (one 256-wide matmul)
  w2 = head_w_ref[2 * F:3 * F, :]
  w3 = head_w_ref[3 * F:4 * F, :]
  b1 = head_b_ref[0:1, :]
  b2 = head_b_ref[1:2, :]
  b3 = head_b_ref[2:3, :]

  h1 = jnp.maximum(dot32(l_cat8, w1) + b1, 0.0)
  # dropout(p=0.6): identity in eval mode.
  h2 = jnp.maximum(dot32(h1, w2) + b2, 0.0)
  out_ref[...] = dot32(h2, w3) + b3                         # [8,128] slab


# ----------------------------------------------------------------------------
# Synthetic parameters (shapes follow __init__ with top_k=4), packed for MXU.
# ----------------------------------------------------------------------------
def init_params(key, top_k=4):
  f = NO_FEATURES
  in_node = 4 * top_k + top_k       # 20
  in_edge = 4
  conv_dims = [(in_node, in_edge), (f, f), (f, f), (f, f)]

  wsd_blocks, we_blocks, b_rows = [], [], []
  for (cn, ce) in conv_dims:
    key, k1, k2, k3, k4 = jax.random.split(key, 5)
    scale = 1.0 / jnp.sqrt(2.0 * cn + ce)
    w_src = jax.random.normal(k1, (cn, f), jnp.float32) * scale
    w_dst = jax.random.normal(k2, (cn, f), jnp.float32) * scale
    w_e = jax.random.normal(k3, (ce, f), jnp.float32) * scale
    w_sd = jnp.concatenate([jnp.pad(w_src, ((0, CPAD - cn), (0, 0))),
                            jnp.pad(w_dst, ((0, CPAD - cn), (0, 0)))], axis=1)
    wsd_blocks.append(w_sd)                                  # [128, 256]
    we_blocks.append(jnp.pad(w_e, ((0, CPAD - ce), (0, 0))))  # [128, 128]
    b_rows.append(jax.random.normal(k4, (f,), jnp.float32) * 0.01)
  conv_wsd = jnp.concatenate(wsd_blocks, axis=0)             # [512, 256]
  conv_we = jnp.concatenate(we_blocks, axis=0)               # [512, 128]
  conv_b = jnp.stack(b_rows, axis=0)                         # [4, 128]

  # GAT weights transposed: columns 8p..8p+2 = theta, theta*a_src, theta*a_dst
  gat_wt = jnp.zeros((CPAD, 128), jnp.float32)
  gat_b_rows = []
  for p in range(3):
    key, k1, k2, k3, k4 = jax.random.split(key, 5)
    theta = jax.random.normal(k1, (f,), jnp.float32) * (1.0 / jnp.sqrt(f))
    a_src = jax.random.normal(k2, (), jnp.float32)
    a_dst = jax.random.normal(k3, (), jnp.float32)
    bias = jax.random.normal(k4, (), jnp.float32) * 0.01
    base = 8 * p
    gat_wt = gat_wt.at[:f, base + 0].set(theta)
    gat_wt = gat_wt.at[:f, base + 1].set(theta * a_src)
    gat_wt = gat_wt.at[:f, base + 2].set(theta * a_dst)
    gat_b_rows.append(jnp.full((128,), bias, jnp.float32))
  gat_b_rows.append(jnp.zeros((128,), jnp.float32))
  gat_b = jnp.stack(gat_b_rows, axis=0)                      # [4, 128]

  key, k1, k2, k3, k4, k5, k6 = jax.random.split(key, 7)
  w1 = jax.random.normal(k1, (2 * f, f), jnp.float32) * (1.0 / jnp.sqrt(2 * f))
  b1 = jax.random.normal(k2, (f,), jnp.float32) * 0.01
  w2 = jax.random.normal(k3, (f, f // 2), jnp.float32) * (1.0 / jnp.sqrt(f))
  b2 = jax.random.normal(k4, (f // 2,), jnp.float32) * 0.01
  w3 = jax.random.normal(k5, (f // 2, top_k), jnp.float32) * (1.0 / jnp.sqrt(f // 2))
  b3 = jax.random.normal(k6, (top_k,), jnp.float32) * 0.01
  head_w = jnp.concatenate([
      w1,
      jnp.pad(w2, ((0, 0), (0, f - f // 2))),
      jnp.pad(w3, ((0, f - f // 2), (0, f - top_k)))], axis=0)   # [512, 128]
  head_b = jnp.stack([b1,
                      jnp.pad(b2, (0, f - f // 2)),
                      jnp.pad(b3, (0, f - top_k))], axis=0)      # [3, 128]
  return dict(conv_wsd=conv_wsd, conv_we=conv_we, conv_b=conv_b,
              gat_wt=gat_wt, gat_b=gat_b, head_w=head_w, head_b=head_b)


# ----------------------------------------------------------------------------
# Wrapper: pad / one-hot structure, single fused single-block pallas_call.
# ----------------------------------------------------------------------------
def _preprocess(node_feat, node_level, edge_index, edge_feat):
  n = node_feat.shape[0]
  e = edge_feat.shape[0]
  x = jnp.concatenate([node_feat.reshape(n, -1), node_level], axis=1)
  x = jnp.pad(x, ((0, NPAD - n), (0, CPAD - x.shape[1])))
  ef = jnp.pad(edge_feat, ((0, EPAD - e), (0, CPAD - edge_feat.shape[1])))
  src, dst = edge_index[0], edge_index[1]
  s_src = jnp.pad(jax.nn.one_hot(src, NPAD, dtype=jnp.float32),
                  ((0, EPAD - e), (0, 0)))
  s_dst = jnp.pad(jax.nn.one_hot(dst, NPAD, dtype=jnp.float32),
                  ((0, EPAD - e), (0, 0)))
  a_dst = s_dst.T
  eye = jnp.eye(NPAD, dtype=jnp.float32)
  nmask = (jnp.arange(NPAD) < n).astype(jnp.float32)[:, None]
  emask = (jnp.arange(EPAD) < e).astype(jnp.float32)[:, None]
  return x, ef, s_src, s_dst, a_dst, eye, nmask, emask


def score_network_forward(params, node_feat, node_level, edge_index, edge_feat,
                          top_k=4):
  x0, e0, s_src, s_dst, a_dst, eye, nmask, emask = _preprocess(
      node_feat, node_level, edge_index, edge_feat)

  inputs = (x0, e0, s_src, s_dst, a_dst, eye, nmask, emask,
            params["conv_wsd"], params["conv_we"], params["conv_b"],
            params["gat_wt"], params["gat_b"],
            params["head_w"], params["head_b"])

  f = NO_FEATURES
  flops = int(
      4 * (2 * NPAD * CPAD * 2 * f          # fused src|dst weight matmul
           + 2 * 2 * EPAD * NPAD * f        # edge gathers
           + 2 * EPAD * CPAD * f            # edge-feature matmul
           + 2 * NPAD * EPAD * f)           # scatter-mean aggregation
      + 3 * (2 * NPAD * CPAD * f            # fused GAT projection
             + 2 * NPAD * EPAD * NPAD       # adjacency
             + 2 * NPAD * NPAD * 4)         # num/denom + rank matvecs
      + 2 * 8 * 2 * f * f + 2 * 2 * 8 * f * f)
  transcendentals = int(3 * (NPAD * NPAD + 2 * NPAD))
  bytes_accessed = int(sum(a.size * a.dtype.itemsize for a in inputs)
                       + 8 * 128 * 4)

  out_slab = pl.pallas_call(
      _score_network_kernel,
      out_shape=jax.ShapeDtypeStruct((8, 128), jnp.float32),
      compiler_params=pltpu.CompilerParams(
          vmem_limit_bytes=32 * 1024 * 1024),
      cost_estimate=pl.CostEstimate(flops=flops,
                                    transcendentals=transcendentals,
                                    bytes_accessed=bytes_accessed),
  )(*inputs)
  return out_slab[0:1, 0:top_k]      # [1, top_k] logits


# ----------------------------------------------------------------------------
if __name__ == "__main__":
  key = jax.random.PRNGKey(0)
  kp, kn, kl, ke, ks, kd = jax.random.split(key, 6)

  TOP_K = 4
  N, E = 16, 32                      # small graph: 16 nodes, 32 edges

  params = init_params(kp, top_k=TOP_K)
  node_feat = jax.random.normal(kn, (N, TOP_K, 4), jnp.float32)   # view->[N,16]
  node_level = jax.random.normal(kl, (N, TOP_K), jnp.float32)     # [N,4]
  edge_feat = jax.random.normal(ke, (E, 4), jnp.float32)          # [E,4]
  src = jax.random.randint(ks, (E,), 0, N, dtype=jnp.int32)
  dst = jax.random.randint(kd, (E,), 0, N, dtype=jnp.int32)
  edge_index = jnp.stack([src, dst], axis=0)                      # [2,E]

  fwd = jax.jit(functools.partial(score_network_forward, params, top_k=TOP_K))
  out = fwd(node_feat, node_level, edge_index, edge_feat)
  jax.block_until_ready(out)

  assert out.shape == (1, TOP_K)
  assert bool(jnp.all(jnp.isfinite(out)))
  print("KERNEL_OK")
</pallas_src>

<mosaic_0001>
module attributes {stable_mosaic.version = 11 : i64} {
  func.func @_score_network_kernel(%arg0: memref<128x128xf32, #tpu.memory_space<vmem>>, %arg1: memref<128x128xf32, #tpu.memory_space<vmem>>, %arg2: memref<128x128xf32, #tpu.memory_space<vmem>>, %arg3: memref<128x128xf32, #tpu.memory_space<vmem>>, %arg4: memref<128x128xf32, #tpu.memory_space<vmem>>, %arg5: memref<128x128xf32, #tpu.memory_space<vmem>>, %arg6: memref<128x1xf32, #tpu.memory_space<vmem>>, %arg7: memref<128x1xf32, #tpu.memory_space<vmem>>, %arg8: memref<512x256xf32, #tpu.memory_space<vmem>>, %arg9: memref<512x128xf32, #tpu.memory_space<vmem>>, %arg10: memref<4x128xf32, #tpu.memory_space<vmem>>, %arg11: memref<128x128xf32, #tpu.memory_space<vmem>>, %arg12: memref<4x128xf32, #tpu.memory_space<vmem>>, %arg13: memref<512x128xf32, #tpu.memory_space<vmem>>, %arg14: memref<3x128xf32, #tpu.memory_space<vmem>>, %arg15: memref<8x128xf32, #tpu.memory_space<vmem>>) attributes {dimension_semantics = [], scalar_prefetch = 0 : i64, scratch_operands = 0 : i64, tpu.core_type = #tpu.core_type<tc>} {
    %c0 = arith.constant 0 : index
    %c0_0 = arith.constant 0 : index
    %0 = vector.load %arg6[%c0, %c0_0] : memref<128x1xf32, #tpu.memory_space<vmem>>, vector<128x1xf32>
    %c0_1 = arith.constant 0 : index
    %c0_2 = arith.constant 0 : index
    %1 = vector.load %arg7[%c0_1, %c0_2] : memref<128x1xf32, #tpu.memory_space<vmem>>, vector<128x1xf32>
    %c0_3 = arith.constant 0 : index
    %c0_4 = arith.constant 0 : index
    %2 = vector.load %arg0[%c0_3, %c0_4] : memref<128x128xf32, #tpu.memory_space<vmem>>, vector<128x128xf32>
    %c0_5 = arith.constant 0 : index
    %c0_6 = arith.constant 0 : index
    %3 = vector.load %arg1[%c0_5, %c0_6] : memref<128x128xf32, #tpu.memory_space<vmem>>, vector<128x128xf32>
    %c0_7 = arith.constant 0 : index
    %c0_8 = arith.constant 0 : index
    %4 = vector.load %arg4[%c0_7, %c0_8] : memref<128x128xf32, #tpu.memory_space<vmem>>, vector<128x128xf32>
    %cst = arith.constant dense<0.000000e+00> : vector<128x1xf32>
    %5 = tpu.matmul %4, %1, %cst {dimension_numbers = #tpu.dot_dimension_numbers<[1], [0], [0], [1], [0, 0, 1, 1], [], []>} : vector<128x128xf32>, vector<128x1xf32>, vector<128x1xf32> -> vector<128x1xf32>
    %cst_9 = arith.constant 1.000000e+00 : f32
    %6 = vector.broadcast %cst_9 : f32 to vector<128x1xf32>
    %7 = arith.maximumf %5, %6 : vector<128x1xf32>
    %cst_10 = arith.constant 1.000000e+00 : f32
    %8 = vector.broadcast %cst_10 : f32 to vector<128x1xf32>
    %9 = arith.divf %8, %7 : vector<128x1xf32>
    %c0_11 = arith.constant 0 : index
    %c0_12 = arith.constant 0 : index
    %10 = vector.load %arg8[%c0_11, %c0_12] : memref<512x256xf32, #tpu.memory_space<vmem>>, vector<128x256xf32>
    %c0_13 = arith.constant 0 : index
    %c0_14 = arith.constant 0 : index
    %11 = vector.load %arg9[%c0_13, %c0_14] : memref<512x128xf32, #tpu.memory_space<vmem>>, vector<128x128xf32>
    %c0_15 = arith.constant 0 : index
    %c0_16 = arith.constant 0 : index
    %12 = vector.load %arg10[%c0_15, %c0_16] : memref<4x128xf32, #tpu.memory_space<vmem>>, vector<1x128xf32>
    %cst_17 = arith.constant dense<0.000000e+00> : vector<128x256xf32>
    %13 = tpu.matmul %2, %10, %cst_17 {dimension_numbers = #tpu.dot_dimension_numbers<[1], [0], [0], [1], [0, 0, 1, 1], [], []>} : vector<128x128xf32>, vector<128x256xf32>, vector<128x256xf32> -> vector<128x256xf32>
    %c0_18 = arith.constant 0 : index
    %c0_19 = arith.constant 0 : index
    %14 = vector.load %arg2[%c0_18, %c0_19] : memref<128x128xf32, #tpu.memory_space<vmem>>, vector<128x128xf32>
    %15 = vector.extract_strided_slice %13 {offsets = [0, 0], sizes = [128, 128], strides = [1, 1]} : vector<128x256xf32> to vector<128x128xf32>
    %cst_20 = arith.constant dense<0.000000e+00> : vector<128x128xf32>
    %16 = tpu.matmul %14, %15, %cst_20 {dimension_numbers = #tpu.dot_dimension_numbers<[1], [0], [0], [1], [0, 0, 1, 1], [], []>} : vector<128x128xf32>, vector<128x128xf32>, vector<128x128xf32> -> vector<128x128xf32>
    %c0_21 = arith.constant 0 : index
    %c0_22 = arith.constant 0 : index
    %17 = vector.load %arg3[%c0_21, %c0_22] : memref<128x128xf32, #tpu.memory_space<vmem>>, vector<128x128xf32>
    %18 = vector.extract_strided_slice %13 {offsets = [0, 128], sizes = [128, 128], strides = [1, 1]} : vector<128x256xf32> to vector<128x128xf32>
    %cst_23 = arith.constant dense<0.000000e+00> : vector<128x128xf32>
    %19 = tpu.matmul %17, %18, %cst_23 {dimension_numbers = #tpu.dot_dimension_numbers<[1], [0], [0], [1], [0, 0, 1, 1], [], []>} : vector<128x128xf32>, vector<128x128xf32>, vector<128x128xf32> -> vector<128x128xf32>
    %20 = arith.addf %16, %19 : vector<128x128xf32>
    %cst_24 = arith.constant dense<0.000000e+00> : vector<128x128xf32>
    %21 = tpu.matmul %3, %11, %cst_24 {dimension_numbers = #tpu.dot_dimension_numbers<[1], [0], [0], [1], [0, 0, 1, 1], [], []>} : vector<128x128xf32>, vector<128x128xf32>, vector<128x128xf32> -> vector<128x128xf32>
    %22 = arith.addf %20, %21 : vector<128x128xf32>
    %23 = vector.broadcast %12 : vector<1x128xf32> to vector<128x128xf32>
    %24 = arith.addf %22, %23 : vector<128x128xf32>
    %25 = vector.broadcast %1 : vector<128x1xf32> to vector<128x128xf32>
    %26 = arith.mulf %24, %25 : vector<128x128xf32>
    %c0_25 = arith.constant 0 : index
    %c0_26 = arith.constant 0 : index
    %27 = vector.load %arg4[%c0_25, %c0_26] : memref<128x128xf32, #tpu.memory_space<vmem>>, vector<128x128xf32>
    %cst_27 = arith.constant dense<0.000000e+00> : vector<128x128xf32>
    %28 = tpu.matmul %27, %26, %cst_27 {dimension_numbers = #tpu.dot_dimension_numbers<[1], [0], [0], [1], [0, 0, 1, 1], [], []>} : vector<128x128xf32>, vector<128x128xf32>, vector<128x128xf32> -> vector<128x128xf32>
    %29 = vector.broadcast %9 : vector<128x1xf32> to vector<128x128xf32>
    %30 = arith.mulf %28, %29 : vector<128x128xf32>
    %cst_28 = arith.constant 0.000000e+00 : f32
    %31 = vector.broadcast %cst_28 : f32 to vector<128x128xf32>
    %32 = arith.maximumf %30, %31 : vector<128x128xf32>
    %cst_29 = arith.constant 0.000000e+00 : f32
    %33 = vector.broadcast %cst_29 : f32 to vector<128x128xf32>
    %34 = arith.maximumf %26, %33 : vector<128x128xf32>
    %c128 = arith.constant 128 : index
    %c0_30 = arith.constant 0 : index
    %35 = vector.load %arg8[%c128, %c0_30] : memref<512x256xf32, #tpu.memory_space<vmem>>, vector<128x256xf32>
    %c128_31 = arith.constant 128 : index
    %c0_32 = arith.constant 0 : index
    %36 = vector.load %arg9[%c128_31, %c0_32] : memref<512x128xf32, #tpu.memory_space<vmem>>, vector<128x128xf32>
    %c1 = arith.constant 1 : index
    %c0_33 = arith.constant 0 : index
    %37 = vector.load %arg10[%c1, %c0_33] : memref<4x128xf32, #tpu.memory_space<vmem>>, vector<1x128xf32>
    %cst_34 = arith.constant dense<0.000000e+00> : vector<128x256xf32>
    %38 = tpu.matmul %32, %35, %cst_34 {dimension_numbers = #tpu.dot_dimension_numbers<[1], [0], [0], [1], [0, 0, 1, 1], [], []>} : vector<128x128xf32>, vector<128x256xf32>, vector<128x256xf32> -> vector<128x256xf32>
    %c0_35 = arith.constant 0 : index
    %c0_36 = arith.constant 0 : index
    %39 = vector.load %arg2[%c0_35, %c0_36] : memref<128x128xf32, #tpu.memory_space<vmem>>, vector<128x128xf32>
    %40 = vector.extract_strided_slice %38 {offsets = [0, 0], sizes = [128, 128], strides = [1, 1]} : vector<128x256xf32> to vector<128x128xf32>
    %cst_37 = arith.constant dense<0.000000e+00> : vector<128x128xf32>
    %41 = tpu.matmul %39, %40, %cst_37 {dimension_numbers = #tpu.dot_dimension_numbers<[1], [0], [0], [1], [0, 0, 1, 1], [], []>} : vector<128x128xf32>, vector<128x128xf32>, vector<128x128xf32> -> vector<128x128xf32>
    %c0_38 = arith.constant 0 : index
    %c0_39 = arith.constant 0 : index
    %42 = vector.load %arg3[%c0_38, %c0_39] : memref<128x128xf32, #tpu.memory_space<vmem>>, vector<128x128xf32>
    %43 = vector.extract_strided_slice %38 {offsets = [0, 128], sizes = [128, 128], strides = [1, 1]} : vector<128x256xf32> to vector<128x128xf32>
    %cst_40 = arith.constant dense<0.000000e+00> : vector<128x128xf32>
    %44 = tpu.matmul %42, %43, %cst_40 {dimension_numbers = #tpu.dot_dimension_numbers<[1], [0], [0], [1], [0, 0, 1, 1], [], []>} : vector<128x128xf32>, vector<128x128xf32>, vector<128x128xf32> -> vector<128x128xf32>
    %45 = arith.addf %41, %44 : vector<128x128xf32>
    %cst_41 = arith.constant dense<0.000000e+00> : vector<128x128xf32>
    %46 = tpu.matmul %34, %36, %cst_41 {dimension_numbers = #tpu.dot_dimension_numbers<[1], [0], [0], [1], [0, 0, 1, 1], [], []>} : vector<128x128xf32>, vector<128x128xf32>, vector<128x128xf32> -> vector<128x128xf32>
    %47 = arith.addf %45, %46 : vector<128x128xf32>
    %48 = vector.broadcast %37 : vector<1x128xf32> to vector<128x128xf32>
    %49 = arith.addf %47, %48 : vector<128x128xf32>
    %50 = vector.broadcast %1 : vector<128x1xf32> to vector<128x128xf32>
    %51 = arith.mulf %49, %50 : vector<128x128xf32>
    %c0_42 = arith.constant 0 : index
    %c0_43 = arith.constant 0 : index
    %52 = vector.load %arg4[%c0_42, %c0_43] : memref<128x128xf32, #tpu.memory_space<vmem>>, vector<128x128xf32>
    %cst_44 = arith.constant dense<0.000000e+00> : vector<128x128xf32>
    %53 = tpu.matmul %52, %51, %cst_44 {dimension_numbers = #tpu.dot_dimension_numbers<[1], [0], [0], [1], [0, 0, 1, 1], [], []>} : vector<128x128xf32>, vector<128x128xf32>, vector<128x128xf32> -> vector<128x128xf32>
    %54 = vector.broadcast %9 : vector<128x1xf32> to vector<128x128xf32>
    %55 = arith.mulf %53, %54 : vector<128x128xf32>
    %cst_45 = arith.constant 0.000000e+00 : f32
    %56 = vector.broadcast %cst_45 : f32 to vector<128x128xf32>
    %57 = arith.maximumf %55, %56 : vector<128x128xf32>
    %cst_46 = arith.constant 0.000000e+00 : f32
    %58 = vector.broadcast %cst_46 : f32 to vector<128x128xf32>
    %59 = arith.maximumf %51, %58 : vector<128x128xf32>
    %c0_47 = arith.constant 0 : index
    %c0_48 = arith.constant 0 : index
    %60 = vector.load %arg11[%c0_47, %c0_48] : memref<128x128xf32, #tpu.memory_space<vmem>>, vector<128x128xf32>
    %cst_49 = arith.constant dense<0.000000e+00> : vector<128x128xf32>
    %61 = tpu.matmul %57, %60, %cst_49 {dimension_numbers = #tpu.dot_dimension_numbers<[1], [0], [0], [1], [0, 0, 1, 1], [], []>} : vector<128x128xf32>, vector<128x128xf32>, vector<128x128xf32> -> vector<128x128xf32>
    %62 = vector.extract_strided_slice %61 {offsets = [0, 0], sizes = [128, 1], strides = [1, 1]} : vector<128x128xf32> to vector<128x1xf32>
    %63 = vector.extract_strided_slice %61 {offsets = [0, 1], sizes = [128, 1], strides = [1, 1]} : vector<128x128xf32> to vector<128x1xf32>
    %64 = vector.extract_strided_slice %61 {offsets = [0, 2], sizes = [128, 1], strides = [1, 1]} : vector<128x128xf32> to vector<128x1xf32>
    %c0_50 = arith.constant 0 : index
    %c0_51 = arith.constant 0 : index
    %65 = vector.load %arg12[%c0_50, %c0_51] : memref<4x128xf32, #tpu.memory_space<vmem>>, vector<1x1xf32>
    %c0_52 = arith.constant 0 : index
    %c0_53 = arith.constant 0 : index
    %66 = vector.load %arg5[%c0_52, %c0_53] : memref<128x128xf32, #tpu.memory_space<vmem>>, vector<128x128xf32>
    %c0_54 = arith.constant 0 : index
    %c0_55 = arith.constant 0 : index
    %67 = vector.load %arg4[%c0_54, %c0_55] : memref<128x128xf32, #tpu.memory_space<vmem>>, vector<128x128xf32>
    %c0_56 = arith.constant 0 : index
    %c0_57 = arith.constant 0 : index
    %68 = vector.load %arg2[%c0_56, %c0_57] : memref<128x128xf32, #tpu.memory_space<vmem>>, vector<128x128xf32>
    %69 = vector.broadcast %1 : vector<128x1xf32> to vector<128x128xf32>
    %70 = arith.mulf %68, %69 : vector<128x128xf32>
    %cst_58 = arith.constant dense<0.000000e+00> : vector<128x128xf32>
    %71 = tpu.matmul %67, %70, %cst_58 {dimension_numbers = #tpu.dot_dimension_numbers<[1], [0], [0], [1], [0, 0, 1, 1], [], []>} : vector<128x128xf32>, vector<128x128xf32>, vector<128x128xf32> -> vector<128x128xf32>
    %cst_59 = arith.constant 1.000000e+00 : f32
    %72 = vector.broadcast %cst_59 : f32 to vector<128x128xf32>
    %73 = arith.subf %72, %66 : vector<128x128xf32>
    %74 = arith.mulf %71, %73 : vector<128x128xf32>
    %75 = vector.broadcast %0 : vector<128x1xf32> to vector<128x128xf32>
    %76 = arith.mulf %66, %75 : vector<128x128xf32>
    %77 = arith.addf %74, %76 : vector<128x128xf32>
    %cst_60 = arith.constant 1.000000e+00 : f32
    %78 = vector.broadcast %cst_60 : f32 to vector<128x1xf32>
    %cst_61 = arith.constant dense<0.000000e+00> : vector<128x128xf32>
    %79 = tpu.matmul %78, %63, %cst_61 {dimension_numbers = #tpu.dot_dimension_numbers<[1], [1], [0], [0], [0, 0, 1, 0], [], []>} : vector<128x1xf32>, vector<128x1xf32>, vector<128x128xf32> -> vector<128x128xf32>
    %80 = vector.broadcast %64 : vector<128x1xf32> to vector<128x128xf32>
    %81 = arith.addf %80, %79 : vector<128x128xf32>
    %cst_62 = arith.constant 0.000000e+00 : f32
    %82 = vector.broadcast %cst_62 : f32 to vector<128x128xf32>
    %83 = arith.cmpf ogt, %81, %82 : vector<128x128xf32>
    %cst_63 = arith.constant 2.000000e-01 : f32
    %84 = vector.broadcast %cst_63 : f32 to vector<128x128xf32>
    %85 = arith.mulf %84, %81 : vector<128x128xf32>
    %86 = arith.select %83, %81, %85 : vector<128x128xi1>, vector<128x128xf32>
    %cst_64 = arith.constant 0.000000e+00 : f32
    %87 = vector.broadcast %cst_64 : f32 to vector<128x128xf32>
    %88 = arith.cmpf ogt, %77, %87 : vector<128x128xf32>
    %cst_65 = arith.constant -1.000000e+30 : f32
    %89 = vector.broadcast %cst_65 : f32 to vector<128x128xf32>
    %90 = arith.select %88, %86, %89 : vector<128x128xi1>, vector<128x128xf32>
    %cst_66 = arith.constant dense<0xFF800000> : vector<128xf32>
    %91 = vector.multi_reduction <maximumf>, %90, %cst_66 [1] : vector<128x128xf32> to vector<128xf32>
    %92 = vector.shape_cast %91 : vector<128xf32> to vector<128x1xf32>
    %93 = vector.broadcast %92 : vector<128x1xf32> to vector<128x128xf32>
    %94 = arith.subf %90, %93 : vector<128x128xf32>
    %95 = math.exp %94 : vector<128x128xf32>
    %96 = arith.mulf %77, %95 : vector<128x128xf32>
    %cst_67 = arith.constant 1.000000e+00 : f32
    %97 = vector.broadcast %cst_67 : f32 to vector<128x1xf32>
    %98 = tpu.concatenate %62, %97 in 1 : vector<128x1xf32>, vector<128x1xf32> -> vector<128x2xf32>
    %cst_68 = arith.constant dense<0.000000e+00> : vector<128x2xf32>
    %99 = tpu.matmul %96, %98, %cst_68 {dimension_numbers = #tpu.dot_dimension_numbers<[1], [0], [0], [1], [0, 0, 1, 1], [], []>} : vector<128x128xf32>, vector<128x2xf32>, vector<128x2xf32> -> vector<128x2xf32>
    %100 = vector.extract_strided_slice %99 {offsets = [0, 0], sizes = [128, 1], strides = [1, 1]} : vector<128x2xf32> to vector<128x1xf32>
    %101 = vector.extract_strided_slice %99 {offsets = [0, 1], sizes = [128, 1], strides = [1, 1]} : vector<128x2xf32> to vector<128x1xf32>
    %cst_69 = arith.constant 9.99999996E-13 : f32
    %102 = vector.broadcast %cst_69 : f32 to vector<128x1xf32>
    %103 = arith.maximumf %101, %102 : vector<128x1xf32>
    %104 = arith.divf %100, %103 : vector<128x1xf32>
    %105 = vector.broadcast %65 : vector<1x1xf32> to vector<128x1xf32>
    %106 = arith.addf %104, %105 : vector<128x1xf32>
    %cst_70 = arith.constant dense<0.000000e+00> : vector<1xf32>
    %107 = vector.multi_reduction <add>, %0, %cst_70 [0] : vector<128x1xf32> to vector<1xf32>
    %108 = vector.shape_cast %107 : vector<1xf32> to vector<1x1xf32>
    %cst_71 = arith.constant 1.000000e+00 : f32
    %109 = vector.broadcast %cst_71 : f32 to vector<1x1xf32>
    %110 = arith.addf %108, %109 : vector<1x1xf32>
    %cst_72 = arith.constant 5.000000e-01 : f32
    %111 = vector.broadcast %cst_72 : f32 to vector<1x1xf32>
    %112 = arith.mulf %110, %111 : vector<1x1xf32>
    %113 = math.floor %112 : vector<1x1xf32>
    %cst_73 = arith.constant 1.000000e+00 : f32
    %114 = vector.broadcast %cst_73 : f32 to vector<128x1xf32>
    %cst_74 = arith.constant dense<0.000000e+00> : vector<128x128xf32>
    %115 = tpu.matmul %114, %106, %cst_74 {dimension_numbers = #tpu.dot_dimension_numbers<[1], [1], [0], [0], [0, 0, 1, 0], [], []>} : vector<128x1xf32>, vector<128x1xf32>, vector<128x128xf32> -> vector<128x128xf32>
    %116 = tpu.iota {dimensions = array<i32: 0>} : vector<128x128xi32>
    %117 = tpu.iota {dimensions = array<i32: 1>} : vector<128x128xi32>
    %118 = vector.broadcast %106 : vector<128x1xf32> to vector<128x128xf32>
    %119 = arith.cmpf ogt, %115, %118 : vector<128x128xf32>
    %120 = vector.broadcast %106 : vector<128x1xf32> to vector<128x128xf32>
    %121 = arith.cmpf oeq, %115, %120 : vector<128x128xf32>
    %122 = arith.cmpi slt, %117, %116 : vector<128x128xi32>
    %123 = arith.andi %121, %122 : vector<128x128xi1>
    %124 = arith.ori %119, %123 : vector<128x128xi1>
    %125 = arith.extui %124 : vector<128x128xi1> to vector<128x128xi32>
    %126 = arith.sitofp %125 : vector<128x128xi32> to vector<128x128xf32>
    %cst_75 = arith.constant dense<0.000000e+00> : vector<128x1xf32>
    %127 = tpu.matmul %126, %0, %cst_75 {dimension_numbers = #tpu.dot_dimension_numbers<[1], [0], [0], [1], [0, 0, 1, 1], [], []>} : vector<128x128xf32>, vector<128x1xf32>, vector<128x1xf32> -> vector<128x1xf32>
    %128 = vector.broadcast %113 : vector<1x1xf32> to vector<128x1xf32>
    %129 = arith.cmpf olt, %127, %128 : vector<128x1xf32>
    %130 = arith.extui %129 : vector<128x1xi1> to vector<128x1xi32>
    %131 = arith.sitofp %130 : vector<128x1xi32> to vector<128x1xf32>
    %132 = arith.mulf %0, %131 : vector<128x1xf32>
    %133 = math.tanh %106 : vector<128x1xf32>
    %134 = vector.broadcast %133 : vector<128x1xf32> to vector<128x128xf32>
    %135 = arith.mulf %57, %134 : vector<128x128xf32>
    %136 = vector.broadcast %132 : vector<128x1xf32> to vector<128x128xf32>
    %137 = arith.mulf %135, %136 : vector<128x128xf32>
    %c0_76 = arith.constant 0 : index
    %c0_77 = arith.constant 0 : index
    %138 = vector.load %arg2[%c0_76, %c0_77] : memref<128x128xf32, #tpu.memory_space<vmem>>, vector<128x128xf32>
    %cst_78 = arith.constant dense<0.000000e+00> : vector<128x1xf32>
    %139 = tpu.matmul %138, %132, %cst_78 {dimension_numbers = #tpu.dot_dimension_numbers<[1], [0], [0], [1], [0, 0, 1, 1], [], []>} : vector<128x128xf32>, vector<128x1xf32>, vector<128x1xf32> -> vector<128x1xf32>
    %c0_79 = arith.constant 0 : index
    %c0_80 = arith.constant 0 : index
    %140 = vector.load %arg3[%c0_79, %c0_80] : memref<128x128xf32, #tpu.memory_space<vmem>>, vector<128x128xf32>
    %cst_81 = arith.constant dense<0.000000e+00> : vector<128x1xf32>
    %141 = tpu.matmul %140, %132, %cst_81 {dimension_numbers = #tpu.dot_dimension_numbers<[1], [0], [0], [1], [0, 0, 1, 1], [], []>} : vector<128x128xf32>, vector<128x1xf32>, vector<128x1xf32> -> vector<128x1xf32>
    %142 = arith.mulf %1, %139 : vector<128x1xf32>
    %143 = arith.mulf %142, %141 : vector<128x1xf32>
    %cst_82 = arith.constant dense<0.000000e+00> : vector<1xf32>
    %144 = vector.multi_reduction <add>, %132, %cst_82 [0] : vector<128x1xf32> to vector<1xf32>
    %145 = vector.shape_cast %144 : vector<1xf32> to vector<1x1xf32>
    %cst_83 = arith.constant 0.000000e+00 : f32
    %146 = vector.broadcast %cst_83 : f32 to vector<128x1xf32>
    %147 = arith.cmpf ogt, %132, %146 : vector<128x1xf32>
    %cst_84 = arith.constant -1.000000e+30 : f32
    %148 = vector.shape_cast %147 : vector<128x1xi1> to vector<128x1xi1>
    %149 = vector.broadcast %148 : vector<128x1xi1> to vector<128x128xi1>
    %150 = vector.broadcast %cst_84 : f32 to vector<128x128xf32>
    %151 = arith.select %149, %137, %150 : vector<128x128xi1>, vector<128x128xf32>
    %cst_85 = arith.constant dense<0xFF800000> : vector<128xf32>
    %152 = vector.multi_reduction <maximumf>, %151, %cst_85 [0] : vector<128x128xf32> to vector<128xf32>
    %153 = vector.shape_cast %152 : vector<128xf32> to vector<1x128xf32>
    %cst_86 = arith.constant 0.000000e+00 : f32
    %154 = vector.broadcast %cst_86 : f32 to vector<1x1xf32>
    %155 = arith.cmpf ogt, %145, %154 : vector<1x1xf32>
    %cst_87 = arith.constant 0.000000e+00 : f32
    %156 = vector.shape_cast %155 : vector<1x1xi1> to vector<1x1xi1>
    %157 = vector.broadcast %156 : vector<1x1xi1> to vector<1x128xi1>
    %158 = vector.broadcast %cst_87 : f32 to vector<1x128xf32>
    %159 = arith.select %157, %153, %158 : vector<1x128xi1>, vector<1x128xf32>
    %cst_88 = arith.constant dense<0.000000e+00> : vector<128xf32>
    %160 = vector.multi_reduction <add>, %137, %cst_88 [0] : vector<128x128xf32> to vector<128xf32>
    %161 = vector.shape_cast %160 : vector<128xf32> to vector<1x128xf32>
    %cst_89 = arith.constant 1.000000e+00 : f32
    %162 = vector.broadcast %cst_89 : f32 to vector<1x1xf32>
    %163 = arith.maximumf %145, %162 : vector<1x1xf32>
    %164 = vector.broadcast %163 : vector<1x1xf32> to vector<1x128xf32>
    %165 = arith.divf %161, %164 : vector<1x128xf32>
    %c0_90 = arith.constant 0 : index
    %c0_91 = arith.constant 0 : index
    %166 = vector.load %arg4[%c0_90, %c0_91] : memref<128x128xf32, #tpu.memory_space<vmem>>, vector<128x128xf32>
    %cst_92 = arith.constant dense<0.000000e+00> : vector<128x1xf32>
    %167 = tpu.matmul %166, %143, %cst_92 {dimension_numbers = #tpu.dot_dimension_numbers<[1], [0], [0], [1], [0, 0, 1, 1], [], []>} : vector<128x128xf32>, vector<128x1xf32>, vector<128x1xf32> -> vector<128x1xf32>
    %cst_93 = arith.constant 1.000000e+00 : f32
    %168 = vector.broadcast %cst_93 : f32 to vector<128x1xf32>
    %169 = arith.maximumf %167, %168 : vector<128x1xf32>
    %cst_94 = arith.constant 1.000000e+00 : f32
    %170 = vector.broadcast %cst_94 : f32 to vector<128x1xf32>
    %171 = arith.divf %170, %169 : vector<128x1xf32>
    %c256 = arith.constant 256 : index
    %c0_95 = arith.constant 0 : index
    %172 = vector.load %arg8[%c256, %c0_95] : memref<512x256xf32, #tpu.memory_space<vmem>>, vector<128x256xf32>
    %c256_96 = arith.constant 256 : index
    %c0_97 = arith.constant 0 : index
    %173 = vector.load %arg9[%c256_96, %c0_97] : memref<512x128xf32, #tpu.memory_space<vmem>>, vector<128x128xf32>
    %c2 = arith.constant 2 : index
    %c0_98 = arith.constant 0 : index
    %174 = vector.load %arg10[%c2, %c0_98] : memref<4x128xf32, #tpu.memory_space<vmem>>, vector<1x128xf32>
    %cst_99 = arith.constant dense<0.000000e+00> : vector<128x256xf32>
    %175 = tpu.matmul %137, %172, %cst_99 {dimension_numbers = #tpu.dot_dimension_numbers<[1], [0], [0], [1], [0, 0, 1, 1], [], []>} : vector<128x128xf32>, vector<128x256xf32>, vector<128x256xf32> -> vector<128x256xf32>
    %c0_100 = arith.constant 0 : index
    %c0_101 = arith.constant 0 : index
    %176 = vector.load %arg2[%c0_100, %c0_101] : memref<128x128xf32, #tpu.memory_space<vmem>>, vector<128x128xf32>
    %177 = vector.extract_strided_slice %175 {offsets = [0, 0], sizes = [128, 128], strides = [1, 1]} : vector<128x256xf32> to vector<128x128xf32>
    %cst_102 = arith.constant dense<0.000000e+00> : vector<128x128xf32>
    %178 = tpu.matmul %176, %177, %cst_102 {dimension_numbers = #tpu.dot_dimension_numbers<[1], [0], [0], [1], [0, 0, 1, 1], [], []>} : vector<128x128xf32>, vector<128x128xf32>, vector<128x128xf32> -> vector<128x128xf32>
    %c0_103 = arith.constant 0 : index
    %c0_104 = arith.constant 0 : index
    %179 = vector.load %arg3[%c0_103, %c0_104] : memref<128x128xf32, #tpu.memory_space<vmem>>, vector<128x128xf32>
    %180 = vector.extract_strided_slice %175 {offsets = [0, 128], sizes = [128, 128], strides = [1, 1]} : vector<128x256xf32> to vector<128x128xf32>
    %cst_105 = arith.constant dense<0.000000e+00> : vector<128x128xf32>
    %181 = tpu.matmul %179, %180, %cst_105 {dimension_numbers = #tpu.dot_dimension_numbers<[1], [0], [0], [1], [0, 0, 1, 1], [], []>} : vector<128x128xf32>, vector<128x128xf32>, vector<128x128xf32> -> vector<128x128xf32>
    %182 = arith.addf %178, %181 : vector<128x128xf32>
    %cst_106 = arith.constant dense<0.000000e+00> : vector<128x128xf32>
    %183 = tpu.matmul %59, %173, %cst_106 {dimension_numbers = #tpu.dot_dimension_numbers<[1], [0], [0], [1], [0, 0, 1, 1], [], []>} : vector<128x128xf32>, vector<128x128xf32>, vector<128x128xf32> -> vector<128x128xf32>
    %184 = arith.addf %182, %183 : vector<128x128xf32>
    %185 = vector.broadcast %174 : vector<1x128xf32> to vector<128x128xf32>
    %186 = arith.addf %184, %185 : vector<128x128xf32>
    %187 = vector.broadcast %143 : vector<128x1xf32> to vector<128x128xf32>
    %188 = arith.mulf %186, %187 : vector<128x128xf32>
    %c0_107 = arith.constant 0 : index
    %c0_108 = arith.constant 0 : index
    %189 = vector.load %arg4[%c0_107, %c0_108] : memref<128x128xf32, #tpu.memory_space<vmem>>, vector<128x128xf32>
    %cst_109 = arith.constant dense<0.000000e+00> : vector<128x128xf32>
    %190 = tpu.matmul %189, %188, %cst_109 {dimension_numbers = #tpu.dot_dimension_numbers<[1], [0], [0], [1], [0, 0, 1, 1], [], []>} : vector<128x128xf32>, vector<128x128xf32>, vector<128x128xf32> -> vector<128x128xf32>
    %191 = vector.broadcast %171 : vector<128x1xf32> to vector<128x128xf32>
    %192 = arith.mulf %190, %191 : vector<128x128xf32>
    %cst_110 = arith.constant 0.000000e+00 : f32
    %193 = vector.broadcast %cst_110 : f32 to vector<128x128xf32>
    %194 = arith.maximumf %192, %193 : vector<128x128xf32>
    %cst_111 = arith.constant 0.000000e+00 : f32
    %195 = vector.broadcast %cst_111 : f32 to vector<128x128xf32>
    %196 = arith.maximumf %188, %195 : vector<128x128xf32>
    %c0_112 = arith.constant 0 : index
    %c0_113 = arith.constant 0 : index
    %197 = vector.load %arg11[%c0_112, %c0_113] : memref<128x128xf32, #tpu.memory_space<vmem>>, vector<128x128xf32>
    %cst_114 = arith.constant dense<0.000000e+00> : vector<128x128xf32>
    %198 = tpu.matmul %194, %197, %cst_114 {dimension_numbers = #tpu.dot_dimension_numbers<[1], [0], [0], [1], [0, 0, 1, 1], [], []>} : vector<128x128xf32>, vector<128x128xf32>, vector<128x128xf32> -> vector<128x128xf32>
    %199 = vector.extract_strided_slice %198 {offsets = [0, 8], sizes = [128, 1], strides = [1, 1]} : vector<128x128xf32> to vector<128x1xf32>
    %200 = vector.extract_strided_slice %198 {offsets = [0, 9], sizes = [128, 1], strides = [1, 1]} : vector<128x128xf32> to vector<128x1xf32>
    %201 = vector.extract_strided_slice %198 {offsets = [0, 10], sizes = [128, 1], strides = [1, 1]} : vector<128x128xf32> to vector<128x1xf32>
    %c1_115 = arith.constant 1 : index
    %c0_116 = arith.constant 0 : index
    %202 = vector.load %arg12[%c1_115, %c0_116] : memref<4x128xf32, #tpu.memory_space<vmem>>, vector<1x1xf32>
    %c0_117 = arith.constant 0 : index
    %c0_118 = arith.constant 0 : index
    %203 = vector.load %arg5[%c0_117, %c0_118] : memref<128x128xf32, #tpu.memory_space<vmem>>, vector<128x128xf32>
    %c0_119 = arith.constant 0 : index
    %c0_120 = arith.constant 0 : index
    %204 = vector.load %arg4[%c0_119, %c0_120] : memref<128x128xf32, #tpu.memory_space<vmem>>, vector<128x128xf32>
    %c0_121 = arith.constant 0 : index
    %c0_122 = arith.constant 0 : index
    %205 = vector.load %arg2[%c0_121, %c0_122] : memref<128x128xf32, #tpu.memory_space<vmem>>, vector<128x128xf32>
    %206 = vector.broadcast %143 : vector<128x1xf32> to vector<128x128xf32>
    %207 = arith.mulf %205, %206 : vector<128x128xf32>
    %cst_123 = arith.constant dense<0.000000e+00> : vector<128x128xf32>
    %208 = tpu.matmul %204, %207, %cst_123 {dimension_numbers = #tpu.dot_dimension_numbers<[1], [0], [0], [1], [0, 0, 1, 1], [], []>} : vector<128x128xf32>, vector<128x128xf32>, vector<128x128xf32> -> vector<128x128xf32>
    %cst_124 = arith.constant 1.000000e+00 : f32
    %209 = vector.broadcast %cst_124 : f32 to vector<128x128xf32>
    %210 = arith.subf %209, %203 : vector<128x128xf32>
    %211 = arith.mulf %208, %210 : vector<128x128xf32>
    %212 = vector.broadcast %132 : vector<128x1xf32> to vector<128x128xf32>
    %213 = arith.mulf %203, %212 : vector<128x128xf32>
    %214 = arith.addf %211, %213 : vector<128x128xf32>
    %cst_125 = arith.constant 1.000000e+00 : f32
    %215 = vector.broadcast %cst_125 : f32 to vector<128x1xf32>
    %cst_126 = arith.constant dense<0.000000e+00> : vector<128x128xf32>
    %216 = tpu.matmul %215, %200, %cst_126 {dimension_numbers = #tpu.dot_dimension_numbers<[1], [1], [0], [0], [0, 0, 1, 0], [], []>} : vector<128x1xf32>, vector<128x1xf32>, vector<128x128xf32> -> vector<128x128xf32>
    %217 = vector.broadcast %201 : vector<128x1xf32> to vector<128x128xf32>
    %218 = arith.addf %217, %216 : vector<128x128xf32>
    %cst_127 = arith.constant 0.000000e+00 : f32
    %219 = vector.broadcast %cst_127 : f32 to vector<128x128xf32>
    %220 = arith.cmpf ogt, %218, %219 : vector<128x128xf32>
    %cst_128 = arith.constant 2.000000e-01 : f32
    %221 = vector.broadcast %cst_128 : f32 to vector<128x128xf32>
    %222 = arith.mulf %221, %218 : vector<128x128xf32>
    %223 = arith.select %220, %218, %222 : vector<128x128xi1>, vector<128x128xf32>
    %cst_129 = arith.constant 0.000000e+00 : f32
    %224 = vector.broadcast %cst_129 : f32 to vector<128x128xf32>
    %225 = arith.cmpf ogt, %214, %224 : vector<128x128xf32>
    %cst_130 = arith.constant -1.000000e+30 : f32
    %226 = vector.broadcast %cst_130 : f32 to vector<128x128xf32>
    %227 = arith.select %225, %223, %226 : vector<128x128xi1>, vector<128x128xf32>
    %cst_131 = arith.constant dense<0xFF800000> : vector<128xf32>
    %228 = vector.multi_reduction <maximumf>, %227, %cst_131 [1] : vector<128x128xf32> to vector<128xf32>
    %229 = vector.shape_cast %228 : vector<128xf32> to vector<128x1xf32>
    %230 = vector.broadcast %229 : vector<128x1xf32> to vector<128x128xf32>
    %231 = arith.subf %227, %230 : vector<128x128xf32>
    %232 = math.exp %231 : vector<128x128xf32>
    %233 = arith.mulf %214, %232 : vector<128x128xf32>
    %cst_132 = arith.constant 1.000000e+00 : f32
    %234 = vector.broadcast %cst_132 : f32 to vector<128x1xf32>
    %235 = tpu.concatenate %199, %234 in 1 : vector<128x1xf32>, vector<128x1xf32> -> vector<128x2xf32>
    %cst_133 = arith.constant dense<0.000000e+00> : vector<128x2xf32>
    %236 = tpu.matmul %233, %235, %cst_133 {dimension_numbers = #tpu.dot_dimension_numbers<[1], [0], [0], [1], [0, 0, 1, 1], [], []>} : vector<128x128xf32>, vector<128x2xf32>, vector<128x2xf32> -> vector<128x2xf32>
    %237 = vector.extract_strided_slice %236 {offsets = [0, 0], sizes = [128, 1], strides = [1, 1]} : vector<128x2xf32> to vector<128x1xf32>
    %238 = vector.extract_strided_slice %236 {offsets = [0, 1], sizes = [128, 1], strides = [1, 1]} : vector<128x2xf32> to vector<128x1xf32>
    %cst_134 = arith.constant 9.99999996E-13 : f32
    %239 = vector.broadcast %cst_134 : f32 to vector<128x1xf32>
    %240 = arith.maximumf %238, %239 : vector<128x1xf32>
    %241 = arith.divf %237, %240 : vector<128x1xf32>
    %242 = vector.broadcast %202 : vector<1x1xf32> to vector<128x1xf32>
    %243 = arith.addf %241, %242 : vector<128x1xf32>
    %cst_135 = arith.constant dense<0.000000e+00> : vector<1xf32>
    %244 = vector.multi_reduction <add>, %132, %cst_135 [0] : vector<128x1xf32> to vector<1xf32>
    %245 = vector.shape_cast %244 : vector<1xf32> to vector<1x1xf32>
    %cst_136 = arith.constant 1.000000e+00 : f32
    %246 = vector.broadcast %cst_136 : f32 to vector<1x1xf32>
    %247 = arith.addf %245, %246 : vector<1x1xf32>
    %cst_137 = arith.constant 5.000000e-01 : f32
    %248 = vector.broadcast %cst_137 : f32 to vector<1x1xf32>
    %249 = arith.mulf %247, %248 : vector<1x1xf32>
    %250 = math.floor %249 : vector<1x1xf32>
    %cst_138 = arith.constant 1.000000e+00 : f32
    %251 = vector.broadcast %cst_138 : f32 to vector<128x1xf32>
    %cst_139 = arith.constant dense<0.000000e+00> : vector<128x128xf32>
    %252 = tpu.matmul %251, %243, %cst_139 {dimension_numbers = #tpu.dot_dimension_numbers<[1], [1], [0], [0], [0, 0, 1, 0], [], []>} : vector<128x1xf32>, vector<128x1xf32>, vector<128x128xf32> -> vector<128x128xf32>
    %253 = tpu.iota {dimensions = array<i32: 0>} : vector<128x128xi32>
    %254 = tpu.iota {dimensions = array<i32: 1>} : vector<128x128xi32>
    %255 = vector.broadcast %243 : vector<128x1xf32> to vector<128x128xf32>
    %256 = arith.cmpf ogt, %252, %255 : vector<128x128xf32>
    %257 = vector.broadcast %243 : vector<128x1xf32> to vector<128x128xf32>
    %258 = arith.cmpf oeq, %252, %257 : vector<128x128xf32>
    %259 = arith.cmpi slt, %254, %253 : vector<128x128xi32>
    %260 = arith.andi %258, %259 : vector<128x128xi1>
    %261 = arith.ori %256, %260 : vector<128x128xi1>
    %262 = arith.extui %261 : vector<128x128xi1> to vector<128x128xi32>
    %263 = arith.sitofp %262 : vector<128x128xi32> to vector<128x128xf32>
    %cst_140 = arith.constant dense<0.000000e+00> : vector<128x1xf32>
    %264 = tpu.matmul %263, %132, %cst_140 {dimension_numbers = #tpu.dot_dimension_numbers<[1], [0], [0], [1], [0, 0, 1, 1], [], []>} : vector<128x128xf32>, vector<128x1xf32>, vector<128x1xf32> -> vector<128x1xf32>
    %265 = vector.broadcast %250 : vector<1x1xf32> to vector<128x1xf32>
    %266 = arith.cmpf olt, %264, %265 : vector<128x1xf32>
    %267 = arith.extui %266 : vector<128x1xi1> to vector<128x1xi32>
    %268 = arith.sitofp %267 : vector<128x1xi32> to vector<128x1xf32>
    %269 = arith.mulf %132, %268 : vector<128x1xf32>
    %270 = math.tanh %243 : vector<128x1xf32>
    %271 = vector.broadcast %270 : vector<128x1xf32> to vector<128x128xf32>
    %272 = arith.mulf %194, %271 : vector<128x128xf32>
    %273 = vector.broadcast %269 : vector<128x1xf32> to vector<128x128xf32>
    %274 = arith.mulf %272, %273 : vector<128x128xf32>
    %c0_141 = arith.constant 0 : index
    %c0_142 = arith.constant 0 : index
    %275 = vector.load %arg2[%c0_141, %c0_142] : memref<128x128xf32, #tpu.memory_space<vmem>>, vector<128x128xf32>
    %cst_143 = arith.constant dense<0.000000e+00> : vector<128x1xf32>
    %276 = tpu.matmul %275, %269, %cst_143 {dimension_numbers = #tpu.dot_dimension_numbers<[1], [0], [0], [1], [0, 0, 1, 1], [], []>} : vector<128x128xf32>, vector<128x1xf32>, vector<128x1xf32> -> vector<128x1xf32>
    %c0_144 = arith.constant 0 : index
    %c0_145 = arith.constant 0 : index
    %277 = vector.load %arg3[%c0_144, %c0_145] : memref<128x128xf32, #tpu.memory_space<vmem>>, vector<128x128xf32>
    %cst_146 = arith.constant dense<0.000000e+00> : vector<128x1xf32>
    %278 = tpu.matmul %277, %269, %cst_146 {dimension_numbers = #tpu.dot_dimension_numbers<[1], [0], [0], [1], [0, 0, 1, 1], [], []>} : vector<128x128xf32>, vector<128x1xf32>, vector<128x1xf32> -> vector<128x1xf32>
    %279 = arith.mulf %143, %276 : vector<128x1xf32>
    %280 = arith.mulf %279, %278 : vector<128x1xf32>
    %cst_147 = arith.constant dense<0.000000e+00> : vector<1xf32>
    %281 = vector.multi_reduction <add>, %269, %cst_147 [0] : vector<128x1xf32> to vector<1xf32>
    %282 = vector.shape_cast %281 : vector<1xf32> to vector<1x1xf32>
    %cst_148 = arith.constant 0.000000e+00 : f32
    %283 = vector.broadcast %cst_148 : f32 to vector<128x1xf32>
    %284 = arith.cmpf ogt, %269, %283 : vector<128x1xf32>
    %cst_149 = arith.constant -1.000000e+30 : f32
    %285 = vector.shape_cast %284 : vector<128x1xi1> to vector<128x1xi1>
    %286 = vector.broadcast %285 : vector<128x1xi1> to vector<128x128xi1>
    %287 = vector.broadcast %cst_149 : f32 to vector<128x128xf32>
    %288 = arith.select %286, %274, %287 : vector<128x128xi1>, vector<128x128xf32>
    %cst_150 = arith.constant dense<0xFF800000> : vector<128xf32>
    %289 = vector.multi_reduction <maximumf>, %288, %cst_150 [0] : vector<128x128xf32> to vector<128xf32>
    %290 = vector.shape_cast %289 : vector<128xf32> to vector<1x128xf32>
    %cst_151 = arith.constant 0.000000e+00 : f32
    %291 = vector.broadcast %cst_151 : f32 to vector<1x1xf32>
    %292 = arith.cmpf ogt, %282, %291 : vector<1x1xf32>
    %cst_152 = arith.constant 0.000000e+00 : f32
    %293 = vector.shape_cast %292 : vector<1x1xi1> to vector<1x1xi1>
    %294 = vector.broadcast %293 : vector<1x1xi1> to vector<1x128xi1>
    %295 = vector.broadcast %cst_152 : f32 to vector<1x128xf32>
    %296 = arith.select %294, %290, %295 : vector<1x128xi1>, vector<1x128xf32>
    %cst_153 = arith.constant dense<0.000000e+00> : vector<128xf32>
    %297 = vector.multi_reduction <add>, %274, %cst_153 [0] : vector<128x128xf32> to vector<128xf32>
    %298 = vector.shape_cast %297 : vector<128xf32> to vector<1x128xf32>
    %cst_154 = arith.constant 1.000000e+00 : f32
    %299 = vector.broadcast %cst_154 : f32 to vector<1x1xf32>
    %300 = arith.maximumf %282, %299 : vector<1x1xf32>
    %301 = vector.broadcast %300 : vector<1x1xf32> to vector<1x128xf32>
    %302 = arith.divf %298, %301 : vector<1x128xf32>
    %303 = arith.addf %159, %296 : vector<1x128xf32>
    %304 = arith.addf %165, %302 : vector<1x128xf32>
    %c0_155 = arith.constant 0 : index
    %c0_156 = arith.constant 0 : index
    %305 = vector.load %arg4[%c0_155, %c0_156] : memref<128x128xf32, #tpu.memory_space<vmem>>, vector<128x128xf32>
    %cst_157 = arith.constant dense<0.000000e+00> : vector<128x1xf32>
    %306 = tpu.matmul %305, %280, %cst_157 {dimension_numbers = #tpu.dot_dimension_numbers<[1], [0], [0], [1], [0, 0, 1, 1], [], []>} : vector<128x128xf32>, vector<128x1xf32>, vector<128x1xf32> -> vector<128x1xf32>
    %cst_158 = arith.constant 1.000000e+00 : f32
    %307 = vector.broadcast %cst_158 : f32 to vector<128x1xf32>
    %308 = arith.maximumf %306, %307 : vector<128x1xf32>
    %cst_159 = arith.constant 1.000000e+00 : f32
    %309 = vector.broadcast %cst_159 : f32 to vector<128x1xf32>
    %310 = arith.divf %309, %308 : vector<128x1xf32>
    %c384 = arith.constant 384 : index
    %c0_160 = arith.constant 0 : index
    %311 = vector.load %arg8[%c384, %c0_160] : memref<512x256xf32, #tpu.memory_space<vmem>>, vector<128x256xf32>
    %c384_161 = arith.constant 384 : index
    %c0_162 = arith.constant 0 : index
    %312 = vector.load %arg9[%c384_161, %c0_162] : memref<512x128xf32, #tpu.memory_space<vmem>>, vector<128x128xf32>
    %c3 = arith.constant 3 : index
    %c0_163 = arith.constant 0 : index
    %313 = vector.load %arg10[%c3, %c0_163] : memref<4x128xf32, #tpu.memory_space<vmem>>, vector<1x128xf32>
    %cst_164 = arith.constant dense<0.000000e+00> : vector<128x256xf32>
    %314 = tpu.matmul %274, %311, %cst_164 {dimension_numbers = #tpu.dot_dimension_numbers<[1], [0], [0], [1], [0, 0, 1, 1], [], []>} : vector<128x128xf32>, vector<128x256xf32>, vector<128x256xf32> -> vector<128x256xf32>
    %c0_165 = arith.constant 0 : index
    %c0_166 = arith.constant 0 : index
    %315 = vector.load %arg2[%c0_165, %c0_166] : memref<128x128xf32, #tpu.memory_space<vmem>>, vector<128x128xf32>
    %316 = vector.extract_strided_slice %314 {offsets = [0, 0], sizes = [128, 128], strides = [1, 1]} : vector<128x256xf32> to vector<128x128xf32>
    %cst_167 = arith.constant dense<0.000000e+00> : vector<128x128xf32>
    %317 = tpu.matmul %315, %316, %cst_167 {dimension_numbers = #tpu.dot_dimension_numbers<[1], [0], [0], [1], [0, 0, 1, 1], [], []>} : vector<128x128xf32>, vector<128x128xf32>, vector<128x128xf32> -> vector<128x128xf32>
    %c0_168 = arith.constant 0 : index
    %c0_169 = arith.constant 0 : index
    %318 = vector.load %arg3[%c0_168, %c0_169] : memref<128x128xf32, #tpu.memory_space<vmem>>, vector<128x128xf32>
    %319 = vector.extract_strided_slice %314 {offsets = [0, 128], sizes = [128, 128], strides = [1, 1]} : vector<128x256xf32> to vector<128x128xf32>
    %cst_170 = arith.constant dense<0.000000e+00> : vector<128x128xf32>
    %320 = tpu.matmul %318, %319, %cst_170 {dimension_numbers = #tpu.dot_dimension_numbers<[1], [0], [0], [1], [0, 0, 1, 1], [], []>} : vector<128x128xf32>, vector<128x128xf32>, vector<128x128xf32> -> vector<128x128xf32>
    %321 = arith.addf %317, %320 : vector<128x128xf32>
    %cst_171 = arith.constant dense<0.000000e+00> : vector<128x128xf32>
    %322 = tpu.matmul %196, %312, %cst_171 {dimension_numbers = #tpu.dot_dimension_numbers<[1], [0], [0], [1], [0, 0, 1, 1], [], []>} : vector<128x128xf32>, vector<128x128xf32>, vector<128x128xf32> -> vector<128x128xf32>
    %323 = arith.addf %321, %322 : vector<128x128xf32>
    %324 = vector.broadcast %313 : vector<1x128xf32> to vector<128x128xf32>
    %325 = arith.addf %323, %324 : vector<128x128xf32>
    %326 = vector.broadcast %280 : vector<128x1xf32> to vector<128x128xf32>
    %327 = arith.mulf %325, %326 : vector<128x128xf32>
    %c0_172 = arith.constant 0 : index
    %c0_173 = arith.constant 0 : index
    %328 = vector.load %arg4[%c0_172, %c0_173] : memref<128x128xf32, #tpu.memory_space<vmem>>, vector<128x128xf32>
    %cst_174 = arith.constant dense<0.000000e+00> : vector<128x128xf32>
    %329 = tpu.matmul %328, %327, %cst_174 {dimension_numbers = #tpu.dot_dimension_numbers<[1], [0], [0], [1], [0, 0, 1, 1], [], []>} : vector<128x128xf32>, vector<128x128xf32>, vector<128x128xf32> -> vector<128x128xf32>
    %330 = vector.broadcast %310 : vector<128x1xf32> to vector<128x128xf32>
    %331 = arith.mulf %329, %330 : vector<128x128xf32>
    %cst_175 = arith.constant 0.000000e+00 : f32
    %332 = vector.broadcast %cst_175 : f32 to vector<128x128xf32>
    %333 = arith.maximumf %331, %332 : vector<128x128xf32>
    %c0_176 = arith.constant 0 : index
    %c0_177 = arith.constant 0 : index
    %334 = vector.load %arg11[%c0_176, %c0_177] : memref<128x128xf32, #tpu.memory_space<vmem>>, vector<128x128xf32>
    %cst_178 = arith.constant dense<0.000000e+00> : vector<128x128xf32>
    %335 = tpu.matmul %333, %334, %cst_178 {dimension_numbers = #tpu.dot_dimension_numbers<[1], [0], [0], [1], [0, 0, 1, 1], [], []>} : vector<128x128xf32>, vector<128x128xf32>, vector<128x128xf32> -> vector<128x128xf32>
    %336 = vector.extract_strided_slice %335 {offsets = [0, 16], sizes = [128, 1], strides = [1, 1]} : vector<128x128xf32> to vector<128x1xf32>
    %337 = vector.extract_strided_slice %335 {offsets = [0, 17], sizes = [128, 1], strides = [1, 1]} : vector<128x128xf32> to vector<128x1xf32>
    %338 = vector.extract_strided_slice %335 {offsets = [0, 18], sizes = [128, 1], strides = [1, 1]} : vector<128x128xf32> to vector<128x1xf32>
    %c2_179 = arith.constant 2 : index
    %c0_180 = arith.constant 0 : index
    %339 = vector.load %arg12[%c2_179, %c0_180] : memref<4x128xf32, #tpu.memory_space<vmem>>, vector<1x1xf32>
    %c0_181 = arith.constant 0 : index
    %c0_182 = arith.constant 0 : index
    %340 = vector.load %arg5[%c0_181, %c0_182] : memref<128x128xf32, #tpu.memory_space<vmem>>, vector<128x128xf32>
    %c0_183 = arith.constant 0 : index
    %c0_184 = arith.constant 0 : index
    %341 = vector.load %arg4[%c0_183, %c0_184] : memref<128x128xf32, #tpu.memory_space<vmem>>, vector<128x128xf32>
    %c0_185 = arith.constant 0 : index
    %c0_186 = arith.constant 0 : index
    %342 = vector.load %arg2[%c0_185, %c0_186] : memref<128x128xf32, #tpu.memory_space<vmem>>, vector<128x128xf32>
    %343 = vector.broadcast %280 : vector<128x1xf32> to vector<128x128xf32>
    %344 = arith.mulf %342, %343 : vector<128x128xf32>
    %cst_187 = arith.constant dense<0.000000e+00> : vector<128x128xf32>
    %345 = tpu.matmul %341, %344, %cst_187 {dimension_numbers = #tpu.dot_dimension_numbers<[1], [0], [0], [1], [0, 0, 1, 1], [], []>} : vector<128x128xf32>, vector<128x128xf32>, vector<128x128xf32> -> vector<128x128xf32>
    %cst_188 = arith.constant 1.000000e+00 : f32
    %346 = vector.broadcast %cst_188 : f32 to vector<128x128xf32>
    %347 = arith.subf %346, %340 : vector<128x128xf32>
    %348 = arith.mulf %345, %347 : vector<128x128xf32>
    %349 = vector.broadcast %269 : vector<128x1xf32> to vector<128x128xf32>
    %350 = arith.mulf %340, %349 : vector<128x128xf32>
    %351 = arith.addf %348, %350 : vector<128x128xf32>
    %cst_189 = arith.constant 1.000000e+00 : f32
    %352 = vector.broadcast %cst_189 : f32 to vector<128x1xf32>
    %cst_190 = arith.constant dense<0.000000e+00> : vector<128x128xf32>
    %353 = tpu.matmul %352, %337, %cst_190 {dimension_numbers = #tpu.dot_dimension_numbers<[1], [1], [0], [0], [0, 0, 1, 0], [], []>} : vector<128x1xf32>, vector<128x1xf32>, vector<128x128xf32> -> vector<128x128xf32>
    %354 = vector.broadcast %338 : vector<128x1xf32> to vector<128x128xf32>
    %355 = arith.addf %354, %353 : vector<128x128xf32>
    %cst_191 = arith.constant 0.000000e+00 : f32
    %356 = vector.broadcast %cst_191 : f32 to vector<128x128xf32>
    %357 = arith.cmpf ogt, %355, %356 : vector<128x128xf32>
    %cst_192 = arith.constant 2.000000e-01 : f32
    %358 = vector.broadcast %cst_192 : f32 to vector<128x128xf32>
    %359 = arith.mulf %358, %355 : vector<128x128xf32>
    %360 = arith.select %357, %355, %359 : vector<128x128xi1>, vector<128x128xf32>
    %cst_193 = arith.constant 0.000000e+00 : f32
    %361 = vector.broadcast %cst_193 : f32 to vector<128x128xf32>
    %362 = arith.cmpf ogt, %351, %361 : vector<128x128xf32>
    %cst_194 = arith.constant -1.000000e+30 : f32
    %363 = vector.broadcast %cst_194 : f32 to vector<128x128xf32>
    %364 = arith.select %362, %360, %363 : vector<128x128xi1>, vector<128x128xf32>
    %cst_195 = arith.constant dense<0xFF800000> : vector<128xf32>
    %365 = vector.multi_reduction <maximumf>, %364, %cst_195 [1] : vector<128x128xf32> to vector<128xf32>
    %366 = vector.shape_cast %365 : vector<128xf32> to vector<128x1xf32>
    %367 = vector.broadcast %366 : vector<128x1xf32> to vector<128x128xf32>
    %368 = arith.subf %364, %367 : vector<128x128xf32>
    %369 = math.exp %368 : vector<128x128xf32>
    %370 = arith.mulf %351, %369 : vector<128x128xf32>
    %cst_196 = arith.constant 1.000000e+00 : f32
    %371 = vector.broadcast %cst_196 : f32 to vector<128x1xf32>
    %372 = tpu.concatenate %336, %371 in 1 : vector<128x1xf32>, vector<128x1xf32> -> vector<128x2xf32>
    %cst_197 = arith.constant dense<0.000000e+00> : vector<128x2xf32>
    %373 = tpu.matmul %370, %372, %cst_197 {dimension_numbers = #tpu.dot_dimension_numbers<[1], [0], [0], [1], [0, 0, 1, 1], [], []>} : vector<128x128xf32>, vector<128x2xf32>, vector<128x2xf32> -> vector<128x2xf32>
    %374 = vector.extract_strided_slice %373 {offsets = [0, 0], sizes = [128, 1], strides = [1, 1]} : vector<128x2xf32> to vector<128x1xf32>
    %375 = vector.extract_strided_slice %373 {offsets = [0, 1], sizes = [128, 1], strides = [1, 1]} : vector<128x2xf32> to vector<128x1xf32>
    %cst_198 = arith.constant 9.99999996E-13 : f32
    %376 = vector.broadcast %cst_198 : f32 to vector<128x1xf32>
    %377 = arith.maximumf %375, %376 : vector<128x1xf32>
    %378 = arith.divf %374, %377 : vector<128x1xf32>
    %379 = vector.broadcast %339 : vector<1x1xf32> to vector<128x1xf32>
    %380 = arith.addf %378, %379 : vector<128x1xf32>
    %cst_199 = arith.constant dense<0.000000e+00> : vector<1xf32>
    %381 = vector.multi_reduction <add>, %269, %cst_199 [0] : vector<128x1xf32> to vector<1xf32>
    %382 = vector.shape_cast %381 : vector<1xf32> to vector<1x1xf32>
    %cst_200 = arith.constant 1.000000e+00 : f32
    %383 = vector.broadcast %cst_200 : f32 to vector<1x1xf32>
    %384 = arith.addf %382, %383 : vector<1x1xf32>
    %cst_201 = arith.constant 5.000000e-01 : f32
    %385 = vector.broadcast %cst_201 : f32 to vector<1x1xf32>
    %386 = arith.mulf %384, %385 : vector<1x1xf32>
    %387 = math.floor %386 : vector<1x1xf32>
    %cst_202 = arith.constant 1.000000e+00 : f32
    %388 = vector.broadcast %cst_202 : f32 to vector<128x1xf32>
    %cst_203 = arith.constant dense<0.000000e+00> : vector<128x128xf32>
    %389 = tpu.matmul %388, %380, %cst_203 {dimension_numbers = #tpu.dot_dimension_numbers<[1], [1], [0], [0], [0, 0, 1, 0], [], []>} : vector<128x1xf32>, vector<128x1xf32>, vector<128x128xf32> -> vector<128x128xf32>
    %390 = tpu.iota {dimensions = array<i32: 0>} : vector<128x128xi32>
    %391 = tpu.iota {dimensions = array<i32: 1>} : vector<128x128xi32>
    %392 = vector.broadcast %380 : vector<128x1xf32> to vector<128x128xf32>
    %393 = arith.cmpf ogt, %389, %392 : vector<128x128xf32>
    %394 = vector.broadcast %380 : vector<128x1xf32> to vector<128x128xf32>
    %395 = arith.cmpf oeq, %389, %394 : vector<128x128xf32>
    %396 = arith.cmpi slt, %391, %390 : vector<128x128xi32>
    %397 = arith.andi %395, %396 : vector<128x128xi1>
    %398 = arith.ori %393, %397 : vector<128x128xi1>
    %399 = arith.extui %398 : vector<128x128xi1> to vector<128x128xi32>
    %400 = arith.sitofp %399 : vector<128x128xi32> to vector<128x128xf32>
    %cst_204 = arith.constant dense<0.000000e+00> : vector<128x1xf32>
    %401 = tpu.matmul %400, %269, %cst_204 {dimension_numbers = #tpu.dot_dimension_numbers<[1], [0], [0], [1], [0, 0, 1, 1], [], []>} : vector<128x128xf32>, vector<128x1xf32>, vector<128x1xf32> -> vector<128x1xf32>
    %402 = vector.broadcast %387 : vector<1x1xf32> to vector<128x1xf32>
    %403 = arith.cmpf olt, %401, %402 : vector<128x1xf32>
    %404 = arith.extui %403 : vector<128x1xi1> to vector<128x1xi32>
    %405 = arith.sitofp %404 : vector<128x1xi32> to vector<128x1xf32>
    %406 = arith.mulf %269, %405 : vector<128x1xf32>
    %407 = math.tanh %380 : vector<128x1xf32>
    %408 = vector.broadcast %407 : vector<128x1xf32> to vector<128x128xf32>
    %409 = arith.mulf %333, %408 : vector<128x128xf32>
    %410 = vector.broadcast %406 : vector<128x1xf32> to vector<128x128xf32>
    %411 = arith.mulf %409, %410 : vector<128x128xf32>
    %cst_205 = arith.constant dense<0.000000e+00> : vector<1xf32>
    %412 = vector.multi_reduction <add>, %406, %cst_205 [0] : vector<128x1xf32> to vector<1xf32>
    %413 = vector.shape_cast %412 : vector<1xf32> to vector<1x1xf32>
    %cst_206 = arith.constant 0.000000e+00 : f32
    %414 = vector.broadcast %cst_206 : f32 to vector<128x1xf32>
    %415 = arith.cmpf ogt, %406, %414 : vector<128x1xf32>
    %cst_207 = arith.constant -1.000000e+30 : f32
    %416 = vector.shape_cast %415 : vector<128x1xi1> to vector<128x1xi1>
    %417 = vector.broadcast %416 : vector<128x1xi1> to vector<128x128xi1>
    %418 = vector.broadcast %cst_207 : f32 to vector<128x128xf32>
    %419 = arith.select %417, %411, %418 : vector<128x128xi1>, vector<128x128xf32>
    %cst_208 = arith.constant dense<0xFF800000> : vector<128xf32>
    %420 = vector.multi_reduction <maximumf>, %419, %cst_208 [0] : vector<128x128xf32> to vector<128xf32>
    %421 = vector.shape_cast %420 : vector<128xf32> to vector<1x128xf32>
    %cst_209 = arith.constant 0.000000e+00 : f32
    %422 = vector.broadcast %cst_209 : f32 to vector<1x1xf32>
    %423 = arith.cmpf ogt, %413, %422 : vector<1x1xf32>
    %cst_210 = arith.constant 0.000000e+00 : f32
    %424 = vector.shape_cast %423 : vector<1x1xi1> to vector<1x1xi1>
    %425 = vector.broadcast %424 : vector<1x1xi1> to vector<1x128xi1>
    %426 = vector.broadcast %cst_210 : f32 to vector<1x128xf32>
    %427 = arith.select %425, %421, %426 : vector<1x128xi1>, vector<1x128xf32>
    %cst_211 = arith.constant dense<0.000000e+00> : vector<128xf32>
    %428 = vector.multi_reduction <add>, %411, %cst_211 [0] : vector<128x128xf32> to vector<128xf32>
    %429 = vector.shape_cast %428 : vector<128xf32> to vector<1x128xf32>
    %cst_212 = arith.constant 1.000000e+00 : f32
    %430 = vector.broadcast %cst_212 : f32 to vector<1x1xf32>
    %431 = arith.maximumf %413, %430 : vector<1x1xf32>
    %432 = vector.broadcast %431 : vector<1x1xf32> to vector<1x128xf32>
    %433 = arith.divf %429, %432 : vector<1x128xf32>
    %434 = arith.addf %303, %427 : vector<1x128xf32>
    %435 = arith.addf %304, %433 : vector<1x128xf32>
    %436 = tpu.concatenate %434, %435 in 1 : vector<1x128xf32>, vector<1x128xf32> -> vector<1x256xf32>
    %437 = vector.shape_cast %436 : vector<1x256xf32> to vector<1x256xf32>
    %438 = vector.broadcast %437 : vector<1x256xf32> to vector<8x256xf32>
    %c0_213 = arith.constant 0 : index
    %c0_214 = arith.constant 0 : index
    %439 = vector.load %arg13[%c0_213, %c0_214] : memref<512x128xf32, #tpu.memory_space<vmem>>, vector<256x128xf32>
    %c256_215 = arith.constant 256 : index
    %c0_216 = arith.constant 0 : index
    %440 = vector.load %arg13[%c256_215, %c0_216] : memref<512x128xf32, #tpu.memory_space<vmem>>, vector<128x128xf32>
    %c384_217 = arith.constant 384 : index
    %c0_218 = arith.constant 0 : index
    %441 = vector.load %arg13[%c384_217, %c0_218] : memref<512x128xf32, #tpu.memory_space<vmem>>, vector<128x128xf32>
    %c0_219 = arith.constant 0 : index
    %c0_220 = arith.constant 0 : index
    %442 = vector.load %arg14[%c0_219, %c0_220] : memref<3x128xf32, #tpu.memory_space<vmem>>, vector<1x128xf32>
    %c1_221 = arith.constant 1 : index
    %c0_222 = arith.constant 0 : index
    %443 = vector.load %arg14[%c1_221, %c0_222] : memref<3x128xf32, #tpu.memory_space<vmem>>, vector<1x128xf32>
    %c2_223 = arith.constant 2 : index
    %c0_224 = arith.constant 0 : index
    %444 = vector.load %arg14[%c2_223, %c0_224] : memref<3x128xf32, #tpu.memory_space<vmem>>, vector<1x128xf32>
    %cst_225 = arith.constant dense<0.000000e+00> : vector<8x128xf32>
    %445 = tpu.matmul %438, %439, %cst_225 {dimension_numbers = #tpu.dot_dimension_numbers<[1], [0], [0], [1], [0, 0, 1, 1], [], []>} : vector<8x256xf32>, vector<256x128xf32>, vector<8x128xf32> -> vector<8x128xf32>
    %446 = vector.broadcast %442 : vector<1x128xf32> to vector<8x128xf32>
    %447 = arith.addf %445, %446 : vector<8x128xf32>
    %cst_226 = arith.constant 0.000000e+00 : f32
    %448 = vector.broadcast %cst_226 : f32 to vector<8x128xf32>
    %449 = arith.maximumf %447, %448 : vector<8x128xf32>
    %cst_227 = arith.constant dense<0.000000e+00> : vector<8x128xf32>
    %450 = tpu.matmul %449, %440, %cst_227 {dimension_numbers = #tpu.dot_dimension_numbers<[1], [0], [0], [1], [0, 0, 1, 1], [], []>} : vector<8x128xf32>, vector<128x128xf32>, vector<8x128xf32> -> vector<8x128xf32>
    %451 = vector.broadcast %443 : vector<1x128xf32> to vector<8x128xf32>
    %452 = arith.addf %450, %451 : vector<8x128xf32>
    %cst_228 = arith.constant 0.000000e+00 : f32
    %453 = vector.broadcast %cst_228 : f32 to vector<8x128xf32>
    %454 = arith.maximumf %452, %453 : vector<8x128xf32>
    %cst_229 = arith.constant dense<0.000000e+00> : vector<8x128xf32>
    %455 = tpu.matmul %454, %441, %cst_229 {dimension_numbers = #tpu.dot_dimension_numbers<[1], [0], [0], [1], [0, 0, 1, 1], [], []>} : vector<8x128xf32>, vector<128x128xf32>, vector<8x128xf32> -> vector<8x128xf32>
    %456 = vector.broadcast %444 : vector<1x128xf32> to vector<8x128xf32>
    %457 = arith.addf %455, %456 : vector<8x128xf32>
    %c0_230 = arith.constant 0 : index
    %c0_231 = arith.constant 0 : index
    %458 = vector.load %arg15[%c0_230, %c0_231] : memref<8x128xf32, #tpu.memory_space<vmem>>, vector<8x128xf32>
    tpu.vector_store %arg15[%c0_230, %c0_231], %457 {strides = array<i32>} : memref<8x128xf32, #tpu.memory_space<vmem>>, vector<8x128xf32>,
    return
  }
}

</mosaic_0001>

<llo_original>
// kernel: score_network_forward.1
$region0: #{score_network_forward.1}
  #allocation0 [shape = 'u32[]', space=smem, size = 0x4, offset = 0x4, fixed_abs, tag = 'smem constant byte address 0x4 - core index']
  #allocation1 [shape = 'u32[72,128]{1,0:T(1,128)}', space=vmem, size = 0x9000, scoped, tag = 'internal scratch']
  %s0 = inlined_call_operand.vmem [shape: f32[128,128], index: 0, kind: input, shape index: {}]
  %s1 = inlined_call_operand.vmem [shape: f32[128,128], index: 1, kind: input, shape index: {}]
  %s2 = inlined_call_operand.vmem [shape: f32[128,128], index: 2, kind: input, shape index: {}]
  %s3 = inlined_call_operand.vmem [shape: f32[128,128], index: 3, kind: input, shape index: {}]
  %s4 = inlined_call_operand.vmem [shape: f32[128,128], index: 4, kind: input, shape index: {}]
  %s5 = inlined_call_operand.vmem [shape: f32[128,128], index: 5, kind: input, shape index: {}]
  %s6 = inlined_call_operand.vmem [shape: f32[128,1], index: 6, kind: input, shape index: {}]
  %s7 = inlined_call_operand.vmem [shape: f32[128,1], index: 7, kind: input, shape index: {}]
  %s8 = inlined_call_operand.vmem [shape: f32[512,256], index: 8, kind: input, shape index: {}]
  %s9 = inlined_call_operand.vmem [shape: f32[512,128], index: 9, kind: input, shape index: {}]
  %s10 = inlined_call_operand.vmem [shape: f32[4,128], index: 10, kind: input, shape index: {}]
  %s11 = inlined_call_operand.vmem [shape: f32[128,128], index: 11, kind: input, shape index: {}]
  %s12 = inlined_call_operand.vmem [shape: f32[4,128], index: 12, kind: input, shape index: {}]
  %s13 = inlined_call_operand.hbm [shape: f32[512,128], index: 13, kind: input, shape index: {}]
  %s14 = inlined_call_operand.vmem [shape: f32[3,128], index: 14, kind: input, shape index: {}]
  %s15 = inlined_call_operand.vmem [shape: f32[8,128], index: 15, kind: output, shape index: {}]
  %s16 = sld [smem:[#allocation0]]
  $region74: #{score_network_forward.1} parent=0
    _
  %s18 = ssub.s32 1, %s16
  %s19 = scalar_select 0, %s18, %s16
  $region1: #{score_network_forward.1} parent=0
    #allocation2 [shape = 'u8[262144]{0}', space=vmem, size = 0x40000, scoped, tag = 'input window, operand 13, single buffered']
    #allocation3 [shape = 's32[1]{0}', space=sflag, size = 0x4, scoped, tag = 'scoped memory for score_network_forward.1']
    %20 = vsyncpa [#allocation3], 0
    // Predicated region
    $region2: #{score_network_forward.1} parent=1 // pred_check
      _
    $region3: #{score_network_forward.1} parent=1 // pred_check_branch
      %22 = sbr.rel (0) target = $region5
    $region4: #{score_network_forward.1} parent=1 // pred_region
      _
    $region5: #{score_network_forward.1} parent=1 // pred_fallthru
      _
    // Predicated region
    $region6: #{score_network_forward.1} parent=1 // pred_check
      _
    $region7: #{score_network_forward.1} parent=1 // pred_check_branch
      %24 = sbr.rel (0) target = $region9
    $region8: #{score_network_forward.1} parent=1 // pred_region
      _
    $region9: #{score_network_forward.1} parent=1 // pred_fallthru
      _
    // Predicated region
    $region10: #{score_network_forward.1} parent=1 // pred_check
      _
    $region11: #{score_network_forward.1} parent=1 // pred_check_branch
      %26 = sbr.rel (0) target = $region13
    $region12: #{score_network_forward.1} parent=1 // pred_region
      _
    $region13: #{score_network_forward.1} parent=1 // pred_fallthru
      _
    // Predicated region
    $region14: #{score_network_forward.1} parent=1 // pred_check
      _
    $region15: #{score_network_forward.1} parent=1 // pred_check_branch
      %28 = sbr.rel (0) target = $region17
    $region16: #{score_network_forward.1} parent=1 // pred_region
      _
    $region17: #{score_network_forward.1} parent=1 // pred_fallthru
      _
    // Predicated region
    $region18: #{score_network_forward.1} parent=1 // pred_check
      _
    $region19: #{score_network_forward.1} parent=1 // pred_check_branch
      %30 = sbr.rel (0) target = $region21
    $region20: #{score_network_forward.1} parent=1 // pred_region
      _
    $region21: #{score_network_forward.1} parent=1 // pred_fallthru
      _
    // Predicated region
    $region22: #{score_network_forward.1} parent=1 // pred_check
      _
    $region23: #{score_network_forward.1} parent=1 // pred_check_branch
      %32 = sbr.rel (0) target = $region25
    $region24: #{score_network_forward.1} parent=1 // pred_region
      _
    $region25: #{score_network_forward.1} parent=1 // pred_fallthru
      _
    // Predicated region
    $region26: #{score_network_forward.1} parent=1 // pred_check
      _
    $region27: #{score_network_forward.1} parent=1 // pred_check_branch
      %34 = sbr.rel (0) target = $region29
    $region28: #{score_network_forward.1} parent=1 // pred_region
      _
    $region29: #{score_network_forward.1} parent=1 // pred_fallthru
      _
    // Predicated region
    $region30: #{score_network_forward.1} parent=1 // pred_check
      _
    $region31: #{score_network_forward.1} parent=1 // pred_check_branch
      %36 = sbr.rel (0) target = $region33
    $region32: #{score_network_forward.1} parent=1 // pred_region
      _
    $region33: #{score_network_forward.1} parent=1 // pred_fallthru
      _
    // Predicated region
    $region34: #{score_network_forward.1} parent=1 // pred_check
      _
    $region35: #{score_network_forward.1} parent=1 // pred_check_branch
      %38 = sbr.rel (0) target = $region37
    $region36: #{score_network_forward.1} parent=1 // pred_region
      _
    $region37: #{score_network_forward.1} parent=1 // pred_fallthru
      _
    // Predicated region
    $region38: #{score_network_forward.1} parent=1 // pred_check
      _
    $region39: #{score_network_forward.1} parent=1 // pred_check_branch
      %40 = sbr.rel (0) target = $region41
    $region40: #{score_network_forward.1} parent=1 // pred_region
      _
    $region41: #{score_network_forward.1} parent=1 // pred_fallthru
      _
    // Predicated region
    $region42: #{score_network_forward.1} parent=1 // pred_check
      _
    $region43: #{score_network_forward.1} parent=1 // pred_check_branch
      %42 = sbr.rel (0) target = $region45
    $region44: #{score_network_forward.1} parent=1 // pred_region
      _
    $region45: #{score_network_forward.1} parent=1 // pred_fallthru
      _
    // Predicated region
    $region46: #{score_network_forward.1} parent=1 // pred_check
      _
    $region47: #{score_network_forward.1} parent=1 // pred_check_branch
      %44 = sbr.rel (0) target = $region49
    $region48: #{score_network_forward.1} parent=1 // pred_region
      _
    $region49: #{score_network_forward.1} parent=1 // pred_fallthru
      _
    // Predicated region
    $region50: #{score_network_forward.1} parent=1 // pred_check
      _
    $region51: #{score_network_forward.1} parent=1 // pred_check_branch
      %46 = sbr.rel (0) target = $region53
    $region52: #{score_network_forward.1} parent=1 // pred_region
      _
    $region53: #{score_network_forward.1} parent=1 // pred_fallthru
      _
    // Predicated region
    $region54: #{score_network_forward.1} parent=1 // pred_check
      _
    $region55: #{score_network_forward.1} parent=1 // pred_check_branch
      %48 = sbr.rel (0) target = $region57
    $region56: #{score_network_forward.1} parent=1 // pred_region
      %50 = vsyncadd [#allocation3], 0
      %s51 = sshll.u32 %s13, 4
      %s52 = int_to_ptr.hbm [resolvable:$true] %s51
      %s53 = sshll.u32 [#allocation2], 4
      %s54 = int_to_ptr.vmem [resolvable:$true] %s53
      %59 = dma.hbm_to_vmem [thread:$0]  %s52, 8192, %s54, [#allocation3], 128, 128, 8
    $region57: #{score_network_forward.1} parent=1 // pred_fallthru
      _
    // Predicated region
    $region58: #{score_network_forward.1} parent=1 // pred_check
      _
    $region59: #{score_network_forward.1} parent=1 // pred_check_branch
      %61 = sbr.rel (0) target = $region61
    $region60: #{score_network_forward.1} parent=1 // pred_region
      _
    $region61: #{score_network_forward.1} parent=1 // pred_fallthru
      _
    // Predicated region
    $region62: #{score_network_forward.1} parent=1 // pred_check
      _
    $region63: #{score_network_forward.1} parent=1 // pred_check_branch
      %63 = sbr.rel (0) target = $region65
    $region64: #{score_network_forward.1} parent=1 // pred_region
      %65 = dma.done [#allocation3], 8192
    $region65: #{score_network_forward.1} parent=1 // pred_fallthru
      _
    %v66 = vld [vmem:[%s6] sm:$0xff]
    %v67 = vld [vmem:[%s6 + $0x8] sm:$0xff]
    %v68 = vld [vmem:[%s6 + $0x10] sm:$0xff]
    %v69 = vld [vmem:[%s6 + $0x18] sm:$0xff]
    %v70 = vld [vmem:[%s6 + $0x20] sm:$0xff]
    %v71 = vld [vmem:[%s6 + $0x28] sm:$0xff]
    %v72 = vld [vmem:[%s6 + $0x30] sm:$0xff]
    %v73 = vld [vmem:[%s6 + $0x38] sm:$0xff]
    %v74 = vld [vmem:[%s6 + $0x40] sm:$0xff]
    %v75 = vld [vmem:[%s6 + $0x48] sm:$0xff]
    %v76 = vld [vmem:[%s6 + $0x50] sm:$0xff]
    %v77 = vld [vmem:[%s6 + $0x58] sm:$0xff]
    %v78 = vld [vmem:[%s6 + $0x60] sm:$0xff]
    %v79 = vld [vmem:[%s6 + $0x68] sm:$0xff]
    %v80 = vld [vmem:[%s6 + $0x70] sm:$0xff]
    %v81 = vld [vmem:[%s6 + $0x78] sm:$0xff]
    %v82 = vld [vmem:[%s7] sm:$0xff]
    %v83 = vld [vmem:[%s7 + $0x8] sm:$0xff]
    %v84 = vld [vmem:[%s7 + $0x10] sm:$0xff]
    %v85 = vld [vmem:[%s7 + $0x18] sm:$0xff]
    %v86 = vld [vmem:[%s7 + $0x20] sm:$0xff]
    %v87 = vld [vmem:[%s7 + $0x28] sm:$0xff]
    %v88 = vld [vmem:[%s7 + $0x30] sm:$0xff]
    %v89 = vld [vmem:[%s7 + $0x38] sm:$0xff]
    %v90 = vld [vmem:[%s7 + $0x40] sm:$0xff]
    %v91 = vld [vmem:[%s7 + $0x48] sm:$0xff]
    %v92 = vld [vmem:[%s7 + $0x50] sm:$0xff]
    %v93 = vld [vmem:[%s7 + $0x58] sm:$0xff]
    %v94 = vld [vmem:[%s7 + $0x60] sm:$0xff]
    %v95 = vld [vmem:[%s7 + $0x68] sm:$0xff]
    %v96 = vld [vmem:[%s7 + $0x70] sm:$0xff]
    %v97 = vld [vmem:[%s7 + $0x78] sm:$0xff]
    %v98 = vld [vmem:[%s0] sm:$0xff]
    %v99 = vld [vmem:[%s0 + $0x8] sm:$0xff]
    %v100 = vld [vmem:[%s0 + $0x10] sm:$0xff]
    %v101 = vld [vmem:[%s0 + $0x18] sm:$0xff]
    %v102 = vld [vmem:[%s0 + $0x20] sm:$0xff]
    %v103 = vld [vmem:[%s0 + $0x28] sm:$0xff]
    %v104 = vld [vmem:[%s0 + $0x30] sm:$0xff]
    %v105 = vld [vmem:[%s0 + $0x38] sm:$0xff]
    %v106 = vld [vmem:[%s0 + $0x40] sm:$0xff]
    %v107 = vld [vmem:[%s0 + $0x48] sm:$0xff]
    %v108 = vld [vmem:[%s0 + $0x50] sm:$0xff]
    %v109 = vld [vmem:[%s0 + $0x58] sm:$0xff]
    %v110 = vld [vmem:[%s0 + $0x60] sm:$0xff]
    %v111 = vld [vmem:[%s0 + $0x68] sm:$0xff]
    %v112 = vld [vmem:[%s0 + $0x70] sm:$0xff]
    %v113 = vld [vmem:[%s0 + $0x78] sm:$0xff]
    %v114 = vld [vmem:[%s1] sm:$0xff]
    %v115 = vld [vmem:[%s1 + $0x8] sm:$0xff]
    %v116 = vld [vmem:[%s1 + $0x10] sm:$0xff]
    %v117 = vld [vmem:[%s1 + $0x18] sm:$0xff]
    %v118 = vld [vmem:[%s1 + $0x20] sm:$0xff]
    %v119 = vld [vmem:[%s1 + $0x28] sm:$0xff]
    %v120 = vld [vmem:[%s1 + $0x30] sm:$0xff]
    %v121 = vld [vmem:[%s1 + $0x38] sm:$0xff]
    %v122 = vld [vmem:[%s1 + $0x40] sm:$0xff]
    %v123 = vld [vmem:[%s1 + $0x48] sm:$0xff]
    %v124 = vld [vmem:[%s1 + $0x50] sm:$0xff]
    %v125 = vld [vmem:[%s1 + $0x58] sm:$0xff]
    %v126 = vld [vmem:[%s1 + $0x60] sm:$0xff]
    %v127 = vld [vmem:[%s1 + $0x68] sm:$0xff]
    %v128 = vld [vmem:[%s1 + $0x70] sm:$0xff]
    %v129 = vld [vmem:[%s1 + $0x78] sm:$0xff]
    %v130 = vld [vmem:[%s4] sm:$0xff]
    %v131 = vld [vmem:[%s4 + $0x8] sm:$0xff]
    %v132 = vld [vmem:[%s4 + $0x10] sm:$0xff]
    %v133 = vld [vmem:[%s4 + $0x18] sm:$0xff]
    %v134 = vld [vmem:[%s4 + $0x20] sm:$0xff]
    %v135 = vld [vmem:[%s4 + $0x28] sm:$0xff]
    %v136 = vld [vmem:[%s4 + $0x30] sm:$0xff]
    %v137 = vld [vmem:[%s4 + $0x38] sm:$0xff]
    %v138 = vld [vmem:[%s4 + $0x40] sm:$0xff]
    %v139 = vld [vmem:[%s4 + $0x48] sm:$0xff]
    %v140 = vld [vmem:[%s4 + $0x50] sm:$0xff]
    %v141 = vld [vmem:[%s4 + $0x58] sm:$0xff]
    %v142 = vld [vmem:[%s4 + $0x60] sm:$0xff]
    %v143 = vld [vmem:[%s4 + $0x68] sm:$0xff]
    %v144 = vld [vmem:[%s4 + $0x70] sm:$0xff]
    %v145 = vld [vmem:[%s4 + $0x78] sm:$0xff]
    %146 = vmatpush.msra.mxu0 %v97
    %147 = vmatpush.msra.mxu0 %v96
    %148 = vmatpush.msra.mxu0 %v95
    %149 = vmatpush.msra.mxu0 %v94
    %150 = vmatpush.msra.mxu0 %v93
    %151 = vmatpush.msra.mxu0 %v92
    %152 = vmatpush.msra.mxu0 %v91
    %153 = vmatpush.msra.mxu0 %v90
    %154 = vmatpush.msra.mxu0 %v89
    %155 = vmatpush.msra.mxu0 %v88
    %156 = vmatpush.msra.mxu0 %v87
    %157 = vmatpush.msra.mxu0 %v86
    %158 = vmatpush.msra.mxu0 %v85
    %159 = vmatpush.msra.mxu0 %v84
    %160 = vmatpush.msra.mxu0 %v83
    %161 = vmatpush.msra.mxu0 %v82
    %162 = vmatmul.f32.gmra.mxu0 %v130
    %v163 = vpop.f32.mrf.mxu0
    %v164 = vadd.f32 0.0, %v163
    %165 = vmatmul.f32.gmra.mxu0 %v131
    %v166 = vpop.f32.mrf.mxu0
    %v167 = vadd.f32 0.0, %v166
    %168 = vmatmul.f32.gmra.mxu0 %v132
    %v169 = vpop.f32.mrf.mxu0
    %v170 = vadd.f32 0.0, %v169
    %171 = vmatmul.f32.gmra.mxu0 %v133
    %v172 = vpop.f32.mrf.mxu0
    %v173 = vadd.f32 0.0, %v172
    %174 = vmatmul.f32.gmra.mxu0 %v134
    %v175 = vpop.f32.mrf.mxu0
    %v176 = vadd.f32 0.0, %v175
    %177 = vmatmul.f32.gmra.mxu0 %v135
    %v178 = vpop.f32.mrf.mxu0
    %v179 = vadd.f32 0.0, %v178
    %180 = vmatmul.f32.gmra.mxu0 %v136
    %v181 = vpop.f32.mrf.mxu0
    %v182 = vadd.f32 0.0, %v181
    %183 = vmatmul.f32.gmra.mxu0 %v137
    %v184 = vpop.f32.mrf.mxu0
    %v185 = vadd.f32 0.0, %v184
    %186 = vmatmul.f32.gmra.mxu0 %v138
    %v187 = vpop.f32.mrf.mxu0
    %v188 = vadd.f32 0.0, %v187
    %189 = vmatmul.f32.gmra.mxu0 %v139
    %v190 = vpop.f32.mrf.mxu0
    %v191 = vadd.f32 0.0, %v190
    %192 = vmatmul.f32.gmra.mxu0 %v140
    %v193 = vpop.f32.mrf.mxu0
    %v194 = vadd.f32 0.0, %v193
    %195 = vmatmul.f32.gmra.mxu0 %v141
    %v196 = vpop.f32.mrf.mxu0
    %v197 = vadd.f32 0.0, %v196
    %198 = vmatmul.f32.gmra.mxu0 %v142
    %v199 = vpop.f32.mrf.mxu0
    %v200 = vadd.f32 0.0, %v199
    %201 = vmatmul.f32.gmra.mxu0 %v143
    %v202 = vpop.f32.mrf.mxu0
    %v203 = vadd.f32 0.0, %v202
    %204 = vmatmul.f32.gmra.mxu0 %v144
    %v205 = vpop.f32.mrf.mxu0
    %v206 = vadd.f32 0.0, %v205
    %207 = vmatmul.f32.gmra.mxu0 %v145
    %v208 = vpop.f32.mrf.mxu0
    %v209 = vadd.f32 0.0, %v208
    %210 = vdwg.mxu0
    %v211 = vmax.f32 %v164, 1.0
    %v212 = vmax.f32 %v167, 1.0
    %v213 = vmax.f32 %v170, 1.0
    %v214 = vmax.f32 %v173, 1.0
    %v215 = vmax.f32 %v176, 1.0
    %v216 = vmax.f32 %v179, 1.0
    %v217 = vmax.f32 %v182, 1.0
    %v218 = vmax.f32 %v185, 1.0
    %v219 = vmax.f32 %v188, 1.0
    %v220 = vmax.f32 %v191, 1.0
    %v221 = vmax.f32 %v194, 1.0
    %v222 = vmax.f32 %v197, 1.0
    %v223 = vmax.f32 %v200, 1.0
    %v224 = vmax.f32 %v203, 1.0
    %v225 = vmax.f32 %v206, 1.0
    %v226 = vmax.f32 %v209, 1.0
    %v227 = vrcp.pop %v211
    %v228 = vmul.f32 %v211, %v227
    %v229 = vsub.f32 1.0, %v228
    %v230 = vmul.f32 %v227, %v229
    %v231 = vadd.f32 %v227, %v230
    %vm232 = vweird.f32 %v211
    %vm233 = vweird.f32 %v227
    %vm234 = vmor %vm232, %vm233
    %v235 = vsel %vm234, %v227, %v231
    %v236 = vand.u32 2147483647, %v211
    %vm237 = vcmp.eq.f32.partialorder %v236, 8.507059e+37
    %v238 = vand.u32 %v211, 2147483648
    %v239 = vor.u32 1.1754944e-38, %v238
    %v240 = vsel %vm237, %v239, %v235
    %v241 = vmul.f32 1.0, %v240
    %v242 = vrcp.pop %v212
    %v243 = vmul.f32 %v212, %v242
    %v244 = vsub.f32 1.0, %v243
    %v245 = vmul.f32 %v242, %v244
    %v246 = vadd.f32 %v242, %v245
    %vm247 = vweird.f32 %v212
    %vm248 = vweird.f32 %v242
    %vm249 = vmor %vm247, %vm248
    %v250 = vsel %vm249, %v242, %v246
    %v251 = vand.u32 2147483647, %v212
    %vm252 = vcmp.eq.f32.partialorder %v251, 8.507059e+37
    %v253 = vand.u32 %v212, 2147483648
    %v254 = vor.u32 1.1754944e-38, %v253
    %v255 = vsel %vm252, %v254, %v250
    %v256 = vmul.f32 1.0, %v255
    %v257 = vrcp.pop %v213
    %v258 = vmul.f32 %v213, %v257
    %v259 = vsub.f32 1.0, %v258
    %v260 = vmul.f32 %v257, %v259
    %v261 = vadd.f32 %v257, %v260
    %vm262 = vweird.f32 %v213
    %vm263 = vweird.f32 %v257
    %vm264 = vmor %vm262, %vm263
    %v265 = vsel %vm264, %v257, %v261
    %v266 = vand.u32 2147483647, %v213
    %vm267 = vcmp.eq.f32.partialorder %v266, 8.507059e+37
    %v268 = vand.u32 %v213, 2147483648
    %v269 = vor.u32 1.1754944e-38, %v268
    %v270 = vsel %vm267, %v269, %v265
    %v271 = vmul.f32 1.0, %v270
    %v272 = vrcp.pop %v214
    %v273 = vmul.f32 %v214, %v272
    %v274 = vsub.f32 1.0, %v273
    %v275 = vmul.f32 %v272, %v274
    %v276 = vadd.f32 %v272, %v275
    %vm277 = vweird.f32 %v214
    %vm278 = vweird.f32 %v272
    %vm279 = vmor %vm277, %vm278
    %v280 = vsel %vm279, %v272, %v276
    %v281 = vand.u32 2147483647, %v214
    %vm282 = vcmp.eq.f32.partialorder %v281, 8.507059e+37
    %v283 = vand.u32 %v214, 2147483648
    %v284 = vor.u32 1.1754944e-38, %v283
    %v285 = vsel %vm282, %v284, %v280
    %v286 = vmul.f32 1.0, %v285
    %v287 = vrcp.pop %v215
    %v288 = vmul.f32 %v215, %v287
    %v289 = vsub.f32 1.0, %v288
    %v290 = vmul.f32 %v287, %v289
    %v291 = vadd.f32 %v287, %v290
    %vm292 = vweird.f32 %v215
    %vm293 = vweird.f32 %v287
    %vm294 = vmor %vm292, %vm293
    %v295 = vsel %vm294, %v287, %v291
    %v296 = vand.u32 2147483647, %v215
    %vm297 = vcmp.eq.f32.partialorder %v296, 8.507059e+37
    %v298 = vand.u32 %v215, 2147483648
    %v299 = vor.u32 1.1754944e-38, %v298
    %v300 = vsel %vm297, %v299, %v295
    %v301 = vmul.f32 1.0, %v300
    %v302 = vrcp.pop %v216
    %v303 = vmul.f32 %v216, %v302
    %v304 = vsub.f32 1.0, %v303
    %v305 = vmul.f32 %v302, %v304
    %v306 = vadd.f32 %v302, %v305
    %vm307 = vweird.f32 %v216
    %vm308 = vweird.f32 %v302
    %vm309 = vmor %vm307, %vm308
    %v310 = vsel %vm309, %v302, %v306
    %v311 = vand.u32 2147483647, %v216
    %vm312 = vcmp.eq.f32.partialorder %v311, 8.507059e+37
    %v313 = vand.u32 %v216, 2147483648
    %v314 = vor.u32 1.1754944e-38, %v313
    %v315 = vsel %vm312, %v314, %v310
    %v316 = vmul.f32 1.0, %v315
    %v317 = vrcp.pop %v217
    %v318 = vmul.f32 %v217, %v317
    %v319 = vsub.f32 1.0, %v318
    %v320 = vmul.f32 %v317, %v319
    %v321 = vadd.f32 %v317, %v320
    %vm322 = vweird.f32 %v217
    %vm323 = vweird.f32 %v317
    %vm324 = vmor %vm322, %vm323
    %v325 = vsel %vm324, %v317, %v321
    %v326 = vand.u32 2147483647, %v217
    %vm327 = vcmp.eq.f32.partialorder %v326, 8.507059e+37
    %v328 = vand.u32 %v217, 2147483648
    %v329 = vor.u32 1.1754944e-38, %v328
    %v330 = vsel %vm327, %v329, %v325
    %v331 = vmul.f32 1.0, %v330
    %v332 = vrcp.pop %v218
    %v333 = vmul.f32 %v218, %v332
    %v334 = vsub.f32 1.0, %v333
    %v335 = vmul.f32 %v332, %v334
    %v336 = vadd.f32 %v332, %v335
    %vm337 = vweird.f32 %v218
    %vm338 = vweird.f32 %v332
    %vm339 = vmor %vm337, %vm338
    %v340 = vsel %vm339, %v332, %v336
    %v341 = vand.u32 2147483647, %v218
    %vm342 = vcmp.eq.f32.partialorder %v341, 8.507059e+37
    %v343 = vand.u32 %v218, 2147483648
    %v344 = vor.u32 1.1754944e-38, %v343
    %v345 = vsel %vm342, %v344, %v340
    %v346 = vmul.f32 1.0, %v345
    %v347 = vrcp.pop %v219
    %v348 = vmul.f32 %v219, %v347
    %v349 = vsub.f32 1.0, %v348
    %v350 = vmul.f32 %v347, %v349
    %v351 = vadd.f32 %v347, %v350
    %vm352 = vweird.f32 %v219
    %vm353 = vweird.f32 %v347
    %vm354 = vmor %vm352, %vm353
    %v355 = vsel %vm354, %v347, %v351
    %v356 = vand.u32 2147483647, %v219
    %vm357 = vcmp.eq.f32.partialorder %v356, 8.507059e+37
    %v358 = vand.u32 %v219, 2147483648
    %v359 = vor.u32 1.1754944e-38, %v358
    %v360 = vsel %vm357, %v359, %v355
    %v361 = vmul.f32 1.0, %v360
    %v362 = vrcp.pop %v220
    %v363 = vmul.f32 %v220, %v362
    %v364 = vsub.f32 1.0, %v363
    %v365 = vmul.f32 %v362, %v364
    %v366 = vadd.f32 %v362, %v365
    %vm367 = vweird.f32 %v220
    %vm368 = vweird.f32 %v362
    %vm369 = vmor %vm367, %vm368
    %v370 = vsel %vm369, %v362, %v366
    %v371 = vand.u32 2147483647, %v220
    %vm372 = vcmp.eq.f32.partialorder %v371, 8.507059e+37
    %v373 = vand.u32 %v220, 2147483648
    %v374 = vor.u32 1.1754944e-38, %v373
    %v375 = vsel %vm372, %v374, %v370
    %v376 = vmul.f32 1.0, %v375
    %v377 = vrcp.pop %v221
    %v378 = vmul.f32 %v221, %v377
    %v379 = vsub.f32 1.0, %v378
    %v380 = vmul.f32 %v377, %v379
    %v381 = vadd.f32 %v377, %v380
    %vm382 = vweird.f32 %v221
    %vm383 = vweird.f32 %v377
    %vm384 = vmor %vm382, %vm383
    %v385 = vsel %vm384, %v377, %v381
    %v386 = vand.u32 2147483647, %v221
    %vm387 = vcmp.eq.f32.partialorder %v386, 8.507059e+37
    %v388 = vand.u32 %v221, 2147483648
    %v389 = vor.u32 1.1754944e-38, %v388
    %v390 = vsel %vm387, %v389, %v385
    %v391 = vmul.f32 1.0, %v390
    %v392 = vrcp.pop %v222
    %v393 = vmul.f32 %v222, %v392
    %v394 = vsub.f32 1.0, %v393
    %v395 = vmul.f32 %v392, %v394
    %v396 = vadd.f32 %v392, %v395
    %vm397 = vweird.f32 %v222
    %vm398 = vweird.f32 %v392
    %vm399 = vmor %vm397, %vm398
    %v400 = vsel %vm399, %v392, %v396
    %v401 = vand.u32 2147483647, %v222
    %vm402 = vcmp.eq.f32.partialorder %v401, 8.507059e+37
    %v403 = vand.u32 %v222, 2147483648
    %v404 = vor.u32 1.1754944e-38, %v403
    %v405 = vsel %vm402, %v404, %v400
    %v406 = vmul.f32 1.0, %v405
    %v407 = vrcp.pop %v223
    %v408 = vmul.f32 %v223, %v407
    %v409 = vsub.f32 1.0, %v408
    %v410 = vmul.f32 %v407, %v409
    %v411 = vadd.f32 %v407, %v410
    %vm412 = vweird.f32 %v223
    %vm413 = vweird.f32 %v407
    %vm414 = vmor %vm412, %vm413
    %v415 = vsel %vm414, %v407, %v411
    %v416 = vand.u32 2147483647, %v223
    %vm417 = vcmp.eq.f32.partialorder %v416, 8.507059e+37
    %v418 = vand.u32 %v223, 2147483648
    %v419 = vor.u32 1.1754944e-38, %v418
    %v420 = vsel %vm417, %v419, %v415
    %v421 = vmul.f32 1.0, %v420
    %v422 = vrcp.pop %v224
    %v423 = vmul.f32 %v224, %v422
    %v424 = vsub.f32 1.0, %v423
    %v425 = vmul.f32 %v422, %v424
    %v426 = vadd.f32 %v422, %v425
    %vm427 = vweird.f32 %v224
    %vm428 = vweird.f32 %v422
    %vm429 = vmor %vm427, %vm428
    %v430 = vsel %vm429, %v422, %v426
    %v431 = vand.u32 2147483647, %v224
    %vm432 = vcmp.eq.f32.partialorder %v431, 8.507059e+37
    %v433 = vand.u32 %v224, 2147483648
    %v434 = vor.u32 1.1754944e-38, %v433
    %v435 = vsel %vm432, %v434, %v430
    %v436 = vmul.f32 1.0, %v435
    %v437 = vrcp.pop %v225
    %v438 = vmul.f32 %v225, %v437
    %v439 = vsub.f32 1.0, %v438
    %v440 = vmul.f32 %v437, %v439
    %v441 = vadd.f32 %v437, %v440
    %vm442 = vweird.f32 %v225
    %vm443 = vweird.f32 %v437
    %vm444 = vmor %vm442, %vm443
    %v445 = vsel %vm444, %v437, %v441
    %v446 = vand.u32 2147483647, %v225
    %vm447 = vcmp.eq.f32.partialorder %v446, 8.507059e+37
    %v448 = vand.u32 %v225, 2147483648
    %v449 = vor.u32 1.1754944e-38, %v448
    %v450 = vsel %vm447, %v449, %v445
    %v451 = vmul.f32 1.0, %v450
    %v452 = vrcp.pop %v226
    %v453 = vmul.f32 %v226, %v452
    %v454 = vsub.f32 1.0, %v453
    %v455 = vmul.f32 %v452, %v454
    %v456 = vadd.f32 %v452, %v455
    %vm457 = vweird.f32 %v226
    %vm458 = vweird.f32 %v452
    %vm459 = vmor %vm457, %vm458
    %v460 = vsel %vm459, %v452, %v456
    %v461 = vand.u32 2147483647, %v226
    %vm462 = vcmp.eq.f32.partialorder %v461, 8.507059e+37
    %v463 = vand.u32 %v226, 2147483648
    %v464 = vor.u32 1.1754944e-38, %v463
    %v465 = vsel %vm462, %v464, %v460
    %v466 = vmul.f32 1.0, %v465
    %v467 = vld [vmem:[%s8] sm:$0xff]
    %v468 = vld [vmem:[%s8 + $0x8] sm:$0xff]
    %v469 = vld [vmem:[%s8 + $0x10] sm:$0xff]
    %v470 = vld [vmem:[%s8 + $0x18] sm:$0xff]
    %v471 = vld [vmem:[%s8 + $0x20] sm:$0xff]
    %v472 = vld [vmem:[%s8 + $0x28] sm:$0xff]
    %v473 = vld [vmem:[%s8 + $0x30] sm:$0xff]
    %v474 = vld [vmem:[%s8 + $0x38] sm:$0xff]
    %v475 = vld [vmem:[%s8 + $0x40] sm:$0xff]
    %v476 = vld [vmem:[%s8 + $0x48] sm:$0xff]
    %v477 = vld [vmem:[%s8 + $0x50] sm:$0xff]
    %v478 = vld [vmem:[%s8 + $0x58] sm:$0xff]
    %v479 = vld [vmem:[%s8 + $0x60] sm:$0xff]
    %v480 = vld [vmem:[%s8 + $0x68] sm:$0xff]
    %v481 = vld [vmem:[%s8 + $0x70] sm:$0xff]
    %v482 = vld [vmem:[%s8 + $0x78] sm:$0xff]
    %v483 = vld [vmem:[%s8 + $0x80] sm:$0xff]
    %v484 = vld [vmem:[%s8 + $0x88] sm:$0xff]
    %v485 = vld [vmem:[%s8 + $0x90] sm:$0xff]
    %v486 = vld [vmem:[%s8 + $0x98] sm:$0xff]
    %v487 = vld [vmem:[%s8 + $0xa0] sm:$0xff]
    %v488 = vld [vmem:[%s8 + $0xa8] sm:$0xff]
    %v489 = vld [vmem:[%s8 + $0xb0] sm:$0xff]
    %v490 = vld [vmem:[%s8 + $0xb8] sm:$0xff]
    %v491 = vld [vmem:[%s8 + $0xc0] sm:$0xff]
    %v492 = vld [vmem:[%s8 + $0xc8] sm:$0xff]
    %v493 = vld [vmem:[%s8 + $0xd0] sm:$0xff]
    %v494 = vld [vmem:[%s8 + $0xd8] sm:$0xff]
    %v495 = vld [vmem:[%s8 + $0xe0] sm:$0xff]
    %v496 = vld [vmem:[%s8 + $0xe8] sm:$0xff]
    %v497 = vld [vmem:[%s8 + $0xf0] sm:$0xff]
    %v498 = vld [vmem:[%s8 + $0xf8] sm:$0xff]
    %v499 = vld [vmem:[%s9] sm:$0xff]
    %v500 = vld [vmem:[%s9 + $0x8] sm:$0xff]
    %v501 = vld [vmem:[%s9 + $0x10] sm:$0xff]
    %v502 = vld [vmem:[%s9 + $0x18] sm:$0xff]
    %v503 = vld [vmem:[%s9 + $0x20] sm:$0xff]
    %v504 = vld [vmem:[%s9 + $0x28] sm:$0xff]
    %v505 = vld [vmem:[%s9 + $0x30] sm:$0xff]
    %v506 = vld [vmem:[%s9 + $0x38] sm:$0xff]
    %v507 = vld [vmem:[%s9 + $0x40] sm:$0xff]
    %v508 = vld [vmem:[%s9 + $0x48] sm:$0xff]
    %v509 = vld [vmem:[%s9 + $0x50] sm:$0xff]
    %v510 = vld [vmem:[%s9 + $0x58] sm:$0xff]
    %v511 = vld [vmem:[%s9 + $0x60] sm:$0xff]
    %v512 = vld [vmem:[%s9 + $0x68] sm:$0xff]
    %v513 = vld [vmem:[%s9 + $0x70] sm:$0xff]
    %v514 = vld [vmem:[%s9 + $0x78] sm:$0xff]
    %v515 = vld [vmem:[%s10] sm:$0x1]
    %516 = vmatpush.msra.mxu0 %v497
    %517 = vmatpush.msra.mxu0 %v495
    %518 = vmatpush.msra.mxu0 %v493
    %519 = vmatpush.msra.mxu0 %v491
    %520 = vmatpush.msra.mxu0 %v489
    %521 = vmatpush.msra.mxu0 %v487
    %522 = vmatpush.msra.mxu0 %v485
    %523 = vmatpush.msra.mxu0 %v483
    %524 = vmatpush.msra.mxu0 %v481
    %525 = vmatpush.msra.mxu0 %v479
    %526 = vmatpush.msra.mxu0 %v477
    %527 = vmatpush.msra.mxu0 %v475
    %528 = vmatpush.msra.mxu0 %v473
    %529 = vmatpush.msra.mxu0 %v471
    %530 = vmatpush.msra.mxu0 %v469
    %531 = vmatpush.msra.mxu0 %v467
    %532 = vmatmul.f32.gmra.mxu0 %v98
    %v533 = vpop.f32.mrf.mxu0
    %v534 = vadd.f32 0.0, %v533
    %535 = vmatmul.f32.gmra.mxu0 %v99
    %v536 = vpop.f32.mrf.mxu0
    %v537 = vadd.f32 0.0, %v536
    %538 = vmatmul.f32.gmra.mxu0 %v100
    %v539 = vpop.f32.mrf.mxu0
    %v540 = vadd.f32 0.0, %v539
    %541 = vmatmul.f32.gmra.mxu0 %v101
    %v542 = vpop.f32.mrf.mxu0
    %v543 = vadd.f32 0.0, %v542
    %544 = vmatmul.f32.gmra.mxu0 %v102
    %v545 = vpop.f32.mrf.mxu0
    %v546 = vadd.f32 0.0, %v545
    %547 = vmatmul.f32.gmra.mxu0 %v103
    %v548 = vpop.f32.mrf.mxu0
    %v549 = vadd.f32 0.0, %v548
    %550 = vmatmul.f32.gmra.mxu0 %v104
    %v551 = vpop.f32.mrf.mxu0
    %v552 = vadd.f32 0.0, %v551
    %553 = vmatmul.f32.gmra.mxu0 %v105
    %v554 = vpop.f32.mrf.mxu0
    %v555 = vadd.f32 0.0, %v554
    %556 = vmatmul.f32.gmra.mxu0 %v106
    %v557 = vpop.f32.mrf.mxu0
    %v558 = vadd.f32 0.0, %v557
    %559 = vmatmul.f32.gmra.mxu0 %v107
    %v560 = vpop.f32.mrf.mxu0
    %v561 = vadd.f32 0.0, %v560
    %562 = vmatmul.f32.gmra.mxu0 %v108
    %v563 = vpop.f32.mrf.mxu0
    %v564 = vadd.f32 0.0, %v563
    %565 = vmatmul.f32.gmra.mxu0 %v109
    %v566 = vpop.f32.mrf.mxu0
    %v567 = vadd.f32 0.0, %v566
    %568 = vmatmul.f32.gmra.mxu0 %v110
    %v569 = vpop.f32.mrf.mxu0
    %v570 = vadd.f32 0.0, %v569
    %571 = vmatmul.f32.gmra.mxu0 %v111
    %v572 = vpop.f32.mrf.mxu0
    %v573 = vadd.f32 0.0, %v572
    %574 = vmatmul.f32.gmra.mxu0 %v112
    %v575 = vpop.f32.mrf.mxu0
    %v576 = vadd.f32 0.0, %v575
    %577 = vmatmul.f32.gmra.mxu0 %v113
    %v578 = vpop.f32.mrf.mxu0
    %v579 = vadd.f32 0.0, %v578
    %580 = vdwg.mxu0
    %581 = vmatpush.msra.mxu0 %v498
    %582 = vmatpush.msra.mxu0 %v496
    %583 = vmatpush.msra.mxu0 %v494
    %584 = vmatpush.msra.mxu0 %v492
    %585 = vmatpush.msra.mxu0 %v490
    %586 = vmatpush.msra.mxu0 %v488
    %587 = vmatpush.msra.mxu0 %v486
    %588 = vmatpush.msra.mxu0 %v484
    %589 = vmatpush.msra.mxu0 %v482
    %590 = vmatpush.msra.mxu0 %v480
    %591 = vmatpush.msra.mxu0 %v478
    %592 = vmatpush.msra.mxu0 %v476
    %593 = vmatpush.msra.mxu0 %v474
    %594 = vmatpush.msra.mxu0 %v472
    %595 = vmatpush.msra.mxu0 %v470
    %596 = vmatpush.msra.mxu0 %v468
    %597 = vmatmul.f32.gmra.mxu0 %v98
    %v598 = vpop.f32.mrf.mxu0
    %v599 = vadd.f32 0.0, %v598
    %600 = vmatmul.f32.gmra.mxu0 %v99
    %v601 = vpop.f32.mrf.mxu0
    %v602 = vadd.f32 0.0, %v601
    %603 = vmatmul.f32.gmra.mxu0 %v100
    %v604 = vpop.f32.mrf.mxu0
    %v605 = vadd.f32 0.0, %v604
    %606 = vmatmul.f32.gmra.mxu0 %v101
    %v607 = vpop.f32.mrf.mxu0
    %v608 = vadd.f32 0.0, %v607
    %609 = vmatmul.f32.gmra.mxu0 %v102
    %v610 = vpop.f32.mrf.mxu0
    %v611 = vadd.f32 0.0, %v610
    %612 = vmatmul.f32.gmra.mxu0 %v103
    %v613 = vpop.f32.mrf.mxu0
    %v614 = vadd.f32 0.0, %v613
    %615 = vmatmul.f32.gmra.mxu0 %v104
    %v616 = vpop.f32.mrf.mxu0
    %v617 = vadd.f32 0.0, %v616
    %618 = vmatmul.f32.gmra.mxu0 %v105
    %v619 = vpop.f32.mrf.mxu0
    %v620 = vadd.f32 0.0, %v619
    %621 = vmatmul.f32.gmra.mxu0 %v106
    %v622 = vpop.f32.mrf.mxu0
    %v623 = vadd.f32 0.0, %v622
    %624 = vmatmul.f32.gmra.mxu0 %v107
    %v625 = vpop.f32.mrf.mxu0
    %v626 = vadd.f32 0.0, %v625
    %627 = vmatmul.f32.gmra.mxu0 %v108
    %v628 = vpop.f32.mrf.mxu0
    %v629 = vadd.f32 0.0, %v628
    %630 = vmatmul.f32.gmra.mxu0 %v109
    %v631 = vpop.f32.mrf.mxu0
    %v632 = vadd.f32 0.0, %v631
    %633 = vmatmul.f32.gmra.mxu0 %v110
    %v634 = vpop.f32.mrf.mxu0
    %v635 = vadd.f32 0.0, %v634
    %636 = vmatmul.f32.gmra.mxu0 %v111
    %v637 = vpop.f32.mrf.mxu0
    %v638 = vadd.f32 0.0, %v637
    %639 = vmatmul.f32.gmra.mxu0 %v112
    %v640 = vpop.f32.mrf.mxu0
    %v641 = vadd.f32 0.0, %v640
    %642 = vmatmul.f32.gmra.mxu0 %v113
    %v643 = vpop.f32.mrf.mxu0
    %v644 = vadd.f32 0.0, %v643
    %645 = vdwg.mxu0
    %v646 = vld [vmem:[%s2] sm:$0xff]
    %v647 = vld [vmem:[%s2 + $0x8] sm:$0xff]
    %v648 = vld [vmem:[%s2 + $0x10] sm:$0xff]
    %v649 = vld [vmem:[%s2 + $0x18] sm:$0xff]
    %v650 = vld [vmem:[%s2 + $0x20] sm:$0xff]
    %v651 = vld [vmem:[%s2 + $0x28] sm:$0xff]
    %v652 = vld [vmem:[%s2 + $0x30] sm:$0xff]
    %v653 = vld [vmem:[%s2 + $0x38] sm:$0xff]
    %v654 = vld [vmem:[%s2 + $0x40] sm:$0xff]
    %v655 = vld [vmem:[%s2 + $0x48] sm:$0xff]
    %v656 = vld [vmem:[%s2 + $0x50] sm:$0xff]
    %v657 = vld [vmem:[%s2 + $0x58] sm:$0xff]
    %v658 = vld [vmem:[%s2 + $0x60] sm:$0xff]
    %v659 = vld [vmem:[%s2 + $0x68] sm:$0xff]
    %v660 = vld [vmem:[%s2 + $0x70] sm:$0xff]
    %v661 = vld [vmem:[%s2 + $0x78] sm:$0xff]
    %v662 = vld [vmem:[%s3] sm:$0xff]
    %v663 = vld [vmem:[%s3 + $0x8] sm:$0xff]
    %v664 = vld [vmem:[%s3 + $0x10] sm:$0xff]
    %v665 = vld [vmem:[%s3 + $0x18] sm:$0xff]
    %v666 = vld [vmem:[%s3 + $0x20] sm:$0xff]
    %v667 = vld [vmem:[%s3 + $0x28] sm:$0xff]
    %v668 = vld [vmem:[%s3 + $0x30] sm:$0xff]
    %v669 = vld [vmem:[%s3 + $0x38] sm:$0xff]
    %v670 = vld [vmem:[%s3 + $0x40] sm:$0xff]
    %v671 = vld [vmem:[%s3 + $0x48] sm:$0xff]
    %v672 = vld [vmem:[%s3 + $0x50] sm:$0xff]
    %v673 = vld [vmem:[%s3 + $0x58] sm:$0xff]
    %v674 = vld [vmem:[%s3 + $0x60] sm:$0xff]
    %v675 = vld [vmem:[%s3 + $0x68] sm:$0xff]
    %v676 = vld [vmem:[%s3 + $0x70] sm:$0xff]
    %v677 = vld [vmem:[%s3 + $0x78] sm:$0xff]
    %678 = vmatpush.msra.mxu0 %v644
    %679 = vmatpush.msra.mxu0 %v641
    %680 = vmatpush.msra.mxu0 %v638
    %681 = vmatpush.msra.mxu0 %v635
    %682 = vmatpush.msra.mxu0 %v632
    %683 = vmatpush.msra.mxu0 %v629
    %684 = vmatpush.msra.mxu0 %v626
    %685 = vmatpush.msra.mxu0 %v623
    %686 = vmatpush.msra.mxu0 %v620
    %687 = vmatpush.msra.mxu0 %v617
    %688 = vmatpush.msra.mxu0 %v614
    %689 = vmatpush.msra.mxu0 %v611
    %690 = vmatpush.msra.mxu0 %v608
    %691 = vmatpush.msra.mxu0 %v605
    %692 = vmatpush.msra.mxu0 %v602
    %693 = vmatpush.msra.mxu0 %v599
    %694 = vmatmul.f32.gmra.mxu0 %v662
    %v695 = vpop.f32.mrf.mxu0
    %v696 = vadd.f32 0.0, %v695
    %697 = vmatmul.f32.gmra.mxu0 %v663
    %v698 = vpop.f32.mrf.mxu0
    %v699 = vadd.f32 0.0, %v698
    %700 = vmatmul.f32.gmra.mxu0 %v664
    %v701 = vpop.f32.mrf.mxu0
    %v702 = vadd.f32 0.0, %v701
    %703 = vmatmul.f32.gmra.mxu0 %v665
    %v704 = vpop.f32.mrf.mxu0
    %v705 = vadd.f32 0.0, %v704
    %706 = vmatmul.f32.gmra.mxu0 %v666
    %v707 = vpop.f32.mrf.mxu0
    %v708 = vadd.f32 0.0, %v707
    %709 = vmatmul.f32.gmra.mxu0 %v667
    %v710 = vpop.f32.mrf.mxu0
    %v711 = vadd.f32 0.0, %v710
    %712 = vmatmul.f32.gmra.mxu0 %v668
    %v713 = vpop.f32.mrf.mxu0
    %v714 = vadd.f32 0.0, %v713
    %715 = vmatmul.f32.gmra.mxu0 %v669
    %v716 = vpop.f32.mrf.mxu0
    %v717 = vadd.f32 0.0, %v716
    %718 = vmatmul.f32.gmra.mxu0 %v670
    %v719 = vpop.f32.mrf.mxu0
    %v720 = vadd.f32 0.0, %v719
    %721 = vmatmul.f32.gmra.mxu0 %v671
    %v722 = vpop.f32.mrf.mxu0
    %v723 = vadd.f32 0.0, %v722
    %724 = vmatmul.f32.gmra.mxu0 %v672
    %v725 = vpop.f32.mrf.mxu0
    %v726 = vadd.f32 0.0, %v725
    %727 = vmatmul.f32.gmra.mxu0 %v673
    %v728 = vpop.f32.mrf.mxu0
    %v729 = vadd.f32 0.0, %v728
    %730 = vmatmul.f32.gmra.mxu0 %v674
    %v731 = vpop.f32.mrf.mxu0
    %v732 = vadd.f32 0.0, %v731
    %733 = vmatmul.f32.gmra.mxu0 %v675
    %v734 = vpop.f32.mrf.mxu0
    %v735 = vadd.f32 0.0, %v734
    %736 = vmatmul.f32.gmra.mxu0 %v676
    %v737 = vpop.f32.mrf.mxu0
    %v738 = vadd.f32 0.0, %v737
    %739 = vmatmul.f32.gmra.mxu0 %v677
    %v740 = vpop.f32.mrf.mxu0
    %v741 = vadd.f32 0.0, %v740
    %742 = vdwg.mxu0
    %743 = vmatpush.msra.mxu0 %v579
    %744 = vmatpush.msra.mxu0 %v576
    %745 = vmatpush.msra.mxu0 %v573
    %746 = vmatpush.msra.mxu0 %v570
    %747 = vmatpush.msra.mxu0 %v567
    %748 = vmatpush.msra.mxu0 %v564
    %749 = vmatpush.msra.mxu0 %v561
    %750 = vmatpush.msra.mxu0 %v558
    %751 = vmatpush.msra.mxu0 %v555
    %752 = vmatpush.msra.mxu0 %v552
    %753 = vmatpush.msra.mxu0 %v549
    %754 = vmatpush.msra.mxu0 %v546
    %755 = vmatpush.msra.mxu0 %v543
    %756 = vmatpush.msra.mxu0 %v540
    %757 = vmatpush.msra.mxu0 %v537
    %758 = vmatpush.msra.mxu0 %v534
    %759 = vmatmul.f32.gmra.mxu0 %v646
    %v760 = vpop.f32.mrf.mxu0
    %v761 = vadd.f32 %v696, %v760
    %762 = vmatmul.f32.gmra.mxu0 %v647
    %v763 = vpop.f32.mrf.mxu0
    %v764 = vadd.f32 %v699, %v763
    %765 = vmatmul.f32.gmra.mxu0 %v648
    %v766 = vpop.f32.mrf.mxu0
    %v767 = vadd.f32 %v702, %v766
    %768 = vmatmul.f32.gmra.mxu0 %v649
    %v769 = vpop.f32.mrf.mxu0
    %v770 = vadd.f32 %v705, %v769
    %771 = vmatmul.f32.gmra.mxu0 %v650
    %v772 = vpop.f32.mrf.mxu0
    %v773 = vadd.f32 %v708, %v772
    %774 = vmatmul.f32.gmra.mxu0 %v651
    %v775 = vpop.f32.mrf.mxu0
    %v776 = vadd.f32 %v711, %v775
    %777 = vmatmul.f32.gmra.mxu0 %v652
    %v778 = vpop.f32.mrf.mxu0
    %v779 = vadd.f32 %v714, %v778
    %780 = vmatmul.f32.gmra.mxu0 %v653
    %v781 = vpop.f32.mrf.mxu0
    %v782 = vadd.f32 %v717, %v781
    %783 = vmatmul.f32.gmra.mxu0 %v654
    %v784 = vpop.f32.mrf.mxu0
    %v785 = vadd.f32 %v720, %v784
    %786 = vmatmul.f32.gmra.mxu0 %v655
    %v787 = vpop.f32.mrf.mxu0
    %v788 = vadd.f32 %v723, %v787
    %789 = vmatmul.f32.gmra.mxu0 %v656
    %v790 = vpop.f32.mrf.mxu0
    %v791 = vadd.f32 %v726, %v790
    %792 = vmatmul.f32.gmra.mxu0 %v657
    %v793 = vpop.f32.mrf.mxu0
    %v794 = vadd.f32 %v729, %v793
    %795 = vmatmul.f32.gmra.mxu0 %v658
    %v796 = vpop.f32.mrf.mxu0
    %v797 = vadd.f32 %v732, %v796
    %798 = vmatmul.f32.gmra.mxu0 %v659
    %v799 = vpop.f32.mrf.mxu0
    %v800 = vadd.f32 %v735, %v799
    %801 = vmatmul.f32.gmra.mxu0 %v660
    %v802 = vpop.f32.mrf.mxu0
    %v803 = vadd.f32 %v738, %v802
    %804 = vmatmul.f32.gmra.mxu0 %v661
    %v805 = vpop.f32.mrf.mxu0
    %v806 = vadd.f32 %v741, %v805
    %807 = vdwg.mxu0
    %808 = vmatpush.msra.mxu0 %v514
    %809 = vmatpush.msra.mxu0 %v513
    %810 = vmatpush.msra.mxu0 %v512
    %811 = vmatpush.msra.mxu0 %v511
    %812 = vmatpush.msra.mxu0 %v510
    %813 = vmatpush.msra.mxu0 %v509
    %814 = vmatpush.msra.mxu0 %v508
    %815 = vmatpush.msra.mxu0 %v507
    %816 = vmatpush.msra.mxu0 %v506
    %817 = vmatpush.msra.mxu0 %v505
    %818 = vmatpush.msra.mxu0 %v504
    %819 = vmatpush.msra.mxu0 %v503
    %820 = vmatpush.msra.mxu0 %v502
    %821 = vmatpush.msra.mxu0 %v501
    %822 = vmatpush.msra.mxu0 %v500
    %823 = vmatpush.msra.mxu0 %v499
    %824 = vmatmul.f32.gmra.mxu0 %v114
    %v825 = vpop.f32.mrf.mxu0
    %v826 = vadd.f32 0.0, %v825
    %827 = vmatmul.f32.gmra.mxu0 %v115
    %v828 = vpop.f32.mrf.mxu0
    %v829 = vadd.f32 0.0, %v828
    %830 = vmatmul.f32.gmra.mxu0 %v116
    %v831 = vpop.f32.mrf.mxu0
    %v832 = vadd.f32 0.0, %v831
    %833 = vmatmul.f32.gmra.mxu0 %v117
    %v834 = vpop.f32.mrf.mxu0
    %v835 = vadd.f32 0.0, %v834
    %836 = vmatmul.f32.gmra.mxu0 %v118
    %v837 = vpop.f32.mrf.mxu0
    %v838 = vadd.f32 0.0, %v837
    %839 = vmatmul.f32.gmra.mxu0 %v119
    %v840 = vpop.f32.mrf.mxu0
    %v841 = vadd.f32 0.0, %v840
    %842 = vmatmul.f32.gmra.mxu0 %v120
    %v843 = vpop.f32.mrf.mxu0
    %v844 = vadd.f32 0.0, %v843
    %845 = vmatmul.f32.gmra.mxu0 %v121
    %v846 = vpop.f32.mrf.mxu0
    %v847 = vadd.f32 0.0, %v846
    %848 = vmatmul.f32.gmra.mxu0 %v122
    %v849 = vpop.f32.mrf.mxu0
    %v850 = vadd.f32 0.0, %v849
    %851 = vmatmul.f32.gmra.mxu0 %v123
    %v852 = vpop.f32.mrf.mxu0
    %v853 = vadd.f32 0.0, %v852
    %854 = vmatmul.f32.gmra.mxu0 %v124
    %v855 = vpop.f32.mrf.mxu0
    %v856 = vadd.f32 0.0, %v855
    %857 = vmatmul.f32.gmra.mxu0 %v125
    %v858 = vpop.f32.mrf.mxu0
    %v859 = vadd.f32 0.0, %v858
    %860 = vmatmul.f32.gmra.mxu0 %v126
    %v861 = vpop.f32.mrf.mxu0
    %v862 = vadd.f32 0.0, %v861
    %863 = vmatmul.f32.gmra.mxu0 %v127
    %v864 = vpop.f32.mrf.mxu0
    %v865 = vadd.f32 0.0, %v864
    %866 = vmatmul.f32.gmra.mxu0 %v128
    %v867 = vpop.f32.mrf.mxu0
    %v868 = vadd.f32 0.0, %v867
    %869 = vmatmul.f32.gmra.mxu0 %v129
    %v870 = vpop.f32.mrf.mxu0
    %v871 = vadd.f32 0.0, %v870
    %872 = vdwg.mxu0
    %v873 = vadd.f32 %v761, %v826
    %v874 = vadd.f32 %v764, %v829
    %v875 = vadd.f32 %v767, %v832
    %v876 = vadd.f32 %v770, %v835
    %v877 = vadd.f32 %v773, %v838
    %v878 = vadd.f32 %v776, %v841
    %v879 = vadd.f32 %v779, %v844
    %v880 = vadd.f32 %v782, %v847
    %v881 = vadd.f32 %v785, %v850
    %v882 = vadd.f32 %v788, %v853
    %v883 = vadd.f32 %v791, %v856
    %v884 = vadd.f32 %v794, %v859
    %v885 = vadd.f32 %v797, %v862
    %v886 = vadd.f32 %v800, %v865
    %v887 = vadd.f32 %v803, %v868
    %v888 = vadd.f32 %v806, %v871
    %v889 = vperm.slane %v515, 0
    %v890 = vadd.f32 %v873, %v889
    %v891 = vadd.f32 %v874, %v889
    %v892 = vadd.f32 %v875, %v889
    %v893 = vadd.f32 %v876, %v889
    %v894 = vadd.f32 %v877, %v889
    %v895 = vadd.f32 %v878, %v889
    %v896 = vadd.f32 %v879, %v889
    %v897 = vadd.f32 %v880, %v889
    %v898 = vadd.f32 %v881, %v889
    %v899 = vadd.f32 %v882, %v889
    %v900 = vadd.f32 %v883, %v889
    %v901 = vadd.f32 %v884, %v889
    %v902 = vadd.f32 %v885, %v889
    %v903 = vadd.f32 %v886, %v889
    %v904 = vadd.f32 %v887, %v889
    %v905 = vadd.f32 %v888, %v889
    %907 = vset.pattern.permute.xlu0 0
    %908 = vperm.xlu0 %907, %v82
    %v909 = vpop.permute.xlu0 %908
    %912 = vset.pattern.permute.xlu0 0
    %913 = vperm.xlu0 %912, %v83
    %v914 = vpop.permute.xlu0 %913
    %917 = vset.pattern.permute.xlu0 0
    %918 = vperm.xlu0 %917, %v84
    %v919 = vpop.permute.xlu0 %918
    %922 = vset.pattern.permute.xlu0 0
    %923 = vperm.xlu0 %922, %v85
    %v924 = vpop.permute.xlu0 %923
    %927 = vset.pattern.permute.xlu0 0
    %928 = vperm.xlu0 %927, %v86
    %v929 = vpop.permute.xlu0 %928
    %932 = vset.pattern.permute.xlu0 0
    %933 = vperm.xlu0 %932, %v87
    %v934 = vpop.permute.xlu0 %933
    %937 = vset.pattern.permute.xlu0 0
    %938 = vperm.xlu0 %937, %v88
    %v939 = vpop.permute.xlu0 %938
    %942 = vset.pattern.permute.xlu0 0
    %943 = vperm.xlu0 %942, %v89
    %v944 = vpop.permute.xlu0 %943
    %947 = vset.pattern.permute.xlu0 0
    %948 = vperm.xlu0 %947, %v90
    %v949 = vpop.permute.xlu0 %948
    %952 = vset.pattern.permute.xlu0 0
    %953 = vperm.xlu0 %952, %v91
    %v954 = vpop.permute.xlu0 %953
    %957 = vset.pattern.permute.xlu0 0
    %958 = vperm.xlu0 %957, %v92
    %v959 = vpop.permute.xlu0 %958
    %962 = vset.pattern.permute.xlu0 0
    %963 = vperm.xlu0 %962, %v93
    %v964 = vpop.permute.xlu0 %963
    %967 = vset.pattern.permute.xlu0 0
    %968 = vperm.xlu0 %967, %v94
    %v969 = vpop.permute.xlu0 %968
    %972 = vset.pattern.permute.xlu0 0
    %973 = vperm.xlu0 %972, %v95
    %v974 = vpop.permute.xlu0 %973
    %977 = vset.pattern.permute.xlu0 0
    %978 = vperm.xlu0 %977, %v96
    %v979 = vpop.permute.xlu0 %978
    %982 = vset.pattern.permute.xlu0 0
    %983 = vperm.xlu0 %982, %v97
    %v984 = vpop.permute.xlu0 %983
    %v986 = vmul.f32 %v890, %v909
    %v987 = vmul.f32 %v891, %v914
    %v988 = vmul.f32 %v892, %v919
    %v989 = vmul.f32 %v893, %v924
    %v990 = vmul.f32 %v894, %v929
    %v991 = vmul.f32 %v895, %v934
    %v992 = vmul.f32 %v896, %v939
    %v993 = vmul.f32 %v897, %v944
    %v994 = vmul.f32 %v898, %v949
    %v995 = vmul.f32 %v899, %v954
    %v996 = vmul.f32 %v900, %v959
    %v997 = vmul.f32 %v901, %v964
    %v998 = vmul.f32 %v902, %v969
    %v999 = vmul.f32 %v903, %v974
    %v1000 = vmul.f32 %v904, %v979
    %v1001 = vmul.f32 %v905, %v984
    %1002 = vmatpush.msra.mxu0 %v1001
    %1003 = vmatpush.msra.mxu0 %v1000
    %1004 = vmatpush.msra.mxu0 %v999
    %1005 = vmatpush.msra.mxu0 %v998
    %1006 = vmatpush.msra.mxu0 %v997
    %1007 = vmatpush.msra.mxu0 %v996
    %1008 = vmatpush.msra.mxu0 %v995
    %1009 = vmatpush.msra.mxu0 %v994
    %1010 = vmatpush.msra.mxu0 %v993
    %1011 = vmatpush.msra.mxu0 %v992
    %1012 = vmatpush.msra.mxu0 %v991
    %1013 = vmatpush.msra.mxu0 %v990
    %1014 = vmatpush.msra.mxu0 %v989
    %1015 = vmatpush.msra.mxu0 %v988
    %1016 = vmatpush.msra.mxu0 %v987
    %1017 = vmatpush.msra.mxu0 %v986
    %1018 = vmatmul.f32.gmra.mxu0 %v130
    %v1019 = vpop.f32.mrf.mxu0
    %v1020 = vadd.f32 0.0, %v1019
    %1021 = vmatmul.f32.gmra.mxu0 %v131
    %v1022 = vpop.f32.mrf.mxu0
    %v1023 = vadd.f32 0.0, %v1022
    %1024 = vmatmul.f32.gmra.mxu0 %v132
    %v1025 = vpop.f32.mrf.mxu0
    %v1026 = vadd.f32 0.0, %v1025
    %1027 = vmatmul.f32.gmra.mxu0 %v133
    %v1028 = vpop.f32.mrf.mxu0
    %v1029 = vadd.f32 0.0, %v1028
    %1030 = vmatmul.f32.gmra.mxu0 %v134
    %v1031 = vpop.f32.mrf.mxu0
    %v1032 = vadd.f32 0.0, %v1031
    %1033 = vmatmul.f32.gmra.mxu0 %v135
    %v1034 = vpop.f32.mrf.mxu0
    %v1035 = vadd.f32 0.0, %v1034
    %1036 = vmatmul.f32.gmra.mxu0 %v136
    %v1037 = vpop.f32.mrf.mxu0
    %v1038 = vadd.f32 0.0, %v1037
    %1039 = vmatmul.f32.gmra.mxu0 %v137
    %v1040 = vpop.f32.mrf.mxu0
    %v1041 = vadd.f32 0.0, %v1040
    %1042 = vmatmul.f32.gmra.mxu0 %v138
    %v1043 = vpop.f32.mrf.mxu0
    %v1044 = vadd.f32 0.0, %v1043
    %1045 = vmatmul.f32.gmra.mxu0 %v139
    %v1046 = vpop.f32.mrf.mxu0
    %v1047 = vadd.f32 0.0, %v1046
    %1048 = vmatmul.f32.gmra.mxu0 %v140
    %v1049 = vpop.f32.mrf.mxu0
    %v1050 = vadd.f32 0.0, %v1049
    %1051 = vmatmul.f32.gmra.mxu0 %v141
    %v1052 = vpop.f32.mrf.mxu0
    %v1053 = vadd.f32 0.0, %v1052
    %1054 = vmatmul.f32.gmra.mxu0 %v142
    %v1055 = vpop.f32.mrf.mxu0
    %v1056 = vadd.f32 0.0, %v1055
    %1057 = vmatmul.f32.gmra.mxu0 %v143
    %v1058 = vpop.f32.mrf.mxu0
    %v1059 = vadd.f32 0.0, %v1058
    %1060 = vmatmul.f32.gmra.mxu0 %v144
    %v1061 = vpop.f32.mrf.mxu0
    %v1062 = vadd.f32 0.0, %v1061
    %1063 = vmatmul.f32.gmra.mxu0 %v145
    %v1064 = vpop.f32.mrf.mxu0
    %v1065 = vadd.f32 0.0, %v1064
    %1066 = vdwg.mxu0
    %1068 = vset.pattern.permute.xlu0 0
    %1069 = vperm.xlu0 %1068, %v241
    %v1070 = vpop.permute.xlu0 %1069
    %1073 = vset.pattern.permute.xlu0 0
    %1074 = vperm.xlu0 %1073, %v256
    %v1075 = vpop.permute.xlu0 %1074
    %1078 = vset.pattern.permute.xlu0 0
    %1079 = vperm.xlu0 %1078, %v271
    %v1080 = vpop.permute.xlu0 %1079
    %1083 = vset.pattern.permute.xlu0 0
    %1084 = vperm.xlu0 %1083, %v286
    %v1085 = vpop.permute.xlu0 %1084
    %1088 = vset.pattern.permute.xlu0 0
    %1089 = vperm.xlu0 %1088, %v301
    %v1090 = vpop.permute.xlu0 %1089
    %1093 = vset.pattern.permute.xlu0 0
    %1094 = vperm.xlu0 %1093, %v316
    %v1095 = vpop.permute.xlu0 %1094
    %1098 = vset.pattern.permute.xlu0 0
    %1099 = vperm.xlu0 %1098, %v331
    %v1100 = vpop.permute.xlu0 %1099
    %1103 = vset.pattern.permute.xlu0 0
    %1104 = vperm.xlu0 %1103, %v346
    %v1105 = vpop.permute.xlu0 %1104
    %1108 = vset.pattern.permute.xlu0 0
    %1109 = vperm.xlu0 %1108, %v361
    %v1110 = vpop.permute.xlu0 %1109
    %1113 = vset.pattern.permute.xlu0 0
    %1114 = vperm.xlu0 %1113, %v376
    %v1115 = vpop.permute.xlu0 %1114
    %1118 = vset.pattern.permute.xlu0 0
    %1119 = vperm.xlu0 %1118, %v391
    %v1120 = vpop.permute.xlu0 %1119
    %1123 = vset.pattern.permute.xlu0 0
    %1124 = vperm.xlu0 %1123, %v406
    %v1125 = vpop.permute.xlu0 %1124
    %1128 = vset.pattern.permute.xlu0 0
    %1129 = vperm.xlu0 %1128, %v421
    %v1130 = vpop.permute.xlu0 %1129
    %1133 = vset.pattern.permute.xlu0 0
    %1134 = vperm.xlu0 %1133, %v436
    %v1135 = vpop.permute.xlu0 %1134
    %1138 = vset.pattern.permute.xlu0 0
    %1139 = vperm.xlu0 %1138, %v451
    %v1140 = vpop.permute.xlu0 %1139
    %1143 = vset.pattern.permute.xlu0 0
    %1144 = vperm.xlu0 %1143, %v466
    %v1145 = vpop.permute.xlu0 %1144
    %v1147 = vmul.f32 %v1020, %v1070
    %v1148 = vmul.f32 %v1023, %v1075
    %v1149 = vmul.f32 %v1026, %v1080
    %v1150 = vmul.f32 %v1029, %v1085
    %v1151 = vmul.f32 %v1032, %v1090
    %v1152 = vmul.f32 %v1035, %v1095
    %v1153 = vmul.f32 %v1038, %v1100
    %v1154 = vmul.f32 %v1041, %v1105
    %v1155 = vmul.f32 %v1044, %v1110
    %v1156 = vmul.f32 %v1047, %v1115
    %v1157 = vmul.f32 %v1050, %v1120
    %v1158 = vmul.f32 %v1053, %v1125
    %v1159 = vmul.f32 %v1056, %v1130
    %v1160 = vmul.f32 %v1059, %v1135
    %v1161 = vmul.f32 %v1062, %v1140
    %v1162 = vmul.f32 %v1065, %v1145
    %v1163 = vmax.f32 %v1147, 0.0
    %v1164 = vmax.f32 %v1148, 0.0
    %v1165 = vmax.f32 %v1149, 0.0
    %v1166 = vmax.f32 %v1150, 0.0
    %v1167 = vmax.f32 %v1151, 0.0
    %v1168 = vmax.f32 %v1152, 0.0
    %v1169 = vmax.f32 %v1153, 0.0
    %v1170 = vmax.f32 %v1154, 0.0
    %v1171 = vmax.f32 %v1155, 0.0
    %v1172 = vmax.f32 %v1156, 0.0
    %v1173 = vmax.f32 %v1157, 0.0
    %v1174 = vmax.f32 %v1158, 0.0
    %v1175 = vmax.f32 %v1159, 0.0
    %v1176 = vmax.f32 %v1160, 0.0
    %v1177 = vmax.f32 %v1161, 0.0
    %v1178 = vmax.f32 %v1162, 0.0
    %v1179 = vmax.f32 %v986, 0.0
    %v1180 = vmax.f32 %v987, 0.0
    %v1181 = vmax.f32 %v988, 0.0
    %v1182 = vmax.f32 %v989, 0.0
    %v1183 = vmax.f32 %v990, 0.0
    %v1184 = vmax.f32 %v991, 0.0
    %v1185 = vmax.f32 %v992, 0.0
    %v1186 = vmax.f32 %v993, 0.0
    %v1187 = vmax.f32 %v994, 0.0
    %v1188 = vmax.f32 %v995, 0.0
    %v1189 = vmax.f32 %v996, 0.0
    %v1190 = vmax.f32 %v997, 0.0
    %v1191 = vmax.f32 %v998, 0.0
    %v1192 = vmax.f32 %v999, 0.0
    %v1193 = vmax.f32 %v1000, 0.0
    %v1194 = vmax.f32 %v1001, 0.0
    %v1195 = vld [vmem:[%s8 + $0x100] sm:$0xff]
    %v1196 = vld [vmem:[%s8 + $0x108] sm:$0xff]
    %v1197 = vld [vmem:[%s8 + $0x110] sm:$0xff]
    %v1198 = vld [vmem:[%s8 + $0x118] sm:$0xff]
    %v1199 = vld [vmem:[%s8 + $0x120] sm:$0xff]
    %v1200 = vld [vmem:[%s8 + $0x128] sm:$0xff]
    %v1201 = vld [vmem:[%s8 + $0x130] sm:$0xff]
    %v1202 = vld [vmem:[%s8 + $0x138] sm:$0xff]
    %v1203 = vld [vmem:[%s8 + $0x140] sm:$0xff]
    %v1204 = vld [vmem:[%s8 + $0x148] sm:$0xff]
    %v1205 = vld [vmem:[%s8 + $0x150] sm:$0xff]
    %v1206 = vld [vmem:[%s8 + $0x158] sm:$0xff]
    %v1207 = vld [vmem:[%s8 + $0x160] sm:$0xff]
    %v1208 = vld [vmem:[%s8 + $0x168] sm:$0xff]
    %v1209 = vld [vmem:[%s8 + $0x170] sm:$0xff]
    %v1210 = vld [vmem:[%s8 + $0x178] sm:$0xff]
    %v1211 = vld [vmem:[%s8 + $0x180] sm:$0xff]
    %v1212 = vld [vmem:[%s8 + $0x188] sm:$0xff]
    %v1213 = vld [vmem:[%s8 + $0x190] sm:$0xff]
    %v1214 = vld [vmem:[%s8 + $0x198] sm:$0xff]
    %v1215 = vld [vmem:[%s8 + $0x1a0] sm:$0xff]
    %v1216 = vld [vmem:[%s8 + $0x1a8] sm:$0xff]
    %v1217 = vld [vmem:[%s8 + $0x1b0] sm:$0xff]
    %v1218 = vld [vmem:[%s8 + $0x1b8] sm:$0xff]
    %v1219 = vld [vmem:[%s8 + $0x1c0] sm:$0xff]
    %v1220 = vld [vmem:[%s8 + $0x1c8] sm:$0xff]
    %v1221 = vld [vmem:[%s8 + $0x1d0] sm:$0xff]
    %v1222 = vld [vmem:[%s8 + $0x1d8] sm:$0xff]
    %v1223 = vld [vmem:[%s8 + $0x1e0] sm:$0xff]
    %v1224 = vld [vmem:[%s8 + $0x1e8] sm:$0xff]
    %v1225 = vld [vmem:[%s8 + $0x1f0] sm:$0xff]
    %v1226 = vld [vmem:[%s8 + $0x1f8] sm:$0xff]
    %v1227 = vld [vmem:[%s9 + $0x80] sm:$0xff]
    %v1228 = vld [vmem:[%s9 + $0x88] sm:$0xff]
    %v1229 = vld [vmem:[%s9 + $0x90] sm:$0xff]
    %v1230 = vld [vmem:[%s9 + $0x98] sm:$0xff]
    %v1231 = vld [vmem:[%s9 + $0xa0] sm:$0xff]
    %v1232 = vld [vmem:[%s9 + $0xa8] sm:$0xff]
    %v1233 = vld [vmem:[%s9 + $0xb0] sm:$0xff]
    %v1234 = vld [vmem:[%s9 + $0xb8] sm:$0xff]
    %v1235 = vld [vmem:[%s9 + $0xc0] sm:$0xff]
    %v1236 = vld [vmem:[%s9 + $0xc8] sm:$0xff]
    %v1237 = vld [vmem:[%s9 + $0xd0] sm:$0xff]
    %v1238 = vld [vmem:[%s9 + $0xd8] sm:$0xff]
    %v1239 = vld [vmem:[%s9 + $0xe0] sm:$0xff]
    %v1240 = vld [vmem:[%s9 + $0xe8] sm:$0xff]
    %v1241 = vld [vmem:[%s9 + $0xf0] sm:$0xff]
    %v1242 = vld [vmem:[%s9 + $0xf8] sm:$0xff]
    %v1243 = vld [vmem:[%s10 + $0x1] sm:$0x1]
    %1244 = vmatpush.msra.mxu0 %v1225
    %1245 = vmatpush.msra.mxu0 %v1223
    %1246 = vmatpush.msra.mxu0 %v1221
    %1247 = vmatpush.msra.mxu0 %v1219
    %1248 = vmatpush.msra.mxu0 %v1217
    %1249 = vmatpush.msra.mxu0 %v1215
    %1250 = vmatpush.msra.mxu0 %v1213
    %1251 = vmatpush.msra.mxu0 %v1211
    %1252 = vmatpush.msra.mxu0 %v1209
    %1253 = vmatpush.msra.mxu0 %v1207
    %1254 = vmatpush.msra.mxu0 %v1205
    %1255 = vmatpush.msra.mxu0 %v1203
    %1256 = vmatpush.msra.mxu0 %v1201
    %1257 = vmatpush.msra.mxu0 %v1199
    %1258 = vmatpush.msra.mxu0 %v1197
    %1259 = vmatpush.msra.mxu0 %v1195
    %1260 = vmatmul.f32.gmra.mxu0 %v1163
    %v1261 = vpop.f32.mrf.mxu0
    %v1262 = vadd.f32 0.0, %v1261
    %1263 = vmatmul.f32.gmra.mxu0 %v1164
    %v1264 = vpop.f32.mrf.mxu0
    %v1265 = vadd.f32 0.0, %v1264
    %1266 = vmatmul.f32.gmra.mxu0 %v1165
    %v1267 = vpop.f32.mrf.mxu0
    %v1268 = vadd.f32 0.0, %v1267
    %1269 = vmatmul.f32.gmra.mxu0 %v1166
    %v1270 = vpop.f32.mrf.mxu0
    %v1271 = vadd.f32 0.0, %v1270
    %1272 = vmatmul.f32.gmra.mxu0 %v1167
    %v1273 = vpop.f32.mrf.mxu0
    %v1274 = vadd.f32 0.0, %v1273
    %1275 = vmatmul.f32.gmra.mxu0 %v1168
    %v1276 = vpop.f32.mrf.mxu0
    %v1277 = vadd.f32 0.0, %v1276
    %1278 = vmatmul.f32.gmra.mxu0 %v1169
    %v1279 = vpop.f32.mrf.mxu0
    %v1280 = vadd.f32 0.0, %v1279
    %1281 = vmatmul.f32.gmra.mxu0 %v1170
    %v1282 = vpop.f32.mrf.mxu0
    %v1283 = vadd.f32 0.0, %v1282
    %1284 = vmatmul.f32.gmra.mxu0 %v1171
    %v1285 = vpop.f32.mrf.mxu0
    %v1286 = vadd.f32 0.0, %v1285
    %1287 = vmatmul.f32.gmra.mxu0 %v1172
    %v1288 = vpop.f32.mrf.mxu0
    %v1289 = vadd.f32 0.0, %v1288
    %1290 = vmatmul.f32.gmra.mxu0 %v1173
    %v1291 = vpop.f32.mrf.mxu0
    %v1292 = vadd.f32 0.0, %v1291
    %1293 = vmatmul.f32.gmra.mxu0 %v1174
    %v1294 = vpop.f32.mrf.mxu0
    %v1295 = vadd.f32 0.0, %v1294
    %1296 = vmatmul.f32.gmra.mxu0 %v1175
    %v1297 = vpop.f32.mrf.mxu0
    %v1298 = vadd.f32 0.0, %v1297
    %1299 = vmatmul.f32.gmra.mxu0 %v1176
    %v1300 = vpop.f32.mrf.mxu0
    %v1301 = vadd.f32 0.0, %v1300
    %1302 = vmatmul.f32.gmra.mxu0 %v1177
    %v1303 = vpop.f32.mrf.mxu0
    %v1304 = vadd.f32 0.0, %v1303
    %1305 = vmatmul.f32.gmra.mxu0 %v1178
    %v1306 = vpop.f32.mrf.mxu0
    %v1307 = vadd.f32 0.0, %v1306
    %1308 = vdwg.mxu0
    %1309 = vmatpush.msra.mxu0 %v1226
    %1310 = vmatpush.msra.mxu0 %v1224
    %1311 = vmatpush.msra.mxu0 %v1222
    %1312 = vmatpush.msra.mxu0 %v1220
    %1313 = vmatpush.msra.mxu0 %v1218
    %1314 = vmatpush.msra.mxu0 %v1216
    %1315 = vmatpush.msra.mxu0 %v1214
    %1316 = vmatpush.msra.mxu0 %v1212
    %1317 = vmatpush.msra.mxu0 %v1210
    %1318 = vmatpush.msra.mxu0 %v1208
    %1319 = vmatpush.msra.mxu0 %v1206
    %1320 = vmatpush.msra.mxu0 %v1204
    %1321 = vmatpush.msra.mxu0 %v1202
    %1322 = vmatpush.msra.mxu0 %v1200
    %1323 = vmatpush.msra.mxu0 %v1198
    %1324 = vmatpush.msra.mxu0 %v1196
    %1325 = vmatmul.f32.gmra.mxu0 %v1163
    %v1326 = vpop.f32.mrf.mxu0
    %v1327 = vadd.f32 0.0, %v1326
    %1328 = vmatmul.f32.gmra.mxu0 %v1164
    %v1329 = vpop.f32.mrf.mxu0
    %v1330 = vadd.f32 0.0, %v1329
    %1331 = vmatmul.f32.gmra.mxu0 %v1165
    %v1332 = vpop.f32.mrf.mxu0
    %v1333 = vadd.f32 0.0, %v1332
    %1334 = vmatmul.f32.gmra.mxu0 %v1166
    %v1335 = vpop.f32.mrf.mxu0
    %v1336 = vadd.f32 0.0, %v1335
    %1337 = vmatmul.f32.gmra.mxu0 %v1167
    %v1338 = vpop.f32.mrf.mxu0
    %v1339 = vadd.f32 0.0, %v1338
    %1340 = vmatmul.f32.gmra.mxu0 %v1168
    %v1341 = vpop.f32.mrf.mxu0
    %v1342 = vadd.f32 0.0, %v1341
    %1343 = vmatmul.f32.gmra.mxu0 %v1169
    %v1344 = vpop.f32.mrf.mxu0
    %v1345 = vadd.f32 0.0, %v1344
    %1346 = vmatmul.f32.gmra.mxu0 %v1170
    %v1347 = vpop.f32.mrf.mxu0
    %v1348 = vadd.f32 0.0, %v1347
    %1349 = vmatmul.f32.gmra.mxu0 %v1171
    %v1350 = vpop.f32.mrf.mxu0
    %v1351 = vadd.f32 0.0, %v1350
    %1352 = vmatmul.f32.gmra.mxu0 %v1172
    %v1353 = vpop.f32.mrf.mxu0
    %v1354 = vadd.f32 0.0, %v1353
    %1355 = vmatmul.f32.gmra.mxu0 %v1173
    %v1356 = vpop.f32.mrf.mxu0
    %v1357 = vadd.f32 0.0, %v1356
    %1358 = vmatmul.f32.gmra.mxu0 %v1174
    %v1359 = vpop.f32.mrf.mxu0
    %v1360 = vadd.f32 0.0, %v1359
    %1361 = vmatmul.f32.gmra.mxu0 %v1175
    %v1362 = vpop.f32.mrf.mxu0
    %v1363 = vadd.f32 0.0, %v1362
    %1364 = vmatmul.f32.gmra.mxu0 %v1176
    %v1365 = vpop.f32.mrf.mxu0
    %v1366 = vadd.f32 0.0, %v1365
    %1367 = vmatmul.f32.gmra.mxu0 %v1177
    %v1368 = vpop.f32.mrf.mxu0
    %v1369 = vadd.f32 0.0, %v1368
    %1370 = vmatmul.f32.gmra.mxu0 %v1178
    %v1371 = vpop.f32.mrf.mxu0
    %v1372 = vadd.f32 0.0, %v1371
    %1373 = vdwg.mxu0
    %1374 = vmatpush.msra.mxu0 %v1372
    %1375 = vmatpush.msra.mxu0 %v1369
    %1376 = vmatpush.msra.mxu0 %v1366
    %1377 = vmatpush.msra.mxu0 %v1363
    %1378 = vmatpush.msra.mxu0 %v1360
    %1379 = vmatpush.msra.mxu0 %v1357
    %1380 = vmatpush.msra.mxu0 %v1354
    %1381 = vmatpush.msra.mxu0 %v1351
    %1382 = vmatpush.msra.mxu0 %v1348
    %1383 = vmatpush.msra.mxu0 %v1345
    %1384 = vmatpush.msra.mxu0 %v1342
    %1385 = vmatpush.msra.mxu0 %v1339
    %1386 = vmatpush.msra.mxu0 %v1336
    %1387 = vmatpush.msra.mxu0 %v1333
    %1388 = vmatpush.msra.mxu0 %v1330
    %1389 = vmatpush.msra.mxu0 %v1327
    %1390 = vmatmul.f32.gmra.mxu0 %v662
    %v1391 = vpop.f32.mrf.mxu0
    %v1392 = vadd.f32 0.0, %v1391
    %1393 = vmatmul.f32.gmra.mxu0 %v663
    %v1394 = vpop.f32.mrf.mxu0
    %v1395 = vadd.f32 0.0, %v1394
    %1396 = vmatmul.f32.gmra.mxu0 %v664
    %v1397 = vpop.f32.mrf.mxu0
    %v1398 = vadd.f32 0.0, %v1397
    %1399 = vmatmul.f32.gmra.mxu0 %v665
    %v1400 = vpop.f32.mrf.mxu0
    %v1401 = vadd.f32 0.0, %v1400
    %1402 = vmatmul.f32.gmra.mxu0 %v666
    %v1403 = vpop.f32.mrf.mxu0
    %v1404 = vadd.f32 0.0, %v1403
    %1405 = vmatmul.f32.gmra.mxu0 %v667
    %v1406 = vpop.f32.mrf.mxu0
    %v1407 = vadd.f32 0.0, %v1406
    %1408 = vmatmul.f32.gmra.mxu0 %v668
    %v1409 = vpop.f32.mrf.mxu0
    %v1410 = vadd.f32 0.0, %v1409
    %1411 = vmatmul.f32.gmra.mxu0 %v669
    %v1412 = vpop.f32.mrf.mxu0
    %v1413 = vadd.f32 0.0, %v1412
    %1414 = vmatmul.f32.gmra.mxu0 %v670
    %v1415 = vpop.f32.mrf.mxu0
    %v1416 = vadd.f32 0.0, %v1415
    %1417 = vmatmul.f32.gmra.mxu0 %v671
    %v1418 = vpop.f32.mrf.mxu0
    %v1419 = vadd.f32 0.0, %v1418
    %1420 = vmatmul.f32.gmra.mxu0 %v672
    %v1421 = vpop.f32.mrf.mxu0
    %v1422 = vadd.f32 0.0, %v1421
    %1423 = vmatmul.f32.gmra.mxu0 %v673
    %v1424 = vpop.f32.mrf.mxu0
    %v1425 = vadd.f32 0.0, %v1424
    %1426 = vmatmul.f32.gmra.mxu0 %v674
    %v1427 = vpop.f32.mrf.mxu0
    %v1428 = vadd.f32 0.0, %v1427
    %1429 = vmatmul.f32.gmra.mxu0 %v675
    %v1430 = vpop.f32.mrf.mxu0
    %v1431 = vadd.f32 0.0, %v1430
    %1432 = vmatmul.f32.gmra.mxu0 %v676
    %v1433 = vpop.f32.mrf.mxu0
    %v1434 = vadd.f32 0.0, %v1433
    %1435 = vmatmul.f32.gmra.mxu0 %v677
    %v1436 = vpop.f32.mrf.mxu0
    %v1437 = vadd.f32 0.0, %v1436
    %1438 = vdwg.mxu0
    %1439 = vmatpush.msra.mxu0 %v1307
    %1440 = vmatpush.msra.mxu0 %v1304
    %1441 = vmatpush.msra.mxu0 %v1301
    %1442 = vmatpush.msra.mxu0 %v1298
    %1443 = vmatpush.msra.mxu0 %v1295
    %1444 = vmatpush.msra.mxu0 %v1292
    %1445 = vmatpush.msra.mxu0 %v1289
    %1446 = vmatpush.msra.mxu0 %v1286
    %1447 = vmatpush.msra.mxu0 %v1283
    %1448 = vmatpush.msra.mxu0 %v1280
    %1449 = vmatpush.msra.mxu0 %v1277
    %1450 = vmatpush.msra.mxu0 %v1274
    %1451 = vmatpush.msra.mxu0 %v1271
    %1452 = vmatpush.msra.mxu0 %v1268
    %1453 = vmatpush.msra.mxu0 %v1265
    %1454 = vmatpush.msra.mxu0 %v1262
    %1455 = vmatmul.f32.gmra.mxu0 %v646
    %v1456 = vpop.f32.mrf.mxu0
    %v1457 = vadd.f32 %v1392, %v1456
    %1458 = vmatmul.f32.gmra.mxu0 %v647
    %v1459 = vpop.f32.mrf.mxu0
    %v1460 = vadd.f32 %v1395, %v1459
    %1461 = vmatmul.f32.gmra.mxu0 %v648
    %v1462 = vpop.f32.mrf.mxu0
    %v1463 = vadd.f32 %v1398, %v1462
    %1464 = vmatmul.f32.gmra.mxu0 %v649
    %v1465 = vpop.f32.mrf.mxu0
    %v1466 = vadd.f32 %v1401, %v1465
    %1467 = vmatmul.f32.gmra.mxu0 %v650
    %v1468 = vpop.f32.mrf.mxu0
    %v1469 = vadd.f32 %v1404, %v1468
    %1470 = vmatmul.f32.gmra.mxu0 %v651
    %v1471 = vpop.f32.mrf.mxu0
    %v1472 = vadd.f32 %v1407, %v1471
    %1473 = vmatmul.f32.gmra.mxu0 %v652
    %v1474 = vpop.f32.mrf.mxu0
    %v1475 = vadd.f32 %v1410, %v1474
    %1476 = vmatmul.f32.gmra.mxu0 %v653
    %v1477 = vpop.f32.mrf.mxu0
    %v1478 = vadd.f32 %v1413, %v1477
    %1479 = vmatmul.f32.gmra.mxu0 %v654
    %v1480 = vpop.f32.mrf.mxu0
    %v1481 = vadd.f32 %v1416, %v1480
    %1482 = vmatmul.f32.gmra.mxu0 %v655
    %v1483 = vpop.f32.mrf.mxu0
    %v1484 = vadd.f32 %v1419, %v1483
    %1485 = vmatmul.f32.gmra.mxu0 %v656
    %v1486 = vpop.f32.mrf.mxu0
    %v1487 = vadd.f32 %v1422, %v1486
    %1488 = vmatmul.f32.gmra.mxu0 %v657
    %v1489 = vpop.f32.mrf.mxu0
    %v1490 = vadd.f32 %v1425, %v1489
    %1491 = vmatmul.f32.gmra.mxu0 %v658
    %v1492 = vpop.f32.mrf.mxu0
    %v1493 = vadd.f32 %v1428, %v1492
    %1494 = vmatmul.f32.gmra.mxu0 %v659
    %v1495 = vpop.f32.mrf.mxu0
    %v1496 = vadd.f32 %v1431, %v1495
    %1497 = vmatmul.f32.gmra.mxu0 %v660
    %v1498 = vpop.f32.mrf.mxu0
    %v1499 = vadd.f32 %v1434, %v1498
    %1500 = vmatmul.f32.gmra.mxu0 %v661
    %v1501 = vpop.f32.mrf.mxu0
    %v1502 = vadd.f32 %v1437, %v1501
    %1503 = vdwg.mxu0
    %1504 = vmatpush.msra.mxu0 %v1242
    %1505 = vmatpush.msra.mxu0 %v1241
    %1506 = vmatpush.msra.mxu0 %v1240
    %1507 = vmatpush.msra.mxu0 %v1239
    %1508 = vmatpush.msra.mxu0 %v1238
    %1509 = vmatpush.msra.mxu0 %v1237
    %1510 = vmatpush.msra.mxu0 %v1236
    %1511 = vmatpush.msra.mxu0 %v1235
    %1512 = vmatpush.msra.mxu0 %v1234
    %1513 = vmatpush.msra.mxu0 %v1233
    %1514 = vmatpush.msra.mxu0 %v1232
    %1515 = vmatpush.msra.mxu0 %v1231
    %1516 = vmatpush.msra.mxu0 %v1230
    %1517 = vmatpush.msra.mxu0 %v1229
    %1518 = vmatpush.msra.mxu0 %v1228
    %1519 = vmatpush.msra.mxu0 %v1227
    %1520 = vmatmul.f32.gmra.mxu0 %v1179
    %v1521 = vpop.f32.mrf.mxu0
    %v1522 = vadd.f32 0.0, %v1521
    %1523 = vmatmul.f32.gmra.mxu0 %v1180
    %v1524 = vpop.f32.mrf.mxu0
    %v1525 = vadd.f32 0.0, %v1524
    %1526 = vmatmul.f32.gmra.mxu0 %v1181
    %v1527 = vpop.f32.mrf.mxu0
    %v1528 = vadd.f32 0.0, %v1527
    %1529 = vmatmul.f32.gmra.mxu0 %v1182
    %v1530 = vpop.f32.mrf.mxu0
    %v1531 = vadd.f32 0.0, %v1530
    %1532 = vmatmul.f32.gmra.mxu0 %v1183
    %v1533 = vpop.f32.mrf.mxu0
    %v1534 = vadd.f32 0.0, %v1533
    %1535 = vmatmul.f32.gmra.mxu0 %v1184
    %v1536 = vpop.f32.mrf.mxu0
    %v1537 = vadd.f32 0.0, %v1536
    %1538 = vmatmul.f32.gmra.mxu0 %v1185
    %v1539 = vpop.f32.mrf.mxu0
    %v1540 = vadd.f32 0.0, %v1539
    %1541 = vmatmul.f32.gmra.mxu0 %v1186
    %v1542 = vpop.f32.mrf.mxu0
    %v1543 = vadd.f32 0.0, %v1542
    %1544 = vmatmul.f32.gmra.mxu0 %v1187
    %v1545 = vpop.f32.mrf.mxu0
    %v1546 = vadd.f32 0.0, %v1545
    %1547 = vmatmul.f32.gmra.mxu0 %v1188
    %v1548 = vpop.f32.mrf.mxu0
    %v1549 = vadd.f32 0.0, %v1548
    %1550 = vmatmul.f32.gmra.mxu0 %v1189
    %v1551 = vpop.f32.mrf.mxu0
    %v1552 = vadd.f32 0.0, %v1551
    %1553 = vmatmul.f32.gmra.mxu0 %v1190
    %v1554 = vpop.f32.mrf.mxu0
    %v1555 = vadd.f32 0.0, %v1554
    %1556 = vmatmul.f32.gmra.mxu0 %v1191
    %v1557 = vpop.f32.mrf.mxu0
    %v1558 = vadd.f32 0.0, %v1557
    %1559 = vmatmul.f32.gmra.mxu0 %v1192
    %v1560 = vpop.f32.mrf.mxu0
    %v1561 = vadd.f32 0.0, %v1560
    %1562 = vmatmul.f32.gmra.mxu0 %v1193
    %v1563 = vpop.f32.mrf.mxu0
    %v1564 = vadd.f32 0.0, %v1563
    %1565 = vmatmul.f32.gmra.mxu0 %v1194
    %v1566 = vpop.f32.mrf.mxu0
    %v1567 = vadd.f32 0.0, %v1566
    %1568 = vdwg.mxu0
    %v1569 = vadd.f32 %v1457, %v1522
    %v1570 = vadd.f32 %v1460, %v1525
    %v1571 = vadd.f32 %v1463, %v1528
    %v1572 = vadd.f32 %v1466, %v1531
    %v1573 = vadd.f32 %v1469, %v1534
    %v1574 = vadd.f32 %v1472, %v1537
    %v1575 = vadd.f32 %v1475, %v1540
    %v1576 = vadd.f32 %v1478, %v1543
    %v1577 = vadd.f32 %v1481, %v1546
    %v1578 = vadd.f32 %v1484, %v1549
    %v1579 = vadd.f32 %v1487, %v1552
    %v1580 = vadd.f32 %v1490, %v1555
    %v1581 = vadd.f32 %v1493, %v1558
    %v1582 = vadd.f32 %v1496, %v1561
    %v1583 = vadd.f32 %v1499, %v1564
    %v1584 = vadd.f32 %v1502, %v1567
    %v1585 = vperm.slane %v1243, 0
    %v1586 = vadd.f32 %v1569, %v1585
    %v1587 = vadd.f32 %v1570, %v1585
    %v1588 = vadd.f32 %v1571, %v1585
    %v1589 = vadd.f32 %v1572, %v1585
    %v1590 = vadd.f32 %v1573, %v1585
    %v1591 = vadd.f32 %v1574, %v1585
    %v1592 = vadd.f32 %v1575, %v1585
    %v1593 = vadd.f32 %v1576, %v1585
    %v1594 = vadd.f32 %v1577, %v1585
    %v1595 = vadd.f32 %v1578, %v1585
    %v1596 = vadd.f32 %v1579, %v1585
    %v1597 = vadd.f32 %v1580, %v1585
    %v1598 = vadd.f32 %v1581, %v1585
    %v1599 = vadd.f32 %v1582, %v1585
    %v1600 = vadd.f32 %v1583, %v1585
    %v1601 = vadd.f32 %v1584, %v1585
    %v1602 = vmul.f32 %v1586, %v909
    %v1603 = vmul.f32 %v1587, %v914
    %v1604 = vmul.f32 %v1588, %v919
    %v1605 = vmul.f32 %v1589, %v924
    %v1606 = vmul.f32 %v1590, %v929
    %v1607 = vmul.f32 %v1591, %v934
    %v1608 = vmul.f32 %v1592, %v939
    %v1609 = vmul.f32 %v1593, %v944
    %v1610 = vmul.f32 %v1594, %v949
    %v1611 = vmul.f32 %v1595, %v954
    %v1612 = vmul.f32 %v1596, %v959
    %v1613 = vmul.f32 %v1597, %v964
    %v1614 = vmul.f32 %v1598, %v969
    %v1615 = vmul.f32 %v1599, %v974
    %v1616 = vmul.f32 %v1600, %v979
    %v1617 = vmul.f32 %v1601, %v984
    %1618 = vmatpush.msra.mxu0 %v1617
    %1619 = vmatpush.msra.mxu0 %v1616
    %1620 = vmatpush.msra.mxu0 %v1615
    %1621 = vmatpush.msra.mxu0 %v1614
    %1622 = vmatpush.msra.mxu0 %v1613
    %1623 = vmatpush.msra.mxu0 %v1612
    %1624 = vmatpush.msra.mxu0 %v1611
    %1625 = vmatpush.msra.mxu0 %v1610
    %1626 = vmatpush.msra.mxu0 %v1609
    %1627 = vmatpush.msra.mxu0 %v1608
    %1628 = vmatpush.msra.mxu0 %v1607
    %1629 = vmatpush.msra.mxu0 %v1606
    %1630 = vmatpush.msra.mxu0 %v1605
    %1631 = vmatpush.msra.mxu0 %v1604
    %1632 = vmatpush.msra.mxu0 %v1603
    %1633 = vmatpush.msra.mxu0 %v1602
    %1634 = vmatmul.f32.gmra.mxu0 %v130
    %v1635 = vpop.f32.mrf.mxu0
    %v1636 = vadd.f32 0.0, %v1635
    %1637 = vmatmul.f32.gmra.mxu0 %v131
    %v1638 = vpop.f32.mrf.mxu0
    %v1639 = vadd.f32 0.0, %v1638
    %1640 = vmatmul.f32.gmra.mxu0 %v132
    %v1641 = vpop.f32.mrf.mxu0
    %v1642 = vadd.f32 0.0, %v1641
    %1643 = vmatmul.f32.gmra.mxu0 %v133
    %v1644 = vpop.f32.mrf.mxu0
    %v1645 = vadd.f32 0.0, %v1644
    %1646 = vmatmul.f32.gmra.mxu0 %v134
    %v1647 = vpop.f32.mrf.mxu0
    %v1648 = vadd.f32 0.0, %v1647
    %1649 = vmatmul.f32.gmra.mxu0 %v135
    %v1650 = vpop.f32.mrf.mxu0
    %v1651 = vadd.f32 0.0, %v1650
    %1652 = vmatmul.f32.gmra.mxu0 %v136
    %v1653 = vpop.f32.mrf.mxu0
    %v1654 = vadd.f32 0.0, %v1653
    %1655 = vmatmul.f32.gmra.mxu0 %v137
    %v1656 = vpop.f32.mrf.mxu0
    %v1657 = vadd.f32 0.0, %v1656
    %1658 = vmatmul.f32.gmra.mxu0 %v138
    %v1659 = vpop.f32.mrf.mxu0
    %v1660 = vadd.f32 0.0, %v1659
    %1661 = vmatmul.f32.gmra.mxu0 %v139
    %v1662 = vpop.f32.mrf.mxu0
    %v1663 = vadd.f32 0.0, %v1662
    %1664 = vmatmul.f32.gmra.mxu0 %v140
    %v1665 = vpop.f32.mrf.mxu0
    %v1666 = vadd.f32 0.0, %v1665
    %1667 = vmatmul.f32.gmra.mxu0 %v141
    %v1668 = vpop.f32.mrf.mxu0
    %v1669 = vadd.f32 0.0, %v1668
    %1670 = vmatmul.f32.gmra.mxu0 %v142
    %v1671 = vpop.f32.mrf.mxu0
    %v1672 = vadd.f32 0.0, %v1671
    %1673 = vmatmul.f32.gmra.mxu0 %v143
    %v1674 = vpop.f32.mrf.mxu0
    %v1675 = vadd.f32 0.0, %v1674
    %1676 = vmatmul.f32.gmra.mxu0 %v144
    %v1677 = vpop.f32.mrf.mxu0
    %v1678 = vadd.f32 0.0, %v1677
    %1679 = vmatmul.f32.gmra.mxu0 %v145
    %v1680 = vpop.f32.mrf.mxu0
    %v1681 = vadd.f32 0.0, %v1680
    %1682 = vdwg.mxu0
    %v1683 = vmul.f32 %v1636, %v1070
    %v1684 = vmul.f32 %v1639, %v1075
    %v1685 = vmul.f32 %v1642, %v1080
    %v1686 = vmul.f32 %v1645, %v1085
    %v1687 = vmul.f32 %v1648, %v1090
    %v1688 = vmul.f32 %v1651, %v1095
    %v1689 = vmul.f32 %v1654, %v1100
    %v1690 = vmul.f32 %v1657, %v1105
    %v1691 = vmul.f32 %v1660, %v1110
    %v1692 = vmul.f32 %v1663, %v1115
    %v1693 = vmul.f32 %v1666, %v1120
    %v1694 = vmul.f32 %v1669, %v1125
    %v1695 = vmul.f32 %v1672, %v1130
    %v1696 = vmul.f32 %v1675, %v1135
    %v1697 = vmul.f32 %v1678, %v1140
    %v1698 = vmul.f32 %v1681, %v1145
    %v1699 = vmax.f32 %v1683, 0.0
    %v1700 = vmax.f32 %v1684, 0.0
    %v1701 = vmax.f32 %v1685, 0.0
    %v1702 = vmax.f32 %v1686, 0.0
    %v1703 = vmax.f32 %v1687, 0.0
    %v1704 = vmax.f32 %v1688, 0.0
    %v1705 = vmax.f32 %v1689, 0.0
    %v1706 = vmax.f32 %v1690, 0.0
    %v1707 = vmax.f32 %v1691, 0.0
    %v1708 = vmax.f32 %v1692, 0.0
    %v1709 = vmax.f32 %v1693, 0.0
    %v1710 = vmax.f32 %v1694, 0.0
    %v1711 = vmax.f32 %v1695, 0.0
    %v1712 = vmax.f32 %v1696, 0.0
    %v1713 = vmax.f32 %v1697, 0.0
    %v1714 = vmax.f32 %v1698, 0.0
    %v1715 = vmax.f32 %v1602, 0.0
    %v1716 = vmax.f32 %v1603, 0.0
    %v1717 = vmax.f32 %v1604, 0.0
    %v1718 = vmax.f32 %v1605, 0.0
    %v1719 = vmax.f32 %v1606, 0.0
    %v1720 = vmax.f32 %v1607, 0.0
    %v1721 = vmax.f32 %v1608, 0.0
    %v1722 = vmax.f32 %v1609, 0.0
    %v1723 = vmax.f32 %v1610, 0.0
    %v1724 = vmax.f32 %v1611, 0.0
    %v1725 = vmax.f32 %v1612, 0.0
    %v1726 = vmax.f32 %v1613, 0.0
    %v1727 = vmax.f32 %v1614, 0.0
    %v1728 = vmax.f32 %v1615, 0.0
    %v1729 = vmax.f32 %v1616, 0.0
    %v1730 = vmax.f32 %v1617, 0.0
    %v1731 = vld [vmem:[%s11] sm:$0xff]
    %v1732 = vld [vmem:[%s11 + $0x8] sm:$0xff]
    %v1733 = vld [vmem:[%s11 + $0x10] sm:$0xff]
    %v1734 = vld [vmem:[%s11 + $0x18] sm:$0xff]
    %v1735 = vld [vmem:[%s11 + $0x20] sm:$0xff]
    %v1736 = vld [vmem:[%s11 + $0x28] sm:$0xff]
    %v1737 = vld [vmem:[%s11 + $0x30] sm:$0xff]
    %v1738 = vld [vmem:[%s11 + $0x38] sm:$0xff]
    %v1739 = vld [vmem:[%s11 + $0x40] sm:$0xff]
    %v1740 = vld [vmem:[%s11 + $0x48] sm:$0xff]
    %v1741 = vld [vmem:[%s11 + $0x50] sm:$0xff]
    %v1742 = vld [vmem:[%s11 + $0x58] sm:$0xff]
    %v1743 = vld [vmem:[%s11 + $0x60] sm:$0xff]
    %v1744 = vld [vmem:[%s11 + $0x68] sm:$0xff]
    %v1745 = vld [vmem:[%s11 + $0x70] sm:$0xff]
    %v1746 = vld [vmem:[%s11 + $0x78] sm:$0xff]
    %1747 = vmatpush.msra.mxu0 %v1746
    %1748 = vmatpush.msra.mxu0 %v1745
    %1749 = vmatpush.msra.mxu0 %v1744
    %1750 = vmatpush.msra.mxu0 %v1743
    %1751 = vmatpush.msra.mxu0 %v1742
    %1752 = vmatpush.msra.mxu0 %v1741
    %1753 = vmatpush.msra.mxu0 %v1740
    %1754 = vmatpush.msra.mxu0 %v1739
    %1755 = vmatpush.msra.mxu0 %v1738
    %1756 = vmatpush.msra.mxu0 %v1737
    %1757 = vmatpush.msra.mxu0 %v1736
    %1758 = vmatpush.msra.mxu0 %v1735
    %1759 = vmatpush.msra.mxu0 %v1734
    %1760 = vmatpush.msra.mxu0 %v1733
    %1761 = vmatpush.msra.mxu0 %v1732
    %1762 = vmatpush.msra.mxu0 %v1731
    %1763 = vmatmul.f32.gmra.mxu0 %v1699
    %v1764 = vpop.f32.mrf.mxu0
    %v1765 = vadd.f32 0.0, %v1764
    %1766 = vmatmul.f32.gmra.mxu0 %v1700
    %v1767 = vpop.f32.mrf.mxu0
    %v1768 = vadd.f32 0.0, %v1767
    %1769 = vmatmul.f32.gmra.mxu0 %v1701
    %v1770 = vpop.f32.mrf.mxu0
    %v1771 = vadd.f32 0.0, %v1770
    %1772 = vmatmul.f32.gmra.mxu0 %v1702
    %v1773 = vpop.f32.mrf.mxu0
    %v1774 = vadd.f32 0.0, %v1773
    %1775 = vmatmul.f32.gmra.mxu0 %v1703
    %v1776 = vpop.f32.mrf.mxu0
    %v1777 = vadd.f32 0.0, %v1776
    %1778 = vmatmul.f32.gmra.mxu0 %v1704
    %v1779 = vpop.f32.mrf.mxu0
    %v1780 = vadd.f32 0.0, %v1779
    %1781 = vmatmul.f32.gmra.mxu0 %v1705
    %v1782 = vpop.f32.mrf.mxu0
    %v1783 = vadd.f32 0.0, %v1782
    %1784 = vmatmul.f32.gmra.mxu0 %v1706
    %v1785 = vpop.f32.mrf.mxu0
    %v1786 = vadd.f32 0.0, %v1785
    %1787 = vmatmul.f32.gmra.mxu0 %v1707
    %v1788 = vpop.f32.mrf.mxu0
    %v1789 = vadd.f32 0.0, %v1788
    %1790 = vmatmul.f32.gmra.mxu0 %v1708
    %v1791 = vpop.f32.mrf.mxu0
    %v1792 = vadd.f32 0.0, %v1791
    %1793 = vmatmul.f32.gmra.mxu0 %v1709
    %v1794 = vpop.f32.mrf.mxu0
    %v1795 = vadd.f32 0.0, %v1794
    %1796 = vmatmul.f32.gmra.mxu0 %v1710
    %v1797 = vpop.f32.mrf.mxu0
    %v1798 = vadd.f32 0.0, %v1797
    %1799 = vmatmul.f32.gmra.mxu0 %v1711
    %v1800 = vpop.f32.mrf.mxu0
    %v1801 = vadd.f32 0.0, %v1800
    %1802 = vmatmul.f32.gmra.mxu0 %v1712
    %v1803 = vpop.f32.mrf.mxu0
    %v1804 = vadd.f32 0.0, %v1803
    %1805 = vmatmul.f32.gmra.mxu0 %v1713
    %v1806 = vpop.f32.mrf.mxu0
    %v1807 = vadd.f32 0.0, %v1806
    %1808 = vmatmul.f32.gmra.mxu0 %v1714
    %v1809 = vpop.f32.mrf.mxu0
    %v1810 = vadd.f32 0.0, %v1809
    %1811 = vdwg.mxu0
    %v1812 = vld [vmem:[%s12] sm:$0x1]
    %v1813 = vld [vmem:[%s5] sm:$0xff]
    %v1814 = vld [vmem:[%s5 + $0x8] sm:$0xff]
    %v1815 = vld [vmem:[%s5 + $0x10] sm:$0xff]
    %v1816 = vld [vmem:[%s5 + $0x18] sm:$0xff]
    %v1817 = vld [vmem:[%s5 + $0x20] sm:$0xff]
    %v1818 = vld [vmem:[%s5 + $0x28] sm:$0xff]
    %v1819 = vld [vmem:[%s5 + $0x30] sm:$0xff]
    %v1820 = vld [vmem:[%s5 + $0x38] sm:$0xff]
    %v1821 = vld [vmem:[%s5 + $0x40] sm:$0xff]
    %v1822 = vld [vmem:[%s5 + $0x48] sm:$0xff]
    %v1823 = vld [vmem:[%s5 + $0x50] sm:$0xff]
    %v1824 = vld [vmem:[%s5 + $0x58] sm:$0xff]
    %v1825 = vld [vmem:[%s5 + $0x60] sm:$0xff]
    %v1826 = vld [vmem:[%s5 + $0x68] sm:$0xff]
    %v1827 = vld [vmem:[%s5 + $0x70] sm:$0xff]
    %v1828 = vld [vmem:[%s5 + $0x78] sm:$0xff]
    %v1829 = vmul.f32 %v646, %v909
    %v1830 = vmul.f32 %v647, %v914
    %v1831 = vmul.f32 %v648, %v919
    %v1832 = vmul.f32 %v649, %v924
    %v1833 = vmul.f32 %v650, %v929
    %v1834 = vmul.f32 %v651, %v934
    %v1835 = vmul.f32 %v652, %v939
    %v1836 = vmul.f32 %v653, %v944
    %v1837 = vmul.f32 %v654, %v949
    %v1838 = vmul.f32 %v655, %v954
    %v1839 = vmul.f32 %v656, %v959
    %v1840 = vmul.f32 %v657, %v964
    %v1841 = vmul.f32 %v658, %v969
    %v1842 = vmul.f32 %v659, %v974
    %v1843 = vmul.f32 %v660, %v979
    %v1844 = vmul.f32 %v661, %v984
    %1845 = vmatpush.msra.mxu0 %v1844
    %1846 = vmatpush.msra.mxu0 %v1843
    %1847 = vmatpush.msra.mxu0 %v1842
    %1848 = vmatpush.msra.mxu0 %v1841
    %1849 = vmatpush.msra.mxu0 %v1840
    %1850 = vmatpush.msra.mxu0 %v1839
    %1851 = vmatpush.msra.mxu0 %v1838
    %1852 = vmatpush.msra.mxu0 %v1837
    %1853 = vmatpush.msra.mxu0 %v1836
    %1854 = vmatpush.msra.mxu0 %v1835
    %1855 = vmatpush.msra.mxu0 %v1834
    %1856 = vmatpush.msra.mxu0 %v1833
    %1857 = vmatpush.msra.mxu0 %v1832
    %1858 = vmatpush.msra.mxu0 %v1831
    %1859 = vmatpush.msra.mxu0 %v1830
    %1860 = vmatpush.msra.mxu0 %v1829
    %1861 = vmatmul.f32.gmra.mxu0 %v130
    %v1862 = vpop.f32.mrf.mxu0
    %v1863 = vadd.f32 0.0, %v1862
    %1864 = vmatmul.f32.gmra.mxu0 %v131
    %v1865 = vpop.f32.mrf.mxu0
    %v1866 = vadd.f32 0.0, %v1865
    %1867 = vmatmul.f32.gmra.mxu0 %v132
    %v1868 = vpop.f32.mrf.mxu0
    %v1869 = vadd.f32 0.0, %v1868
    %1870 = vmatmul.f32.gmra.mxu0 %v133
    %v1871 = vpop.f32.mrf.mxu0
    %v1872 = vadd.f32 0.0, %v1871
    %1873 = vmatmul.f32.gmra.mxu0 %v134
    %v1874 = vpop.f32.mrf.mxu0
    %v1875 = vadd.f32 0.0, %v1874
    %1876 = vmatmul.f32.gmra.mxu0 %v135
    %v1877 = vpop.f32.mrf.mxu0
    %v1878 = vadd.f32 0.0, %v1877
    %1879 = vmatmul.f32.gmra.mxu0 %v136
    %v1880 = vpop.f32.mrf.mxu0
    %v1881 = vadd.f32 0.0, %v1880
    %1882 = vmatmul.f32.gmra.mxu0 %v137
    %v1883 = vpop.f32.mrf.mxu0
    %v1884 = vadd.f32 0.0, %v1883
    %1885 = vmatmul.f32.gmra.mxu0 %v138
    %v1886 = vpop.f32.mrf.mxu0
    %v1887 = vadd.f32 0.0, %v1886
    %1888 = vmatmul.f32.gmra.mxu0 %v139
    %v1889 = vpop.f32.mrf.mxu0
    %v1890 = vadd.f32 0.0, %v1889
    %1891 = vmatmul.f32.gmra.mxu0 %v140
    %v1892 = vpop.f32.mrf.mxu0
    %v1893 = vadd.f32 0.0, %v1892
    %1894 = vmatmul.f32.gmra.mxu0 %v141
    %v1895 = vpop.f32.mrf.mxu0
    %v1896 = vadd.f32 0.0, %v1895
    %1897 = vmatmul.f32.gmra.mxu0 %v142
    %v1898 = vpop.f32.mrf.mxu0
    %v1899 = vadd.f32 0.0, %v1898
    %1900 = vmatmul.f32.gmra.mxu0 %v143
    %v1901 = vpop.f32.mrf.mxu0
    %v1902 = vadd.f32 0.0, %v1901
    %1903 = vmatmul.f32.gmra.mxu0 %v144
    %v1904 = vpop.f32.mrf.mxu0
    %v1905 = vadd.f32 0.0, %v1904
    %1906 = vmatmul.f32.gmra.mxu0 %v145
    %v1907 = vpop.f32.mrf.mxu0
    %v1908 = vadd.f32 0.0, %v1907
    %1909 = vdwg.mxu0
    %v1910 = vsub.f32 1.0, %v1813
    %v1911 = vsub.f32 1.0, %v1814
    %v1912 = vsub.f32 1.0, %v1815
    %v1913 = vsub.f32 1.0, %v1816
    %v1914 = vsub.f32 1.0, %v1817
    %v1915 = vsub.f32 1.0, %v1818
    %v1916 = vsub.f32 1.0, %v1819
    %v1917 = vsub.f32 1.0, %v1820
    %v1918 = vsub.f32 1.0, %v1821
    %v1919 = vsub.f32 1.0, %v1822
    %v1920 = vsub.f32 1.0, %v1823
    %v1921 = vsub.f32 1.0, %v1824
    %v1922 = vsub.f32 1.0, %v1825
    %v1923 = vsub.f32 1.0, %v1826
    %v1924 = vsub.f32 1.0, %v1827
    %v1925 = vsub.f32 1.0, %v1828
    %v1926 = vmul.f32 %v1863, %v1910
    %v1927 = vmul.f32 %v1866, %v1911
    %v1928 = vmul.f32 %v1869, %v1912
    %v1929 = vmul.f32 %v1872, %v1913
    %v1930 = vmul.f32 %v1875, %v1914
    %v1931 = vmul.f32 %v1878, %v1915
    %v1932 = vmul.f32 %v1881, %v1916
    %v1933 = vmul.f32 %v1884, %v1917
    %v1934 = vmul.f32 %v1887, %v1918
    %v1935 = vmul.f32 %v1890, %v1919
    %v1936 = vmul.f32 %v1893, %v1920
    %v1937 = vmul.f32 %v1896, %v1921
    %v1938 = vmul.f32 %v1899, %v1922
    %v1939 = vmul.f32 %v1902, %v1923
    %v1940 = vmul.f32 %v1905, %v1924
    %v1941 = vmul.f32 %v1908, %v1925
    %1943 = vset.pattern.permute.xlu0 0
    %1944 = vperm.xlu0 %1943, %v66
    %v1945 = vpop.permute.xlu0 %1944
    %1948 = vset.pattern.permute.xlu0 0
    %1949 = vperm.xlu0 %1948, %v67
    %v1950 = vpop.permute.xlu0 %1949
    %1953 = vset.pattern.permute.xlu0 0
    %1954 = vperm.xlu0 %1953, %v68
    %v1955 = vpop.permute.xlu0 %1954
    %1958 = vset.pattern.permute.xlu0 0
    %1959 = vperm.xlu0 %1958, %v69
    %v1960 = vpop.permute.xlu0 %1959
    %1963 = vset.pattern.permute.xlu0 0
    %1964 = vperm.xlu0 %1963, %v70
    %v1965 = vpop.permute.xlu0 %1964
    %1968 = vset.pattern.permute.xlu0 0
    %1969 = vperm.xlu0 %1968, %v71
    %v1970 = vpop.permute.xlu0 %1969
    %1973 = vset.pattern.permute.xlu0 0
    %1974 = vperm.xlu0 %1973, %v72
    %v1975 = vpop.permute.xlu0 %1974
    %1978 = vset.pattern.permute.xlu0 0
    %1979 = vperm.xlu0 %1978, %v73
    %v1980 = vpop.permute.xlu0 %1979
    %1983 = vset.pattern.permute.xlu0 0
    %1984 = vperm.xlu0 %1983, %v74
    %v1985 = vpop.permute.xlu0 %1984
    %1988 = vset.pattern.permute.xlu0 0
    %1989 = vperm.xlu0 %1988, %v75
    %v1990 = vpop.permute.xlu0 %1989
    %1993 = vset.pattern.permute.xlu0 0
    %1994 = vperm.xlu0 %1993, %v76
    %v1995 = vpop.permute.xlu0 %1994
    %1998 = vset.pattern.permute.xlu0 0
    %1999 = vperm.xlu0 %1998, %v77
    %v2000 = vpop.permute.xlu0 %1999
    %2003 = vset.pattern.permute.xlu0 0
    %2004 = vperm.xlu0 %2003, %v78
    %v2005 = vpop.permute.xlu0 %2004
    %2008 = vset.pattern.permute.xlu0 0
    %2009 = vperm.xlu0 %2008, %v79
    %v2010 = vpop.permute.xlu0 %2009
    %2013 = vset.pattern.permute.xlu0 0
    %2014 = vperm.xlu0 %2013, %v80
    %v2015 = vpop.permute.xlu0 %2014
    %2018 = vset.pattern.permute.xlu0 0
    %2019 = vperm.xlu0 %2018, %v81
    %v2020 = vpop.permute.xlu0 %2019
    %v2022 = vmul.f32 %v1813, %v1945
    %v2023 = vmul.f32 %v1814, %v1950
    %v2024 = vmul.f32 %v1815, %v1955
    %v2025 = vmul.f32 %v1816, %v1960
    %v2026 = vmul.f32 %v1817, %v1965
    %v2027 = vmul.f32 %v1818, %v1970
    %v2028 = vmul.f32 %v1819, %v1975
    %v2029 = vmul.f32 %v1820, %v1980
    %v2030 = vmul.f32 %v1821, %v1985
    %v2031 = vmul.f32 %v1822, %v1990
    %v2032 = vmul.f32 %v1823, %v1995
    %v2033 = vmul.f32 %v1824, %v2000
    %v2034 = vmul.f32 %v1825, %v2005
    %v2035 = vmul.f32 %v1826, %v2010
    %v2036 = vmul.f32 %v1827, %v2015
    %v2037 = vmul.f32 %v1828, %v2020
    %v2038 = vadd.f32 %v1926, %v2022
    %v2039 = vadd.f32 %v1927, %v2023
    %v2040 = vadd.f32 %v1928, %v2024
    %v2041 = vadd.f32 %v1929, %v2025
    %v2042 = vadd.f32 %v1930, %v2026
    %v2043 = vadd.f32 %v1931, %v2027
    %v2044 = vadd.f32 %v1932, %v2028
    %v2045 = vadd.f32 %v1933, %v2029
    %v2046 = vadd.f32 %v1934, %v2030
    %v2047 = vadd.f32 %v1935, %v2031
    %v2048 = vadd.f32 %v1936, %v2032
    %v2049 = vadd.f32 %v1937, %v2033
    %v2050 = vadd.f32 %v1938, %v2034
    %v2051 = vadd.f32 %v1939, %v2035
    %v2052 = vadd.f32 %v1940, %v2036
    %v2053 = vadd.f32 %v1941, %v2037
    %2070 = vrot.lane.b32.xlu0 %v1765, 127
    %v2071 = vpop.permute.xlu0 %2070
    %2072 = vrot.lane.b32.xlu0 %v1768, 127
    %v2073 = vpop.permute.xlu0 %2072
    %2074 = vrot.lane.b32.xlu0 %v1771, 127
    %v2075 = vpop.permute.xlu0 %2074
    %2076 = vrot.lane.b32.xlu0 %v1774, 127
    %v2077 = vpop.permute.xlu0 %2076
    %2078 = vrot.lane.b32.xlu0 %v1777, 127
    %v2079 = vpop.permute.xlu0 %2078
    %2080 = vrot.lane.b32.xlu0 %v1780, 127
    %v2081 = vpop.permute.xlu0 %2080
    %2082 = vrot.lane.b32.xlu0 %v1783, 127
    %v2083 = vpop.permute.xlu0 %2082
    %2084 = vrot.lane.b32.xlu0 %v1786, 127
    %v2085 = vpop.permute.xlu0 %2084
    %2086 = vrot.lane.b32.xlu0 %v1789, 127
    %v2087 = vpop.permute.xlu0 %2086
    %2088 = vrot.lane.b32.xlu0 %v1792, 127
    %v2089 = vpop.permute.xlu0 %2088
    %2090 = vrot.lane.b32.xlu0 %v1795, 127
    %v2091 = vpop.permute.xlu0 %2090
    %2092 = vrot.lane.b32.xlu0 %v1798, 127
    %v2093 = vpop.permute.xlu0 %2092
    %2094 = vrot.lane.b32.xlu0 %v1801, 127
    %v2095 = vpop.permute.xlu0 %2094
    %2096 = vrot.lane.b32.xlu0 %v1804, 127
    %v2097 = vpop.permute.xlu0 %2096
    %2098 = vrot.lane.b32.xlu0 %v1807, 127
    %v2099 = vpop.permute.xlu0 %2098
    %2100 = vrot.lane.b32.xlu0 %v1810, 127
    %v2101 = vpop.permute.xlu0 %2100
    %vm2102 = vcmask 7168
    %v2104 = vsel %vm2102, 1.0, 0
    %v2106 = vsel %vm2102, %v2071, 0
    %v2108 = vsel %vm2102, %v2073, 0
    %v2110 = vsel %vm2102, %v2075, 0
    %v2112 = vsel %vm2102, %v2077, 0
    %v2114 = vsel %vm2102, %v2079, 0
    %v2116 = vsel %vm2102, %v2081, 0
    %v2118 = vsel %vm2102, %v2083, 0
    %v2120 = vsel %vm2102, %v2085, 0
    %v2122 = vsel %vm2102, %v2087, 0
    %v2124 = vsel %vm2102, %v2089, 0
    %v2126 = vsel %vm2102, %v2091, 0
    %v2128 = vsel %vm2102, %v2093, 0
    %v2130 = vsel %vm2102, %v2095, 0
    %v2132 = vsel %vm2102, %v2097, 0
    %v2134 = vsel %vm2102, %v2099, 0
    %v2136 = vsel %vm2102, %v2101, 0
    %2138 = vmatpush.xpose.msra.mxu0 %v2136
    %2139 = vmatpush.xpose.msra.mxu0 %v2134
    %2140 = vmatpush.xpose.msra.mxu0 %v2132
    %2141 = vmatpush.xpose.msra.mxu0 %v2130
    %2142 = vmatpush.xpose.msra.mxu0 %v2128
    %2143 = vmatpush.xpose.msra.mxu0 %v2126
    %2144 = vmatpush.xpose.msra.mxu0 %v2124
    %2145 = vmatpush.xpose.msra.mxu0 %v2122
    %2146 = vmatpush.xpose.msra.mxu0 %v2120
    %2147 = vmatpush.xpose.msra.mxu0 %v2118
    %2148 = vmatpush.xpose.msra.mxu0 %v2116
    %2149 = vmatpush.xpose.msra.mxu0 %v2114
    %2150 = vmatpush.xpose.msra.mxu0 %v2112
    %2151 = vmatpush.xpose.msra.mxu0 %v2110
    %2152 = vmatpush.xpose.msra.mxu0 %v2108
    %2153 = vmatpush.xpose.msra.mxu0 %v2106
    %2154 = vmatmul.f32.gmra.mxu0 %v2104
    %v2155 = vpop.f32.mrf.mxu0
    %v2156 = vadd.f32 0.0, %v2155
    %2157 = vmatmul.f32.gmra.mxu0 %v2104
    %v2158 = vpop.f32.mrf.mxu0
    %v2159 = vadd.f32 0.0, %v2158
    %2160 = vmatmul.f32.gmra.mxu0 %v2104
    %v2161 = vpop.f32.mrf.mxu0
    %v2162 = vadd.f32 0.0, %v2161
    %2163 = vmatmul.f32.gmra.mxu0 %v2104
    %v2164 = vpop.f32.mrf.mxu0
    %v2165 = vadd.f32 0.0, %v2164
    %2166 = vmatmul.f32.gmra.mxu0 %v2104
    %v2167 = vpop.f32.mrf.mxu0
    %v2168 = vadd.f32 0.0, %v2167
    %2169 = vmatmul.f32.gmra.mxu0 %v2104
    %v2170 = vpop.f32.mrf.mxu0
    %v2171 = vadd.f32 0.0, %v2170
    %2172 = vmatmul.f32.gmra.mxu0 %v2104
    %v2173 = vpop.f32.mrf.mxu0
    %v2174 = vadd.f32 0.0, %v2173
    %2175 = vmatmul.f32.gmra.mxu0 %v2104
    %v2176 = vpop.f32.mrf.mxu0
    %v2177 = vadd.f32 0.0, %v2176
    %2178 = vmatmul.f32.gmra.mxu0 %v2104
    %v2179 = vpop.f32.mrf.mxu0
    %v2180 = vadd.f32 0.0, %v2179
    %2181 = vmatmul.f32.gmra.mxu0 %v2104
    %v2182 = vpop.f32.mrf.mxu0
    %v2183 = vadd.f32 0.0, %v2182
    %2184 = vmatmul.f32.gmra.mxu0 %v2104
    %v2185 = vpop.f32.mrf.mxu0
    %v2186 = vadd.f32 0.0, %v2185
    %2187 = vmatmul.f32.gmra.mxu0 %v2104
    %v2188 = vpop.f32.mrf.mxu0
    %v2189 = vadd.f32 0.0, %v2188
    %2190 = vmatmul.f32.gmra.mxu0 %v2104
    %v2191 = vpop.f32.mrf.mxu0
    %v2192 = vadd.f32 0.0, %v2191
    %2193 = vmatmul.f32.gmra.mxu0 %v2104
    %v2194 = vpop.f32.mrf.mxu0
    %v2195 = vadd.f32 0.0, %v2194
    %2196 = vmatmul.f32.gmra.mxu0 %v2104
    %v2197 = vpop.f32.mrf.mxu0
    %v2198 = vadd.f32 0.0, %v2197
    %2199 = vmatmul.f32.gmra.mxu0 %v2104
    %v2200 = vpop.f32.mrf.mxu0
    %v2201 = vadd.f32 0.0, %v2200
    %2202 = vdwg.mxu0
    %2203 = vset.pattern.permute.xlu0 2
    %2204 = vperm.xlu0 %2203, %v1765
    %v2205 = vpop.permute.xlu0 %2204
    %2207 = vset.pattern.permute.xlu0 2
    %2208 = vperm.xlu0 %2207, %v1768
    %v2209 = vpop.permute.xlu0 %2208
    %2211 = vset.pattern.permute.xlu0 2
    %2212 = vperm.xlu0 %2211, %v1771
    %v2213 = vpop.permute.xlu0 %2212
    %2215 = vset.pattern.permute.xlu0 2
    %2216 = vperm.xlu0 %2215, %v1774
    %v2217 = vpop.permute.xlu0 %2216
    %2219 = vset.pattern.permute.xlu0 2
    %2220 = vperm.xlu0 %2219, %v1777
    %v2221 = vpop.permute.xlu0 %2220
    %2223 = vset.pattern.permute.xlu0 2
    %2224 = vperm.xlu0 %2223, %v1780
    %v2225 = vpop.permute.xlu0 %2224
    %2227 = vset.pattern.permute.xlu0 2
    %2228 = vperm.xlu0 %2227, %v1783
    %v2229 = vpop.permute.xlu0 %2228
    %2231 = vset.pattern.permute.xlu0 2
    %2232 = vperm.xlu0 %2231, %v1786
    %v2233 = vpop.permute.xlu0 %2232
    %2235 = vset.pattern.permute.xlu0 2
    %2236 = vperm.xlu0 %2235, %v1789
    %v2237 = vpop.permute.xlu0 %2236
    %2239 = vset.pattern.permute.xlu0 2
    %2240 = vperm.xlu0 %2239, %v1792
    %v2241 = vpop.permute.xlu0 %2240
    %2243 = vset.pattern.permute.xlu0 2
    %2244 = vperm.xlu0 %2243, %v1795
    %v2245 = vpop.permute.xlu0 %2244
    %2247 = vset.pattern.permute.xlu0 2
    %2248 = vperm.xlu0 %2247, %v1798
    %v2249 = vpop.permute.xlu0 %2248
    %2251 = vset.pattern.permute.xlu0 2
    %2252 = vperm.xlu0 %2251, %v1801
    %v2253 = vpop.permute.xlu0 %2252
    %2255 = vset.pattern.permute.xlu0 2
    %2256 = vperm.xlu0 %2255, %v1804
    %v2257 = vpop.permute.xlu0 %2256
    %2259 = vset.pattern.permute.xlu0 2
    %2260 = vperm.xlu0 %2259, %v1807
    %v2261 = vpop.permute.xlu0 %2260
    %2263 = vset.pattern.permute.xlu0 2
    %2264 = vperm.xlu0 %2263, %v1810
    %v2265 = vpop.permute.xlu0 %2264
    %v2267 = vadd.f32 %v2205, %v2156
    %v2268 = vadd.f32 %v2209, %v2159
    %v2269 = vadd.f32 %v2213, %v2162
    %v2270 = vadd.f32 %v2217, %v2165
    %v2271 = vadd.f32 %v2221, %v2168
    %v2272 = vadd.f32 %v2225, %v2171
    %v2273 = vadd.f32 %v2229, %v2174
    %v2274 = vadd.f32 %v2233, %v2177
    %v2275 = vadd.f32 %v2237, %v2180
    %v2276 = vadd.f32 %v2241, %v2183
    %v2277 = vadd.f32 %v2245, %v2186
    %v2278 = vadd.f32 %v2249, %v2189
    %v2279 = vadd.f32 %v2253, %v2192
    %v2280 = vadd.f32 %v2257, %v2195
    %v2281 = vadd.f32 %v2261, %v2198
    %v2282 = vadd.f32 %v2265, %v2201
    %vm2283 = vcmp.gt.f32.partialorder %v2267, 0.0
    %vm2284 = vcmp.gt.f32.partialorder %v2268, 0.0
    %vm2285 = vcmp.gt.f32.partialorder %v2269, 0.0
    %vm2286 = vcmp.gt.f32.partialorder %v2270, 0.0
    %vm2287 = vcmp.gt.f32.partialorder %v2271, 0.0
    %vm2288 = vcmp.gt.f32.partialorder %v2272, 0.0
    %vm2289 = vcmp.gt.f32.partialorder %v2273, 0.0
    %vm2290 = vcmp.gt.f32.partialorder %v2274, 0.0
    %vm2291 = vcmp.gt.f32.partialorder %v2275, 0.0
    %vm2292 = vcmp.gt.f32.partialorder %v2276, 0.0
    %vm2293 = vcmp.gt.f32.partialorder %v2277, 0.0
    %vm2294 = vcmp.gt.f32.partialorder %v2278, 0.0
    %vm2295 = vcmp.gt.f32.partialorder %v2279, 0.0
    %vm2296 = vcmp.gt.f32.partialorder %v2280, 0.0
    %vm2297 = vcmp.gt.f32.partialorder %v2281, 0.0
    %vm2298 = vcmp.gt.f32.partialorder %v2282, 0.0
    %v2299 = vmul.f32 %v2267, 0.2
    %v2300 = vmul.f32 %v2268, 0.2
    %v2301 = vmul.f32 %v2269, 0.2
    %v2302 = vmul.f32 %v2270, 0.2
    %v2303 = vmul.f32 %v2271, 0.2
    %v2304 = vmul.f32 %v2272, 0.2
    %v2305 = vmul.f32 %v2273, 0.2
    %v2306 = vmul.f32 %v2274, 0.2
    %v2307 = vmul.f32 %v2275, 0.2
    %v2308 = vmul.f32 %v2276, 0.2
    %v2309 = vmul.f32 %v2277, 0.2
    %v2310 = vmul.f32 %v2278, 0.2
    %v2311 = vmul.f32 %v2279, 0.2
    %v2312 = vmul.f32 %v2280, 0.2
    %v2313 = vmul.f32 %v2281, 0.2
    %v2314 = vmul.f32 %v2282, 0.2
    %v2315 = vsel %vm2283, %v2267, %v2299
    %v2316 = vsel %vm2284, %v2268, %v2300
    %v2317 = vsel %vm2285, %v2269, %v2301
    %v2318 = vsel %vm2286, %v2270, %v2302
    %v2319 = vsel %vm2287, %v2271, %v2303
    %v2320 = vsel %vm2288, %v2272, %v2304
    %v2321 = vsel %vm2289, %v2273, %v2305
    %v2322 = vsel %vm2290, %v2274, %v2306
    %v2323 = vsel %vm2291, %v2275, %v2307
    %v2324 = vsel %vm2292, %v2276, %v2308
    %v2325 = vsel %vm2293, %v2277, %v2309
    %v2326 = vsel %vm2294, %v2278, %v2310
    %v2327 = vsel %vm2295, %v2279, %v2311
    %v2328 = vsel %vm2296, %v2280, %v2312
    %v2329 = vsel %vm2297, %v2281, %v2313
    %v2330 = vsel %vm2298, %v2282, %v2314
    %vm2331 = vcmp.gt.f32.partialorder %v2038, 0.0
    %vm2332 = vcmp.gt.f32.partialorder %v2039, 0.0
    %vm2333 = vcmp.gt.f32.partialorder %v2040, 0.0
    %vm2334 = vcmp.gt.f32.partialorder %v2041, 0.0
    %vm2335 = vcmp.gt.f32.partialorder %v2042, 0.0
    %vm2336 = vcmp.gt.f32.partialorder %v2043, 0.0
    %vm2337 = vcmp.gt.f32.partialorder %v2044, 0.0
    %vm2338 = vcmp.gt.f32.partialorder %v2045, 0.0
    %vm2339 = vcmp.gt.f32.partialorder %v2046, 0.0
    %vm2340 = vcmp.gt.f32.partialorder %v2047, 0.0
    %vm2341 = vcmp.gt.f32.partialorder %v2048, 0.0
    %vm2342 = vcmp.gt.f32.partialorder %v2049, 0.0
    %vm2343 = vcmp.gt.f32.partialorder %v2050, 0.0
    %vm2344 = vcmp.gt.f32.partialorder %v2051, 0.0
    %vm2345 = vcmp.gt.f32.partialorder %v2052, 0.0
    %vm2346 = vcmp.gt.f32.partialorder %v2053, 0.0
    %v2347 = vsel %vm2331, %v2315, -1e+30
    %v2348 = vsel %vm2332, %v2316, -1e+30
    %v2349 = vsel %vm2333, %v2317, -1e+30
    %v2350 = vsel %vm2334, %v2318, -1e+30
    %v2351 = vsel %vm2335, %v2319, -1e+30
    %v2352 = vsel %vm2336, %v2320, -1e+30
    %v2353 = vsel %vm2337, %v2321, -1e+30
    %v2354 = vsel %vm2338, %v2322, -1e+30
    %v2355 = vsel %vm2339, %v2323, -1e+30
    %v2356 = vsel %vm2340, %v2324, -1e+30
    %v2357 = vsel %vm2341, %v2325, -1e+30
    %v2358 = vsel %vm2342, %v2326, -1e+30
    %v2359 = vsel %vm2343, %v2327, -1e+30
    %v2360 = vsel %vm2344, %v2328, -1e+30
    %v2361 = vsel %vm2345, %v2329, -1e+30
    %v2362 = vsel %vm2346, %v2330, -1e+30
    %2363 = vmax.xlane.f32.xlu0 %v2347
    %v2364 = vpop.xlane.xlu0 %2363
    %2365 = vmax.xlane.f32.xlu0 %v2348
    %v2366 = vpop.xlane.xlu0 %2365
    %2367 = vmax.xlane.f32.xlu0 %v2349
    %v2368 = vpop.xlane.xlu0 %2367
    %2369 = vmax.xlane.f32.xlu0 %v2350
    %v2370 = vpop.xlane.xlu0 %2369
    %2371 = vmax.xlane.f32.xlu0 %v2351
    %v2372 = vpop.xlane.xlu0 %2371
    %2373 = vmax.xlane.f32.xlu0 %v2352
    %v2374 = vpop.xlane.xlu0 %2373
    %2375 = vmax.xlane.f32.xlu0 %v2353
    %v2376 = vpop.xlane.xlu0 %2375
    %2377 = vmax.xlane.f32.xlu0 %v2354
    %v2378 = vpop.xlane.xlu0 %2377
    %2379 = vmax.xlane.f32.xlu0 %v2355
    %v2380 = vpop.xlane.xlu0 %2379
    %2381 = vmax.xlane.f32.xlu0 %v2356
    %v2382 = vpop.xlane.xlu0 %2381
    %2383 = vmax.xlane.f32.xlu0 %v2357
    %v2384 = vpop.xlane.xlu0 %2383
    %2385 = vmax.xlane.f32.xlu0 %v2358
    %v2386 = vpop.xlane.xlu0 %2385
    %2387 = vmax.xlane.f32.xlu0 %v2359
    %v2388 = vpop.xlane.xlu0 %2387
    %2389 = vmax.xlane.f32.xlu0 %v2360
    %v2390 = vpop.xlane.xlu0 %2389
    %2391 = vmax.xlane.f32.xlu0 %v2361
    %v2392 = vpop.xlane.xlu0 %2391
    %2393 = vmax.xlane.f32.xlu0 %v2362
    %v2394 = vpop.xlane.xlu0 %2393
    %v2395 = vsub.f32 %v2347, %v2364
    %v2396 = vsub.f32 %v2348, %v2366
    %v2397 = vsub.f32 %v2349, %v2368
    %v2398 = vsub.f32 %v2350, %v2370
    %v2399 = vsub.f32 %v2351, %v2372
    %v2400 = vsub.f32 %v2352, %v2374
    %v2401 = vsub.f32 %v2353, %v2376
    %v2402 = vsub.f32 %v2354, %v2378
    %v2403 = vsub.f32 %v2355, %v2380
    %v2404 = vsub.f32 %v2356, %v2382
    %v2405 = vsub.f32 %v2357, %v2384
    %v2406 = vsub.f32 %v2358, %v2386
    %v2407 = vsub.f32 %v2359, %v2388
    %v2408 = vsub.f32 %v2360, %v2390
    %v2409 = vsub.f32 %v2361, %v2392
    %v2410 = vsub.f32 %v2362, %v2394
    %v2411 = vmul.f32 %v2395, 1.442695
    %v2412 = vpow.pop %v2411
    %v2413 = vmul.f32 %v2396, 1.442695
    %v2414 = vpow.pop %v2413
    %v2415 = vmul.f32 %v2397, 1.442695
    %v2416 = vpow.pop %v2415
    %v2417 = vmul.f32 %v2398, 1.442695
    %v2418 = vpow.pop %v2417
    %v2419 = vmul.f32 %v2399, 1.442695
    %v2420 = vpow.pop %v2419
    %v2421 = vmul.f32 %v2400, 1.442695
    %v2422 = vpow.pop %v2421
    %v2423 = vmul.f32 %v2401, 1.442695
    %v2424 = vpow.pop %v2423
    %v2425 = vmul.f32 %v2402, 1.442695
    %v2426 = vpow.pop %v2425
    %v2427 = vmul.f32 %v2403, 1.442695
    %v2428 = vpow.pop %v2427
    %v2429 = vmul.f32 %v2404, 1.442695
    %v2430 = vpow.pop %v2429
    %v2431 = vmul.f32 %v2405, 1.442695
    %v2432 = vpow.pop %v2431
    %v2433 = vmul.f32 %v2406, 1.442695
    %v2434 = vpow.pop %v2433
    %v2435 = vmul.f32 %v2407, 1.442695
    %v2436 = vpow.pop %v2435
    %v2437 = vmul.f32 %v2408, 1.442695
    %v2438 = vpow.pop %v2437
    %v2439 = vmul.f32 %v2409, 1.442695
    %v2440 = vpow.pop %v2439
    %v2441 = vmul.f32 %v2410, 1.442695
    %v2442 = vpow.pop %v2441
    %v2443 = vmul.f32 %v2038, %v2412
    %v2444 = vmul.f32 %v2039, %v2414
    %v2445 = vmul.f32 %v2040, %v2416
    %v2446 = vmul.f32 %v2041, %v2418
    %v2447 = vmul.f32 %v2042, %v2420
    %v2448 = vmul.f32 %v2043, %v2422
    %v2449 = vmul.f32 %v2044, %v2424
    %v2450 = vmul.f32 %v2045, %v2426
    %v2451 = vmul.f32 %v2046, %v2428
    %v2452 = vmul.f32 %v2047, %v2430
    %v2453 = vmul.f32 %v2048, %v2432
    %v2454 = vmul.f32 %v2049, %v2434
    %v2455 = vmul.f32 %v2050, %v2436
    %v2456 = vmul.f32 %v2051, %v2438
    %v2457 = vmul.f32 %v2052, %v2440
    %v2458 = vmul.f32 %v2053, %v2442
    %v2459 = vsel %vm2102, %v1765, 1.0
    %v2460 = vsel %vm2102, %v1768, 1.0
    %v2461 = vsel %vm2102, %v1771, 1.0
    %v2462 = vsel %vm2102, %v1774, 1.0
    %v2463 = vsel %vm2102, %v1777, 1.0
    %v2464 = vsel %vm2102, %v1780, 1.0
    %v2465 = vsel %vm2102, %v1783, 1.0
    %v2466 = vsel %vm2102, %v1786, 1.0
    %v2467 = vsel %vm2102, %v1789, 1.0
    %v2468 = vsel %vm2102, %v1792, 1.0
    %v2469 = vsel %vm2102, %v1795, 1.0
    %v2470 = vsel %vm2102, %v1798, 1.0
    %v2471 = vsel %vm2102, %v1801, 1.0
    %v2472 = vsel %vm2102, %v1804, 1.0
    %v2473 = vsel %vm2102, %v1807, 1.0
    %v2474 = vsel %vm2102, %v1810, 1.0
    %2475 = vmatpush.msra.mxu0 %v2474
    %2476 = vmatpush.msra.mxu0 %v2473
    %2477 = vmatpush.msra.mxu0 %v2472
    %2478 = vmatpush.msra.mxu0 %v2471
    %2479 = vmatpush.msra.mxu0 %v2470
    %2480 = vmatpush.msra.mxu0 %v2469
    %2481 = vmatpush.msra.mxu0 %v2468
    %2482 = vmatpush.msra.mxu0 %v2467
    %2483 = vmatpush.msra.mxu0 %v2466
    %2484 = vmatpush.msra.mxu0 %v2465
    %2485 = vmatpush.msra.mxu0 %v2464
    %2486 = vmatpush.msra.mxu0 %v2463
    %2487 = vmatpush.msra.mxu0 %v2462
    %2488 = vmatpush.msra.mxu0 %v2461
    %2489 = vmatpush.msra.mxu0 %v2460
    %2490 = vmatpush.msra.mxu0 %v2459
    %2491 = vmatmul.f32.gmra.mxu0 %v2443
    %v2492 = vpop.f32.mrf.mxu0
    %v2493 = vadd.f32 0.0, %v2492
    %2494 = vmatmul.f32.gmra.mxu0 %v2444
    %v2495 = vpop.f32.mrf.mxu0
    %v2496 = vadd.f32 0.0, %v2495
    %2497 = vmatmul.f32.gmra.mxu0 %v2445
    %v2498 = vpop.f32.mrf.mxu0
    %v2499 = vadd.f32 0.0, %v2498
    %2500 = vmatmul.f32.gmra.mxu0 %v2446
    %v2501 = vpop.f32.mrf.mxu0
    %v2502 = vadd.f32 0.0, %v2501
    %2503 = vmatmul.f32.gmra.mxu0 %v2447
    %v2504 = vpop.f32.mrf.mxu0
    %v2505 = vadd.f32 0.0, %v2504
    %2506 = vmatmul.f32.gmra.mxu0 %v2448
    %v2507 = vpop.f32.mrf.mxu0
    %v2508 = vadd.f32 0.0, %v2507
    %2509 = vmatmul.f32.gmra.mxu0 %v2449
    %v2510 = vpop.f32.mrf.mxu0
    %v2511 = vadd.f32 0.0, %v2510
    %2512 = vmatmul.f32.gmra.mxu0 %v2450
    %v2513 = vpop.f32.mrf.mxu0
    %v2514 = vadd.f32 0.0, %v2513
    %2515 = vmatmul.f32.gmra.mxu0 %v2451
    %v2516 = vpop.f32.mrf.mxu0
    %v2517 = vadd.f32 0.0, %v2516
    %2518 = vmatmul.f32.gmra.mxu0 %v2452
    %v2519 = vpop.f32.mrf.mxu0
    %v2520 = vadd.f32 0.0, %v2519
    %2521 = vmatmul.f32.gmra.mxu0 %v2453
    %v2522 = vpop.f32.mrf.mxu0
    %v2523 = vadd.f32 0.0, %v2522
    %2524 = vmatmul.f32.gmra.mxu0 %v2454
    %v2525 = vpop.f32.mrf.mxu0
    %v2526 = vadd.f32 0.0, %v2525
    %2527 = vmatmul.f32.gmra.mxu0 %v2455
    %v2528 = vpop.f32.mrf.mxu0
    %v2529 = vadd.f32 0.0, %v2528
    %2530 = vmatmul.f32.gmra.mxu0 %v2456
    %v2531 = vpop.f32.mrf.mxu0
    %v2532 = vadd.f32 0.0, %v2531
    %2533 = vmatmul.f32.gmra.mxu0 %v2457
    %v2534 = vpop.f32.mrf.mxu0
    %v2535 = vadd.f32 0.0, %v2534
    %2536 = vmatmul.f32.gmra.mxu0 %v2458
    %v2537 = vpop.f32.mrf.mxu0
    %v2538 = vadd.f32 0.0, %v2537
    %2539 = vdwg.mxu0
    %v2540 = vmax.f32 %v2493, 1e-12
    %v2541 = vmax.f32 %v2496, 1e-12
    %v2542 = vmax.f32 %v2499, 1e-12
    %v2543 = vmax.f32 %v2502, 1e-12
    %v2544 = vmax.f32 %v2505, 1e-12
    %v2545 = vmax.f32 %v2508, 1e-12
    %v2546 = vmax.f32 %v2511, 1e-12
    %v2547 = vmax.f32 %v2514, 1e-12
    %v2548 = vmax.f32 %v2517, 1e-12
    %v2549 = vmax.f32 %v2520, 1e-12
    %v2550 = vmax.f32 %v2523, 1e-12
    %v2551 = vmax.f32 %v2526, 1e-12
    %v2552 = vmax.f32 %v2529, 1e-12
    %v2553 = vmax.f32 %v2532, 1e-12
    %v2554 = vmax.f32 %v2535, 1e-12
    %v2555 = vmax.f32 %v2538, 1e-12
    %2572 = vrot.lane.b32.xlu0 %v2540, 127
    %v2573 = vpop.permute.xlu0 %2572
    %2574 = vrot.lane.b32.xlu0 %v2541, 127
    %v2575 = vpop.permute.xlu0 %2574
    %2576 = vrot.lane.b32.xlu0 %v2542, 127
    %v2577 = vpop.permute.xlu0 %2576
    %2578 = vrot.lane.b32.xlu0 %v2543, 127
    %v2579 = vpop.permute.xlu0 %2578
    %2580 = vrot.lane.b32.xlu0 %v2544, 127
    %v2581 = vpop.permute.xlu0 %2580
    %2582 = vrot.lane.b32.xlu0 %v2545, 127
    %v2583 = vpop.permute.xlu0 %2582
    %2584 = vrot.lane.b32.xlu0 %v2546, 127
    %v2585 = vpop.permute.xlu0 %2584
    %2586 = vrot.lane.b32.xlu0 %v2547, 127
    %v2587 = vpop.permute.xlu0 %2586
    %2588 = vrot.lane.b32.xlu0 %v2548, 127
    %v2589 = vpop.permute.xlu0 %2588
    %2590 = vrot.lane.b32.xlu0 %v2549, 127
    %v2591 = vpop.permute.xlu0 %2590
    %2592 = vrot.lane.b32.xlu0 %v2550, 127
    %v2593 = vpop.permute.xlu0 %2592
    %2594 = vrot.lane.b32.xlu0 %v2551, 127
    %v2595 = vpop.permute.xlu0 %2594
    %2596 = vrot.lane.b32.xlu0 %v2552, 127
    %v2597 = vpop.permute.xlu0 %2596
    %2598 = vrot.lane.b32.xlu0 %v2553, 127
    %v2599 = vpop.permute.xlu0 %2598
    %2600 = vrot.lane.b32.xlu0 %v2554, 127
    %v2601 = vpop.permute.xlu0 %2600
    %2602 = vrot.lane.b32.xlu0 %v2555, 127
    %v2603 = vpop.permute.xlu0 %2602
    %v2620 = vrcp.pop %v2573
    %v2621 = vmul.f32 %v2573, %v2620
    %v2622 = vsub.f32 1.0, %v2621
    %v2623 = vmul.f32 %v2620, %v2622
    %v2624 = vadd.f32 %v2620, %v2623
    %vm2625 = vweird.f32 %v2573
    %vm2626 = vweird.f32 %v2620
    %vm2627 = vmor %vm2625, %vm2626
    %v2628 = vsel %vm2627, %v2620, %v2624
    %v2629 = vand.u32 2147483647, %v2573
    %vm2630 = vcmp.eq.f32.partialorder %v2629, 8.507059e+37
    %v2631 = vand.u32 %v2573, 2147483648
    %v2632 = vor.u32 1.1754944e-38, %v2631
    %v2633 = vsel %vm2630, %v2632, %v2628
    %v2634 = vmul.f32 %v2493, %v2633
    %v2635 = vrcp.pop %v2575
    %v2636 = vmul.f32 %v2575, %v2635
    %v2637 = vsub.f32 1.0, %v2636
    %v2638 = vmul.f32 %v2635, %v2637
    %v2639 = vadd.f32 %v2635, %v2638
    %vm2640 = vweird.f32 %v2575
    %vm2641 = vweird.f32 %v2635
    %vm2642 = vmor %vm2640, %vm2641
    %v2643 = vsel %vm2642, %v2635, %v2639
    %v2644 = vand.u32 2147483647, %v2575
    %vm2645 = vcmp.eq.f32.partialorder %v2644, 8.507059e+37
    %v2646 = vand.u32 %v2575, 2147483648
    %v2647 = vor.u32 1.1754944e-38, %v2646
    %v2648 = vsel %vm2645, %v2647, %v2643
    %v2649 = vmul.f32 %v2496, %v2648
    %v2650 = vrcp.pop %v2577
    %v2651 = vmul.f32 %v2577, %v2650
    %v2652 = vsub.f32 1.0, %v2651
    %v2653 = vmul.f32 %v2650, %v2652
    %v2654 = vadd.f32 %v2650, %v2653
    %vm2655 = vweird.f32 %v2577
    %vm2656 = vweird.f32 %v2650
    %vm2657 = vmor %vm2655, %vm2656
    %v2658 = vsel %vm2657, %v2650, %v2654
    %v2659 = vand.u32 2147483647, %v2577
    %vm2660 = vcmp.eq.f32.partialorder %v2659, 8.507059e+37
    %v2661 = vand.u32 %v2577, 2147483648
    %v2662 = vor.u32 1.1754944e-38, %v2661
    %v2663 = vsel %vm2660, %v2662, %v2658
    %v2664 = vmul.f32 %v2499, %v2663
    %v2665 = vrcp.pop %v2579
    %v2666 = vmul.f32 %v2579, %v2665
    %v2667 = vsub.f32 1.0, %v2666
    %v2668 = vmul.f32 %v2665, %v2667
    %v2669 = vadd.f32 %v2665, %v2668
    %vm2670 = vweird.f32 %v2579
    %vm2671 = vweird.f32 %v2665
    %vm2672 = vmor %vm2670, %vm2671
    %v2673 = vsel %vm2672, %v2665, %v2669
    %v2674 = vand.u32 2147483647, %v2579
    %vm2675 = vcmp.eq.f32.partialorder %v2674, 8.507059e+37
    %v2676 = vand.u32 %v2579, 2147483648
    %v2677 = vor.u32 1.1754944e-38, %v2676
    %v2678 = vsel %vm2675, %v2677, %v2673
    %v2679 = vmul.f32 %v2502, %v2678
    %v2680 = vrcp.pop %v2581
    %v2681 = vmul.f32 %v2581, %v2680
    %v2682 = vsub.f32 1.0, %v2681
    %v2683 = vmul.f32 %v2680, %v2682
    %v2684 = vadd.f32 %v2680, %v2683
    %vm2685 = vweird.f32 %v2581
    %vm2686 = vweird.f32 %v2680
    %vm2687 = vmor %vm2685, %vm2686
    %v2688 = vsel %vm2687, %v2680, %v2684
    %v2689 = vand.u32 2147483647, %v2581
    %vm2690 = vcmp.eq.f32.partialorder %v2689, 8.507059e+37
    %v2691 = vand.u32 %v2581, 2147483648
    %v2692 = vor.u32 1.1754944e-38, %v2691
    %v2693 = vsel %vm2690, %v2692, %v2688
    %v2694 = vmul.f32 %v2505, %v2693
    %v2695 = vrcp.pop %v2583
    %v2696 = vmul.f32 %v2583, %v2695
    %v2697 = vsub.f32 1.0, %v2696
    %v2698 = vmul.f32 %v2695, %v2697
    %v2699 = vadd.f32 %v2695, %v2698
    %vm2700 = vweird.f32 %v2583
    %vm2701 = vweird.f32 %v2695
    %vm2702 = vmor %vm2700, %vm2701
    %v2703 = vsel %vm2702, %v2695, %v2699
    %v2704 = vand.u32 2147483647, %v2583
    %vm2705 = vcmp.eq.f32.partialorder %v2704, 8.507059e+37
    %v2706 = vand.u32 %v2583, 2147483648
    %v2707 = vor.u32 1.1754944e-38, %v2706
    %v2708 = vsel %vm2705, %v2707, %v2703
    %v2709 = vmul.f32 %v2508, %v2708
    %v2710 = vrcp.pop %v2585
    %v2711 = vmul.f32 %v2585, %v2710
    %v2712 = vsub.f32 1.0, %v2711
    %v2713 = vmul.f32 %v2710, %v2712
    %v2714 = vadd.f32 %v2710, %v2713
    %vm2715 = vweird.f32 %v2585
    %vm2716 = vweird.f32 %v2710
    %vm2717 = vmor %vm2715, %vm2716
    %v2718 = vsel %vm2717, %v2710, %v2714
    %v2719 = vand.u32 2147483647, %v2585
    %vm2720 = vcmp.eq.f32.partialorder %v2719, 8.507059e+37
    %v2721 = vand.u32 %v2585, 2147483648
    %v2722 = vor.u32 1.1754944e-38, %v2721
    %v2723 = vsel %vm2720, %v2722, %v2718
    %v2724 = vmul.f32 %v2511, %v2723
    %v2725 = vrcp.pop %v2587
    %v2726 = vmul.f32 %v2587, %v2725
    %v2727 = vsub.f32 1.0, %v2726
    %v2728 = vmul.f32 %v2725, %v2727
    %v2729 = vadd.f32 %v2725, %v2728
    %vm2730 = vweird.f32 %v2587
    %vm2731 = vweird.f32 %v2725
    %vm2732 = vmor %vm2730, %vm2731
    %v2733 = vsel %vm2732, %v2725, %v2729
    %v2734 = vand.u32 2147483647, %v2587
    %vm2735 = vcmp.eq.f32.partialorder %v2734, 8.507059e+37
    %v2736 = vand.u32 %v2587, 2147483648
    %v2737 = vor.u32 1.1754944e-38, %v2736
    %v2738 = vsel %vm2735, %v2737, %v2733
    %v2739 = vmul.f32 %v2514, %v2738
    %v2740 = vrcp.pop %v2589
    %v2741 = vmul.f32 %v2589, %v2740
    %v2742 = vsub.f32 1.0, %v2741
    %v2743 = vmul.f32 %v2740, %v2742
    %v2744 = vadd.f32 %v2740, %v2743
    %vm2745 = vweird.f32 %v2589
    %vm2746 = vweird.f32 %v2740
    %vm2747 = vmor %vm2745, %vm2746
    %v2748 = vsel %vm2747, %v2740, %v2744
    %v2749 = vand.u32 2147483647, %v2589
    %vm2750 = vcmp.eq.f32.partialorder %v2749, 8.507059e+37
    %v2751 = vand.u32 %v2589, 2147483648
    %v2752 = vor.u32 1.1754944e-38, %v2751
    %v2753 = vsel %vm2750, %v2752, %v2748
    %v2754 = vmul.f32 %v2517, %v2753
    %v2755 = vrcp.pop %v2591
    %v2756 = vmul.f32 %v2591, %v2755
    %v2757 = vsub.f32 1.0, %v2756
    %v2758 = vmul.f32 %v2755, %v2757
    %v2759 = vadd.f32 %v2755, %v2758
    %vm2760 = vweird.f32 %v2591
    %vm2761 = vweird.f32 %v2755
    %vm2762 = vmor %vm2760, %vm2761
    %v2763 = vsel %vm2762, %v2755, %v2759
    %v2764 = vand.u32 2147483647, %v2591
    %vm2765 = vcmp.eq.f32.partialorder %v2764, 8.507059e+37
    %v2766 = vand.u32 %v2591, 2147483648
    %v2767 = vor.u32 1.1754944e-38, %v2766
    %v2768 = vsel %vm2765, %v2767, %v2763
    %v2769 = vmul.f32 %v2520, %v2768
    %v2770 = vrcp.pop %v2593
    %v2771 = vmul.f32 %v2593, %v2770
    %v2772 = vsub.f32 1.0, %v2771
    %v2773 = vmul.f32 %v2770, %v2772
    %v2774 = vadd.f32 %v2770, %v2773
    %vm2775 = vweird.f32 %v2593
    %vm2776 = vweird.f32 %v2770
    %vm2777 = vmor %vm2775, %vm2776
    %v2778 = vsel %vm2777, %v2770, %v2774
    %v2779 = vand.u32 2147483647, %v2593
    %vm2780 = vcmp.eq.f32.partialorder %v2779, 8.507059e+37
    %v2781 = vand.u32 %v2593, 2147483648
    %v2782 = vor.u32 1.1754944e-38, %v2781
    %v2783 = vsel %vm2780, %v2782, %v2778
    %v2784 = vmul.f32 %v2523, %v2783
    %v2785 = vrcp.pop %v2595
    %v2786 = vmul.f32 %v2595, %v2785
    %v2787 = vsub.f32 1.0, %v2786
    %v2788 = vmul.f32 %v2785, %v2787
    %v2789 = vadd.f32 %v2785, %v2788
    %vm2790 = vweird.f32 %v2595
    %vm2791 = vweird.f32 %v2785
    %vm2792 = vmor %vm2790, %vm2791
    %v2793 = vsel %vm2792, %v2785, %v2789
    %v2794 = vand.u32 2147483647, %v2595
    %vm2795 = vcmp.eq.f32.partialorder %v2794, 8.507059e+37
    %v2796 = vand.u32 %v2595, 2147483648
    %v2797 = vor.u32 1.1754944e-38, %v2796
    %v2798 = vsel %vm2795, %v2797, %v2793
    %v2799 = vmul.f32 %v2526, %v2798
    %v2800 = vrcp.pop %v2597
    %v2801 = vmul.f32 %v2597, %v2800
    %v2802 = vsub.f32 1.0, %v2801
    %v2803 = vmul.f32 %v2800, %v2802
    %v2804 = vadd.f32 %v2800, %v2803
    %vm2805 = vweird.f32 %v2597
    %vm2806 = vweird.f32 %v2800
    %vm2807 = vmor %vm2805, %vm2806
    %v2808 = vsel %vm2807, %v2800, %v2804
    %v2809 = vand.u32 2147483647, %v2597
    %vm2810 = vcmp.eq.f32.partialorder %v2809, 8.507059e+37
    %v2811 = vand.u32 %v2597, 2147483648
    %v2812 = vor.u32 1.1754944e-38, %v2811
    %v2813 = vsel %vm2810, %v2812, %v2808
    %v2814 = vmul.f32 %v2529, %v2813
    %v2815 = vrcp.pop %v2599
    %v2816 = vmul.f32 %v2599, %v2815
    %v2817 = vsub.f32 1.0, %v2816
    %v2818 = vmul.f32 %v2815, %v2817
    %v2819 = vadd.f32 %v2815, %v2818
    %vm2820 = vweird.f32 %v2599
    %vm2821 = vweird.f32 %v2815
    %vm2822 = vmor %vm2820, %vm2821
    %v2823 = vsel %vm2822, %v2815, %v2819
    %v2824 = vand.u32 2147483647, %v2599
    %vm2825 = vcmp.eq.f32.partialorder %v2824, 8.507059e+37
    %v2826 = vand.u32 %v2599, 2147483648
    %v2827 = vor.u32 1.1754944e-38, %v2826
    %v2828 = vsel %vm2825, %v2827, %v2823
    %v2829 = vmul.f32 %v2532, %v2828
    %v2830 = vrcp.pop %v2601
    %v2831 = vmul.f32 %v2601, %v2830
    %v2832 = vsub.f32 1.0, %v2831
    %v2833 = vmul.f32 %v2830, %v2832
    %v2834 = vadd.f32 %v2830, %v2833
    %vm2835 = vweird.f32 %v2601
    %vm2836 = vweird.f32 %v2830
    %vm2837 = vmor %vm2835, %vm2836
    %v2838 = vsel %vm2837, %v2830, %v2834
    %v2839 = vand.u32 2147483647, %v2601
    %vm2840 = vcmp.eq.f32.partialorder %v2839, 8.507059e+37
    %v2841 = vand.u32 %v2601, 2147483648
    %v2842 = vor.u32 1.1754944e-38, %v2841
    %v2843 = vsel %vm2840, %v2842, %v2838
    %v2844 = vmul.f32 %v2535, %v2843
    %v2845 = vrcp.pop %v2603
    %v2846 = vmul.f32 %v2603, %v2845
    %v2847 = vsub.f32 1.0, %v2846
    %v2848 = vmul.f32 %v2845, %v2847
    %v2849 = vadd.f32 %v2845, %v2848
    %vm2850 = vweird.f32 %v2603
    %vm2851 = vweird.f32 %v2845
    %vm2852 = vmor %vm2850, %vm2851
    %v2853 = vsel %vm2852, %v2845, %v2849
    %v2854 = vand.u32 2147483647, %v2603
    %vm2855 = vcmp.eq.f32.partialorder %v2854, 8.507059e+37
    %v2856 = vand.u32 %v2603, 2147483648
    %v2857 = vor.u32 1.1754944e-38, %v2856
    %v2858 = vsel %vm2855, %v2857, %v2853
    %v2859 = vmul.f32 %v2538, %v2858
    %v2860 = vperm.slane %v1812, 0
    %v2861 = vadd.f32 %v2634, %v2860
    %v2862 = vadd.f32 %v2649, %v2860
    %v2863 = vadd.f32 %v2664, %v2860
    %v2864 = vadd.f32 %v2679, %v2860
    %v2865 = vadd.f32 %v2694, %v2860
    %v2866 = vadd.f32 %v2709, %v2860
    %v2867 = vadd.f32 %v2724, %v2860
    %v2868 = vadd.f32 %v2739, %v2860
    %v2869 = vadd.f32 %v2754, %v2860
    %v2870 = vadd.f32 %v2769, %v2860
    %v2871 = vadd.f32 %v2784, %v2860
    %v2872 = vadd.f32 %v2799, %v2860
    %v2873 = vadd.f32 %v2814, %v2860
    %v2874 = vadd.f32 %v2829, %v2860
    %v2875 = vadd.f32 %v2844, %v2860
    %v2876 = vadd.f32 %v2859, %v2860
    %v2877 = vsel %vm2102, %v66, 0.0
    %v2878 = vsel %vm2102, %v67, 0.0
    %v2879 = vadd.f32 %v2877, %v2878
    %v2880 = vsel %vm2102, %v68, 0.0
    %v2881 = vadd.f32 %v2879, %v2880
    %v2882 = vsel %vm2102, %v69, 0.0
    %v2883 = vadd.f32 %v2881, %v2882
    %v2884 = vsel %vm2102, %v70, 0.0
    %v2885 = vadd.f32 %v2883, %v2884
    %v2886 = vsel %vm2102, %v71, 0.0
    %v2887 = vadd.f32 %v2885, %v2886
    %v2888 = vsel %vm2102, %v72, 0.0
    %v2889 = vadd.f32 %v2887, %v2888
    %v2890 = vsel %vm2102, %v73, 0.0
    %v2891 = vadd.f32 %v2889, %v2890
    %v2892 = vsel %vm2102, %v74, 0.0
    %v2893 = vadd.f32 %v2891, %v2892
    %v2894 = vsel %vm2102, %v75, 0.0
    %v2895 = vadd.f32 %v2893, %v2894
    %v2896 = vsel %vm2102, %v76, 0.0
    %v2897 = vadd.f32 %v2895, %v2896
    %v2898 = vsel %vm2102, %v77, 0.0
    %v2899 = vadd.f32 %v2897, %v2898
    %v2900 = vsel %vm2102, %v78, 0.0
    %v2901 = vadd.f32 %v2899, %v2900
    %v2902 = vsel %vm2102, %v79, 0.0
    %v2903 = vadd.f32 %v2901, %v2902
    %v2904 = vsel %vm2102, %v80, 0.0
    %v2905 = vadd.f32 %v2903, %v2904
    %v2906 = vsel %vm2102, %v81, 0.0
    %v2907 = vadd.f32 %v2905, %v2906
    %v2908 = vrot.slane %v2907, 4
    %v2909 = vadd.f32 %v2907, %v2908
    %v2910 = vrot.slane %v2909, 2
    %v2911 = vadd.f32 %v2909, %v2910
    %v2912 = vrot.slane %v2911, 1
    %v2913 = vadd.f32 %v2911, %v2912
    %v2914 = vadd.f32 %v2913, 1.0
    %v2915 = vmul.f32 %v2914, 0.5
    %v2916 = vfloor.f32 %v2915
    %v2918 = vsel %vm2102, %v2861, 0
    %v2921 = vsel %vm2102, %v2862, 0
    %v2924 = vsel %vm2102, %v2863, 0
    %v2927 = vsel %vm2102, %v2864, 0
    %v2930 = vsel %vm2102, %v2865, 0
    %v2933 = vsel %vm2102, %v2866, 0
    %v2936 = vsel %vm2102, %v2867, 0
    %v2939 = vsel %vm2102, %v2868, 0
    %v2942 = vsel %vm2102, %v2869, 0
    %v2945 = vsel %vm2102, %v2870, 0
    %v2948 = vsel %vm2102, %v2871, 0
    %v2951 = vsel %vm2102, %v2872, 0
    %v2954 = vsel %vm2102, %v2873, 0
    %v2957 = vsel %vm2102, %v2874, 0
    %v2960 = vsel %vm2102, %v2875, 0
    %v2963 = vsel %vm2102, %v2876, 0
    %2965 = vmatpush.xpose.msra.mxu0 %v2963
    %2966 = vmatpush.xpose.msra.mxu0 %v2960
    %2967 = vmatpush.xpose.msra.mxu0 %v2957
    %2968 = vmatpush.xpose.msra.mxu0 %v2954
    %2969 = vmatpush.xpose.msra.mxu0 %v2951
    %2970 = vmatpush.xpose.msra.mxu0 %v2948
    %2971 = vmatpush.xpose.msra.mxu0 %v2945
    %2972 = vmatpush.xpose.msra.mxu0 %v2942
    %2973 = vmatpush.xpose.msra.mxu0 %v2939
    %2974 = vmatpush.xpose.msra.mxu0 %v2936
    %2975 = vmatpush.xpose.msra.mxu0 %v2933
    %2976 = vmatpush.xpose.msra.mxu0 %v2930
    %2977 = vmatpush.xpose.msra.mxu0 %v2927
    %2978 = vmatpush.xpose.msra.mxu0 %v2924
    %2979 = vmatpush.xpose.msra.mxu0 %v2921
    %2980 = vmatpush.xpose.msra.mxu0 %v2918
    %2981 = vmatmul.f32.gmra.mxu0 %v2104
    %v2982 = vpop.f32.mrf.mxu0
    %v2983 = vadd.f32 0.0, %v2982
    %2984 = vmatmul.f32.gmra.mxu0 %v2104
    %v2985 = vpop.f32.mrf.mxu0
    %v2986 = vadd.f32 0.0, %v2985
    %2987 = vmatmul.f32.gmra.mxu0 %v2104
    %v2988 = vpop.f32.mrf.mxu0
    %v2989 = vadd.f32 0.0, %v2988
    %2990 = vmatmul.f32.gmra.mxu0 %v2104
    %v2991 = vpop.f32.mrf.mxu0
    %v2992 = vadd.f32 0.0, %v2991
    %2993 = vmatmul.f32.gmra.mxu0 %v2104
    %v2994 = vpop.f32.mrf.mxu0
    %v2995 = vadd.f32 0.0, %v2994
    %2996 = vmatmul.f32.gmra.mxu0 %v2104
    %v2997 = vpop.f32.mrf.mxu0
    %v2998 = vadd.f32 0.0, %v2997
    %2999 = vmatmul.f32.gmra.mxu0 %v2104
    %v3000 = vpop.f32.mrf.mxu0
    %v3001 = vadd.f32 0.0, %v3000
    %3002 = vmatmul.f32.gmra.mxu0 %v2104
    %v3003 = vpop.f32.mrf.mxu0
    %v3004 = vadd.f32 0.0, %v3003
    %3005 = vmatmul.f32.gmra.mxu0 %v2104
    %v3006 = vpop.f32.mrf.mxu0
    %v3007 = vadd.f32 0.0, %v3006
    %3008 = vmatmul.f32.gmra.mxu0 %v2104
    %v3009 = vpop.f32.mrf.mxu0
    %v3010 = vadd.f32 0.0, %v3009
    %3011 = vmatmul.f32.gmra.mxu0 %v2104
    %v3012 = vpop.f32.mrf.mxu0
    %v3013 = vadd.f32 0.0, %v3012
    %3014 = vmatmul.f32.gmra.mxu0 %v2104
    %v3015 = vpop.f32.mrf.mxu0
    %v3016 = vadd.f32 0.0, %v3015
    %3017 = vmatmul.f32.gmra.mxu0 %v2104
    %v3018 = vpop.f32.mrf.mxu0
    %v3019 = vadd.f32 0.0, %v3018
    %3020 = vmatmul.f32.gmra.mxu0 %v2104
    %v3021 = vpop.f32.mrf.mxu0
    %v3022 = vadd.f32 0.0, %v3021
    %3023 = vmatmul.f32.gmra.mxu0 %v2104
    %v3024 = vpop.f32.mrf.mxu0
    %v3025 = vadd.f32 0.0, %v3024
    %3026 = vmatmul.f32.gmra.mxu0 %v2104
    %v3027 = vpop.f32.mrf.mxu0
    %v3028 = vadd.f32 0.0, %v3027
    %3029 = vdwg.mxu0
    %v3030 = vlaneseq
    %v3031 = vshrl.u32 %v3030, 7
    %v3032 = vadd.s32 %v3031, 8
    %v3033 = vadd.s32 %v3031, 16
    %v3034 = vadd.s32 %v3031, 24
    %v3035 = vadd.s32 %v3031, 32
    %v3036 = vadd.s32 %v3031, 40
    %v3037 = vadd.s32 %v3031, 48
    %v3038 = vadd.s32 %v3031, 56
    %v3039 = vadd.s32 %v3031, 64
    %v3040 = vadd.s32 %v3031, 72
    %v3041 = vadd.s32 %v3031, 80
    %v3042 = vadd.s32 %v3031, 88
    %v3043 = vadd.s32 %v3031, 96
    %v3044 = vadd.s32 %v3031, 104
    %v3045 = vadd.s32 %v3031, 112
    %v3046 = vadd.s32 %v3031, 120
    %v3047 = vlaneseq
    %v3048 = vand.u32 %v3047, 127
    %3049 = vset.pattern.permute.xlu0 0
    %3050 = vperm.xlu0 %3049, %v2861
    %v3051 = vpop.permute.xlu0 %3050
    %3053 = vset.pattern.permute.xlu0 0
    %3054 = vperm.xlu0 %3053, %v2862
    %v3055 = vpop.permute.xlu0 %3054
    %3057 = vset.pattern.permute.xlu0 0
    %3058 = vperm.xlu0 %3057, %v2863
    %v3059 = vpop.permute.xlu0 %3058
    %3061 = vset.pattern.permute.xlu0 0
    %3062 = vperm.xlu0 %3061, %v2864
    %v3063 = vpop.permute.xlu0 %3062
    %3065 = vset.pattern.permute.xlu0 0
    %3066 = vperm.xlu0 %3065, %v2865
    %v3067 = vpop.permute.xlu0 %3066
    %3069 = vset.pattern.permute.xlu0 0
    %3070 = vperm.xlu0 %3069, %v2866
    %v3071 = vpop.permute.xlu0 %3070
    %3073 = vset.pattern.permute.xlu0 0
    %3074 = vperm.xlu0 %3073, %v2867
    %v3075 = vpop.permute.xlu0 %3074
    %3077 = vset.pattern.permute.xlu0 0
    %3078 = vperm.xlu0 %3077, %v2868
    %v3079 = vpop.permute.xlu0 %3078
    %3081 = vset.pattern.permute.xlu0 0
    %3082 = vperm.xlu0 %3081, %v2869
    %v3083 = vpop.permute.xlu0 %3082
    %3085 = vset.pattern.permute.xlu0 0
    %3086 = vperm.xlu0 %3085, %v2870
    %v3087 = vpop.permute.xlu0 %3086
    %3089 = vset.pattern.permute.xlu0 0
    %3090 = vperm.xlu0 %3089, %v2871
    %v3091 = vpop.permute.xlu0 %3090
    %3093 = vset.pattern.permute.xlu0 0
    %3094 = vperm.xlu0 %3093, %v2872
    %v3095 = vpop.permute.xlu0 %3094
    %3097 = vset.pattern.permute.xlu0 0
    %3098 = vperm.xlu0 %3097, %v2873
    %v3099 = vpop.permute.xlu0 %3098
    %3101 = vset.pattern.permute.xlu0 0
    %3102 = vperm.xlu0 %3101, %v2874
    %v3103 = vpop.permute.xlu0 %3102
    %3105 = vset.pattern.permute.xlu0 0
    %3106 = vperm.xlu0 %3105, %v2875
    %v3107 = vpop.permute.xlu0 %3106
    %3109 = vset.pattern.permute.xlu0 0
    %3110 = vperm.xlu0 %3109, %v2876
    %v3111 = vpop.permute.xlu0 %3110
    %vm3113 = vcmp.gt.f32.partialorder %v2983, %v3051
    %vm3114 = vcmp.gt.f32.partialorder %v2986, %v3055
    %vm3115 = vcmp.gt.f32.partialorder %v2989, %v3059
    %vm3116 = vcmp.gt.f32.partialorder %v2992, %v3063
    %vm3117 = vcmp.gt.f32.partialorder %v2995, %v3067
    %vm3118 = vcmp.gt.f32.partialorder %v2998, %v3071
    %vm3119 = vcmp.gt.f32.partialorder %v3001, %v3075
    %vm3120 = vcmp.gt.f32.partialorder %v3004, %v3079
    %vm3121 = vcmp.gt.f32.partialorder %v3007, %v3083
    %vm3122 = vcmp.gt.f32.partialorder %v3010, %v3087
    %vm3123 = vcmp.gt.f32.partialorder %v3013, %v3091
    %vm3124 = vcmp.gt.f32.partialorder %v3016, %v3095
    %vm3125 = vcmp.gt.f32.partialorder %v3019, %v3099
    %vm3126 = vcmp.gt.f32.partialorder %v3022, %v3103
    %vm3127 = vcmp.gt.f32.partialorder %v3025, %v3107
    %vm3128 = vcmp.gt.f32.partialorder %v3028, %v3111
    %vm3129 = vcmp.eq.f32.partialorder %v2983, %v3051
    %vm3130 = vcmp.eq.f32.partialorder %v2986, %v3055
    %vm3131 = vcmp.eq.f32.partialorder %v2989, %v3059
    %vm3132 = vcmp.eq.f32.partialorder %v2992, %v3063
    %vm3133 = vcmp.eq.f32.partialorder %v2995, %v3067
    %vm3134 = vcmp.eq.f32.partialorder %v2998, %v3071
    %vm3135 = vcmp.eq.f32.partialorder %v3001, %v3075
    %vm3136 = vcmp.eq.f32.partialorder %v3004, %v3079
    %vm3137 = vcmp.eq.f32.partialorder %v3007, %v3083
    %vm3138 = vcmp.eq.f32.partialorder %v3010, %v3087
    %vm3139 = vcmp.eq.f32.partialorder %v3013, %v3091
    %vm3140 = vcmp.eq.f32.partialorder %v3016, %v3095
    %vm3141 = vcmp.eq.f32.partialorder %v3019, %v3099
    %vm3142 = vcmp.eq.f32.partialorder %v3022, %v3103
    %vm3143 = vcmp.eq.f32.partialorder %v3025, %v3107
    %vm3144 = vcmp.eq.f32.partialorder %v3028, %v3111
    %vm3145 = vcmp.lt.s32.totalorder %v3048, %v3031
    %vm3146 = vcmp.lt.s32.totalorder %v3048, %v3032
    %vm3147 = vcmp.lt.s32.totalorder %v3048, %v3033
    %vm3148 = vcmp.lt.s32.totalorder %v3048, %v3034
    %vm3149 = vcmp.lt.s32.totalorder %v3048, %v3035
    %vm3150 = vcmp.lt.s32.totalorder %v3048, %v3036
    %vm3151 = vcmp.lt.s32.totalorder %v3048, %v3037
    %vm3152 = vcmp.lt.s32.totalorder %v3048, %v3038
    %vm3153 = vcmp.lt.s32.totalorder %v3048, %v3039
    %vm3154 = vcmp.lt.s32.totalorder %v3048, %v3040
    %vm3155 = vcmp.lt.s32.totalorder %v3048, %v3041
    %vm3156 = vcmp.lt.s32.totalorder %v3048, %v3042
    %vm3157 = vcmp.lt.s32.totalorder %v3048, %v3043
    %vm3158 = vcmp.lt.s32.totalorder %v3048, %v3044
    %vm3159 = vcmp.lt.s32.totalorder %v3048, %v3045
    %vm3160 = vcmp.lt.s32.totalorder %v3048, %v3046
    %vm3161 = vmand %vm3129, %vm3145
    %vm3162 = vmand %vm3130, %vm3146
    %vm3163 = vmand %vm3131, %vm3147
    %vm3164 = vmand %vm3132, %vm3148
    %vm3165 = vmand %vm3133, %vm3149
    %vm3166 = vmand %vm3134, %vm3150
    %vm3167 = vmand %vm3135, %vm3151
    %vm3168 = vmand %vm3136, %vm3152
    %vm3169 = vmand %vm3137, %vm3153
    %vm3170 = vmand %vm3138, %vm3154
    %vm3171 = vmand %vm3139, %vm3155
    %vm3172 = vmand %vm3140, %vm3156
    %vm3173 = vmand %vm3141, %vm3157
    %vm3174 = vmand %vm3142, %vm3158
    %vm3175 = vmand %vm3143, %vm3159
    %vm3176 = vmand %vm3144, %vm3160
    %vm3177 = vmor %vm3113, %vm3161
    %vm3178 = vmor %vm3114, %vm3162
    %vm3179 = vmor %vm3115, %vm3163
    %vm3180 = vmor %vm3116, %vm3164
    %vm3181 = vmor %vm3117, %vm3165
    %vm3182 = vmor %vm3118, %vm3166
    %vm3183 = vmor %vm3119, %vm3167
    %vm3184 = vmor %vm3120, %vm3168
    %vm3185 = vmor %vm3121, %vm3169
    %vm3186 = vmor %vm3122, %vm3170
    %vm3187 = vmor %vm3123, %vm3171
    %vm3188 = vmor %vm3124, %vm3172
    %vm3189 = vmor %vm3125, %vm3173
    %vm3190 = vmor %vm3126, %vm3174
    %vm3191 = vmor %vm3127, %vm3175
    %vm3192 = vmor %vm3128, %vm3176
    %v3193 = vsel %vm3177, 1, 0
    %v3194 = vsel %vm3178, 1, 0
    %v3195 = vsel %vm3179, 1, 0
    %v3196 = vsel %vm3180, 1, 0
    %v3197 = vsel %vm3181, 1, 0
    %v3198 = vsel %vm3182, 1, 0
    %v3199 = vsel %vm3183, 1, 0
    %v3200 = vsel %vm3184, 1, 0
    %v3201 = vsel %vm3185, 1, 0
    %v3202 = vsel %vm3186, 1, 0
    %v3203 = vsel %vm3187, 1, 0
    %v3204 = vsel %vm3188, 1, 0
    %v3205 = vsel %vm3189, 1, 0
    %v3206 = vsel %vm3190, 1, 0
    %v3207 = vsel %vm3191, 1, 0
    %v3208 = vsel %vm3192, 1, 0
    %v3209 = vcvt.s32.f32 %v3193
    %v3210 = vcvt.s32.f32 %v3194
    %v3211 = vcvt.s32.f32 %v3195
    %v3212 = vcvt.s32.f32 %v3196
    %v3213 = vcvt.s32.f32 %v3197
    %v3214 = vcvt.s32.f32 %v3198
    %v3215 = vcvt.s32.f32 %v3199
    %v3216 = vcvt.s32.f32 %v3200
    %v3217 = vcvt.s32.f32 %v3201
    %v3218 = vcvt.s32.f32 %v3202
    %v3219 = vcvt.s32.f32 %v3203
    %v3220 = vcvt.s32.f32 %v3204
    %v3221 = vcvt.s32.f32 %v3205
    %v3222 = vcvt.s32.f32 %v3206
    %v3223 = vcvt.s32.f32 %v3207
    %v3224 = vcvt.s32.f32 %v3208
    %3225 = vmatpush.msra.mxu0 %v81
    %3226 = vmatpush.msra.mxu0 %v80
    %3227 = vmatpush.msra.mxu0 %v79
    %3228 = vmatpush.msra.mxu0 %v78
    %3229 = vmatpush.msra.mxu0 %v77
    %3230 = vmatpush.msra.mxu0 %v76
    %3231 = vmatpush.msra.mxu0 %v75
    %3232 = vmatpush.msra.mxu0 %v74
    %3233 = vmatpush.msra.mxu0 %v73
    %3234 = vmatpush.msra.mxu0 %v72
    %3235 = vmatpush.msra.mxu0 %v71
    %3236 = vmatpush.msra.mxu0 %v70
    %3237 = vmatpush.msra.mxu0 %v69
    %3238 = vmatpush.msra.mxu0 %v68
    %3239 = vmatpush.msra.mxu0 %v67
    %3240 = vmatpush.msra.mxu0 %v66
    %3241 = vmatmul.f32.gmra.mxu0 %v3209
    %v3242 = vpop.f32.mrf.mxu0
    %v3243 = vadd.f32 0.0, %v3242
    %3244 = vmatmul.f32.gmra.mxu0 %v3210
    %v3245 = vpop.f32.mrf.mxu0
    %v3246 = vadd.f32 0.0, %v3245
    %3247 = vmatmul.f32.gmra.mxu0 %v3211
    %v3248 = vpop.f32.mrf.mxu0
    %v3249 = vadd.f32 0.0, %v3248
    %3250 = vmatmul.f32.gmra.mxu0 %v3212
    %v3251 = vpop.f32.mrf.mxu0
    %v3252 = vadd.f32 0.0, %v3251
    %3253 = vmatmul.f32.gmra.mxu0 %v3213
    %v3254 = vpop.f32.mrf.mxu0
    %v3255 = vadd.f32 0.0, %v3254
    %3256 = vmatmul.f32.gmra.mxu0 %v3214
    %v3257 = vpop.f32.mrf.mxu0
    %v3258 = vadd.f32 0.0, %v3257
    %3259 = vmatmul.f32.gmra.mxu0 %v3215
    %v3260 = vpop.f32.mrf.mxu0
    %v3261 = vadd.f32 0.0, %v3260
    %3262 = vmatmul.f32.gmra.mxu0 %v3216
    %v3263 = vpop.f32.mrf.mxu0
    %v3264 = vadd.f32 0.0, %v3263
    %3265 = vmatmul.f32.gmra.mxu0 %v3217
    %v3266 = vpop.f32.mrf.mxu0
    %v3267 = vadd.f32 0.0, %v3266
    %3268 = vmatmul.f32.gmra.mxu0 %v3218
    %v3269 = vpop.f32.mrf.mxu0
    %v3270 = vadd.f32 0.0, %v3269
    %3271 = vmatmul.f32.gmra.mxu0 %v3219
    %v3272 = vpop.f32.mrf.mxu0
    %v3273 = vadd.f32 0.0, %v3272
    %3274 = vmatmul.f32.gmra.mxu0 %v3220
    %v3275 = vpop.f32.mrf.mxu0
    %v3276 = vadd.f32 0.0, %v3275
    %3277 = vmatmul.f32.gmra.mxu0 %v3221
    %v3278 = vpop.f32.mrf.mxu0
    %v3279 = vadd.f32 0.0, %v3278
    %3280 = vmatmul.f32.gmra.mxu0 %v3222
    %v3281 = vpop.f32.mrf.mxu0
    %v3282 = vadd.f32 0.0, %v3281
    %3283 = vmatmul.f32.gmra.mxu0 %v3223
    %v3284 = vpop.f32.mrf.mxu0
    %v3285 = vadd.f32 0.0, %v3284
    %3286 = vmatmul.f32.gmra.mxu0 %v3224
    %v3287 = vpop.f32.mrf.mxu0
    %v3288 = vadd.f32 0.0, %v3287
    %3289 = vdwg.mxu0
    %vm3290 = vcmp.lt.f32.partialorder %v3243, %v2916
    %vm3291 = vcmp.lt.f32.partialorder %v3246, %v2916
    %vm3292 = vcmp.lt.f32.partialorder %v3249, %v2916
    %vm3293 = vcmp.lt.f32.partialorder %v3252, %v2916
    %vm3294 = vcmp.lt.f32.partialorder %v3255, %v2916
    %vm3295 = vcmp.lt.f32.partialorder %v3258, %v2916
    %vm3296 = vcmp.lt.f32.partialorder %v3261, %v2916
    %vm3297 = vcmp.lt.f32.partialorder %v3264, %v2916
    %vm3298 = vcmp.lt.f32.partialorder %v3267, %v2916
    %vm3299 = vcmp.lt.f32.partialorder %v3270, %v2916
    %vm3300 = vcmp.lt.f32.partialorder %v3273, %v2916
    %vm3301 = vcmp.lt.f32.partialorder %v3276, %v2916
    %vm3302 = vcmp.lt.f32.partialorder %v3279, %v2916
    %vm3303 = vcmp.lt.f32.partialorder %v3282, %v2916
    %vm3304 = vcmp.lt.f32.partialorder %v3285, %v2916
    %vm3305 = vcmp.lt.f32.partialorder %v3288, %v2916
    %v3306 = vsel %vm3290, 1, 0
    %v3307 = vsel %vm3291, 1, 0
    %v3308 = vsel %vm3292, 1, 0
    %v3309 = vsel %vm3293, 1, 0
    %v3310 = vsel %vm3294, 1, 0
    %v3311 = vsel %vm3295, 1, 0
    %v3312 = vsel %vm3296, 1, 0
    %v3313 = vsel %vm3297, 1, 0
    %v3314 = vsel %vm3298, 1, 0
    %v3315 = vsel %vm3299, 1, 0
    %v3316 = vsel %vm3300, 1, 0
    %v3317 = vsel %vm3301, 1, 0
    %v3318 = vsel %vm3302, 1, 0
    %v3319 = vsel %vm3303, 1, 0
    %v3320 = vsel %vm3304, 1, 0
    %v3321 = vsel %vm3305, 1, 0
    %v3322 = vcvt.s32.f32 %v3306
    %v3323 = vcvt.s32.f32 %v3307
    %v3324 = vcvt.s32.f32 %v3308
    %v3325 = vcvt.s32.f32 %v3309
    %v3326 = vcvt.s32.f32 %v3310
    %v3327 = vcvt.s32.f32 %v3311
    %v3328 = vcvt.s32.f32 %v3312
    %v3329 = vcvt.s32.f32 %v3313
    %v3330 = vcvt.s32.f32 %v3314
    %v3331 = vcvt.s32.f32 %v3315
    %v3332 = vcvt.s32.f32 %v3316
    %v3333 = vcvt.s32.f32 %v3317
    %v3334 = vcvt.s32.f32 %v3318
    %v3335 = vcvt.s32.f32 %v3319
    %v3336 = vcvt.s32.f32 %v3320
    %v3337 = vcvt.s32.f32 %v3321
    %v3338 = vmul.f32 %v66, %v3322
    %v3339 = vmul.f32 %v67, %v3323
    %v3340 = vmul.f32 %v68, %v3324
    %v3341 = vmul.f32 %v69, %v3325
    %v3342 = vmul.f32 %v70, %v3326
    %v3343 = vmul.f32 %v71, %v3327
    %v3344 = vmul.f32 %v72, %v3328
    %v3345 = vmul.f32 %v73, %v3329
    %v3346 = vmul.f32 %v74, %v3330
    %v3347 = vmul.f32 %v75, %v3331
    %v3348 = vmul.f32 %v76, %v3332
    %v3349 = vmul.f32 %v77, %v3333
    %v3350 = vmul.f32 %v78, %v3334
    %v3351 = vmul.f32 %v79, %v3335
    %v3352 = vmul.f32 %v80, %v3336
    %v3353 = vmul.f32 %v81, %v3337
    %v3354 = vtanh.pop %v2861
    %v3355 = vtanh.pop %v2862
    %v3356 = vtanh.pop %v2863
    %v3357 = vtanh.pop %v2864
    %v3358 = vtanh.pop %v2865
    %v3359 = vtanh.pop %v2866
    %v3360 = vtanh.pop %v2867
    %v3361 = vtanh.pop %v2868
    %v3362 = vtanh.pop %v2869
    %v3363 = vtanh.pop %v2870
    %v3364 = vtanh.pop %v2871
    %v3365 = vtanh.pop %v2872
    %v3366 = vtanh.pop %v2873
    %v3367 = vtanh.pop %v2874
    %v3368 = vtanh.pop %v2875
    %v3369 = vtanh.pop %v2876
    %3371 = vset.pattern.permute.xlu0 0
    %3372 = vperm.xlu0 %3371, %v3354
    %v3373 = vpop.permute.xlu0 %3372
    %3376 = vset.pattern.permute.xlu0 0
    %3377 = vperm.xlu0 %3376, %v3355
    %v3378 = vpop.permute.xlu0 %3377
    %3381 = vset.pattern.permute.xlu0 0
    %3382 = vperm.xlu0 %3381, %v3356
    %v3383 = vpop.permute.xlu0 %3382
    %3386 = vset.pattern.permute.xlu0 0
    %3387 = vperm.xlu0 %3386, %v3357
    %v3388 = vpop.permute.xlu0 %3387
    %3391 = vset.pattern.permute.xlu0 0
    %3392 = vperm.xlu0 %3391, %v3358
    %v3393 = vpop.permute.xlu0 %3392
    %3396 = vset.pattern.permute.xlu0 0
    %3397 = vperm.xlu0 %3396, %v3359
    %v3398 = vpop.permute.xlu0 %3397
    %3401 = vset.pattern.permute.xlu0 0
    %3402 = vperm.xlu0 %3401, %v3360
    %v3403 = vpop.permute.xlu0 %3402
    %3406 = vset.pattern.permute.xlu0 0
    %3407 = vperm.xlu0 %3406, %v3361
    %v3408 = vpop.permute.xlu0 %3407
    %3411 = vset.pattern.permute.xlu0 0
    %3412 = vperm.xlu0 %3411, %v3362
    %v3413 = vpop.permute.xlu0 %3412
    %3416 = vset.pattern.permute.xlu0 0
    %3417 = vperm.xlu0 %3416, %v3363
    %v3418 = vpop.permute.xlu0 %3417
    %3421 = vset.pattern.permute.xlu0 0
    %3422 = vperm.xlu0 %3421, %v3364
    %v3423 = vpop.permute.xlu0 %3422
    %3426 = vset.pattern.permute.xlu0 0
    %3427 = vperm.xlu0 %3426, %v3365
    %v3428 = vpop.permute.xlu0 %3427
    %3431 = vset.pattern.permute.xlu0 0
    %3432 = vperm.xlu0 %3431, %v3366
    %v3433 = vpop.permute.xlu0 %3432
    %3436 = vset.pattern.permute.xlu0 0
    %3437 = vperm.xlu0 %3436, %v3367
    %v3438 = vpop.permute.xlu0 %3437
    %3441 = vset.pattern.permute.xlu0 0
    %3442 = vperm.xlu0 %3441, %v3368
    %v3443 = vpop.permute.xlu0 %3442
    %3446 = vset.pattern.permute.xlu0 0
    %3447 = vperm.xlu0 %3446, %v3369
    %v3448 = vpop.permute.xlu0 %3447
    %v3450 = vmul.f32 %v1699, %v3373
    %v3451 = vmul.f32 %v1700, %v3378
    %v3452 = vmul.f32 %v1701, %v3383
    %v3453 = vmul.f32 %v1702, %v3388
    %v3454 = vmul.f32 %v1703, %v3393
    %v3455 = vmul.f32 %v1704, %v3398
    %v3456 = vmul.f32 %v1705, %v3403
    %v3457 = vmul.f32 %v1706, %v3408
    %v3458 = vmul.f32 %v1707, %v3413
    %v3459 = vmul.f32 %v1708, %v3418
    %v3460 = vmul.f32 %v1709, %v3423
    %v3461 = vmul.f32 %v1710, %v3428
    %v3462 = vmul.f32 %v1711, %v3433
    %v3463 = vmul.f32 %v1712, %v3438
    %v3464 = vmul.f32 %v1713, %v3443
    %v3465 = vmul.f32 %v1714, %v3448
    %3467 = vset.pattern.permute.xlu0 0
    %3468 = vperm.xlu0 %3467, %v3338
    %v3469 = vpop.permute.xlu0 %3468
    %3472 = vset.pattern.permute.xlu0 0
    %3473 = vperm.xlu0 %3472, %v3339
    %v3474 = vpop.permute.xlu0 %3473
    %3477 = vset.pattern.permute.xlu0 0
    %3478 = vperm.xlu0 %3477, %v3340
    %v3479 = vpop.permute.xlu0 %3478
    %3482 = vset.pattern.permute.xlu0 0
    %3483 = vperm.xlu0 %3482, %v3341
    %v3484 = vpop.permute.xlu0 %3483
    %3487 = vset.pattern.permute.xlu0 0
    %3488 = vperm.xlu0 %3487, %v3342
    %v3489 = vpop.permute.xlu0 %3488
    %3492 = vset.pattern.permute.xlu0 0
    %3493 = vperm.xlu0 %3492, %v3343
    %v3494 = vpop.permute.xlu0 %3493
    %3497 = vset.pattern.permute.xlu0 0
    %3498 = vperm.xlu0 %3497, %v3344
    %v3499 = vpop.permute.xlu0 %3498
    %3502 = vset.pattern.permute.xlu0 0
    %3503 = vperm.xlu0 %3502, %v3345
    %v3504 = vpop.permute.xlu0 %3503
    %3507 = vset.pattern.permute.xlu0 0
    %3508 = vperm.xlu0 %3507, %v3346
    %v3509 = vpop.permute.xlu0 %3508
    %3512 = vset.pattern.permute.xlu0 0
    %3513 = vperm.xlu0 %3512, %v3347
    %v3514 = vpop.permute.xlu0 %3513
    %3517 = vset.pattern.permute.xlu0 0
    %3518 = vperm.xlu0 %3517, %v3348
    %v3519 = vpop.permute.xlu0 %3518
    %3522 = vset.pattern.permute.xlu0 0
    %3523 = vperm.xlu0 %3522, %v3349
    %v3524 = vpop.permute.xlu0 %3523
    %3527 = vset.pattern.permute.xlu0 0
    %3528 = vperm.xlu0 %3527, %v3350
    %v3529 = vpop.permute.xlu0 %3528
    %3532 = vset.pattern.permute.xlu0 0
    %3533 = vperm.xlu0 %3532, %v3351
    %v3534 = vpop.permute.xlu0 %3533
    %3537 = vset.pattern.permute.xlu0 0
    %3538 = vperm.xlu0 %3537, %v3352
    %v3539 = vpop.permute.xlu0 %3538
    %3542 = vset.pattern.permute.xlu0 0
    %3543 = vperm.xlu0 %3542, %v3353
    %v3544 = vpop.permute.xlu0 %3543
    %v3546 = vmul.f32 %v3450, %v3469
    %v3547 = vmul.f32 %v3451, %v3474
    %v3548 = vmul.f32 %v3452, %v3479
    %v3549 = vmul.f32 %v3453, %v3484
    %v3550 = vmul.f32 %v3454, %v3489
    %v3551 = vmul.f32 %v3455, %v3494
    %v3552 = vmul.f32 %v3456, %v3499
    %v3553 = vmul.f32 %v3457, %v3504
    %v3554 = vmul.f32 %v3458, %v3509
    %v3555 = vmul.f32 %v3459, %v3514
    %v3556 = vmul.f32 %v3460, %v3519
    %v3557 = vmul.f32 %v3461, %v3524
    %v3558 = vmul.f32 %v3462, %v3529
    %v3559 = vmul.f32 %v3463, %v3534
    %v3560 = vmul.f32 %v3464, %v3539
    %v3561 = vmul.f32 %v3465, %v3544
    %3562 = vmatpush.msra.mxu0 %v3353
    %3563 = vmatpush.msra.mxu0 %v3352
    %3564 = vmatpush.msra.mxu0 %v3351
    %3565 = vmatpush.msra.mxu0 %v3350
    %3566 = vmatpush.msra.mxu0 %v3349
    %3567 = vmatpush.msra.mxu0 %v3348
    %3568 = vmatpush.msra.mxu0 %v3347
    %3569 = vmatpush.msra.mxu0 %v3346
    %3570 = vmatpush.msra.mxu0 %v3345
    %3571 = vmatpush.msra.mxu0 %v3344
    %3572 = vmatpush.msra.mxu0 %v3343
    %3573 = vmatpush.msra.mxu0 %v3342
    %3574 = vmatpush.msra.mxu0 %v3341
    %3575 = vmatpush.msra.mxu0 %v3340
    %3576 = vmatpush.msra.mxu0 %v3339
    %3577 = vmatpush.msra.mxu0 %v3338
    %3578 = vmatmul.f32.gmra.mxu0 %v646
    %v3579 = vpop.f32.mrf.mxu0
    %v3580 = vadd.f32 0.0, %v3579
    %3581 = vmatmul.f32.gmra.mxu0 %v647
    %v3582 = vpop.f32.mrf.mxu0
    %v3583 = vadd.f32 0.0, %v3582
    %3584 = vmatmul.f32.gmra.mxu0 %v648
    %v3585 = vpop.f32.mrf.mxu0
    %v3586 = vadd.f32 0.0, %v3585
    %3587 = vmatmul.f32.gmra.mxu0 %v649
    %v3588 = vpop.f32.mrf.mxu0
    %v3589 = vadd.f32 0.0, %v3588
    %3590 = vmatmul.f32.gmra.mxu0 %v650
    %v3591 = vpop.f32.mrf.mxu0
    %v3592 = vadd.f32 0.0, %v3591
    %3593 = vmatmul.f32.gmra.mxu0 %v651
    %v3594 = vpop.f32.mrf.mxu0
    %v3595 = vadd.f32 0.0, %v3594
    %3596 = vmatmul.f32.gmra.mxu0 %v652
    %v3597 = vpop.f32.mrf.mxu0
    %v3598 = vadd.f32 0.0, %v3597
    %3599 = vmatmul.f32.gmra.mxu0 %v653
    %v3600 = vpop.f32.mrf.mxu0
    %v3601 = vadd.f32 0.0, %v3600
    %3602 = vmatmul.f32.gmra.mxu0 %v654
    %v3603 = vpop.f32.mrf.mxu0
    %v3604 = vadd.f32 0.0, %v3603
    %3605 = vmatmul.f32.gmra.mxu0 %v655
    %v3606 = vpop.f32.mrf.mxu0
    %v3607 = vadd.f32 0.0, %v3606
    %3608 = vmatmul.f32.gmra.mxu0 %v656
    %v3609 = vpop.f32.mrf.mxu0
    %v3610 = vadd.f32 0.0, %v3609
    %3611 = vmatmul.f32.gmra.mxu0 %v657
    %v3612 = vpop.f32.mrf.mxu0
    %v3613 = vadd.f32 0.0, %v3612
    %3614 = vmatmul.f32.gmra.mxu0 %v658
    %v3615 = vpop.f32.mrf.mxu0
    %v3616 = vadd.f32 0.0, %v3615
    %3617 = vmatmul.f32.gmra.mxu0 %v659
    %v3618 = vpop.f32.mrf.mxu0
    %v3619 = vadd.f32 0.0, %v3618
    %3620 = vmatmul.f32.gmra.mxu0 %v660
    %v3621 = vpop.f32.mrf.mxu0
    %v3622 = vadd.f32 0.0, %v3621
    %3623 = vmatmul.f32.gmra.mxu0 %v661
    %v3624 = vpop.f32.mrf.mxu0
    %v3625 = vadd.f32 0.0, %v3624
    %3626 = vdwg.mxu0
    %3627 = vmatpush.msra.mxu0 %v3353
    %3628 = vmatpush.msra.mxu0 %v3352
    %3629 = vmatpush.msra.mxu0 %v3351
    %3630 = vmatpush.msra.mxu0 %v3350
    %3631 = vmatpush.msra.mxu0 %v3349
    %3632 = vmatpush.msra.mxu0 %v3348
    %3633 = vmatpush.msra.mxu0 %v3347
    %3634 = vmatpush.msra.mxu0 %v3346
    %3635 = vmatpush.msra.mxu0 %v3345
    %3636 = vmatpush.msra.mxu0 %v3344
    %3637 = vmatpush.msra.mxu0 %v3343
    %3638 = vmatpush.msra.mxu0 %v3342
    %3639 = vmatpush.msra.mxu0 %v3341
    %3640 = vmatpush.msra.mxu0 %v3340
    %3641 = vmatpush.msra.mxu0 %v3339
    %3642 = vmatpush.msra.mxu0 %v3338
    %3643 = vmatmul.f32.gmra.mxu0 %v662
    %v3644 = vpop.f32.mrf.mxu0
    %v3645 = vadd.f32 0.0, %v3644
    %3646 = vmatmul.f32.gmra.mxu0 %v663
    %v3647 = vpop.f32.mrf.mxu0
    %v3648 = vadd.f32 0.0, %v3647
    %3649 = vmatmul.f32.gmra.mxu0 %v664
    %v3650 = vpop.f32.mrf.mxu0
    %v3651 = vadd.f32 0.0, %v3650
    %3652 = vmatmul.f32.gmra.mxu0 %v665
    %v3653 = vpop.f32.mrf.mxu0
    %v3654 = vadd.f32 0.0, %v3653
    %3655 = vmatmul.f32.gmra.mxu0 %v666
    %v3656 = vpop.f32.mrf.mxu0
    %v3657 = vadd.f32 0.0, %v3656
    %3658 = vmatmul.f32.gmra.mxu0 %v667
    %v3659 = vpop.f32.mrf.mxu0
    %v3660 = vadd.f32 0.0, %v3659
    %3661 = vmatmul.f32.gmra.mxu0 %v668
    %v3662 = vpop.f32.mrf.mxu0
    %v3663 = vadd.f32 0.0, %v3662
    %3664 = vmatmul.f32.gmra.mxu0 %v669
    %v3665 = vpop.f32.mrf.mxu0
    %v3666 = vadd.f32 0.0, %v3665
    %3667 = vmatmul.f32.gmra.mxu0 %v670
    %v3668 = vpop.f32.mrf.mxu0
    %v3669 = vadd.f32 0.0, %v3668
    %3670 = vmatmul.f32.gmra.mxu0 %v671
    %v3671 = vpop.f32.mrf.mxu0
    %v3672 = vadd.f32 0.0, %v3671
    %3673 = vmatmul.f32.gmra.mxu0 %v672
    %v3674 = vpop.f32.mrf.mxu0
    %v3675 = vadd.f32 0.0, %v3674
    %3676 = vmatmul.f32.gmra.mxu0 %v673
    %v3677 = vpop.f32.mrf.mxu0
    %v3678 = vadd.f32 0.0, %v3677
    %3679 = vmatmul.f32.gmra.mxu0 %v674
    %v3680 = vpop.f32.mrf.mxu0
    %v3681 = vadd.f32 0.0, %v3680
    %3682 = vmatmul.f32.gmra.mxu0 %v675
    %v3683 = vpop.f32.mrf.mxu0
    %v3684 = vadd.f32 0.0, %v3683
    %3685 = vmatmul.f32.gmra.mxu0 %v676
    %v3686 = vpop.f32.mrf.mxu0
    %v3687 = vadd.f32 0.0, %v3686
    %3688 = vmatmul.f32.gmra.mxu0 %v677
    %v3689 = vpop.f32.mrf.mxu0
    %v3690 = vadd.f32 0.0, %v3689
    %3691 = vdwg.mxu0
    %v3692 = vmul.f32 %v82, %v3580
    %v3693 = vmul.f32 %v83, %v3583
    %v3694 = vmul.f32 %v84, %v3586
    %v3695 = vmul.f32 %v85, %v3589
    %v3696 = vmul.f32 %v86, %v3592
    %v3697 = vmul.f32 %v87, %v3595
    %v3698 = vmul.f32 %v88, %v3598
    %v3699 = vmul.f32 %v89, %v3601
    %v3700 = vmul.f32 %v90, %v3604
    %v3701 = vmul.f32 %v91, %v3607
    %v3702 = vmul.f32 %v92, %v3610
    %v3703 = vmul.f32 %v93, %v3613
    %v3704 = vmul.f32 %v94, %v3616
    %v3705 = vmul.f32 %v95, %v3619
    %v3706 = vmul.f32 %v96, %v3622
    %v3707 = vmul.f32 %v97, %v3625
    %v3708 = vmul.f32 %v3692, %v3645
    %v3709 = vmul.f32 %v3693, %v3648
    %v3710 = vmul.f32 %v3694, %v3651
    %v3711 = vmul.f32 %v3695, %v3654
    %v3712 = vmul.f32 %v3696, %v3657
    %v3713 = vmul.f32 %v3697, %v3660
    %v3714 = vmul.f32 %v3698, %v3663
    %v3715 = vmul.f32 %v3699, %v3666
    %v3716 = vmul.f32 %v3700, %v3669
    %v3717 = vmul.f32 %v3701, %v3672
    %v3718 = vmul.f32 %v3702, %v3675
    %v3719 = vmul.f32 %v3703, %v3678
    %v3720 = vmul.f32 %v3704, %v3681
    %v3721 = vmul.f32 %v3705, %v3684
    %v3722 = vmul.f32 %v3706, %v3687
    %v3723 = vmul.f32 %v3707, %v3690
    %v3724 = vsel %vm2102, %v3338, 0.0
    %v3725 = vsel %vm2102, %v3339, 0.0
    %v3726 = vadd.f32 %v3724, %v3725
    %v3727 = vsel %vm2102, %v3340, 0.0
    %v3728 = vadd.f32 %v3726, %v3727
    %v3729 = vsel %vm2102, %v3341, 0.0
    %v3730 = vadd.f32 %v3728, %v3729
    %v3731 = vsel %vm2102, %v3342, 0.0
    %v3732 = vadd.f32 %v3730, %v3731
    %v3733 = vsel %vm2102, %v3343, 0.0
    %v3734 = vadd.f32 %v3732, %v3733
    %v3735 = vsel %vm2102, %v3344, 0.0
    %v3736 = vadd.f32 %v3734, %v3735
    %v3737 = vsel %vm2102, %v3345, 0.0
    %v3738 = vadd.f32 %v3736, %v3737
    %v3739 = vsel %vm2102, %v3346, 0.0
    %v3740 = vadd.f32 %v3738, %v3739
    %v3741 = vsel %vm2102, %v3347, 0.0
    %v3742 = vadd.f32 %v3740, %v3741
    %v3743 = vsel %vm2102, %v3348, 0.0
    %v3744 = vadd.f32 %v3742, %v3743
    %v3745 = vsel %vm2102, %v3349, 0.0
    %v3746 = vadd.f32 %v3744, %v3745
    %v3747 = vsel %vm2102, %v3350, 0.0
    %v3748 = vadd.f32 %v3746, %v3747
    %v3749 = vsel %vm2102, %v3351, 0.0
    %v3750 = vadd.f32 %v3748, %v3749
    %v3751 = vsel %vm2102, %v3352, 0.0
    %v3752 = vadd.f32 %v3750, %v3751
    %v3753 = vsel %vm2102, %v3353, 0.0
    %v3754 = vadd.f32 %v3752, %v3753
    %v3755 = vrot.slane %v3754, 4
    %v3756 = vadd.f32 %v3754, %v3755
    %v3757 = vrot.slane %v3756, 2
    %v3758 = vadd.f32 %v3756, %v3757
    %v3759 = vrot.slane %v3758, 1
    %v3760 = vadd.f32 %v3758, %v3759
    %vm3761 = vcmp.gt.f32.partialorder %v3338, 0.0
    %vm3762 = vcmp.gt.f32.partialorder %v3339, 0.0
    %vm3763 = vcmp.gt.f32.partialorder %v3340, 0.0
    %vm3764 = vcmp.gt.f32.partialorder %v3341, 0.0
    %vm3765 = vcmp.gt.f32.partialorder %v3342, 0.0
    %vm3766 = vcmp.gt.f32.partialorder %v3343, 0.0
    %vm3767 = vcmp.gt.f32.partialorder %v3344, 0.0
    %vm3768 = vcmp.gt.f32.partialorder %v3345, 0.0
    %vm3769 = vcmp.gt.f32.partialorder %v3346, 0.0
    %vm3770 = vcmp.gt.f32.partialorder %v3347, 0.0
    %vm3771 = vcmp.gt.f32.partialorder %v3348, 0.0
    %vm3772 = vcmp.gt.f32.partialorder %v3349, 0.0
    %vm3773 = vcmp.gt.f32.partialorder %v3350, 0.0
    %vm3774 = vcmp.gt.f32.partialorder %v3351, 0.0
    %vm3775 = vcmp.gt.f32.partialorder %v3352, 0.0
    %vm3776 = vcmp.gt.f32.partialorder %v3353, 0.0
    %v3777 = vsel %vm3761, 1, 0
    %v3778 = vsel %vm3762, 1, 0
    %v3779 = vsel %vm3763, 1, 0
    %v3780 = vsel %vm3764, 1, 0
    %v3781 = vsel %vm3765, 1, 0
    %v3782 = vsel %vm3766, 1, 0
    %v3783 = vsel %vm3767, 1, 0
    %v3784 = vsel %vm3768, 1, 0
    %v3785 = vsel %vm3769, 1, 0
    %v3786 = vsel %vm3770, 1, 0
    %v3787 = vsel %vm3771, 1, 0
    %v3788 = vsel %vm3772, 1, 0
    %v3789 = vsel %vm3773, 1, 0
    %v3790 = vsel %vm3774, 1, 0
    %v3791 = vsel %vm3775, 1, 0
    %v3792 = vsel %vm3776, 1, 0
    %3793 = vset.pattern.permute.xlu0 0
    %3794 = vperm.xlu0 %3793, %v3777
    %v3795 = vpop.permute.xlu0 %3794
    %3796 = vset.pattern.permute.xlu0 0
    %3797 = vperm.xlu0 %3796, %v3778
    %v3798 = vpop.permute.xlu0 %3797
    %3799 = vset.pattern.permute.xlu0 0
    %3800 = vperm.xlu0 %3799, %v3779
    %v3801 = vpop.permute.xlu0 %3800
    %3802 = vset.pattern.permute.xlu0 0
    %3803 = vperm.xlu0 %3802, %v3780
    %v3804 = vpop.permute.xlu0 %3803
    %3805 = vset.pattern.permute.xlu0 0
    %3806 = vperm.xlu0 %3805, %v3781
    %v3807 = vpop.permute.xlu0 %3806
    %3808 = vset.pattern.permute.xlu0 0
    %3809 = vperm.xlu0 %3808, %v3782
    %v3810 = vpop.permute.xlu0 %3809
    %3811 = vset.pattern.permute.xlu0 0
    %3812 = vperm.xlu0 %3811, %v3783
    %v3813 = vpop.permute.xlu0 %3812
    %3814 = vset.pattern.permute.xlu0 0
    %3815 = vperm.xlu0 %3814, %v3784
    %v3816 = vpop.permute.xlu0 %3815
    %3817 = vset.pattern.permute.xlu0 0
    %3818 = vperm.xlu0 %3817, %v3785
    %v3819 = vpop.permute.xlu0 %3818
    %3820 = vset.pattern.permute.xlu0 0
    %3821 = vperm.xlu0 %3820, %v3786
    %v3822 = vpop.permute.xlu0 %3821
    %3823 = vset.pattern.permute.xlu0 0
    %3824 = vperm.xlu0 %3823, %v3787
    %v3825 = vpop.permute.xlu0 %3824
    %3826 = vset.pattern.permute.xlu0 0
    %3827 = vperm.xlu0 %3826, %v3788
    %v3828 = vpop.permute.xlu0 %3827
    %3829 = vset.pattern.permute.xlu0 0
    %3830 = vperm.xlu0 %3829, %v3789
    %v3831 = vpop.permute.xlu0 %3830
    %3832 = vset.pattern.permute.xlu0 0
    %3833 = vperm.xlu0 %3832, %v3790
    %v3834 = vpop.permute.xlu0 %3833
    %3835 = vset.pattern.permute.xlu0 0
    %3836 = vperm.xlu0 %3835, %v3791
    %v3837 = vpop.permute.xlu0 %3836
    %3838 = vset.pattern.permute.xlu0 0
    %3839 = vperm.xlu0 %3838, %v3792
    %v3840 = vpop.permute.xlu0 %3839
    %vm3841 = vcmp.eq.s32.totalorder %v3795, 1
    %vm3842 = vcmp.eq.s32.totalorder %v3798, 1
    %vm3843 = vcmp.eq.s32.totalorder %v3801, 1
    %vm3844 = vcmp.eq.s32.totalorder %v3804, 1
    %vm3845 = vcmp.eq.s32.totalorder %v3807, 1
    %vm3846 = vcmp.eq.s32.totalorder %v3810, 1
    %vm3847 = vcmp.eq.s32.totalorder %v3813, 1
    %vm3848 = vcmp.eq.s32.totalorder %v3816, 1
    %vm3849 = vcmp.eq.s32.totalorder %v3819, 1
    %vm3850 = vcmp.eq.s32.totalorder %v3822, 1
    %vm3851 = vcmp.eq.s32.totalorder %v3825, 1
    %vm3852 = vcmp.eq.s32.totalorder %v3828, 1
    %vm3853 = vcmp.eq.s32.totalorder %v3831, 1
    %vm3854 = vcmp.eq.s32.totalorder %v3834, 1
    %vm3855 = vcmp.eq.s32.totalorder %v3837, 1
    %vm3856 = vcmp.eq.s32.totalorder %v3840, 1
    %v3857 = vsel %vm3841, %v3546, -1e+30
    %v3858 = vsel %vm3842, %v3547, -1e+30
    %v3859 = vsel %vm3843, %v3548, -1e+30
    %v3860 = vsel %vm3844, %v3549, -1e+30
    %v3861 = vsel %vm3845, %v3550, -1e+30
    %v3862 = vsel %vm3846, %v3551, -1e+30
    %v3863 = vsel %vm3847, %v3552, -1e+30
    %v3864 = vsel %vm3848, %v3553, -1e+30
    %v3865 = vsel %vm3849, %v3554, -1e+30
    %v3866 = vsel %vm3850, %v3555, -1e+30
    %v3867 = vsel %vm3851, %v3556, -1e+30
    %v3868 = vsel %vm3852, %v3557, -1e+30
    %v3869 = vsel %vm3853, %v3558, -1e+30
    %v3870 = vsel %vm3854, %v3559, -1e+30
    %v3871 = vsel %vm3855, %v3560, -1e+30
    %v3872 = vsel %vm3856, %v3561, -1e+30
    %v3873 = vmax.f32 %v3857, %v3861
    %v3874 = vmax.f32 %v3858, %v3862
    %v3875 = vmax.f32 %v3859, %v3863
    %v3876 = vmax.f32 %v3860, %v3864
    %v3877 = vmax.f32 %v3873, %v3865
    %v3878 = vmax.f32 %v3874, %v3866
    %v3879 = vmax.f32 %v3875, %v3867
    %v3880 = vmax.f32 %v3876, %v3868
    %v3881 = vmax.f32 %v3877, %v3869
    %v3882 = vmax.f32 %v3878, %v3870
    %v3883 = vmax.f32 %v3879, %v3871
    %v3884 = vmax.f32 %v3880, %v3872
    %v3885 = vmax.f32 %v3881, %v3882
    %v3886 = vmax.f32 %v3883, %v3884
    %v3887 = vmax.f32 %v3885, %v3886
    %v3888 = vrot.slane %v3887, 4
    %v3889 = vmax.f32 %v3887, %v3888
    %v3890 = vrot.slane %v3889, 2
    %v3891 = vmax.f32 %v3889, %v3890
    %v3892 = vrot.slane %v3891, 1
    %v3893 = vmax.f32 %v3891, %v3892
    %vm3894 = vcmp.gt.f32.partialorder %v3760, 0.0
    %v3895 = vsel %vm3894, 1, 0
    %3896 = vset.pattern.permute.xlu0 0
    %3897 = vperm.xlu0 %3896, %v3895
    %v3898 = vpop.permute.xlu0 %3897
    %vm3899 = vcmp.eq.s32.totalorder %v3898, 1
    %v3900 = vsel %vm3899, %v3893, 0.0
    %v3901 = vadd.f32 %v3546, %v3547
    %v3902 = vadd.f32 %v3901, %v3548
    %v3903 = vadd.f32 %v3902, %v3549
    %v3904 = vadd.f32 %v3903, %v3550
    %v3905 = vadd.f32 %v3904, %v3551
    %v3906 = vadd.f32 %v3905, %v3552
    %v3907 = vadd.f32 %v3906, %v3553
    %v3908 = vadd.f32 %v3907, %v3554
    %v3909 = vadd.f32 %v3908, %v3555
    %v3910 = vadd.f32 %v3909, %v3556
    %v3911 = vadd.f32 %v3910, %v3557
    %v3912 = vadd.f32 %v3911, %v3558
    %v3913 = vadd.f32 %v3912, %v3559
    %v3914 = vadd.f32 %v3913, %v3560
    %v3915 = vadd.f32 %v3914, %v3561
    %v3916 = vrot.slane %v3915, 4
    %v3917 = vadd.f32 %v3915, %v3916
    %v3918 = vrot.slane %v3917, 2
    %v3919 = vadd.f32 %v3917, %v3918
    %v3920 = vrot.slane %v3919, 1
    %v3921 = vadd.f32 %v3919, %v3920
    %v3922 = vmax.f32 %v3760, 1.0
    %3924 = vset.pattern.permute.xlu0 0
    %3925 = vperm.xlu0 %3924, %v3922
    %v3926 = vpop.permute.xlu0 %3925
    %v3928 = vrcp.pop %v3926
    %v3929 = vmul.f32 %v3926, %v3928
    %v3930 = vsub.f32 1.0, %v3929
    %v3931 = vmul.f32 %v3928, %v3930
    %v3932 = vadd.f32 %v3928, %v3931
    %vm3933 = vweird.f32 %v3926
    %vm3934 = vweird.f32 %v3928
    %vm3935 = vmor %vm3933, %vm3934
    %v3936 = vsel %vm3935, %v3928, %v3932
    %v3937 = vand.u32 2147483647, %v3926
    %vm3938 = vcmp.eq.f32.partialorder %v3937, 8.507059e+37
    %v3939 = vand.u32 %v3926, 2147483648
    %v3940 = vor.u32 1.1754944e-38, %v3939
    %v3941 = vsel %vm3938, %v3940, %v3936
    %v3942 = vmul.f32 %v3921, %v3941
    %3943 = vmatpush.msra.mxu0 %v3723
    %3944 = vmatpush.msra.mxu0 %v3722
    %3945 = vmatpush.msra.mxu0 %v3721
    %3946 = vmatpush.msra.mxu0 %v3720
    %3947 = vmatpush.msra.mxu0 %v3719
    %3948 = vmatpush.msra.mxu0 %v3718
    %3949 = vmatpush.msra.mxu0 %v3717
    %3950 = vmatpush.msra.mxu0 %v3716
    %3951 = vmatpush.msra.mxu0 %v3715
    %3952 = vmatpush.msra.mxu0 %v3714
    %3953 = vmatpush.msra.mxu0 %v3713
    %3954 = vmatpush.msra.mxu0 %v3712
    %3955 = vmatpush.msra.mxu0 %v3711
    %3956 = vmatpush.msra.mxu0 %v3710
    %3957 = vmatpush.msra.mxu0 %v3709
    %3958 = vmatpush.msra.mxu0 %v3708
    %3959 = vmatmul.f32.gmra.mxu0 %v130
    %v3960 = vpop.f32.mrf.mxu0
    %v3961 = vadd.f32 0.0, %v3960
    %3962 = vmatmul.f32.gmra.mxu0 %v131
    %v3963 = vpop.f32.mrf.mxu0
    %v3964 = vadd.f32 0.0, %v3963
    %3965 = vmatmul.f32.gmra.mxu0 %v132
    %v3966 = vpop.f32.mrf.mxu0
    %v3967 = vadd.f32 0.0, %v3966
    %3968 = vmatmul.f32.gmra.mxu0 %v133
    %v3969 = vpop.f32.mrf.mxu0
    %v3970 = vadd.f32 0.0, %v3969
    %3971 = vmatmul.f32.gmra.mxu0 %v134
    %v3972 = vpop.f32.mrf.mxu0
    %v3973 = vadd.f32 0.0, %v3972
    %3974 = vmatmul.f32.gmra.mxu0 %v135
    %v3975 = vpop.f32.mrf.mxu0
    %v3976 = vadd.f32 0.0, %v3975
    %3977 = vmatmul.f32.gmra.mxu0 %v136
    %v3978 = vpop.f32.mrf.mxu0
    %v3979 = vadd.f32 0.0, %v3978
    %3980 = vmatmul.f32.gmra.mxu0 %v137
    %v3981 = vpop.f32.mrf.mxu0
    %v3982 = vadd.f32 0.0, %v3981
    %3983 = vmatmul.f32.gmra.mxu0 %v138
    %v3984 = vpop.f32.mrf.mxu0
    %v3985 = vadd.f32 0.0, %v3984
    %3986 = vmatmul.f32.gmra.mxu0 %v139
    %v3987 = vpop.f32.mrf.mxu0
    %v3988 = vadd.f32 0.0, %v3987
    %3989 = vmatmul.f32.gmra.mxu0 %v140
    %v3990 = vpop.f32.mrf.mxu0
    %v3991 = vadd.f32 0.0, %v3990
    %3992 = vmatmul.f32.gmra.mxu0 %v141
    %v3993 = vpop.f32.mrf.mxu0
    %v3994 = vadd.f32 0.0, %v3993
    %3995 = vmatmul.f32.gmra.mxu0 %v142
    %v3996 = vpop.f32.mrf.mxu0
    %v3997 = vadd.f32 0.0, %v3996
    %3998 = vmatmul.f32.gmra.mxu0 %v143
    %v3999 = vpop.f32.mrf.mxu0
    %v4000 = vadd.f32 0.0, %v3999
    %4001 = vmatmul.f32.gmra.mxu0 %v144
    %v4002 = vpop.f32.mrf.mxu0
    %v4003 = vadd.f32 0.0, %v4002
    %4004 = vmatmul.f32.gmra.mxu0 %v145
    %v4005 = vpop.f32.mrf.mxu0
    %v4006 = vadd.f32 0.0, %v4005
    %4007 = vdwg.mxu0
    %v4008 = vmax.f32 %v3961, 1.0
    %v4009 = vmax.f32 %v3964, 1.0
    %v4010 = vmax.f32 %v3967, 1.0
    %v4011 = vmax.f32 %v3970, 1.0
    %v4012 = vmax.f32 %v3973, 1.0
    %v4013 = vmax.f32 %v3976, 1.0
    %v4014 = vmax.f32 %v3979, 1.0
    %v4015 = vmax.f32 %v3982, 1.0
    %v4016 = vmax.f32 %v3985, 1.0
    %v4017 = vmax.f32 %v3988, 1.0
    %v4018 = vmax.f32 %v3991, 1.0
    %v4019 = vmax.f32 %v3994, 1.0
    %v4020 = vmax.f32 %v3997, 1.0
    %v4021 = vmax.f32 %v4000, 1.0
    %v4022 = vmax.f32 %v4003, 1.0
    %v4023 = vmax.f32 %v4006, 1.0
    %v4024 = vrcp.pop %v4008
    %v4025 = vmul.f32 %v4008, %v4024
    %v4026 = vsub.f32 1.0, %v4025
    %v4027 = vmul.f32 %v4024, %v4026
    %v4028 = vadd.f32 %v4024, %v4027
    %vm4029 = vweird.f32 %v4008
    %vm4030 = vweird.f32 %v4024
    %vm4031 = vmor %vm4029, %vm4030
    %v4032 = vsel %vm4031, %v4024, %v4028
    %v4033 = vand.u32 2147483647, %v4008
    %vm4034 = vcmp.eq.f32.partialorder %v4033, 8.507059e+37
    %v4035 = vand.u32 %v4008, 2147483648
    %v4036 = vor.u32 1.1754944e-38, %v4035
    %v4037 = vsel %vm4034, %v4036, %v4032
    %v4038 = vmul.f32 1.0, %v4037
    %v4039 = vrcp.pop %v4009
    %v4040 = vmul.f32 %v4009, %v4039
    %v4041 = vsub.f32 1.0, %v4040
    %v4042 = vmul.f32 %v4039, %v4041
    %v4043 = vadd.f32 %v4039, %v4042
    %vm4044 = vweird.f32 %v4009
    %vm4045 = vweird.f32 %v4039
    %vm4046 = vmor %vm4044, %vm4045
    %v4047 = vsel %vm4046, %v4039, %v4043
    %v4048 = vand.u32 2147483647, %v4009
    %vm4049 = vcmp.eq.f32.partialorder %v4048, 8.507059e+37
    %v4050 = vand.u32 %v4009, 2147483648
    %v4051 = vor.u32 1.1754944e-38, %v4050
    %v4052 = vsel %vm4049, %v4051, %v4047
    %v4053 = vmul.f32 1.0, %v4052
    %v4054 = vrcp.pop %v4010
    %v4055 = vmul.f32 %v4010, %v4054
    %v4056 = vsub.f32 1.0, %v4055
    %v4057 = vmul.f32 %v4054, %v4056
    %v4058 = vadd.f32 %v4054, %v4057
    %vm4059 = vweird.f32 %v4010
    %vm4060 = vweird.f32 %v4054
    %vm4061 = vmor %vm4059, %vm4060
    %v4062 = vsel %vm4061, %v4054, %v4058
    %v4063 = vand.u32 2147483647, %v4010
    %vm4064 = vcmp.eq.f32.partialorder %v4063, 8.507059e+37
    %v4065 = vand.u32 %v4010, 2147483648
    %v4066 = vor.u32 1.1754944e-38, %v4065
    %v4067 = vsel %vm4064, %v4066, %v4062
    %v4068 = vmul.f32 1.0, %v4067
    %v4069 = vrcp.pop %v4011
    %v4070 = vmul.f32 %v4011, %v4069
    %v4071 = vsub.f32 1.0, %v4070
    %v4072 = vmul.f32 %v4069, %v4071
    %v4073 = vadd.f32 %v4069, %v4072
    %vm4074 = vweird.f32 %v4011
    %vm4075 = vweird.f32 %v4069
    %vm4076 = vmor %vm4074, %vm4075
    %v4077 = vsel %vm4076, %v4069, %v4073
    %v4078 = vand.u32 2147483647, %v4011
    %vm4079 = vcmp.eq.f32.partialorder %v4078, 8.507059e+37
    %v4080 = vand.u32 %v4011, 2147483648
    %v4081 = vor.u32 1.1754944e-38, %v4080
    %v4082 = vsel %vm4079, %v4081, %v4077
    %v4083 = vmul.f32 1.0, %v4082
    %v4084 = vrcp.pop %v4012
    %v4085 = vmul.f32 %v4012, %v4084
    %v4086 = vsub.f32 1.0, %v4085
    %v4087 = vmul.f32 %v4084, %v4086
    %v4088 = vadd.f32 %v4084, %v4087
    %vm4089 = vweird.f32 %v4012
    %vm4090 = vweird.f32 %v4084
    %vm4091 = vmor %vm4089, %vm4090
    %v4092 = vsel %vm4091, %v4084, %v4088
    %v4093 = vand.u32 2147483647, %v4012
    %vm4094 = vcmp.eq.f32.partialorder %v4093, 8.507059e+37
    %v4095 = vand.u32 %v4012, 2147483648
    %v4096 = vor.u32 1.1754944e-38, %v4095
    %v4097 = vsel %vm4094, %v4096, %v4092
    %v4098 = vmul.f32 1.0, %v4097
    %v4099 = vrcp.pop %v4013
    %v4100 = vmul.f32 %v4013, %v4099
    %v4101 = vsub.f32 1.0, %v4100
    %v4102 = vmul.f32 %v4099, %v4101
    %v4103 = vadd.f32 %v4099, %v4102
    %vm4104 = vweird.f32 %v4013
    %vm4105 = vweird.f32 %v4099
    %vm4106 = vmor %vm4104, %vm4105
    %v4107 = vsel %vm4106, %v4099, %v4103
    %v4108 = vand.u32 2147483647, %v4013
    %vm4109 = vcmp.eq.f32.partialorder %v4108, 8.507059e+37
    %v4110 = vand.u32 %v4013, 2147483648
    %v4111 = vor.u32 1.1754944e-38, %v4110
    %v4112 = vsel %vm4109, %v4111, %v4107
    %v4113 = vmul.f32 1.0, %v4112
    %v4114 = vrcp.pop %v4014
    %v4115 = vmul.f32 %v4014, %v4114
    %v4116 = vsub.f32 1.0, %v4115
    %v4117 = vmul.f32 %v4114, %v4116
    %v4118 = vadd.f32 %v4114, %v4117
    %vm4119 = vweird.f32 %v4014
    %vm4120 = vweird.f32 %v4114
    %vm4121 = vmor %vm4119, %vm4120
    %v4122 = vsel %vm4121, %v4114, %v4118
    %v4123 = vand.u32 2147483647, %v4014
    %vm4124 = vcmp.eq.f32.partialorder %v4123, 8.507059e+37
    %v4125 = vand.u32 %v4014, 2147483648
    %v4126 = vor.u32 1.1754944e-38, %v4125
    %v4127 = vsel %vm4124, %v4126, %v4122
    %v4128 = vmul.f32 1.0, %v4127
    %v4129 = vrcp.pop %v4015
    %v4130 = vmul.f32 %v4015, %v4129
    %v4131 = vsub.f32 1.0, %v4130
    %v4132 = vmul.f32 %v4129, %v4131
    %v4133 = vadd.f32 %v4129, %v4132
    %vm4134 = vweird.f32 %v4015
    %vm4135 = vweird.f32 %v4129
    %vm4136 = vmor %vm4134, %vm4135
    %v4137 = vsel %vm4136, %v4129, %v4133
    %v4138 = vand.u32 2147483647, %v4015
    %vm4139 = vcmp.eq.f32.partialorder %v4138, 8.507059e+37
    %v4140 = vand.u32 %v4015, 2147483648
    %v4141 = vor.u32 1.1754944e-38, %v4140
    %v4142 = vsel %vm4139, %v4141, %v4137
    %v4143 = vmul.f32 1.0, %v4142
    %v4144 = vrcp.pop %v4016
    %v4145 = vmul.f32 %v4016, %v4144
    %v4146 = vsub.f32 1.0, %v4145
    %v4147 = vmul.f32 %v4144, %v4146
    %v4148 = vadd.f32 %v4144, %v4147
    %vm4149 = vweird.f32 %v4016
    %vm4150 = vweird.f32 %v4144
    %vm4151 = vmor %vm4149, %vm4150
    %v4152 = vsel %vm4151, %v4144, %v4148
    %v4153 = vand.u32 2147483647, %v4016
    %vm4154 = vcmp.eq.f32.partialorder %v4153, 8.507059e+37
    %v4155 = vand.u32 %v4016, 2147483648
    %v4156 = vor.u32 1.1754944e-38, %v4155
    %v4157 = vsel %vm4154, %v4156, %v4152
    %v4158 = vmul.f32 1.0, %v4157
    %v4159 = vrcp.pop %v4017
    %v4160 = vmul.f32 %v4017, %v4159
    %v4161 = vsub.f32 1.0, %v4160
    %v4162 = vmul.f32 %v4159, %v4161
    %v4163 = vadd.f32 %v4159, %v4162
    %vm4164 = vweird.f32 %v4017
    %vm4165 = vweird.f32 %v4159
    %vm4166 = vmor %vm4164, %vm4165
    %v4167 = vsel %vm4166, %v4159, %v4163
    %v4168 = vand.u32 2147483647, %v4017
    %vm4169 = vcmp.eq.f32.partialorder %v4168, 8.507059e+37
    %v4170 = vand.u32 %v4017, 2147483648
    %v4171 = vor.u32 1.1754944e-38, %v4170
    %v4172 = vsel %vm4169, %v4171, %v4167
    %v4173 = vmul.f32 1.0, %v4172
    %v4174 = vrcp.pop %v4018
    %v4175 = vmul.f32 %v4018, %v4174
    %v4176 = vsub.f32 1.0, %v4175
    %v4177 = vmul.f32 %v4174, %v4176
    %v4178 = vadd.f32 %v4174, %v4177
    %vm4179 = vweird.f32 %v4018
    %vm4180 = vweird.f32 %v4174
    %vm4181 = vmor %vm4179, %vm4180
    %v4182 = vsel %vm4181, %v4174, %v4178
    %v4183 = vand.u32 2147483647, %v4018
    %vm4184 = vcmp.eq.f32.partialorder %v4183, 8.507059e+37
    %v4185 = vand.u32 %v4018, 2147483648
    %v4186 = vor.u32 1.1754944e-38, %v4185
    %v4187 = vsel %vm4184, %v4186, %v4182
    %v4188 = vmul.f32 1.0, %v4187
    %v4189 = vrcp.pop %v4019
    %v4190 = vmul.f32 %v4019, %v4189
    %v4191 = vsub.f32 1.0, %v4190
    %v4192 = vmul.f32 %v4189, %v4191
    %v4193 = vadd.f32 %v4189, %v4192
    %vm4194 = vweird.f32 %v4019
    %vm4195 = vweird.f32 %v4189
    %vm4196 = vmor %vm4194, %vm4195
    %v4197 = vsel %vm4196, %v4189, %v4193
    %v4198 = vand.u32 2147483647, %v4019
    %vm4199 = vcmp.eq.f32.partialorder %v4198, 8.507059e+37
    %v4200 = vand.u32 %v4019, 2147483648
    %v4201 = vor.u32 1.1754944e-38, %v4200
    %v4202 = vsel %vm4199, %v4201, %v4197
    %v4203 = vmul.f32 1.0, %v4202
    %v4204 = vrcp.pop %v4020
    %v4205 = vmul.f32 %v4020, %v4204
    %v4206 = vsub.f32 1.0, %v4205
    %v4207 = vmul.f32 %v4204, %v4206
    %v4208 = vadd.f32 %v4204, %v4207
    %vm4209 = vweird.f32 %v4020
    %vm4210 = vweird.f32 %v4204
    %vm4211 = vmor %vm4209, %vm4210
    %v4212 = vsel %vm4211, %v4204, %v4208
    %v4213 = vand.u32 2147483647, %v4020
    %vm4214 = vcmp.eq.f32.partialorder %v4213, 8.507059e+37
    %v4215 = vand.u32 %v4020, 2147483648
    %v4216 = vor.u32 1.1754944e-38, %v4215
    %v4217 = vsel %vm4214, %v4216, %v4212
    %v4218 = vmul.f32 1.0, %v4217
    %v4219 = vrcp.pop %v4021
    %v4220 = vmul.f32 %v4021, %v4219
    %v4221 = vsub.f32 1.0, %v4220
    %v4222 = vmul.f32 %v4219, %v4221
    %v4223 = vadd.f32 %v4219, %v4222
    %vm4224 = vweird.f32 %v4021
    %vm4225 = vweird.f32 %v4219
    %vm4226 = vmor %vm4224, %vm4225
    %v4227 = vsel %vm4226, %v4219, %v4223
    %v4228 = vand.u32 2147483647, %v4021
    %vm4229 = vcmp.eq.f32.partialorder %v4228, 8.507059e+37
    %v4230 = vand.u32 %v4021, 2147483648
    %v4231 = vor.u32 1.1754944e-38, %v4230
    %v4232 = vsel %vm4229, %v4231, %v4227
    %v4233 = vmul.f32 1.0, %v4232
    %v4234 = vrcp.pop %v4022
    %v4235 = vmul.f32 %v4022, %v4234
    %v4236 = vsub.f32 1.0, %v4235
    %v4237 = vmul.f32 %v4234, %v4236
    %v4238 = vadd.f32 %v4234, %v4237
    %vm4239 = vweird.f32 %v4022
    %vm4240 = vweird.f32 %v4234
    %vm4241 = vmor %vm4239, %vm4240
    %v4242 = vsel %vm4241, %v4234, %v4238
    %v4243 = vand.u32 2147483647, %v4022
    %vm4244 = vcmp.eq.f32.partialorder %v4243, 8.507059e+37
    %v4245 = vand.u32 %v4022, 2147483648
    %v4246 = vor.u32 1.1754944e-38, %v4245
    %v4247 = vsel %vm4244, %v4246, %v4242
    %v4248 = vmul.f32 1.0, %v4247
    %v4249 = vrcp.pop %v4023
    %v4250 = vmul.f32 %v4023, %v4249
    %v4251 = vsub.f32 1.0, %v4250
    %v4252 = vmul.f32 %v4249, %v4251
    %v4253 = vadd.f32 %v4249, %v4252
    %vm4254 = vweird.f32 %v4023
    %vm4255 = vweird.f32 %v4249
    %vm4256 = vmor %vm4254, %vm4255
    %v4257 = vsel %vm4256, %v4249, %v4253
    %v4258 = vand.u32 2147483647, %v4023
    %vm4259 = vcmp.eq.f32.partialorder %v4258, 8.507059e+37
    %v4260 = vand.u32 %v4023, 2147483648
    %v4261 = vor.u32 1.1754944e-38, %v4260
    %v4262 = vsel %vm4259, %v4261, %v4257
    %v4263 = vmul.f32 1.0, %v4262
    %v4264 = vld [vmem:[%s8 + $0x200] sm:$0xff]
    %v4265 = vld [vmem:[%s8 + $0x208] sm:$0xff]
    %v4266 = vld [vmem:[%s8 + $0x210] sm:$0xff]
    %v4267 = vld [vmem:[%s8 + $0x218] sm:$0xff]
    %v4268 = vld [vmem:[%s8 + $0x220] sm:$0xff]
    %v4269 = vld [vmem:[%s8 + $0x228] sm:$0xff]
    %v4270 = vld [vmem:[%s8 + $0x230] sm:$0xff]
    %v4271 = vld [vmem:[%s8 + $0x238] sm:$0xff]
    %v4272 = vld [vmem:[%s8 + $0x240] sm:$0xff]
    %v4273 = vld [vmem:[%s8 + $0x248] sm:$0xff]
    %v4274 = vld [vmem:[%s8 + $0x250] sm:$0xff]
    %v4275 = vld [vmem:[%s8 + $0x258] sm:$0xff]
    %v4276 = vld [vmem:[%s8 + $0x260] sm:$0xff]
    %v4277 = vld [vmem:[%s8 + $0x268] sm:$0xff]
    %v4278 = vld [vmem:[%s8 + $0x270] sm:$0xff]
    %v4279 = vld [vmem:[%s8 + $0x278] sm:$0xff]
    %v4280 = vld [vmem:[%s8 + $0x280] sm:$0xff]
    %v4281 = vld [vmem:[%s8 + $0x288] sm:$0xff]
    %v4282 = vld [vmem:[%s8 + $0x290] sm:$0xff]
    %v4283 = vld [vmem:[%s8 + $0x298] sm:$0xff]
    %v4284 = vld [vmem:[%s8 + $0x2a0] sm:$0xff]
    %v4285 = vld [vmem:[%s8 + $0x2a8] sm:$0xff]
    %v4286 = vld [vmem:[%s8 + $0x2b0] sm:$0xff]
    %v4287 = vld [vmem:[%s8 + $0x2b8] sm:$0xff]
    %v4288 = vld [vmem:[%s8 + $0x2c0] sm:$0xff]
    %v4289 = vld [vmem:[%s8 + $0x2c8] sm:$0xff]
    %v4290 = vld [vmem:[%s8 + $0x2d0] sm:$0xff]
    %v4291 = vld [vmem:[%s8 + $0x2d8] sm:$0xff]
    %v4292 = vld [vmem:[%s8 + $0x2e0] sm:$0xff]
    %v4293 = vld [vmem:[%s8 + $0x2e8] sm:$0xff]
    %v4294 = vld [vmem:[%s8 + $0x2f0] sm:$0xff]
    %v4295 = vld [vmem:[%s8 + $0x2f8] sm:$0xff]
    %v4296 = vld [vmem:[%s9 + $0x100] sm:$0xff]
    %v4297 = vld [vmem:[%s9 + $0x108] sm:$0xff]
    %v4298 = vld [vmem:[%s9 + $0x110] sm:$0xff]
    %v4299 = vld [vmem:[%s9 + $0x118] sm:$0xff]
    %v4300 = vld [vmem:[%s9 + $0x120] sm:$0xff]
    %v4301 = vld [vmem:[%s9 + $0x128] sm:$0xff]
    %v4302 = vld [vmem:[%s9 + $0x130] sm:$0xff]
    %v4303 = vld [vmem:[%s9 + $0x138] sm:$0xff]
    %v4304 = vld [vmem:[%s9 + $0x140] sm:$0xff]
    %v4305 = vld [vmem:[%s9 + $0x148] sm:$0xff]
    %v4306 = vld [vmem:[%s9 + $0x150] sm:$0xff]
    %v4307 = vld [vmem:[%s9 + $0x158] sm:$0xff]
    %v4308 = vld [vmem:[%s9 + $0x160] sm:$0xff]
    %v4309 = vld [vmem:[%s9 + $0x168] sm:$0xff]
    %v4310 = vld [vmem:[%s9 + $0x170] sm:$0xff]
    %v4311 = vld [vmem:[%s9 + $0x178] sm:$0xff]
    %v4312 = vld [vmem:[%s10 + $0x2] sm:$0x1]
    %4313 = vmatpush.msra.mxu0 %v4294
    %4314 = vmatpush.msra.mxu0 %v4292
    %4315 = vmatpush.msra.mxu0 %v4290
    %4316 = vmatpush.msra.mxu0 %v4288
    %4317 = vmatpush.msra.mxu0 %v4286
    %4318 = vmatpush.msra.mxu0 %v4284
    %4319 = vmatpush.msra.mxu0 %v4282
    %4320 = vmatpush.msra.mxu0 %v4280
    %4321 = vmatpush.msra.mxu0 %v4278
    %4322 = vmatpush.msra.mxu0 %v4276
    %4323 = vmatpush.msra.mxu0 %v4274
    %4324 = vmatpush.msra.mxu0 %v4272
    %4325 = vmatpush.msra.mxu0 %v4270
    %4326 = vmatpush.msra.mxu0 %v4268
    %4327 = vmatpush.msra.mxu0 %v4266
    %4328 = vmatpush.msra.mxu0 %v4264
    %4329 = vmatmul.f32.gmra.mxu0 %v3546
    %v4330 = vpop.f32.mrf.mxu0
    %v4331 = vadd.f32 0.0, %v4330
    %4332 = vmatmul.f32.gmra.mxu0 %v3547
    %v4333 = vpop.f32.mrf.mxu0
    %v4334 = vadd.f32 0.0, %v4333
    %4335 = vmatmul.f32.gmra.mxu0 %v3548
    %v4336 = vpop.f32.mrf.mxu0
    %v4337 = vadd.f32 0.0, %v4336
    %4338 = vmatmul.f32.gmra.mxu0 %v3549
    %v4339 = vpop.f32.mrf.mxu0
    %v4340 = vadd.f32 0.0, %v4339
    %4341 = vmatmul.f32.gmra.mxu0 %v3550
    %v4342 = vpop.f32.mrf.mxu0
    %v4343 = vadd.f32 0.0, %v4342
    %4344 = vmatmul.f32.gmra.mxu0 %v3551
    %v4345 = vpop.f32.mrf.mxu0
    %v4346 = vadd.f32 0.0, %v4345
    %4347 = vmatmul.f32.gmra.mxu0 %v3552
    %v4348 = vpop.f32.mrf.mxu0
    %v4349 = vadd.f32 0.0, %v4348
    %4350 = vmatmul.f32.gmra.mxu0 %v3553
    %v4351 = vpop.f32.mrf.mxu0
    %v4352 = vadd.f32 0.0, %v4351
    %4353 = vmatmul.f32.gmra.mxu0 %v3554
    %v4354 = vpop.f32.mrf.mxu0
    %v4355 = vadd.f32 0.0, %v4354
    %4356 = vmatmul.f32.gmra.mxu0 %v3555
    %v4357 = vpop.f32.mrf.mxu0
    %v4358 = vadd.f32 0.0, %v4357
    %4359 = vmatmul.f32.gmra.mxu0 %v3556
    %v4360 = vpop.f32.mrf.mxu0
    %v4361 = vadd.f32 0.0, %v4360
    %4362 = vmatmul.f32.gmra.mxu0 %v3557
    %v4363 = vpop.f32.mrf.mxu0
    %v4364 = vadd.f32 0.0, %v4363
    %4365 = vmatmul.f32.gmra.mxu0 %v3558
    %v4366 = vpop.f32.mrf.mxu0
    %v4367 = vadd.f32 0.0, %v4366
    %4368 = vmatmul.f32.gmra.mxu0 %v3559
    %v4369 = vpop.f32.mrf.mxu0
    %v4370 = vadd.f32 0.0, %v4369
    %4371 = vmatmul.f32.gmra.mxu0 %v3560
    %v4372 = vpop.f32.mrf.mxu0
    %v4373 = vadd.f32 0.0, %v4372
    %4374 = vmatmul.f32.gmra.mxu0 %v3561
    %v4375 = vpop.f32.mrf.mxu0
    %v4376 = vadd.f32 0.0, %v4375
    %4377 = vdwg.mxu0
    %4378 = vmatpush.msra.mxu0 %v4295
    %4379 = vmatpush.msra.mxu0 %v4293
    %4380 = vmatpush.msra.mxu0 %v4291
    %4381 = vmatpush.msra.mxu0 %v4289
    %4382 = vmatpush.msra.mxu0 %v4287
    %4383 = vmatpush.msra.mxu0 %v4285
    %4384 = vmatpush.msra.mxu0 %v4283
    %4385 = vmatpush.msra.mxu0 %v4281
    %4386 = vmatpush.msra.mxu0 %v4279
    %4387 = vmatpush.msra.mxu0 %v4277
    %4388 = vmatpush.msra.mxu0 %v4275
    %4389 = vmatpush.msra.mxu0 %v4273
    %4390 = vmatpush.msra.mxu0 %v4271
    %4391 = vmatpush.msra.mxu0 %v4269
    %4392 = vmatpush.msra.mxu0 %v4267
    %4393 = vmatpush.msra.mxu0 %v4265
    %4394 = vmatmul.f32.gmra.mxu0 %v3546
    %v4395 = vpop.f32.mrf.mxu0
    %v4396 = vadd.f32 0.0, %v4395
    %4397 = vmatmul.f32.gmra.mxu0 %v3547
    %v4398 = vpop.f32.mrf.mxu0
    %v4399 = vadd.f32 0.0, %v4398
    %4400 = vmatmul.f32.gmra.mxu0 %v3548
    %v4401 = vpop.f32.mrf.mxu0
    %v4402 = vadd.f32 0.0, %v4401
    %4403 = vmatmul.f32.gmra.mxu0 %v3549
    %v4404 = vpop.f32.mrf.mxu0
    %v4405 = vadd.f32 0.0, %v4404
    %4406 = vmatmul.f32.gmra.mxu0 %v3550
    %v4407 = vpop.f32.mrf.mxu0
    %v4408 = vadd.f32 0.0, %v4407
    %4409 = vmatmul.f32.gmra.mxu0 %v3551
    %v4410 = vpop.f32.mrf.mxu0
    %v4411 = vadd.f32 0.0, %v4410
    %4412 = vmatmul.f32.gmra.mxu0 %v3552
    %v4413 = vpop.f32.mrf.mxu0
    %v4414 = vadd.f32 0.0, %v4413
    %4415 = vmatmul.f32.gmra.mxu0 %v3553
    %v4416 = vpop.f32.mrf.mxu0
    %v4417 = vadd.f32 0.0, %v4416
    %4418 = vmatmul.f32.gmra.mxu0 %v3554
    %v4419 = vpop.f32.mrf.mxu0
    %v4420 = vadd.f32 0.0, %v4419
    %4421 = vmatmul.f32.gmra.mxu0 %v3555
    %v4422 = vpop.f32.mrf.mxu0
    %v4423 = vadd.f32 0.0, %v4422
    %4424 = vmatmul.f32.gmra.mxu0 %v3556
    %v4425 = vpop.f32.mrf.mxu0
    %v4426 = vadd.f32 0.0, %v4425
    %4427 = vmatmul.f32.gmra.mxu0 %v3557
    %v4428 = vpop.f32.mrf.mxu0
    %v4429 = vadd.f32 0.0, %v4428
    %4430 = vmatmul.f32.gmra.mxu0 %v3558
    %v4431 = vpop.f32.mrf.mxu0
    %v4432 = vadd.f32 0.0, %v4431
    %4433 = vmatmul.f32.gmra.mxu0 %v3559
    %v4434 = vpop.f32.mrf.mxu0
    %v4435 = vadd.f32 0.0, %v4434
    %4436 = vmatmul.f32.gmra.mxu0 %v3560
    %v4437 = vpop.f32.mrf.mxu0
    %v4438 = vadd.f32 0.0, %v4437
    %4439 = vmatmul.f32.gmra.mxu0 %v3561
    %v4440 = vpop.f32.mrf.mxu0
    %v4441 = vadd.f32 0.0, %v4440
    %4442 = vdwg.mxu0
    %4443 = vmatpush.msra.mxu0 %v4441
    %4444 = vmatpush.msra.mxu0 %v4438
    %4445 = vmatpush.msra.mxu0 %v4435
    %4446 = vmatpush.msra.mxu0 %v4432
    %4447 = vmatpush.msra.mxu0 %v4429
    %4448 = vmatpush.msra.mxu0 %v4426
    %4449 = vmatpush.msra.mxu0 %v4423
    %4450 = vmatpush.msra.mxu0 %v4420
    %4451 = vmatpush.msra.mxu0 %v4417
    %4452 = vmatpush.msra.mxu0 %v4414
    %4453 = vmatpush.msra.mxu0 %v4411
    %4454 = vmatpush.msra.mxu0 %v4408
    %4455 = vmatpush.msra.mxu0 %v4405
    %4456 = vmatpush.msra.mxu0 %v4402
    %4457 = vmatpush.msra.mxu0 %v4399
    %4458 = vmatpush.msra.mxu0 %v4396
    %4459 = vmatmul.f32.gmra.mxu0 %v662
    %v4460 = vpop.f32.mrf.mxu0
    %v4461 = vadd.f32 0.0, %v4460
    %4462 = vmatmul.f32.gmra.mxu0 %v663
    %v4463 = vpop.f32.mrf.mxu0
    %v4464 = vadd.f32 0.0, %v4463
    %4465 = vmatmul.f32.gmra.mxu0 %v664
    %v4466 = vpop.f32.mrf.mxu0
    %v4467 = vadd.f32 0.0, %v4466
    %4468 = vmatmul.f32.gmra.mxu0 %v665
    %v4469 = vpop.f32.mrf.mxu0
    %v4470 = vadd.f32 0.0, %v4469
    %4471 = vmatmul.f32.gmra.mxu0 %v666
    %v4472 = vpop.f32.mrf.mxu0
    %v4473 = vadd.f32 0.0, %v4472
    %4474 = vmatmul.f32.gmra.mxu0 %v667
    %v4475 = vpop.f32.mrf.mxu0
    %v4476 = vadd.f32 0.0, %v4475
    %4477 = vmatmul.f32.gmra.mxu0 %v668
    %v4478 = vpop.f32.mrf.mxu0
    %v4479 = vadd.f32 0.0, %v4478
    %4480 = vmatmul.f32.gmra.mxu0 %v669
    %v4481 = vpop.f32.mrf.mxu0
    %v4482 = vadd.f32 0.0, %v4481
    %4483 = vmatmul.f32.gmra.mxu0 %v670
    %v4484 = vpop.f32.mrf.mxu0
    %v4485 = vadd.f32 0.0, %v4484
    %4486 = vmatmul.f32.gmra.mxu0 %v671
    %v4487 = vpop.f32.mrf.mxu0
    %v4488 = vadd.f32 0.0, %v4487
    %4489 = vmatmul.f32.gmra.mxu0 %v672
    %v4490 = vpop.f32.mrf.mxu0
    %v4491 = vadd.f32 0.0, %v4490
    %4492 = vmatmul.f32.gmra.mxu0 %v673
    %v4493 = vpop.f32.mrf.mxu0
    %v4494 = vadd.f32 0.0, %v4493
    %4495 = vmatmul.f32.gmra.mxu0 %v674
    %v4496 = vpop.f32.mrf.mxu0
    %v4497 = vadd.f32 0.0, %v4496
    %4498 = vmatmul.f32.gmra.mxu0 %v675
    %v4499 = vpop.f32.mrf.mxu0
    %v4500 = vadd.f32 0.0, %v4499
    %4501 = vmatmul.f32.gmra.mxu0 %v676
    %v4502 = vpop.f32.mrf.mxu0
    %v4503 = vadd.f32 0.0, %v4502
    %4504 = vmatmul.f32.gmra.mxu0 %v677
    %v4505 = vpop.f32.mrf.mxu0
    %v4506 = vadd.f32 0.0, %v4505
    %4507 = vdwg.mxu0
    %4508 = vmatpush.msra.mxu0 %v4376
    %4509 = vmatpush.msra.mxu0 %v4373
    %4510 = vmatpush.msra.mxu0 %v4370
    %4511 = vmatpush.msra.mxu0 %v4367
    %4512 = vmatpush.msra.mxu0 %v4364
    %4513 = vmatpush.msra.mxu0 %v4361
    %4514 = vmatpush.msra.mxu0 %v4358
    %4515 = vmatpush.msra.mxu0 %v4355
    %4516 = vmatpush.msra.mxu0 %v4352
    %4517 = vmatpush.msra.mxu0 %v4349
    %4518 = vmatpush.msra.mxu0 %v4346
    %4519 = vmatpush.msra.mxu0 %v4343
    %4520 = vmatpush.msra.mxu0 %v4340
    %4521 = vmatpush.msra.mxu0 %v4337
    %4522 = vmatpush.msra.mxu0 %v4334
    %4523 = vmatpush.msra.mxu0 %v4331
    %4524 = vmatmul.f32.gmra.mxu0 %v646
    %v4525 = vpop.f32.mrf.mxu0
    %v4526 = vadd.f32 %v4461, %v4525
    %4527 = vmatmul.f32.gmra.mxu0 %v647
    %v4528 = vpop.f32.mrf.mxu0
    %v4529 = vadd.f32 %v4464, %v4528
    %4530 = vmatmul.f32.gmra.mxu0 %v648
    %v4531 = vpop.f32.mrf.mxu0
    %v4532 = vadd.f32 %v4467, %v4531
    %4533 = vmatmul.f32.gmra.mxu0 %v649
    %v4534 = vpop.f32.mrf.mxu0
    %v4535 = vadd.f32 %v4470, %v4534
    %4536 = vmatmul.f32.gmra.mxu0 %v650
    %v4537 = vpop.f32.mrf.mxu0
    %v4538 = vadd.f32 %v4473, %v4537
    %4539 = vmatmul.f32.gmra.mxu0 %v651
    %v4540 = vpop.f32.mrf.mxu0
    %v4541 = vadd.f32 %v4476, %v4540
    %4542 = vmatmul.f32.gmra.mxu0 %v652
    %v4543 = vpop.f32.mrf.mxu0
    %v4544 = vadd.f32 %v4479, %v4543
    %4545 = vmatmul.f32.gmra.mxu0 %v653
    %v4546 = vpop.f32.mrf.mxu0
    %v4547 = vadd.f32 %v4482, %v4546
    %4548 = vmatmul.f32.gmra.mxu0 %v654
    %v4549 = vpop.f32.mrf.mxu0
    %v4550 = vadd.f32 %v4485, %v4549
    %4551 = vmatmul.f32.gmra.mxu0 %v655
    %v4552 = vpop.f32.mrf.mxu0
    %v4553 = vadd.f32 %v4488, %v4552
    %4554 = vmatmul.f32.gmra.mxu0 %v656
    %v4555 = vpop.f32.mrf.mxu0
    %v4556 = vadd.f32 %v4491, %v4555
    %4557 = vmatmul.f32.gmra.mxu0 %v657
    %v4558 = vpop.f32.mrf.mxu0
    %v4559 = vadd.f32 %v4494, %v4558
    %4560 = vmatmul.f32.gmra.mxu0 %v658
    %v4561 = vpop.f32.mrf.mxu0
    %v4562 = vadd.f32 %v4497, %v4561
    %4563 = vmatmul.f32.gmra.mxu0 %v659
    %v4564 = vpop.f32.mrf.mxu0
    %v4565 = vadd.f32 %v4500, %v4564
    %4566 = vmatmul.f32.gmra.mxu0 %v660
    %v4567 = vpop.f32.mrf.mxu0
    %v4568 = vadd.f32 %v4503, %v4567
    %4569 = vmatmul.f32.gmra.mxu0 %v661
    %v4570 = vpop.f32.mrf.mxu0
    %v4571 = vadd.f32 %v4506, %v4570
    %4572 = vdwg.mxu0
    %4573 = vmatpush.msra.mxu0 %v4311
    %4574 = vmatpush.msra.mxu0 %v4310
    %4575 = vmatpush.msra.mxu0 %v4309
    %4576 = vmatpush.msra.mxu0 %v4308
    %4577 = vmatpush.msra.mxu0 %v4307
    %4578 = vmatpush.msra.mxu0 %v4306
    %4579 = vmatpush.msra.mxu0 %v4305
    %4580 = vmatpush.msra.mxu0 %v4304
    %4581 = vmatpush.msra.mxu0 %v4303
    %4582 = vmatpush.msra.mxu0 %v4302
    %4583 = vmatpush.msra.mxu0 %v4301
    %4584 = vmatpush.msra.mxu0 %v4300
    %4585 = vmatpush.msra.mxu0 %v4299
    %4586 = vmatpush.msra.mxu0 %v4298
    %4587 = vmatpush.msra.mxu0 %v4297
    %4588 = vmatpush.msra.mxu0 %v4296
    %4589 = vmatmul.f32.gmra.mxu0 %v1715
    %v4590 = vpop.f32.mrf.mxu0
    %v4591 = vadd.f32 0.0, %v4590
    %4592 = vmatmul.f32.gmra.mxu0 %v1716
    %v4593 = vpop.f32.mrf.mxu0
    %v4594 = vadd.f32 0.0, %v4593
    %4595 = vmatmul.f32.gmra.mxu0 %v1717
    %v4596 = vpop.f32.mrf.mxu0
    %v4597 = vadd.f32 0.0, %v4596
    %4598 = vmatmul.f32.gmra.mxu0 %v1718
    %v4599 = vpop.f32.mrf.mxu0
    %v4600 = vadd.f32 0.0, %v4599
    %4601 = vmatmul.f32.gmra.mxu0 %v1719
    %v4602 = vpop.f32.mrf.mxu0
    %v4603 = vadd.f32 0.0, %v4602
    %4604 = vmatmul.f32.gmra.mxu0 %v1720
    %v4605 = vpop.f32.mrf.mxu0
    %v4606 = vadd.f32 0.0, %v4605
    %4607 = vmatmul.f32.gmra.mxu0 %v1721
    %v4608 = vpop.f32.mrf.mxu0
    %v4609 = vadd.f32 0.0, %v4608
    %4610 = vmatmul.f32.gmra.mxu0 %v1722
    %v4611 = vpop.f32.mrf.mxu0
    %v4612 = vadd.f32 0.0, %v4611
    %4613 = vmatmul.f32.gmra.mxu0 %v1723
    %v4614 = vpop.f32.mrf.mxu0
    %v4615 = vadd.f32 0.0, %v4614
    %4616 = vmatmul.f32.gmra.mxu0 %v1724
    %v4617 = vpop.f32.mrf.mxu0
    %v4618 = vadd.f32 0.0, %v4617
    %4619 = vmatmul.f32.gmra.mxu0 %v1725
    %v4620 = vpop.f32.mrf.mxu0
    %v4621 = vadd.f32 0.0, %v4620
    %4622 = vmatmul.f32.gmra.mxu0 %v1726
    %v4623 = vpop.f32.mrf.mxu0
    %v4624 = vadd.f32 0.0, %v4623
    %4625 = vmatmul.f32.gmra.mxu0 %v1727
    %v4626 = vpop.f32.mrf.mxu0
    %v4627 = vadd.f32 0.0, %v4626
    %4628 = vmatmul.f32.gmra.mxu0 %v1728
    %v4629 = vpop.f32.mrf.mxu0
    %v4630 = vadd.f32 0.0, %v4629
    %4631 = vmatmul.f32.gmra.mxu0 %v1729
    %v4632 = vpop.f32.mrf.mxu0
    %v4633 = vadd.f32 0.0, %v4632
    %4634 = vmatmul.f32.gmra.mxu0 %v1730
    %v4635 = vpop.f32.mrf.mxu0
    %v4636 = vadd.f32 0.0, %v4635
    %4637 = vdwg.mxu0
    %v4638 = vadd.f32 %v4526, %v4591
    %v4639 = vadd.f32 %v4529, %v4594
    %v4640 = vadd.f32 %v4532, %v4597
    %v4641 = vadd.f32 %v4535, %v4600
    %v4642 = vadd.f32 %v4538, %v4603
    %v4643 = vadd.f32 %v4541, %v4606
    %v4644 = vadd.f32 %v4544, %v4609
    %v4645 = vadd.f32 %v4547, %v4612
    %v4646 = vadd.f32 %v4550, %v4615
    %v4647 = vadd.f32 %v4553, %v4618
    %v4648 = vadd.f32 %v4556, %v4621
    %v4649 = vadd.f32 %v4559, %v4624
    %v4650 = vadd.f32 %v4562, %v4627
    %v4651 = vadd.f32 %v4565, %v4630
    %v4652 = vadd.f32 %v4568, %v4633
    %v4653 = vadd.f32 %v4571, %v4636
    %v4654 = vperm.slane %v4312, 0
    %v4655 = vadd.f32 %v4638, %v4654
    %v4656 = vadd.f32 %v4639, %v4654
    %v4657 = vadd.f32 %v4640, %v4654
    %v4658 = vadd.f32 %v4641, %v4654
    %v4659 = vadd.f32 %v4642, %v4654
    %v4660 = vadd.f32 %v4643, %v4654
    %v4661 = vadd.f32 %v4644, %v4654
    %v4662 = vadd.f32 %v4645, %v4654
    %v4663 = vadd.f32 %v4646, %v4654
    %v4664 = vadd.f32 %v4647, %v4654
    %v4665 = vadd.f32 %v4648, %v4654
    %v4666 = vadd.f32 %v4649, %v4654
    %v4667 = vadd.f32 %v4650, %v4654
    %v4668 = vadd.f32 %v4651, %v4654
    %v4669 = vadd.f32 %v4652, %v4654
    %v4670 = vadd.f32 %v4653, %v4654
    %4672 = vset.pattern.permute.xlu0 0
    %4673 = vperm.xlu0 %4672, %v3708
    %v4674 = vpop.permute.xlu0 %4673
    %4677 = vset.pattern.permute.xlu0 0
    %4678 = vperm.xlu0 %4677, %v3709
    %v4679 = vpop.permute.xlu0 %4678
    %4682 = vset.pattern.permute.xlu0 0
    %4683 = vperm.xlu0 %4682, %v3710
    %v4684 = vpop.permute.xlu0 %4683
    %4687 = vset.pattern.permute.xlu0 0
    %4688 = vperm.xlu0 %4687, %v3711
    %v4689 = vpop.permute.xlu0 %4688
    %4692 = vset.pattern.permute.xlu0 0
    %4693 = vperm.xlu0 %4692, %v3712
    %v4694 = vpop.permute.xlu0 %4693
    %4697 = vset.pattern.permute.xlu0 0
    %4698 = vperm.xlu0 %4697, %v3713
    %v4699 = vpop.permute.xlu0 %4698
    %4702 = vset.pattern.permute.xlu0 0
    %4703 = vperm.xlu0 %4702, %v3714
    %v4704 = vpop.permute.xlu0 %4703
    %4707 = vset.pattern.permute.xlu0 0
    %4708 = vperm.xlu0 %4707, %v3715
    %v4709 = vpop.permute.xlu0 %4708
    %4712 = vset.pattern.permute.xlu0 0
    %4713 = vperm.xlu0 %4712, %v3716
    %v4714 = vpop.permute.xlu0 %4713
    %4717 = vset.pattern.permute.xlu0 0
    %4718 = vperm.xlu0 %4717, %v3717
    %v4719 = vpop.permute.xlu0 %4718
    %4722 = vset.pattern.permute.xlu0 0
    %4723 = vperm.xlu0 %4722, %v3718
    %v4724 = vpop.permute.xlu0 %4723
    %4727 = vset.pattern.permute.xlu0 0
    %4728 = vperm.xlu0 %4727, %v3719
    %v4729 = vpop.permute.xlu0 %4728
    %4732 = vset.pattern.permute.xlu0 0
    %4733 = vperm.xlu0 %4732, %v3720
    %v4734 = vpop.permute.xlu0 %4733
    %4737 = vset.pattern.permute.xlu0 0
    %4738 = vperm.xlu0 %4737, %v3721
    %v4739 = vpop.permute.xlu0 %4738
    %4742 = vset.pattern.permute.xlu0 0
    %4743 = vperm.xlu0 %4742, %v3722
    %v4744 = vpop.permute.xlu0 %4743
    %4747 = vset.pattern.permute.xlu0 0
    %4748 = vperm.xlu0 %4747, %v3723
    %v4749 = vpop.permute.xlu0 %4748
    %v4751 = vmul.f32 %v4655, %v4674
    %v4752 = vmul.f32 %v4656, %v4679
    %v4753 = vmul.f32 %v4657, %v4684
    %v4754 = vmul.f32 %v4658, %v4689
    %v4755 = vmul.f32 %v4659, %v4694
    %v4756 = vmul.f32 %v4660, %v4699
    %v4757 = vmul.f32 %v4661, %v4704
    %v4758 = vmul.f32 %v4662, %v4709
    %v4759 = vmul.f32 %v4663, %v4714
    %v4760 = vmul.f32 %v4664, %v4719
    %v4761 = vmul.f32 %v4665, %v4724
    %v4762 = vmul.f32 %v4666, %v4729
    %v4763 = vmul.f32 %v4667, %v4734
    %v4764 = vmul.f32 %v4668, %v4739
    %v4765 = vmul.f32 %v4669, %v4744
    %v4766 = vmul.f32 %v4670, %v4749
    %4767 = vmatpush.msra.mxu0 %v4766
    %4768 = vmatpush.msra.mxu0 %v4765
    %4769 = vmatpush.msra.mxu0 %v4764
    %4770 = vmatpush.msra.mxu0 %v4763
    %4771 = vmatpush.msra.mxu0 %v4762
    %4772 = vmatpush.msra.mxu0 %v4761
    %4773 = vmatpush.msra.mxu0 %v4760
    %4774 = vmatpush.msra.mxu0 %v4759
    %4775 = vmatpush.msra.mxu0 %v4758
    %4776 = vmatpush.msra.mxu0 %v4757
    %4777 = vmatpush.msra.mxu0 %v4756
    %4778 = vmatpush.msra.mxu0 %v4755
    %4779 = vmatpush.msra.mxu0 %v4754
    %4780 = vmatpush.msra.mxu0 %v4753
    %4781 = vmatpush.msra.mxu0 %v4752
    %4782 = vmatpush.msra.mxu0 %v4751
    %4783 = vmatmul.f32.gmra.mxu0 %v130
    %v4784 = vpop.f32.mrf.mxu0
    %v4785 = vadd.f32 0.0, %v4784
    %4786 = vmatmul.f32.gmra.mxu0 %v131
    %v4787 = vpop.f32.mrf.mxu0
    %v4788 = vadd.f32 0.0, %v4787
    %4789 = vmatmul.f32.gmra.mxu0 %v132
    %v4790 = vpop.f32.mrf.mxu0
    %v4791 = vadd.f32 0.0, %v4790
    %4792 = vmatmul.f32.gmra.mxu0 %v133
    %v4793 = vpop.f32.mrf.mxu0
    %v4794 = vadd.f32 0.0, %v4793
    %4795 = vmatmul.f32.gmra.mxu0 %v134
    %v4796 = vpop.f32.mrf.mxu0
    %v4797 = vadd.f32 0.0, %v4796
    %4798 = vmatmul.f32.gmra.mxu0 %v135
    %v4799 = vpop.f32.mrf.mxu0
    %v4800 = vadd.f32 0.0, %v4799
    %4801 = vmatmul.f32.gmra.mxu0 %v136
    %v4802 = vpop.f32.mrf.mxu0
    %v4803 = vadd.f32 0.0, %v4802
    %4804 = vmatmul.f32.gmra.mxu0 %v137
    %v4805 = vpop.f32.mrf.mxu0
    %v4806 = vadd.f32 0.0, %v4805
    %4807 = vmatmul.f32.gmra.mxu0 %v138
    %v4808 = vpop.f32.mrf.mxu0
    %v4809 = vadd.f32 0.0, %v4808
    %4810 = vmatmul.f32.gmra.mxu0 %v139
    %v4811 = vpop.f32.mrf.mxu0
    %v4812 = vadd.f32 0.0, %v4811
    %4813 = vmatmul.f32.gmra.mxu0 %v140
    %v4814 = vpop.f32.mrf.mxu0
    %v4815 = vadd.f32 0.0, %v4814
    %4816 = vmatmul.f32.gmra.mxu0 %v141
    %v4817 = vpop.f32.mrf.mxu0
    %v4818 = vadd.f32 0.0, %v4817
    %4819 = vmatmul.f32.gmra.mxu0 %v142
    %v4820 = vpop.f32.mrf.mxu0
    %v4821 = vadd.f32 0.0, %v4820
    %4822 = vmatmul.f32.gmra.mxu0 %v143
    %v4823 = vpop.f32.mrf.mxu0
    %v4824 = vadd.f32 0.0, %v4823
    %4825 = vmatmul.f32.gmra.mxu0 %v144
    %v4826 = vpop.f32.mrf.mxu0
    %v4827 = vadd.f32 0.0, %v4826
    %4828 = vmatmul.f32.gmra.mxu0 %v145
    %v4829 = vpop.f32.mrf.mxu0
    %v4830 = vadd.f32 0.0, %v4829
    %4831 = vdwg.mxu0
    %4833 = vset.pattern.permute.xlu0 0
    %4834 = vperm.xlu0 %4833, %v4038
    %v4835 = vpop.permute.xlu0 %4834
    %4838 = vset.pattern.permute.xlu0 0
    %4839 = vperm.xlu0 %4838, %v4053
    %v4840 = vpop.permute.xlu0 %4839
    %4843 = vset.pattern.permute.xlu0 0
    %4844 = vperm.xlu0 %4843, %v4068
    %v4845 = vpop.permute.xlu0 %4844
    %4848 = vset.pattern.permute.xlu0 0
    %4849 = vperm.xlu0 %4848, %v4083
    %v4850 = vpop.permute.xlu0 %4849
    %4853 = vset.pattern.permute.xlu0 0
    %4854 = vperm.xlu0 %4853, %v4098
    %v4855 = vpop.permute.xlu0 %4854
    %4858 = vset.pattern.permute.xlu0 0
    %4859 = vperm.xlu0 %4858, %v4113
    %v4860 = vpop.permute.xlu0 %4859
    %4863 = vset.pattern.permute.xlu0 0
    %4864 = vperm.xlu0 %4863, %v4128
    %v4865 = vpop.permute.xlu0 %4864
    %4868 = vset.pattern.permute.xlu0 0
    %4869 = vperm.xlu0 %4868, %v4143
    %v4870 = vpop.permute.xlu0 %4869
    %4873 = vset.pattern.permute.xlu0 0
    %4874 = vperm.xlu0 %4873, %v4158
    %v4875 = vpop.permute.xlu0 %4874
    %4878 = vset.pattern.permute.xlu0 0
    %4879 = vperm.xlu0 %4878, %v4173
    %v4880 = vpop.permute.xlu0 %4879
    %4883 = vset.pattern.permute.xlu0 0
    %4884 = vperm.xlu0 %4883, %v4188
    %v4885 = vpop.permute.xlu0 %4884
    %4888 = vset.pattern.permute.xlu0 0
    %4889 = vperm.xlu0 %4888, %v4203
    %v4890 = vpop.permute.xlu0 %4889
    %4893 = vset.pattern.permute.xlu0 0
    %4894 = vperm.xlu0 %4893, %v4218
    %v4895 = vpop.permute.xlu0 %4894
    %4898 = vset.pattern.permute.xlu0 0
    %4899 = vperm.xlu0 %4898, %v4233
    %v4900 = vpop.permute.xlu0 %4899
    %4903 = vset.pattern.permute.xlu0 0
    %4904 = vperm.xlu0 %4903, %v4248
    %v4905 = vpop.permute.xlu0 %4904
    %4908 = vset.pattern.permute.xlu0 0
    %4909 = vperm.xlu0 %4908, %v4263
    %v4910 = vpop.permute.xlu0 %4909
    %v4912 = vmul.f32 %v4785, %v4835
    %v4913 = vmul.f32 %v4788, %v4840
    %v4914 = vmul.f32 %v4791, %v4845
    %v4915 = vmul.f32 %v4794, %v4850
    %v4916 = vmul.f32 %v4797, %v4855
    %v4917 = vmul.f32 %v4800, %v4860
    %v4918 = vmul.f32 %v4803, %v4865
    %v4919 = vmul.f32 %v4806, %v4870
    %v4920 = vmul.f32 %v4809, %v4875
    %v4921 = vmul.f32 %v4812, %v4880
    %v4922 = vmul.f32 %v4815, %v4885
    %v4923 = vmul.f32 %v4818, %v4890
    %v4924 = vmul.f32 %v4821, %v4895
    %v4925 = vmul.f32 %v4824, %v4900
    %v4926 = vmul.f32 %v4827, %v4905
    %v4927 = vmul.f32 %v4830, %v4910
    %v4928 = vmax.f32 %v4912, 0.0
    %v4929 = vmax.f32 %v4913, 0.0
    %v4930 = vmax.f32 %v4914, 0.0
    %v4931 = vmax.f32 %v4915, 0.0
    %v4932 = vmax.f32 %v4916, 0.0
    %v4933 = vmax.f32 %v4917, 0.0
    %v4934 = vmax.f32 %v4918, 0.0
    %v4935 = vmax.f32 %v4919, 0.0
    %v4936 = vmax.f32 %v4920, 0.0
    %v4937 = vmax.f32 %v4921, 0.0
    %v4938 = vmax.f32 %v4922, 0.0
    %v4939 = vmax.f32 %v4923, 0.0
    %v4940 = vmax.f32 %v4924, 0.0
    %v4941 = vmax.f32 %v4925, 0.0
    %v4942 = vmax.f32 %v4926, 0.0
    %v4943 = vmax.f32 %v4927, 0.0
    %v4944 = vmax.f32 %v4751, 0.0
    %v4945 = vmax.f32 %v4752, 0.0
    %v4946 = vmax.f32 %v4753, 0.0
    %v4947 = vmax.f32 %v4754, 0.0
    %v4948 = vmax.f32 %v4755, 0.0
    %v4949 = vmax.f32 %v4756, 0.0
    %v4950 = vmax.f32 %v4757, 0.0
    %v4951 = vmax.f32 %v4758, 0.0
    %v4952 = vmax.f32 %v4759, 0.0
    %v4953 = vmax.f32 %v4760, 0.0
    %v4954 = vmax.f32 %v4761, 0.0
    %v4955 = vmax.f32 %v4762, 0.0
    %v4956 = vmax.f32 %v4763, 0.0
    %v4957 = vmax.f32 %v4764, 0.0
    %v4958 = vmax.f32 %v4765, 0.0
    %v4959 = vmax.f32 %v4766, 0.0
    %4960 = vmatpush.msra.mxu0 %v1746
    %4961 = vmatpush.msra.mxu0 %v1745
    %4962 = vmatpush.msra.mxu0 %v1744
    %4963 = vmatpush.msra.mxu0 %v1743
    %4964 = vmatpush.msra.mxu0 %v1742
    %4965 = vmatpush.msra.mxu0 %v1741
    %4966 = vmatpush.msra.mxu0 %v1740
    %4967 = vmatpush.msra.mxu0 %v1739
    %4968 = vmatpush.msra.mxu0 %v1738
    %4969 = vmatpush.msra.mxu0 %v1737
    %4970 = vmatpush.msra.mxu0 %v1736
    %4971 = vmatpush.msra.mxu0 %v1735
    %4972 = vmatpush.msra.mxu0 %v1734
    %4973 = vmatpush.msra.mxu0 %v1733
    %4974 = vmatpush.msra.mxu0 %v1732
    %4975 = vmatpush.msra.mxu0 %v1731
    %4976 = vmatmul.f32.gmra.mxu0 %v4928
    %v4977 = vpop.f32.mrf.mxu0
    %v4978 = vadd.f32 0.0, %v4977
    %4979 = vmatmul.f32.gmra.mxu0 %v4929
    %v4980 = vpop.f32.mrf.mxu0
    %v4981 = vadd.f32 0.0, %v4980
    %4982 = vmatmul.f32.gmra.mxu0 %v4930
    %v4983 = vpop.f32.mrf.mxu0
    %v4984 = vadd.f32 0.0, %v4983
    %4985 = vmatmul.f32.gmra.mxu0 %v4931
    %v4986 = vpop.f32.mrf.mxu0
    %v4987 = vadd.f32 0.0, %v4986
    %4988 = vmatmul.f32.gmra.mxu0 %v4932
    %v4989 = vpop.f32.mrf.mxu0
    %v4990 = vadd.f32 0.0, %v4989
    %4991 = vmatmul.f32.gmra.mxu0 %v4933
    %v4992 = vpop.f32.mrf.mxu0
    %v4993 = vadd.f32 0.0, %v4992
    %4994 = vmatmul.f32.gmra.mxu0 %v4934
    %v4995 = vpop.f32.mrf.mxu0
    %v4996 = vadd.f32 0.0, %v4995
    %4997 = vmatmul.f32.gmra.mxu0 %v4935
    %v4998 = vpop.f32.mrf.mxu0
    %v4999 = vadd.f32 0.0, %v4998
    %5000 = vmatmul.f32.gmra.mxu0 %v4936
    %v5001 = vpop.f32.mrf.mxu0
    %v5002 = vadd.f32 0.0, %v5001
    %5003 = vmatmul.f32.gmra.mxu0 %v4937
    %v5004 = vpop.f32.mrf.mxu0
    %v5005 = vadd.f32 0.0, %v5004
    %5006 = vmatmul.f32.gmra.mxu0 %v4938
    %v5007 = vpop.f32.mrf.mxu0
    %v5008 = vadd.f32 0.0, %v5007
    %5009 = vmatmul.f32.gmra.mxu0 %v4939
    %v5010 = vpop.f32.mrf.mxu0
    %v5011 = vadd.f32 0.0, %v5010
    %5012 = vmatmul.f32.gmra.mxu0 %v4940
    %v5013 = vpop.f32.mrf.mxu0
    %v5014 = vadd.f32 0.0, %v5013
    %5015 = vmatmul.f32.gmra.mxu0 %v4941
    %v5016 = vpop.f32.mrf.mxu0
    %v5017 = vadd.f32 0.0, %v5016
    %5018 = vmatmul.f32.gmra.mxu0 %v4942
    %v5019 = vpop.f32.mrf.mxu0
    %v5020 = vadd.f32 0.0, %v5019
    %5021 = vmatmul.f32.gmra.mxu0 %v4943
    %v5022 = vpop.f32.mrf.mxu0
    %v5023 = vadd.f32 0.0, %v5022
    %5024 = vdwg.mxu0
    %v5025 = vld [vmem:[%s12 + $0x1] sm:$0x1]
    %v5026 = vmul.f32 %v646, %v4674
    %v5027 = vmul.f32 %v647, %v4679
    %v5028 = vmul.f32 %v648, %v4684
    %v5029 = vmul.f32 %v649, %v4689
    %v5030 = vmul.f32 %v650, %v4694
    %v5031 = vmul.f32 %v651, %v4699
    %v5032 = vmul.f32 %v652, %v4704
    %v5033 = vmul.f32 %v653, %v4709
    %v5034 = vmul.f32 %v654, %v4714
    %v5035 = vmul.f32 %v655, %v4719
    %v5036 = vmul.f32 %v656, %v4724
    %v5037 = vmul.f32 %v657, %v4729
    %v5038 = vmul.f32 %v658, %v4734
    %v5039 = vmul.f32 %v659, %v4739
    %v5040 = vmul.f32 %v660, %v4744
    %v5041 = vmul.f32 %v661, %v4749
    %5042 = vmatpush.msra.mxu0 %v5041
    %5043 = vmatpush.msra.mxu0 %v5040
    %5044 = vmatpush.msra.mxu0 %v5039
    %5045 = vmatpush.msra.mxu0 %v5038
    %5046 = vmatpush.msra.mxu0 %v5037
    %5047 = vmatpush.msra.mxu0 %v5036
    %5048 = vmatpush.msra.mxu0 %v5035
    %5049 = vmatpush.msra.mxu0 %v5034
    %5050 = vmatpush.msra.mxu0 %v5033
    %5051 = vmatpush.msra.mxu0 %v5032
    %5052 = vmatpush.msra.mxu0 %v5031
    %5053 = vmatpush.msra.mxu0 %v5030
    %5054 = vmatpush.msra.mxu0 %v5029
    %5055 = vmatpush.msra.mxu0 %v5028
    %5056 = vmatpush.msra.mxu0 %v5027
    %5057 = vmatpush.msra.mxu0 %v5026
    %5058 = vmatmul.f32.gmra.mxu0 %v130
    %v5059 = vpop.f32.mrf.mxu0
    %v5060 = vadd.f32 0.0, %v5059
    %5061 = vmatmul.f32.gmra.mxu0 %v131
    %v5062 = vpop.f32.mrf.mxu0
    %v5063 = vadd.f32 0.0, %v5062
    %5064 = vmatmul.f32.gmra.mxu0 %v132
    %v5065 = vpop.f32.mrf.mxu0
    %v5066 = vadd.f32 0.0, %v5065
    %5067 = vmatmul.f32.gmra.mxu0 %v133
    %v5068 = vpop.f32.mrf.mxu0
    %v5069 = vadd.f32 0.0, %v5068
    %5070 = vmatmul.f32.gmra.mxu0 %v134
    %v5071 = vpop.f32.mrf.mxu0
    %v5072 = vadd.f32 0.0, %v5071
    %5073 = vmatmul.f32.gmra.mxu0 %v135
    %v5074 = vpop.f32.mrf.mxu0
    %v5075 = vadd.f32 0.0, %v5074
    %5076 = vmatmul.f32.gmra.mxu0 %v136
    %v5077 = vpop.f32.mrf.mxu0
    %v5078 = vadd.f32 0.0, %v5077
    %5079 = vmatmul.f32.gmra.mxu0 %v137
    %v5080 = vpop.f32.mrf.mxu0
    %v5081 = vadd.f32 0.0, %v5080
    %5082 = vmatmul.f32.gmra.mxu0 %v138
    %v5083 = vpop.f32.mrf.mxu0
    %v5084 = vadd.f32 0.0, %v5083
    %5085 = vmatmul.f32.gmra.mxu0 %v139
    %v5086 = vpop.f32.mrf.mxu0
    %v5087 = vadd.f32 0.0, %v5086
    %5088 = vmatmul.f32.gmra.mxu0 %v140
    %v5089 = vpop.f32.mrf.mxu0
    %v5090 = vadd.f32 0.0, %v5089
    %5091 = vmatmul.f32.gmra.mxu0 %v141
    %v5092 = vpop.f32.mrf.mxu0
    %v5093 = vadd.f32 0.0, %v5092
    %5094 = vmatmul.f32.gmra.mxu0 %v142
    %v5095 = vpop.f32.mrf.mxu0
    %v5096 = vadd.f32 0.0, %v5095
    %5097 = vmatmul.f32.gmra.mxu0 %v143
    %v5098 = vpop.f32.mrf.mxu0
    %v5099 = vadd.f32 0.0, %v5098
    %5100 = vmatmul.f32.gmra.mxu0 %v144
    %v5101 = vpop.f32.mrf.mxu0
    %v5102 = vadd.f32 0.0, %v5101
    %5103 = vmatmul.f32.gmra.mxu0 %v145
    %v5104 = vpop.f32.mrf.mxu0
    %v5105 = vadd.f32 0.0, %v5104
    %5106 = vdwg.mxu0
    %v5107 = vmul.f32 %v5060, %v1910
    %v5108 = vmul.f32 %v5063, %v1911
    %v5109 = vmul.f32 %v5066, %v1912
    %v5110 = vmul.f32 %v5069, %v1913
    %v5111 = vmul.f32 %v5072, %v1914
    %v5112 = vmul.f32 %v5075, %v1915
    %v5113 = vmul.f32 %v5078, %v1916
    %v5114 = vmul.f32 %v5081, %v1917
    %v5115 = vmul.f32 %v5084, %v1918
    %v5116 = vmul.f32 %v5087, %v1919
    %v5117 = vmul.f32 %v5090, %v1920
    %v5118 = vmul.f32 %v5093, %v1921
    %v5119 = vmul.f32 %v5096, %v1922
    %v5120 = vmul.f32 %v5099, %v1923
    %v5121 = vmul.f32 %v5102, %v1924
    %v5122 = vmul.f32 %v5105, %v1925
    %v5123 = vmul.f32 %v1813, %v3469
    %v5124 = vmul.f32 %v1814, %v3474
    %v5125 = vmul.f32 %v1815, %v3479
    %v5126 = vmul.f32 %v1816, %v3484
    %v5127 = vmul.f32 %v1817, %v3489
    %v5128 = vmul.f32 %v1818, %v3494
    %v5129 = vmul.f32 %v1819, %v3499
    %v5130 = vmul.f32 %v1820, %v3504
    %v5131 = vmul.f32 %v1821, %v3509
    %v5132 = vmul.f32 %v1822, %v3514
    %v5133 = vmul.f32 %v1823, %v3519
    %v5134 = vmul.f32 %v1824, %v3524
    %v5135 = vmul.f32 %v1825, %v3529
    %v5136 = vmul.f32 %v1826, %v3534
    %v5137 = vmul.f32 %v1827, %v3539
    %v5138 = vmul.f32 %v1828, %v3544
    %v5139 = vadd.f32 %v5107, %v5123
    %v5140 = vadd.f32 %v5108, %v5124
    %v5141 = vadd.f32 %v5109, %v5125
    %v5142 = vadd.f32 %v5110, %v5126
    %v5143 = vadd.f32 %v5111, %v5127
    %v5144 = vadd.f32 %v5112, %v5128
    %v5145 = vadd.f32 %v5113, %v5129
    %v5146 = vadd.f32 %v5114, %v5130
    %v5147 = vadd.f32 %v5115, %v5131
    %v5148 = vadd.f32 %v5116, %v5132
    %v5149 = vadd.f32 %v5117, %v5133
    %v5150 = vadd.f32 %v5118, %v5134
    %v5151 = vadd.f32 %v5119, %v5135
    %v5152 = vadd.f32 %v5120, %v5136
    %v5153 = vadd.f32 %v5121, %v5137
    %v5154 = vadd.f32 %v5122, %v5138
    %5171 = vrot.lane.b32.xlu0 %v4978, 119
    %v5172 = vpop.permute.xlu0 %5171
    %5173 = vrot.lane.b32.xlu0 %v4981, 119
    %v5174 = vpop.permute.xlu0 %5173
    %5175 = vrot.lane.b32.xlu0 %v4984, 119
    %v5176 = vpop.permute.xlu0 %5175
    %5177 = vrot.lane.b32.xlu0 %v4987, 119
    %v5178 = vpop.permute.xlu0 %5177
    %5179 = vrot.lane.b32.xlu0 %v4990, 119
    %v5180 = vpop.permute.xlu0 %5179
    %5181 = vrot.lane.b32.xlu0 %v4993, 119
    %v5182 = vpop.permute.xlu0 %5181
    %5183 = vrot.lane.b32.xlu0 %v4996, 119
    %v5184 = vpop.permute.xlu0 %5183
    %5185 = vrot.lane.b32.xlu0 %v4999, 119
    %v5186 = vpop.permute.xlu0 %5185
    %5187 = vrot.lane.b32.xlu0 %v5002, 119
    %v5188 = vpop.permute.xlu0 %5187
    %5189 = vrot.lane.b32.xlu0 %v5005, 119
    %v5190 = vpop.permute.xlu0 %5189
    %5191 = vrot.lane.b32.xlu0 %v5008, 119
    %v5192 = vpop.permute.xlu0 %5191
    %5193 = vrot.lane.b32.xlu0 %v5011, 119
    %v5194 = vpop.permute.xlu0 %5193
    %5195 = vrot.lane.b32.xlu0 %v5014, 119
    %v5196 = vpop.permute.xlu0 %5195
    %5197 = vrot.lane.b32.xlu0 %v5017, 119
    %v5198 = vpop.permute.xlu0 %5197
    %5199 = vrot.lane.b32.xlu0 %v5020, 119
    %v5200 = vpop.permute.xlu0 %5199
    %5201 = vrot.lane.b32.xlu0 %v5023, 119
    %v5202 = vpop.permute.xlu0 %5201
    %v5203 = vsel %vm2102, %v5172, 0
    %v5205 = vsel %vm2102, %v5174, 0
    %v5207 = vsel %vm2102, %v5176, 0
    %v5209 = vsel %vm2102, %v5178, 0
    %v5211 = vsel %vm2102, %v5180, 0
    %v5213 = vsel %vm2102, %v5182, 0
    %v5215 = vsel %vm2102, %v5184, 0
    %v5217 = vsel %vm2102, %v5186, 0
    %v5219 = vsel %vm2102, %v5188, 0
    %v5221 = vsel %vm2102, %v5190, 0
    %v5223 = vsel %vm2102, %v5192, 0
    %v5225 = vsel %vm2102, %v5194, 0
    %v5227 = vsel %vm2102, %v5196, 0
    %v5229 = vsel %vm2102, %v5198, 0
    %v5231 = vsel %vm2102, %v5200, 0
    %v5233 = vsel %vm2102, %v5202, 0
    %5235 = vmatpush.xpose.msra.mxu0 %v5233
    %5236 = vmatpush.xpose.msra.mxu0 %v5231
    %5237 = vmatpush.xpose.msra.mxu0 %v5229
    %5238 = vmatpush.xpose.msra.mxu0 %v5227
    %5239 = vmatpush.xpose.msra.mxu0 %v5225
    %5240 = vmatpush.xpose.msra.mxu0 %v5223
    %5241 = vmatpush.xpose.msra.mxu0 %v5221
    %5242 = vmatpush.xpose.msra.mxu0 %v5219
    %5243 = vmatpush.xpose.msra.mxu0 %v5217
    %5244 = vmatpush.xpose.msra.mxu0 %v5215
    %5245 = vmatpush.xpose.msra.mxu0 %v5213
    %5246 = vmatpush.xpose.msra.mxu0 %v5211
    %5247 = vmatpush.xpose.msra.mxu0 %v5209
    %5248 = vmatpush.xpose.msra.mxu0 %v5207
    %5249 = vmatpush.xpose.msra.mxu0 %v5205
    %5250 = vmatpush.xpose.msra.mxu0 %v5203
    %5251 = vmatmul.f32.gmra.mxu0 %v2104
    %v5252 = vpop.f32.mrf.mxu0
    %v5253 = vadd.f32 0.0, %v5252
    %5254 = vmatmul.f32.gmra.mxu0 %v2104
    %v5255 = vpop.f32.mrf.mxu0
    %v5256 = vadd.f32 0.0, %v5255
    %5257 = vmatmul.f32.gmra.mxu0 %v2104
    %v5258 = vpop.f32.mrf.mxu0
    %v5259 = vadd.f32 0.0, %v5258
    %5260 = vmatmul.f32.gmra.mxu0 %v2104
    %v5261 = vpop.f32.mrf.mxu0
    %v5262 = vadd.f32 0.0, %v5261
    %5263 = vmatmul.f32.gmra.mxu0 %v2104
    %v5264 = vpop.f32.mrf.mxu0
    %v5265 = vadd.f32 0.0, %v5264
    %5266 = vmatmul.f32.gmra.mxu0 %v2104
    %v5267 = vpop.f32.mrf.mxu0
    %v5268 = vadd.f32 0.0, %v5267
    %5269 = vmatmul.f32.gmra.mxu0 %v2104
    %v5270 = vpop.f32.mrf.mxu0
    %v5271 = vadd.f32 0.0, %v5270
    %5272 = vmatmul.f32.gmra.mxu0 %v2104
    %v5273 = vpop.f32.mrf.mxu0
    %v5274 = vadd.f32 0.0, %v5273
    %5275 = vmatmul.f32.gmra.mxu0 %v2104
    %v5276 = vpop.f32.mrf.mxu0
    %v5277 = vadd.f32 0.0, %v5276
    %5278 = vmatmul.f32.gmra.mxu0 %v2104
    %v5279 = vpop.f32.mrf.mxu0
    %v5280 = vadd.f32 0.0, %v5279
    %5281 = vmatmul.f32.gmra.mxu0 %v2104
    %v5282 = vpop.f32.mrf.mxu0
    %v5283 = vadd.f32 0.0, %v5282
    %5284 = vmatmul.f32.gmra.mxu0 %v2104
    %v5285 = vpop.f32.mrf.mxu0
    %v5286 = vadd.f32 0.0, %v5285
    %5287 = vmatmul.f32.gmra.mxu0 %v2104
    %v5288 = vpop.f32.mrf.mxu0
    %v5289 = vadd.f32 0.0, %v5288
    %5290 = vmatmul.f32.gmra.mxu0 %v2104
    %v5291 = vpop.f32.mrf.mxu0
    %v5292 = vadd.f32 0.0, %v5291
    %5293 = vmatmul.f32.gmra.mxu0 %v2104
    %v5294 = vpop.f32.mrf.mxu0
    %v5295 = vadd.f32 0.0, %v5294
    %5296 = vmatmul.f32.gmra.mxu0 %v2104
    %v5297 = vpop.f32.mrf.mxu0
    %v5298 = vadd.f32 0.0, %v5297
    %5299 = vdwg.mxu0
    %5300 = vset.pattern.permute.xlu0 10
    %5301 = vperm.xlu0 %5300, %v4978
    %v5302 = vpop.permute.xlu0 %5301
    %5304 = vset.pattern.permute.xlu0 10
    %5305 = vperm.xlu0 %5304, %v4981
    %v5306 = vpop.permute.xlu0 %5305
    %5308 = vset.pattern.permute.xlu0 10
    %5309 = vperm.xlu0 %5308, %v4984
    %v5310 = vpop.permute.xlu0 %5309
    %5312 = vset.pattern.permute.xlu0 10
    %5313 = vperm.xlu0 %5312, %v4987
    %v5314 = vpop.permute.xlu0 %5313
    %5316 = vset.pattern.permute.xlu0 10
    %5317 = vperm.xlu0 %5316, %v4990
    %v5318 = vpop.permute.xlu0 %5317
    %5320 = vset.pattern.permute.xlu0 10
    %5321 = vperm.xlu0 %5320, %v4993
    %v5322 = vpop.permute.xlu0 %5321
    %5324 = vset.pattern.permute.xlu0 10
    %5325 = vperm.xlu0 %5324, %v4996
    %v5326 = vpop.permute.xlu0 %5325
    %5328 = vset.pattern.permute.xlu0 10
    %5329 = vperm.xlu0 %5328, %v4999
    %v5330 = vpop.permute.xlu0 %5329
    %5332 = vset.pattern.permute.xlu0 10
    %5333 = vperm.xlu0 %5332, %v5002
    %v5334 = vpop.permute.xlu0 %5333
    %5336 = vset.pattern.permute.xlu0 10
    %5337 = vperm.xlu0 %5336, %v5005
    %v5338 = vpop.permute.xlu0 %5337
    %5340 = vset.pattern.permute.xlu0 10
    %5341 = vperm.xlu0 %5340, %v5008
    %v5342 = vpop.permute.xlu0 %5341
    %5344 = vset.pattern.permute.xlu0 10
    %5345 = vperm.xlu0 %5344, %v5011
    %v5346 = vpop.permute.xlu0 %5345
    %5348 = vset.pattern.permute.xlu0 10
    %5349 = vperm.xlu0 %5348, %v5014
    %v5350 = vpop.permute.xlu0 %5349
    %5352 = vset.pattern.permute.xlu0 10
    %5353 = vperm.xlu0 %5352, %v5017
    %v5354 = vpop.permute.xlu0 %5353
    %5356 = vset.pattern.permute.xlu0 10
    %5357 = vperm.xlu0 %5356, %v5020
    %v5358 = vpop.permute.xlu0 %5357
    %5360 = vset.pattern.permute.xlu0 10
    %5361 = vperm.xlu0 %5360, %v5023
    %v5362 = vpop.permute.xlu0 %5361
    %v5364 = vadd.f32 %v5302, %v5253
    %v5365 = vadd.f32 %v5306, %v5256
    %v5366 = vadd.f32 %v5310, %v5259
    %v5367 = vadd.f32 %v5314, %v5262
    %v5368 = vadd.f32 %v5318, %v5265
    %v5369 = vadd.f32 %v5322, %v5268
    %v5370 = vadd.f32 %v5326, %v5271
    %v5371 = vadd.f32 %v5330, %v5274
    %v5372 = vadd.f32 %v5334, %v5277
    %v5373 = vadd.f32 %v5338, %v5280
    %v5374 = vadd.f32 %v5342, %v5283
    %v5375 = vadd.f32 %v5346, %v5286
    %v5376 = vadd.f32 %v5350, %v5289
    %v5377 = vadd.f32 %v5354, %v5292
    %v5378 = vadd.f32 %v5358, %v5295
    %v5379 = vadd.f32 %v5362, %v5298
    %vm5380 = vcmp.gt.f32.partialorder %v5364, 0.0
    %vm5381 = vcmp.gt.f32.partialorder %v5365, 0.0
    %vm5382 = vcmp.gt.f32.partialorder %v5366, 0.0
    %vm5383 = vcmp.gt.f32.partialorder %v5367, 0.0
    %vm5384 = vcmp.gt.f32.partialorder %v5368, 0.0
    %vm5385 = vcmp.gt.f32.partialorder %v5369, 0.0
    %vm5386 = vcmp.gt.f32.partialorder %v5370, 0.0
    %vm5387 = vcmp.gt.f32.partialorder %v5371, 0.0
    %vm5388 = vcmp.gt.f32.partialorder %v5372, 0.0
    %vm5389 = vcmp.gt.f32.partialorder %v5373, 0.0
    %vm5390 = vcmp.gt.f32.partialorder %v5374, 0.0
    %vm5391 = vcmp.gt.f32.partialorder %v5375, 0.0
    %vm5392 = vcmp.gt.f32.partialorder %v5376, 0.0
    %vm5393 = vcmp.gt.f32.partialorder %v5377, 0.0
    %vm5394 = vcmp.gt.f32.partialorder %v5378, 0.0
    %vm5395 = vcmp.gt.f32.partialorder %v5379, 0.0
    %v5396 = vmul.f32 %v5364, 0.2
    %v5397 = vmul.f32 %v5365, 0.2
    %v5398 = vmul.f32 %v5366, 0.2
    %v5399 = vmul.f32 %v5367, 0.2
    %v5400 = vmul.f32 %v5368, 0.2
    %v5401 = vmul.f32 %v5369, 0.2
    %v5402 = vmul.f32 %v5370, 0.2
    %v5403 = vmul.f32 %v5371, 0.2
    %v5404 = vmul.f32 %v5372, 0.2
    %v5405 = vmul.f32 %v5373, 0.2
    %v5406 = vmul.f32 %v5374, 0.2
    %v5407 = vmul.f32 %v5375, 0.2
    %v5408 = vmul.f32 %v5376, 0.2
    %v5409 = vmul.f32 %v5377, 0.2
    %v5410 = vmul.f32 %v5378, 0.2
    %v5411 = vmul.f32 %v5379, 0.2
    %v5412 = vsel %vm5380, %v5364, %v5396
    %v5413 = vsel %vm5381, %v5365, %v5397
    %v5414 = vsel %vm5382, %v5366, %v5398
    %v5415 = vsel %vm5383, %v5367, %v5399
    %v5416 = vsel %vm5384, %v5368, %v5400
    %v5417 = vsel %vm5385, %v5369, %v5401
    %v5418 = vsel %vm5386, %v5370, %v5402
    %v5419 = vsel %vm5387, %v5371, %v5403
    %v5420 = vsel %vm5388, %v5372, %v5404
    %v5421 = vsel %vm5389, %v5373, %v5405
    %v5422 = vsel %vm5390, %v5374, %v5406
    %v5423 = vsel %vm5391, %v5375, %v5407
    %v5424 = vsel %vm5392, %v5376, %v5408
    %v5425 = vsel %vm5393, %v5377, %v5409
    %v5426 = vsel %vm5394, %v5378, %v5410
    %v5427 = vsel %vm5395, %v5379, %v5411
    %vm5428 = vcmp.gt.f32.partialorder %v5139, 0.0
    %vm5429 = vcmp.gt.f32.partialorder %v5140, 0.0
    %vm5430 = vcmp.gt.f32.partialorder %v5141, 0.0
    %vm5431 = vcmp.gt.f32.partialorder %v5142, 0.0
    %vm5432 = vcmp.gt.f32.partialorder %v5143, 0.0
    %vm5433 = vcmp.gt.f32.partialorder %v5144, 0.0
    %vm5434 = vcmp.gt.f32.partialorder %v5145, 0.0
    %vm5435 = vcmp.gt.f32.partialorder %v5146, 0.0
    %vm5436 = vcmp.gt.f32.partialorder %v5147, 0.0
    %vm5437 = vcmp.gt.f32.partialorder %v5148, 0.0
    %vm5438 = vcmp.gt.f32.partialorder %v5149, 0.0
    %vm5439 = vcmp.gt.f32.partialorder %v5150, 0.0
    %vm5440 = vcmp.gt.f32.partialorder %v5151, 0.0
    %vm5441 = vcmp.gt.f32.partialorder %v5152, 0.0
    %vm5442 = vcmp.gt.f32.partialorder %v5153, 0.0
    %vm5443 = vcmp.gt.f32.partialorder %v5154, 0.0
    %v5444 = vsel %vm5428, %v5412, -1e+30
    %v5445 = vsel %vm5429, %v5413, -1e+30
    %v5446 = vsel %vm5430, %v5414, -1e+30
    %v5447 = vsel %vm5431, %v5415, -1e+30
    %v5448 = vsel %vm5432, %v5416, -1e+30
    %v5449 = vsel %vm5433, %v5417, -1e+30
    %v5450 = vsel %vm5434, %v5418, -1e+30
    %v5451 = vsel %vm5435, %v5419, -1e+30
    %v5452 = vsel %vm5436, %v5420, -1e+30
    %v5453 = vsel %vm5437, %v5421, -1e+30
    %v5454 = vsel %vm5438, %v5422, -1e+30
    %v5455 = vsel %vm5439, %v5423, -1e+30
    %v5456 = vsel %vm5440, %v5424, -1e+30
    %v5457 = vsel %vm5441, %v5425, -1e+30
    %v5458 = vsel %vm5442, %v5426, -1e+30
    %v5459 = vsel %vm5443, %v5427, -1e+30
    %5460 = vmax.xlane.f32.xlu0 %v5444
    %v5461 = vpop.xlane.xlu0 %5460
    %5462 = vmax.xlane.f32.xlu0 %v5445
    %v5463 = vpop.xlane.xlu0 %5462
    %5464 = vmax.xlane.f32.xlu0 %v5446
    %v5465 = vpop.xlane.xlu0 %5464
    %5466 = vmax.xlane.f32.xlu0 %v5447
    %v5467 = vpop.xlane.xlu0 %5466
    %5468 = vmax.xlane.f32.xlu0 %v5448
    %v5469 = vpop.xlane.xlu0 %5468
    %5470 = vmax.xlane.f32.xlu0 %v5449
    %v5471 = vpop.xlane.xlu0 %5470
    %5472 = vmax.xlane.f32.xlu0 %v5450
    %v5473 = vpop.xlane.xlu0 %5472
    %5474 = vmax.xlane.f32.xlu0 %v5451
    %v5475 = vpop.xlane.xlu0 %5474
    %5476 = vmax.xlane.f32.xlu0 %v5452
    %v5477 = vpop.xlane.xlu0 %5476
    %5478 = vmax.xlane.f32.xlu0 %v5453
    %v5479 = vpop.xlane.xlu0 %5478
    %5480 = vmax.xlane.f32.xlu0 %v5454
    %v5481 = vpop.xlane.xlu0 %5480
    %5482 = vmax.xlane.f32.xlu0 %v5455
    %v5483 = vpop.xlane.xlu0 %5482
    %5484 = vmax.xlane.f32.xlu0 %v5456
    %v5485 = vpop.xlane.xlu0 %5484
    %5486 = vmax.xlane.f32.xlu0 %v5457
    %v5487 = vpop.xlane.xlu0 %5486
    %5488 = vmax.xlane.f32.xlu0 %v5458
    %v5489 = vpop.xlane.xlu0 %5488
    %5490 = vmax.xlane.f32.xlu0 %v5459
    %v5491 = vpop.xlane.xlu0 %5490
    %v5492 = vsub.f32 %v5444, %v5461
    %v5493 = vsub.f32 %v5445, %v5463
    %v5494 = vsub.f32 %v5446, %v5465
    %v5495 = vsub.f32 %v5447, %v5467
    %v5496 = vsub.f32 %v5448, %v5469
    %v5497 = vsub.f32 %v5449, %v5471
    %v5498 = vsub.f32 %v5450, %v5473
    %v5499 = vsub.f32 %v5451, %v5475
    %v5500 = vsub.f32 %v5452, %v5477
    %v5501 = vsub.f32 %v5453, %v5479
    %v5502 = vsub.f32 %v5454, %v5481
    %v5503 = vsub.f32 %v5455, %v5483
    %v5504 = vsub.f32 %v5456, %v5485
    %v5505 = vsub.f32 %v5457, %v5487
    %v5506 = vsub.f32 %v5458, %v5489
    %v5507 = vsub.f32 %v5459, %v5491
    %v5508 = vmul.f32 %v5492, 1.442695
    %v5509 = vpow.pop %v5508
    %v5510 = vmul.f32 %v5493, 1.442695
    %v5511 = vpow.pop %v5510
    %v5512 = vmul.f32 %v5494, 1.442695
    %v5513 = vpow.pop %v5512
    %v5514 = vmul.f32 %v5495, 1.442695
    %v5515 = vpow.pop %v5514
    %v5516 = vmul.f32 %v5496, 1.442695
    %v5517 = vpow.pop %v5516
    %v5518 = vmul.f32 %v5497, 1.442695
    %v5519 = vpow.pop %v5518
    %v5520 = vmul.f32 %v5498, 1.442695
    %v5521 = vpow.pop %v5520
    %v5522 = vmul.f32 %v5499, 1.442695
    %v5523 = vpow.pop %v5522
    %v5524 = vmul.f32 %v5500, 1.442695
    %v5525 = vpow.pop %v5524
    %v5526 = vmul.f32 %v5501, 1.442695
    %v5527 = vpow.pop %v5526
    %v5528 = vmul.f32 %v5502, 1.442695
    %v5529 = vpow.pop %v5528
    %v5530 = vmul.f32 %v5503, 1.442695
    %v5531 = vpow.pop %v5530
    %v5532 = vmul.f32 %v5504, 1.442695
    %v5533 = vpow.pop %v5532
    %v5534 = vmul.f32 %v5505, 1.442695
    %v5535 = vpow.pop %v5534
    %v5536 = vmul.f32 %v5506, 1.442695
    %v5537 = vpow.pop %v5536
    %v5538 = vmul.f32 %v5507, 1.442695
    %v5539 = vpow.pop %v5538
    %v5540 = vmul.f32 %v5139, %v5509
    %v5541 = vmul.f32 %v5140, %v5511
    %v5542 = vmul.f32 %v5141, %v5513
    %v5543 = vmul.f32 %v5142, %v5515
    %v5544 = vmul.f32 %v5143, %v5517
    %v5545 = vmul.f32 %v5144, %v5519
    %v5546 = vmul.f32 %v5145, %v5521
    %v5547 = vmul.f32 %v5146, %v5523
    %v5548 = vmul.f32 %v5147, %v5525
    %v5549 = vmul.f32 %v5148, %v5527
    %v5550 = vmul.f32 %v5149, %v5529
    %v5551 = vmul.f32 %v5150, %v5531
    %v5552 = vmul.f32 %v5151, %v5533
    %v5553 = vmul.f32 %v5152, %v5535
    %v5554 = vmul.f32 %v5153, %v5537
    %v5555 = vmul.f32 %v5154, %v5539
    %5556 = vrot.lane.b32.xlu0 %v4978, 120
    %v5557 = vpop.permute.xlu0 %5556
    %5558 = vrot.lane.b32.xlu0 %v4981, 120
    %v5559 = vpop.permute.xlu0 %5558
    %5560 = vrot.lane.b32.xlu0 %v4984, 120
    %v5561 = vpop.permute.xlu0 %5560
    %5562 = vrot.lane.b32.xlu0 %v4987, 120
    %v5563 = vpop.permute.xlu0 %5562
    %5564 = vrot.lane.b32.xlu0 %v4990, 120
    %v5565 = vpop.permute.xlu0 %5564
    %5566 = vrot.lane.b32.xlu0 %v4993, 120
    %v5567 = vpop.permute.xlu0 %5566
    %5568 = vrot.lane.b32.xlu0 %v4996, 120
    %v5569 = vpop.permute.xlu0 %5568
    %5570 = vrot.lane.b32.xlu0 %v4999, 120
    %v5571 = vpop.permute.xlu0 %5570
    %5572 = vrot.lane.b32.xlu0 %v5002, 120
    %v5573 = vpop.permute.xlu0 %5572
    %5574 = vrot.lane.b32.xlu0 %v5005, 120
    %v5575 = vpop.permute.xlu0 %5574
    %5576 = vrot.lane.b32.xlu0 %v5008, 120
    %v5577 = vpop.permute.xlu0 %5576
    %5578 = vrot.lane.b32.xlu0 %v5011, 120
    %v5579 = vpop.permute.xlu0 %5578
    %5580 = vrot.lane.b32.xlu0 %v5014, 120
    %v5581 = vpop.permute.xlu0 %5580
    %5582 = vrot.lane.b32.xlu0 %v5017, 120
    %v5583 = vpop.permute.xlu0 %5582
    %5584 = vrot.lane.b32.xlu0 %v5020, 120
    %v5585 = vpop.permute.xlu0 %5584
    %5586 = vrot.lane.b32.xlu0 %v5023, 120
    %v5587 = vpop.permute.xlu0 %5586
    %v5604 = vsel %vm2102, %v5557, 1.0
    %v5605 = vsel %vm2102, %v5559, 1.0
    %v5606 = vsel %vm2102, %v5561, 1.0
    %v5607 = vsel %vm2102, %v5563, 1.0
    %v5608 = vsel %vm2102, %v5565, 1.0
    %v5609 = vsel %vm2102, %v5567, 1.0
    %v5610 = vsel %vm2102, %v5569, 1.0
    %v5611 = vsel %vm2102, %v5571, 1.0
    %v5612 = vsel %vm2102, %v5573, 1.0
    %v5613 = vsel %vm2102, %v5575, 1.0
    %v5614 = vsel %vm2102, %v5577, 1.0
    %v5615 = vsel %vm2102, %v5579, 1.0
    %v5616 = vsel %vm2102, %v5581, 1.0
    %v5617 = vsel %vm2102, %v5583, 1.0
    %v5618 = vsel %vm2102, %v5585, 1.0
    %v5619 = vsel %vm2102, %v5587, 1.0
    %5620 = vmatpush.msra.mxu0 %v5619
    %5621 = vmatpush.msra.mxu0 %v5618
    %5622 = vmatpush.msra.mxu0 %v5617
    %5623 = vmatpush.msra.mxu0 %v5616
    %5624 = vmatpush.msra.mxu0 %v5615
    %5625 = vmatpush.msra.mxu0 %v5614
    %5626 = vmatpush.msra.mxu0 %v5613
    %5627 = vmatpush.msra.mxu0 %v5612
    %5628 = vmatpush.msra.mxu0 %v5611
    %5629 = vmatpush.msra.mxu0 %v5610
    %5630 = vmatpush.msra.mxu0 %v5609
    %5631 = vmatpush.msra.mxu0 %v5608
    %5632 = vmatpush.msra.mxu0 %v5607
    %5633 = vmatpush.msra.mxu0 %v5606
    %5634 = vmatpush.msra.mxu0 %v5605
    %5635 = vmatpush.msra.mxu0 %v5604
    %5636 = vmatmul.f32.gmra.mxu0 %v5540
    %v5637 = vpop.f32.mrf.mxu0
    %v5638 = vadd.f32 0.0, %v5637
    %5639 = vmatmul.f32.gmra.mxu0 %v5541
    %v5640 = vpop.f32.mrf.mxu0
    %v5641 = vadd.f32 0.0, %v5640
    %5642 = vmatmul.f32.gmra.mxu0 %v5542
    %v5643 = vpop.f32.mrf.mxu0
    %v5644 = vadd.f32 0.0, %v5643
    %5645 = vmatmul.f32.gmra.mxu0 %v5543
    %v5646 = vpop.f32.mrf.mxu0
    %v5647 = vadd.f32 0.0, %v5646
    %5648 = vmatmul.f32.gmra.mxu0 %v5544
    %v5649 = vpop.f32.mrf.mxu0
    %v5650 = vadd.f32 0.0, %v5649
    %5651 = vmatmul.f32.gmra.mxu0 %v5545
    %v5652 = vpop.f32.mrf.mxu0
    %v5653 = vadd.f32 0.0, %v5652
    %5654 = vmatmul.f32.gmra.mxu0 %v5546
    %v5655 = vpop.f32.mrf.mxu0
    %v5656 = vadd.f32 0.0, %v5655
    %5657 = vmatmul.f32.gmra.mxu0 %v5547
    %v5658 = vpop.f32.mrf.mxu0
    %v5659 = vadd.f32 0.0, %v5658
    %5660 = vmatmul.f32.gmra.mxu0 %v5548
    %v5661 = vpop.f32.mrf.mxu0
    %v5662 = vadd.f32 0.0, %v5661
    %5663 = vmatmul.f32.gmra.mxu0 %v5549
    %v5664 = vpop.f32.mrf.mxu0
    %v5665 = vadd.f32 0.0, %v5664
    %5666 = vmatmul.f32.gmra.mxu0 %v5550
    %v5667 = vpop.f32.mrf.mxu0
    %v5668 = vadd.f32 0.0, %v5667
    %5669 = vmatmul.f32.gmra.mxu0 %v5551
    %v5670 = vpop.f32.mrf.mxu0
    %v5671 = vadd.f32 0.0, %v5670
    %5672 = vmatmul.f32.gmra.mxu0 %v5552
    %v5673 = vpop.f32.mrf.mxu0
    %v5674 = vadd.f32 0.0, %v5673
    %5675 = vmatmul.f32.gmra.mxu0 %v5553
    %v5676 = vpop.f32.mrf.mxu0
    %v5677 = vadd.f32 0.0, %v5676
    %5678 = vmatmul.f32.gmra.mxu0 %v5554
    %v5679 = vpop.f32.mrf.mxu0
    %v5680 = vadd.f32 0.0, %v5679
    %5681 = vmatmul.f32.gmra.mxu0 %v5555
    %v5682 = vpop.f32.mrf.mxu0
    %v5683 = vadd.f32 0.0, %v5682
    %5684 = vdwg.mxu0
    %v5685 = vmax.f32 %v5638, 1e-12
    %v5686 = vmax.f32 %v5641, 1e-12
    %v5687 = vmax.f32 %v5644, 1e-12
    %v5688 = vmax.f32 %v5647, 1e-12
    %v5689 = vmax.f32 %v5650, 1e-12
    %v5690 = vmax.f32 %v5653, 1e-12
    %v5691 = vmax.f32 %v5656, 1e-12
    %v5692 = vmax.f32 %v5659, 1e-12
    %v5693 = vmax.f32 %v5662, 1e-12
    %v5694 = vmax.f32 %v5665, 1e-12
    %v5695 = vmax.f32 %v5668, 1e-12
    %v5696 = vmax.f32 %v5671, 1e-12
    %v5697 = vmax.f32 %v5674, 1e-12
    %v5698 = vmax.f32 %v5677, 1e-12
    %v5699 = vmax.f32 %v5680, 1e-12
    %v5700 = vmax.f32 %v5683, 1e-12
    %5717 = vrot.lane.b32.xlu0 %v5685, 127
    %v5718 = vpop.permute.xlu0 %5717
    %5719 = vrot.lane.b32.xlu0 %v5686, 127
    %v5720 = vpop.permute.xlu0 %5719
    %5721 = vrot.lane.b32.xlu0 %v5687, 127
    %v5722 = vpop.permute.xlu0 %5721
    %5723 = vrot.lane.b32.xlu0 %v5688, 127
    %v5724 = vpop.permute.xlu0 %5723
    %5725 = vrot.lane.b32.xlu0 %v5689, 127
    %v5726 = vpop.permute.xlu0 %5725
    %5727 = vrot.lane.b32.xlu0 %v5690, 127
    %v5728 = vpop.permute.xlu0 %5727
    %5729 = vrot.lane.b32.xlu0 %v5691, 127
    %v5730 = vpop.permute.xlu0 %5729
    %5731 = vrot.lane.b32.xlu0 %v5692, 127
    %v5732 = vpop.permute.xlu0 %5731
    %5733 = vrot.lane.b32.xlu0 %v5693, 127
    %v5734 = vpop.permute.xlu0 %5733
    %5735 = vrot.lane.b32.xlu0 %v5694, 127
    %v5736 = vpop.permute.xlu0 %5735
    %5737 = vrot.lane.b32.xlu0 %v5695, 127
    %v5738 = vpop.permute.xlu0 %5737
    %5739 = vrot.lane.b32.xlu0 %v5696, 127
    %v5740 = vpop.permute.xlu0 %5739
    %5741 = vrot.lane.b32.xlu0 %v5697, 127
    %v5742 = vpop.permute.xlu0 %5741
    %5743 = vrot.lane.b32.xlu0 %v5698, 127
    %v5744 = vpop.permute.xlu0 %5743
    %5745 = vrot.lane.b32.xlu0 %v5699, 127
    %v5746 = vpop.permute.xlu0 %5745
    %5747 = vrot.lane.b32.xlu0 %v5700, 127
    %v5748 = vpop.permute.xlu0 %5747
    %v5765 = vrcp.pop %v5718
    %v5766 = vmul.f32 %v5718, %v5765
    %v5767 = vsub.f32 1.0, %v5766
    %v5768 = vmul.f32 %v5765, %v5767
    %v5769 = vadd.f32 %v5765, %v5768
    %vm5770 = vweird.f32 %v5718
    %vm5771 = vweird.f32 %v5765
    %vm5772 = vmor %vm5770, %vm5771
    %v5773 = vsel %vm5772, %v5765, %v5769
    %v5774 = vand.u32 2147483647, %v5718
    %vm5775 = vcmp.eq.f32.partialorder %v5774, 8.507059e+37
    %v5776 = vand.u32 %v5718, 2147483648
    %v5777 = vor.u32 1.1754944e-38, %v5776
    %v5778 = vsel %vm5775, %v5777, %v5773
    %v5779 = vmul.f32 %v5638, %v5778
    %v5780 = vrcp.pop %v5720
    %v5781 = vmul.f32 %v5720, %v5780
    %v5782 = vsub.f32 1.0, %v5781
    %v5783 = vmul.f32 %v5780, %v5782
    %v5784 = vadd.f32 %v5780, %v5783
    %vm5785 = vweird.f32 %v5720
    %vm5786 = vweird.f32 %v5780
    %vm5787 = vmor %vm5785, %vm5786
    %v5788 = vsel %vm5787, %v5780, %v5784
    %v5789 = vand.u32 2147483647, %v5720
    %vm5790 = vcmp.eq.f32.partialorder %v5789, 8.507059e+37
    %v5791 = vand.u32 %v5720, 2147483648
    %v5792 = vor.u32 1.1754944e-38, %v5791
    %v5793 = vsel %vm5790, %v5792, %v5788
    %v5794 = vmul.f32 %v5641, %v5793
    %v5795 = vrcp.pop %v5722
    %v5796 = vmul.f32 %v5722, %v5795
    %v5797 = vsub.f32 1.0, %v5796
    %v5798 = vmul.f32 %v5795, %v5797
    %v5799 = vadd.f32 %v5795, %v5798
    %vm5800 = vweird.f32 %v5722
    %vm5801 = vweird.f32 %v5795
    %vm5802 = vmor %vm5800, %vm5801
    %v5803 = vsel %vm5802, %v5795, %v5799
    %v5804 = vand.u32 2147483647, %v5722
    %vm5805 = vcmp.eq.f32.partialorder %v5804, 8.507059e+37
    %v5806 = vand.u32 %v5722, 2147483648
    %v5807 = vor.u32 1.1754944e-38, %v5806
    %v5808 = vsel %vm5805, %v5807, %v5803
    %v5809 = vmul.f32 %v5644, %v5808
    %v5810 = vrcp.pop %v5724
    %v5811 = vmul.f32 %v5724, %v5810
    %v5812 = vsub.f32 1.0, %v5811
    %v5813 = vmul.f32 %v5810, %v5812
    %v5814 = vadd.f32 %v5810, %v5813
    %vm5815 = vweird.f32 %v5724
    %vm5816 = vweird.f32 %v5810
    %vm5817 = vmor %vm5815, %vm5816
    %v5818 = vsel %vm5817, %v5810, %v5814
    %v5819 = vand.u32 2147483647, %v5724
    %vm5820 = vcmp.eq.f32.partialorder %v5819, 8.507059e+37
    %v5821 = vand.u32 %v5724, 2147483648
    %v5822 = vor.u32 1.1754944e-38, %v5821
    %v5823 = vsel %vm5820, %v5822, %v5818
    %v5824 = vmul.f32 %v5647, %v5823
    %v5825 = vrcp.pop %v5726
    %v5826 = vmul.f32 %v5726, %v5825
    %v5827 = vsub.f32 1.0, %v5826
    %v5828 = vmul.f32 %v5825, %v5827
    %v5829 = vadd.f32 %v5825, %v5828
    %vm5830 = vweird.f32 %v5726
    %vm5831 = vweird.f32 %v5825
    %vm5832 = vmor %vm5830, %vm5831
    %v5833 = vsel %vm5832, %v5825, %v5829
    %v5834 = vand.u32 2147483647, %v5726
    %vm5835 = vcmp.eq.f32.partialorder %v5834, 8.507059e+37
    %v5836 = vand.u32 %v5726, 2147483648
    %v5837 = vor.u32 1.1754944e-38, %v5836
    %v5838 = vsel %vm5835, %v5837, %v5833
    %v5839 = vmul.f32 %v5650, %v5838
    %v5840 = vrcp.pop %v5728
    %v5841 = vmul.f32 %v5728, %v5840
    %v5842 = vsub.f32 1.0, %v5841
    %v5843 = vmul.f32 %v5840, %v5842
    %v5844 = vadd.f32 %v5840, %v5843
    %vm5845 = vweird.f32 %v5728
    %vm5846 = vweird.f32 %v5840
    %vm5847 = vmor %vm5845, %vm5846
    %v5848 = vsel %vm5847, %v5840, %v5844
    %v5849 = vand.u32 2147483647, %v5728
    %vm5850 = vcmp.eq.f32.partialorder %v5849, 8.507059e+37
    %v5851 = vand.u32 %v5728, 2147483648
    %v5852 = vor.u32 1.1754944e-38, %v5851
    %v5853 = vsel %vm5850, %v5852, %v5848
    %v5854 = vmul.f32 %v5653, %v5853
    %v5855 = vrcp.pop %v5730
    %v5856 = vmul.f32 %v5730, %v5855
    %v5857 = vsub.f32 1.0, %v5856
    %v5858 = vmul.f32 %v5855, %v5857
    %v5859 = vadd.f32 %v5855, %v5858
    %vm5860 = vweird.f32 %v5730
    %vm5861 = vweird.f32 %v5855
    %vm5862 = vmor %vm5860, %vm5861
    %v5863 = vsel %vm5862, %v5855, %v5859
    %v5864 = vand.u32 2147483647, %v5730
    %vm5865 = vcmp.eq.f32.partialorder %v5864, 8.507059e+37
    %v5866 = vand.u32 %v5730, 2147483648
    %v5867 = vor.u32 1.1754944e-38, %v5866
    %v5868 = vsel %vm5865, %v5867, %v5863
    %v5869 = vmul.f32 %v5656, %v5868
    %v5870 = vrcp.pop %v5732
    %v5871 = vmul.f32 %v5732, %v5870
    %v5872 = vsub.f32 1.0, %v5871
    %v5873 = vmul.f32 %v5870, %v5872
    %v5874 = vadd.f32 %v5870, %v5873
    %vm5875 = vweird.f32 %v5732
    %vm5876 = vweird.f32 %v5870
    %vm5877 = vmor %vm5875, %vm5876
    %v5878 = vsel %vm5877, %v5870, %v5874
    %v5879 = vand.u32 2147483647, %v5732
    %vm5880 = vcmp.eq.f32.partialorder %v5879, 8.507059e+37
    %v5881 = vand.u32 %v5732, 2147483648
    %v5882 = vor.u32 1.1754944e-38, %v5881
    %v5883 = vsel %vm5880, %v5882, %v5878
    %v5884 = vmul.f32 %v5659, %v5883
    %v5885 = vrcp.pop %v5734
    %v5886 = vmul.f32 %v5734, %v5885
    %v5887 = vsub.f32 1.0, %v5886
    %v5888 = vmul.f32 %v5885, %v5887
    %v5889 = vadd.f32 %v5885, %v5888
    %vm5890 = vweird.f32 %v5734
    %vm5891 = vweird.f32 %v5885
    %vm5892 = vmor %vm5890, %vm5891
    %v5893 = vsel %vm5892, %v5885, %v5889
    %v5894 = vand.u32 2147483647, %v5734
    %vm5895 = vcmp.eq.f32.partialorder %v5894, 8.507059e+37
    %v5896 = vand.u32 %v5734, 2147483648
    %v5897 = vor.u32 1.1754944e-38, %v5896
    %v5898 = vsel %vm5895, %v5897, %v5893
    %v5899 = vmul.f32 %v5662, %v5898
    %v5900 = vrcp.pop %v5736
    %v5901 = vmul.f32 %v5736, %v5900
    %v5902 = vsub.f32 1.0, %v5901
    %v5903 = vmul.f32 %v5900, %v5902
    %v5904 = vadd.f32 %v5900, %v5903
    %vm5905 = vweird.f32 %v5736
    %vm5906 = vweird.f32 %v5900
    %vm5907 = vmor %vm5905, %vm5906
    %v5908 = vsel %vm5907, %v5900, %v5904
    %v5909 = vand.u32 2147483647, %v5736
    %vm5910 = vcmp.eq.f32.partialorder %v5909, 8.507059e+37
    %v5911 = vand.u32 %v5736, 2147483648
    %v5912 = vor.u32 1.1754944e-38, %v5911
    %v5913 = vsel %vm5910, %v5912, %v5908
    %v5914 = vmul.f32 %v5665, %v5913
    %v5915 = vrcp.pop %v5738
    %v5916 = vmul.f32 %v5738, %v5915
    %v5917 = vsub.f32 1.0, %v5916
    %v5918 = vmul.f32 %v5915, %v5917
    %v5919 = vadd.f32 %v5915, %v5918
    %vm5920 = vweird.f32 %v5738
    %vm5921 = vweird.f32 %v5915
    %vm5922 = vmor %vm5920, %vm5921
    %v5923 = vsel %vm5922, %v5915, %v5919
    %v5924 = vand.u32 2147483647, %v5738
    %vm5925 = vcmp.eq.f32.partialorder %v5924, 8.507059e+37
    %v5926 = vand.u32 %v5738, 2147483648
    %v5927 = vor.u32 1.1754944e-38, %v5926
    %v5928 = vsel %vm5925, %v5927, %v5923
    %v5929 = vmul.f32 %v5668, %v5928
    %v5930 = vrcp.pop %v5740
    %v5931 = vmul.f32 %v5740, %v5930
    %v5932 = vsub.f32 1.0, %v5931
    %v5933 = vmul.f32 %v5930, %v5932
    %v5934 = vadd.f32 %v5930, %v5933
    %vm5935 = vweird.f32 %v5740
    %vm5936 = vweird.f32 %v5930
    %vm5937 = vmor %vm5935, %vm5936
    %v5938 = vsel %vm5937, %v5930, %v5934
    %v5939 = vand.u32 2147483647, %v5740
    %vm5940 = vcmp.eq.f32.partialorder %v5939, 8.507059e+37
    %v5941 = vand.u32 %v5740, 2147483648
    %v5942 = vor.u32 1.1754944e-38, %v5941
    %v5943 = vsel %vm5940, %v5942, %v5938
    %v5944 = vmul.f32 %v5671, %v5943
    %v5945 = vrcp.pop %v5742
    %v5946 = vmul.f32 %v5742, %v5945
    %v5947 = vsub.f32 1.0, %v5946
    %v5948 = vmul.f32 %v5945, %v5947
    %v5949 = vadd.f32 %v5945, %v5948
    %vm5950 = vweird.f32 %v5742
    %vm5951 = vweird.f32 %v5945
    %vm5952 = vmor %vm5950, %vm5951
    %v5953 = vsel %vm5952, %v5945, %v5949
    %v5954 = vand.u32 2147483647, %v5742
    %vm5955 = vcmp.eq.f32.partialorder %v5954, 8.507059e+37
    %v5956 = vand.u32 %v5742, 2147483648
    %v5957 = vor.u32 1.1754944e-38, %v5956
    %v5958 = vsel %vm5955, %v5957, %v5953
    %v5959 = vmul.f32 %v5674, %v5958
    %v5960 = vrcp.pop %v5744
    %v5961 = vmul.f32 %v5744, %v5960
    %v5962 = vsub.f32 1.0, %v5961
    %v5963 = vmul.f32 %v5960, %v5962
    %v5964 = vadd.f32 %v5960, %v5963
    %vm5965 = vweird.f32 %v5744
    %vm5966 = vweird.f32 %v5960
    %vm5967 = vmor %vm5965, %vm5966
    %v5968 = vsel %vm5967, %v5960, %v5964
    %v5969 = vand.u32 2147483647, %v5744
    %vm5970 = vcmp.eq.f32.partialorder %v5969, 8.507059e+37
    %v5971 = vand.u32 %v5744, 2147483648
    %v5972 = vor.u32 1.1754944e-38, %v5971
    %v5973 = vsel %vm5970, %v5972, %v5968
    %v5974 = vmul.f32 %v5677, %v5973
    %v5975 = vrcp.pop %v5746
    %v5976 = vmul.f32 %v5746, %v5975
    %v5977 = vsub.f32 1.0, %v5976
    %v5978 = vmul.f32 %v5975, %v5977
    %v5979 = vadd.f32 %v5975, %v5978
    %vm5980 = vweird.f32 %v5746
    %vm5981 = vweird.f32 %v5975
    %vm5982 = vmor %vm5980, %vm5981
    %v5983 = vsel %vm5982, %v5975, %v5979
    %v5984 = vand.u32 2147483647, %v5746
    %vm5985 = vcmp.eq.f32.partialorder %v5984, 8.507059e+37
    %v5986 = vand.u32 %v5746, 2147483648
    %v5987 = vor.u32 1.1754944e-38, %v5986
    %v5988 = vsel %vm5985, %v5987, %v5983
    %v5989 = vmul.f32 %v5680, %v5988
    %v5990 = vrcp.pop %v5748
    %v5991 = vmul.f32 %v5748, %v5990
    %v5992 = vsub.f32 1.0, %v5991
    %v5993 = vmul.f32 %v5990, %v5992
    %v5994 = vadd.f32 %v5990, %v5993
    %vm5995 = vweird.f32 %v5748
    %vm5996 = vweird.f32 %v5990
    %vm5997 = vmor %vm5995, %vm5996
    %v5998 = vsel %vm5997, %v5990, %v5994
    %v5999 = vand.u32 2147483647, %v5748
    %vm6000 = vcmp.eq.f32.partialorder %v5999, 8.507059e+37
    %v6001 = vand.u32 %v5748, 2147483648
    %v6002 = vor.u32 1.1754944e-38, %v6001
    %v6003 = vsel %vm6000, %v6002, %v5998
    %v6004 = vmul.f32 %v5683, %v6003
    %v6005 = vperm.slane %v5025, 0
    %v6006 = vadd.f32 %v5779, %v6005
    %v6007 = vadd.f32 %v5794, %v6005
    %v6008 = vadd.f32 %v5809, %v6005
    %v6009 = vadd.f32 %v5824, %v6005
    %v6010 = vadd.f32 %v5839, %v6005
    %v6011 = vadd.f32 %v5854, %v6005
    %v6012 = vadd.f32 %v5869, %v6005
    %v6013 = vadd.f32 %v5884, %v6005
    %v6014 = vadd.f32 %v5899, %v6005
    %v6015 = vadd.f32 %v5914, %v6005
    %v6016 = vadd.f32 %v5929, %v6005
    %v6017 = vadd.f32 %v5944, %v6005
    %v6018 = vadd.f32 %v5959, %v6005
    %v6019 = vadd.f32 %v5974, %v6005
    %v6020 = vadd.f32 %v5989, %v6005
    %v6021 = vadd.f32 %v6004, %v6005
    %v6022 = vadd.f32 %v3760, 1.0
    %v6023 = vmul.f32 %v6022, 0.5
    %v6024 = vfloor.f32 %v6023
    %v6026 = vsel %vm2102, %v6006, 0
    %v6029 = vsel %vm2102, %v6007, 0
    %v6032 = vsel %vm2102, %v6008, 0
    %v6035 = vsel %vm2102, %v6009, 0
    %v6038 = vsel %vm2102, %v6010, 0
    %v6041 = vsel %vm2102, %v6011, 0
    %v6044 = vsel %vm2102, %v6012, 0
    %v6047 = vsel %vm2102, %v6013, 0
    %v6050 = vsel %vm2102, %v6014, 0
    %v6053 = vsel %vm2102, %v6015, 0
    %v6056 = vsel %vm2102, %v6016, 0
    %v6059 = vsel %vm2102, %v6017, 0
    %v6062 = vsel %vm2102, %v6018, 0
    %v6065 = vsel %vm2102, %v6019, 0
    %v6068 = vsel %vm2102, %v6020, 0
    %v6071 = vsel %vm2102, %v6021, 0
    %6073 = vmatpush.xpose.msra.mxu0 %v6071
    %6074 = vmatpush.xpose.msra.mxu0 %v6068
    %6075 = vmatpush.xpose.msra.mxu0 %v6065
    %6076 = vmatpush.xpose.msra.mxu0 %v6062
    %6077 = vmatpush.xpose.msra.mxu0 %v6059
    %6078 = vmatpush.xpose.msra.mxu0 %v6056
    %6079 = vmatpush.xpose.msra.mxu0 %v6053
    %6080 = vmatpush.xpose.msra.mxu0 %v6050
    %6081 = vmatpush.xpose.msra.mxu0 %v6047
    %6082 = vmatpush.xpose.msra.mxu0 %v6044
    %6083 = vmatpush.xpose.msra.mxu0 %v6041
    %6084 = vmatpush.xpose.msra.mxu0 %v6038
    %6085 = vmatpush.xpose.msra.mxu0 %v6035
    %6086 = vmatpush.xpose.msra.mxu0 %v6032
    %6087 = vmatpush.xpose.msra.mxu0 %v6029
    %6088 = vmatpush.xpose.msra.mxu0 %v6026
    %6089 = vmatmul.f32.gmra.mxu0 %v2104
    %v6090 = vpop.f32.mrf.mxu0
    %v6091 = vadd.f32 0.0, %v6090
    %6092 = vmatmul.f32.gmra.mxu0 %v2104
    %v6093 = vpop.f32.mrf.mxu0
    %v6094 = vadd.f32 0.0, %v6093
    %6095 = vmatmul.f32.gmra.mxu0 %v2104
    %v6096 = vpop.f32.mrf.mxu0
    %v6097 = vadd.f32 0.0, %v6096
    %6098 = vmatmul.f32.gmra.mxu0 %v2104
    %v6099 = vpop.f32.mrf.mxu0
    %v6100 = vadd.f32 0.0, %v6099
    %6101 = vmatmul.f32.gmra.mxu0 %v2104
    %v6102 = vpop.f32.mrf.mxu0
    %v6103 = vadd.f32 0.0, %v6102
    %6104 = vmatmul.f32.gmra.mxu0 %v2104
    %v6105 = vpop.f32.mrf.mxu0
    %v6106 = vadd.f32 0.0, %v6105
    %6107 = vmatmul.f32.gmra.mxu0 %v2104
    %v6108 = vpop.f32.mrf.mxu0
    %v6109 = vadd.f32 0.0, %v6108
    %6110 = vmatmul.f32.gmra.mxu0 %v2104
    %v6111 = vpop.f32.mrf.mxu0
    %v6112 = vadd.f32 0.0, %v6111
    %6113 = vmatmul.f32.gmra.mxu0 %v2104
    %v6114 = vpop.f32.mrf.mxu0
    %v6115 = vadd.f32 0.0, %v6114
    %6116 = vmatmul.f32.gmra.mxu0 %v2104
    %v6117 = vpop.f32.mrf.mxu0
    %v6118 = vadd.f32 0.0, %v6117
    %6119 = vmatmul.f32.gmra.mxu0 %v2104
    %v6120 = vpop.f32.mrf.mxu0
    %v6121 = vadd.f32 0.0, %v6120
    %6122 = vmatmul.f32.gmra.mxu0 %v2104
    %v6123 = vpop.f32.mrf.mxu0
    %v6124 = vadd.f32 0.0, %v6123
    %6125 = vmatmul.f32.gmra.mxu0 %v2104
    %v6126 = vpop.f32.mrf.mxu0
    %v6127 = vadd.f32 0.0, %v6126
    %6128 = vmatmul.f32.gmra.mxu0 %v2104
    %v6129 = vpop.f32.mrf.mxu0
    %v6130 = vadd.f32 0.0, %v6129
    %6131 = vmatmul.f32.gmra.mxu0 %v2104
    %v6132 = vpop.f32.mrf.mxu0
    %v6133 = vadd.f32 0.0, %v6132
    %6134 = vmatmul.f32.gmra.mxu0 %v2104
    %v6135 = vpop.f32.mrf.mxu0
    %v6136 = vadd.f32 0.0, %v6135
    %6137 = vdwg.mxu0
    %6138 = vset.pattern.permute.xlu0 0
    %6139 = vperm.xlu0 %6138, %v6006
    %v6140 = vpop.permute.xlu0 %6139
    %6142 = vset.pattern.permute.xlu0 0
    %6143 = vperm.xlu0 %6142, %v6007
    %v6144 = vpop.permute.xlu0 %6143
    %6146 = vset.pattern.permute.xlu0 0
    %6147 = vperm.xlu0 %6146, %v6008
    %v6148 = vpop.permute.xlu0 %6147
    %6150 = vset.pattern.permute.xlu0 0
    %6151 = vperm.xlu0 %6150, %v6009
    %v6152 = vpop.permute.xlu0 %6151
    %6154 = vset.pattern.permute.xlu0 0
    %6155 = vperm.xlu0 %6154, %v6010
    %v6156 = vpop.permute.xlu0 %6155
    %6158 = vset.pattern.permute.xlu0 0
    %6159 = vperm.xlu0 %6158, %v6011
    %v6160 = vpop.permute.xlu0 %6159
    %6162 = vset.pattern.permute.xlu0 0
    %6163 = vperm.xlu0 %6162, %v6012
    %v6164 = vpop.permute.xlu0 %6163
    %6166 = vset.pattern.permute.xlu0 0
    %6167 = vperm.xlu0 %6166, %v6013
    %v6168 = vpop.permute.xlu0 %6167
    %6170 = vset.pattern.permute.xlu0 0
    %6171 = vperm.xlu0 %6170, %v6014
    %v6172 = vpop.permute.xlu0 %6171
    %6174 = vset.pattern.permute.xlu0 0
    %6175 = vperm.xlu0 %6174, %v6015
    %v6176 = vpop.permute.xlu0 %6175
    %6178 = vset.pattern.permute.xlu0 0
    %6179 = vperm.xlu0 %6178, %v6016
    %v6180 = vpop.permute.xlu0 %6179
    %6182 = vset.pattern.permute.xlu0 0
    %6183 = vperm.xlu0 %6182, %v6017
    %v6184 = vpop.permute.xlu0 %6183
    %6186 = vset.pattern.permute.xlu0 0
    %6187 = vperm.xlu0 %6186, %v6018
    %v6188 = vpop.permute.xlu0 %6187
    %6190 = vset.pattern.permute.xlu0 0
    %6191 = vperm.xlu0 %6190, %v6019
    %v6192 = vpop.permute.xlu0 %6191
    %6194 = vset.pattern.permute.xlu0 0
    %6195 = vperm.xlu0 %6194, %v6020
    %v6196 = vpop.permute.xlu0 %6195
    %6198 = vset.pattern.permute.xlu0 0
    %6199 = vperm.xlu0 %6198, %v6021
    %v6200 = vpop.permute.xlu0 %6199
    %vm6202 = vcmp.gt.f32.partialorder %v6091, %v6140
    %vm6203 = vcmp.gt.f32.partialorder %v6094, %v6144
    %vm6204 = vcmp.gt.f32.partialorder %v6097, %v6148
    %vm6205 = vcmp.gt.f32.partialorder %v6100, %v6152
    %vm6206 = vcmp.gt.f32.partialorder %v6103, %v6156
    %vm6207 = vcmp.gt.f32.partialorder %v6106, %v6160
    %vm6208 = vcmp.gt.f32.partialorder %v6109, %v6164
    %vm6209 = vcmp.gt.f32.partialorder %v6112, %v6168
    %vm6210 = vcmp.gt.f32.partialorder %v6115, %v6172
    %vm6211 = vcmp.gt.f32.partialorder %v6118, %v6176
    %vm6212 = vcmp.gt.f32.partialorder %v6121, %v6180
    %vm6213 = vcmp.gt.f32.partialorder %v6124, %v6184
    %vm6214 = vcmp.gt.f32.partialorder %v6127, %v6188
    %vm6215 = vcmp.gt.f32.partialorder %v6130, %v6192
    %vm6216 = vcmp.gt.f32.partialorder %v6133, %v6196
    %vm6217 = vcmp.gt.f32.partialorder %v6136, %v6200
    %vm6218 = vcmp.eq.f32.partialorder %v6091, %v6140
    %vm6219 = vcmp.eq.f32.partialorder %v6094, %v6144
    %vm6220 = vcmp.eq.f32.partialorder %v6097, %v6148
    %vm6221 = vcmp.eq.f32.partialorder %v6100, %v6152
    %vm6222 = vcmp.eq.f32.partialorder %v6103, %v6156
    %vm6223 = vcmp.eq.f32.partialorder %v6106, %v6160
    %vm6224 = vcmp.eq.f32.partialorder %v6109, %v6164
    %vm6225 = vcmp.eq.f32.partialorder %v6112, %v6168
    %vm6226 = vcmp.eq.f32.partialorder %v6115, %v6172
    %vm6227 = vcmp.eq.f32.partialorder %v6118, %v6176
    %vm6228 = vcmp.eq.f32.partialorder %v6121, %v6180
    %vm6229 = vcmp.eq.f32.partialorder %v6124, %v6184
    %vm6230 = vcmp.eq.f32.partialorder %v6127, %v6188
    %vm6231 = vcmp.eq.f32.partialorder %v6130, %v6192
    %vm6232 = vcmp.eq.f32.partialorder %v6133, %v6196
    %vm6233 = vcmp.eq.f32.partialorder %v6136, %v6200
    %vm6234 = vmand %vm6218, %vm3145
    %vm6235 = vmand %vm6219, %vm3146
    %vm6236 = vmand %vm6220, %vm3147
    %vm6237 = vmand %vm6221, %vm3148
    %vm6238 = vmand %vm6222, %vm3149
    %vm6239 = vmand %vm6223, %vm3150
    %vm6240 = vmand %vm6224, %vm3151
    %vm6241 = vmand %vm6225, %vm3152
    %vm6242 = vmand %vm6226, %vm3153
    %vm6243 = vmand %vm6227, %vm3154
    %vm6244 = vmand %vm6228, %vm3155
    %vm6245 = vmand %vm6229, %vm3156
    %vm6246 = vmand %vm6230, %vm3157
    %vm6247 = vmand %vm6231, %vm3158
    %vm6248 = vmand %vm6232, %vm3159
    %vm6249 = vmand %vm6233, %vm3160
    %vm6250 = vmor %vm6202, %vm6234
    %vm6251 = vmor %vm6203, %vm6235
    %vm6252 = vmor %vm6204, %vm6236
    %vm6253 = vmor %vm6205, %vm6237
    %vm6254 = vmor %vm6206, %vm6238
    %vm6255 = vmor %vm6207, %vm6239
    %vm6256 = vmor %vm6208, %vm6240
    %vm6257 = vmor %vm6209, %vm6241
    %vm6258 = vmor %vm6210, %vm6242
    %vm6259 = vmor %vm6211, %vm6243
    %vm6260 = vmor %vm6212, %vm6244
    %vm6261 = vmor %vm6213, %vm6245
    %vm6262 = vmor %vm6214, %vm6246
    %vm6263 = vmor %vm6215, %vm6247
    %vm6264 = vmor %vm6216, %vm6248
    %vm6265 = vmor %vm6217, %vm6249
    %v6266 = vsel %vm6250, 1, 0
    %v6267 = vsel %vm6251, 1, 0
    %v6268 = vsel %vm6252, 1, 0
    %v6269 = vsel %vm6253, 1, 0
    %v6270 = vsel %vm6254, 1, 0
    %v6271 = vsel %vm6255, 1, 0
    %v6272 = vsel %vm6256, 1, 0
    %v6273 = vsel %vm6257, 1, 0
    %v6274 = vsel %vm6258, 1, 0
    %v6275 = vsel %vm6259, 1, 0
    %v6276 = vsel %vm6260, 1, 0
    %v6277 = vsel %vm6261, 1, 0
    %v6278 = vsel %vm6262, 1, 0
    %v6279 = vsel %vm6263, 1, 0
    %v6280 = vsel %vm6264, 1, 0
    %v6281 = vsel %vm6265, 1, 0
    %v6282 = vcvt.s32.f32 %v6266
    %v6283 = vcvt.s32.f32 %v6267
    %v6284 = vcvt.s32.f32 %v6268
    %v6285 = vcvt.s32.f32 %v6269
    %v6286 = vcvt.s32.f32 %v6270
    %v6287 = vcvt.s32.f32 %v6271
    %v6288 = vcvt.s32.f32 %v6272
    %v6289 = vcvt.s32.f32 %v6273
    %v6290 = vcvt.s32.f32 %v6274
    %v6291 = vcvt.s32.f32 %v6275
    %v6292 = vcvt.s32.f32 %v6276
    %v6293 = vcvt.s32.f32 %v6277
    %v6294 = vcvt.s32.f32 %v6278
    %v6295 = vcvt.s32.f32 %v6279
    %v6296 = vcvt.s32.f32 %v6280
    %v6297 = vcvt.s32.f32 %v6281
    %6298 = vmatpush.msra.mxu0 %v3353
    %6299 = vmatpush.msra.mxu0 %v3352
    %6300 = vmatpush.msra.mxu0 %v3351
    %6301 = vmatpush.msra.mxu0 %v3350
    %6302 = vmatpush.msra.mxu0 %v3349
    %6303 = vmatpush.msra.mxu0 %v3348
    %6304 = vmatpush.msra.mxu0 %v3347
    %6305 = vmatpush.msra.mxu0 %v3346
    %6306 = vmatpush.msra.mxu0 %v3345
    %6307 = vmatpush.msra.mxu0 %v3344
    %6308 = vmatpush.msra.mxu0 %v3343
    %6309 = vmatpush.msra.mxu0 %v3342
    %6310 = vmatpush.msra.mxu0 %v3341
    %6311 = vmatpush.msra.mxu0 %v3340
    %6312 = vmatpush.msra.mxu0 %v3339
    %6313 = vmatpush.msra.mxu0 %v3338
    %6314 = vmatmul.f32.gmra.mxu0 %v6282
    %v6315 = vpop.f32.mrf.mxu0
    %v6316 = vadd.f32 0.0, %v6315
    %6317 = vmatmul.f32.gmra.mxu0 %v6283
    %v6318 = vpop.f32.mrf.mxu0
    %v6319 = vadd.f32 0.0, %v6318
    %6320 = vmatmul.f32.gmra.mxu0 %v6284
    %v6321 = vpop.f32.mrf.mxu0
    %v6322 = vadd.f32 0.0, %v6321
    %6323 = vmatmul.f32.gmra.mxu0 %v6285
    %v6324 = vpop.f32.mrf.mxu0
    %v6325 = vadd.f32 0.0, %v6324
    %6326 = vmatmul.f32.gmra.mxu0 %v6286
    %v6327 = vpop.f32.mrf.mxu0
    %v6328 = vadd.f32 0.0, %v6327
    %6329 = vmatmul.f32.gmra.mxu0 %v6287
    %v6330 = vpop.f32.mrf.mxu0
    %v6331 = vadd.f32 0.0, %v6330
    %6332 = vmatmul.f32.gmra.mxu0 %v6288
    %v6333 = vpop.f32.mrf.mxu0
    %v6334 = vadd.f32 0.0, %v6333
    %6335 = vmatmul.f32.gmra.mxu0 %v6289
    %v6336 = vpop.f32.mrf.mxu0
    %v6337 = vadd.f32 0.0, %v6336
    %6338 = vmatmul.f32.gmra.mxu0 %v6290
    %v6339 = vpop.f32.mrf.mxu0
    %v6340 = vadd.f32 0.0, %v6339
    %6341 = vmatmul.f32.gmra.mxu0 %v6291
    %v6342 = vpop.f32.mrf.mxu0
    %v6343 = vadd.f32 0.0, %v6342
    %6344 = vmatmul.f32.gmra.mxu0 %v6292
    %v6345 = vpop.f32.mrf.mxu0
    %v6346 = vadd.f32 0.0, %v6345
    %6347 = vmatmul.f32.gmra.mxu0 %v6293
    %v6348 = vpop.f32.mrf.mxu0
    %v6349 = vadd.f32 0.0, %v6348
    %6350 = vmatmul.f32.gmra.mxu0 %v6294
    %v6351 = vpop.f32.mrf.mxu0
    %v6352 = vadd.f32 0.0, %v6351
    %6353 = vmatmul.f32.gmra.mxu0 %v6295
    %v6354 = vpop.f32.mrf.mxu0
    %v6355 = vadd.f32 0.0, %v6354
    %6356 = vmatmul.f32.gmra.mxu0 %v6296
    %v6357 = vpop.f32.mrf.mxu0
    %v6358 = vadd.f32 0.0, %v6357
    %6359 = vmatmul.f32.gmra.mxu0 %v6297
    %v6360 = vpop.f32.mrf.mxu0
    %v6361 = vadd.f32 0.0, %v6360
    %6362 = vdwg.mxu0
    %vm6363 = vcmp.lt.f32.partialorder %v6316, %v6024
    %vm6364 = vcmp.lt.f32.partialorder %v6319, %v6024
    %vm6365 = vcmp.lt.f32.partialorder %v6322, %v6024
    %vm6366 = vcmp.lt.f32.partialorder %v6325, %v6024
    %vm6367 = vcmp.lt.f32.partialorder %v6328, %v6024
    %vm6368 = vcmp.lt.f32.partialorder %v6331, %v6024
    %vm6369 = vcmp.lt.f32.partialorder %v6334, %v6024
    %vm6370 = vcmp.lt.f32.partialorder %v6337, %v6024
    %vm6371 = vcmp.lt.f32.partialorder %v6340, %v6024
    %vm6372 = vcmp.lt.f32.partialorder %v6343, %v6024
    %vm6373 = vcmp.lt.f32.partialorder %v6346, %v6024
    %vm6374 = vcmp.lt.f32.partialorder %v6349, %v6024
    %vm6375 = vcmp.lt.f32.partialorder %v6352, %v6024
    %vm6376 = vcmp.lt.f32.partialorder %v6355, %v6024
    %vm6377 = vcmp.lt.f32.partialorder %v6358, %v6024
    %vm6378 = vcmp.lt.f32.partialorder %v6361, %v6024
    %v6379 = vsel %vm6363, 1, 0
    %v6380 = vsel %vm6364, 1, 0
    %v6381 = vsel %vm6365, 1, 0
    %v6382 = vsel %vm6366, 1, 0
    %v6383 = vsel %vm6367, 1, 0
    %v6384 = vsel %vm6368, 1, 0
    %v6385 = vsel %vm6369, 1, 0
    %v6386 = vsel %vm6370, 1, 0
    %v6387 = vsel %vm6371, 1, 0
    %v6388 = vsel %vm6372, 1, 0
    %v6389 = vsel %vm6373, 1, 0
    %v6390 = vsel %vm6374, 1, 0
    %v6391 = vsel %vm6375, 1, 0
    %v6392 = vsel %vm6376, 1, 0
    %v6393 = vsel %vm6377, 1, 0
    %v6394 = vsel %vm6378, 1, 0
    %v6395 = vcvt.s32.f32 %v6379
    %v6396 = vcvt.s32.f32 %v6380
    %v6397 = vcvt.s32.f32 %v6381
    %v6398 = vcvt.s32.f32 %v6382
    %v6399 = vcvt.s32.f32 %v6383
    %v6400 = vcvt.s32.f32 %v6384
    %v6401 = vcvt.s32.f32 %v6385
    %v6402 = vcvt.s32.f32 %v6386
    %v6403 = vcvt.s32.f32 %v6387
    %v6404 = vcvt.s32.f32 %v6388
    %v6405 = vcvt.s32.f32 %v6389
    %v6406 = vcvt.s32.f32 %v6390
    %v6407 = vcvt.s32.f32 %v6391
    %v6408 = vcvt.s32.f32 %v6392
    %v6409 = vcvt.s32.f32 %v6393
    %v6410 = vcvt.s32.f32 %v6394
    %v6411 = vmul.f32 %v3338, %v6395
    %v6412 = vmul.f32 %v3339, %v6396
    %v6413 = vmul.f32 %v3340, %v6397
    %v6414 = vmul.f32 %v3341, %v6398
    %v6415 = vmul.f32 %v3342, %v6399
    %v6416 = vmul.f32 %v3343, %v6400
    %v6417 = vmul.f32 %v3344, %v6401
    %v6418 = vmul.f32 %v3345, %v6402
    %v6419 = vmul.f32 %v3346, %v6403
    %v6420 = vmul.f32 %v3347, %v6404
    %v6421 = vmul.f32 %v3348, %v6405
    %v6422 = vmul.f32 %v3349, %v6406
    %v6423 = vmul.f32 %v3350, %v6407
    %v6424 = vmul.f32 %v3351, %v6408
    %v6425 = vmul.f32 %v3352, %v6409
    %v6426 = vmul.f32 %v3353, %v6410
    %v6427 = vtanh.pop %v6006
    %v6428 = vtanh.pop %v6007
    %v6429 = vtanh.pop %v6008
    %v6430 = vtanh.pop %v6009
    %v6431 = vtanh.pop %v6010
    %v6432 = vtanh.pop %v6011
    %v6433 = vtanh.pop %v6012
    %v6434 = vtanh.pop %v6013
    %v6435 = vtanh.pop %v6014
    %v6436 = vtanh.pop %v6015
    %v6437 = vtanh.pop %v6016
    %v6438 = vtanh.pop %v6017
    %v6439 = vtanh.pop %v6018
    %v6440 = vtanh.pop %v6019
    %v6441 = vtanh.pop %v6020
    %v6442 = vtanh.pop %v6021
    %6444 = vset.pattern.permute.xlu0 0
    %6445 = vperm.xlu0 %6444, %v6427
    %v6446 = vpop.permute.xlu0 %6445
    %6449 = vset.pattern.permute.xlu0 0
    %6450 = vperm.xlu0 %6449, %v6428
    %v6451 = vpop.permute.xlu0 %6450
    %6454 = vset.pattern.permute.xlu0 0
    %6455 = vperm.xlu0 %6454, %v6429
    %v6456 = vpop.permute.xlu0 %6455
    %6459 = vset.pattern.permute.xlu0 0
    %6460 = vperm.xlu0 %6459, %v6430
    %v6461 = vpop.permute.xlu0 %6460
    %6464 = vset.pattern.permute.xlu0 0
    %6465 = vperm.xlu0 %6464, %v6431
    %v6466 = vpop.permute.xlu0 %6465
    %6469 = vset.pattern.permute.xlu0 0
    %6470 = vperm.xlu0 %6469, %v6432
    %v6471 = vpop.permute.xlu0 %6470
    %6474 = vset.pattern.permute.xlu0 0
    %6475 = vperm.xlu0 %6474, %v6433
    %v6476 = vpop.permute.xlu0 %6475
    %6479 = vset.pattern.permute.xlu0 0
    %6480 = vperm.xlu0 %6479, %v6434
    %v6481 = vpop.permute.xlu0 %6480
    %6484 = vset.pattern.permute.xlu0 0
    %6485 = vperm.xlu0 %6484, %v6435
    %v6486 = vpop.permute.xlu0 %6485
    %6489 = vset.pattern.permute.xlu0 0
    %6490 = vperm.xlu0 %6489, %v6436
    %v6491 = vpop.permute.xlu0 %6490
    %6494 = vset.pattern.permute.xlu0 0
    %6495 = vperm.xlu0 %6494, %v6437
    %v6496 = vpop.permute.xlu0 %6495
    %6499 = vset.pattern.permute.xlu0 0
    %6500 = vperm.xlu0 %6499, %v6438
    %v6501 = vpop.permute.xlu0 %6500
    %6504 = vset.pattern.permute.xlu0 0
    %6505 = vperm.xlu0 %6504, %v6439
    %v6506 = vpop.permute.xlu0 %6505
    %6509 = vset.pattern.permute.xlu0 0
    %6510 = vperm.xlu0 %6509, %v6440
    %v6511 = vpop.permute.xlu0 %6510
    %6514 = vset.pattern.permute.xlu0 0
    %6515 = vperm.xlu0 %6514, %v6441
    %v6516 = vpop.permute.xlu0 %6515
    %6519 = vset.pattern.permute.xlu0 0
    %6520 = vperm.xlu0 %6519, %v6442
    %v6521 = vpop.permute.xlu0 %6520
    %v6523 = vmul.f32 %v4928, %v6446
    %v6524 = vmul.f32 %v4929, %v6451
    %v6525 = vmul.f32 %v4930, %v6456
    %v6526 = vmul.f32 %v4931, %v6461
    %v6527 = vmul.f32 %v4932, %v6466
    %v6528 = vmul.f32 %v4933, %v6471
    %v6529 = vmul.f32 %v4934, %v6476
    %v6530 = vmul.f32 %v4935, %v6481
    %v6531 = vmul.f32 %v4936, %v6486
    %v6532 = vmul.f32 %v4937, %v6491
    %v6533 = vmul.f32 %v4938, %v6496
    %v6534 = vmul.f32 %v4939, %v6501
    %v6535 = vmul.f32 %v4940, %v6506
    %v6536 = vmul.f32 %v4941, %v6511
    %v6537 = vmul.f32 %v4942, %v6516
    %v6538 = vmul.f32 %v4943, %v6521
    %6540 = vset.pattern.permute.xlu0 0
    %6541 = vperm.xlu0 %6540, %v6411
    %v6542 = vpop.permute.xlu0 %6541
    %6545 = vset.pattern.permute.xlu0 0
    %6546 = vperm.xlu0 %6545, %v6412
    %v6547 = vpop.permute.xlu0 %6546
    %6550 = vset.pattern.permute.xlu0 0
    %6551 = vperm.xlu0 %6550, %v6413
    %v6552 = vpop.permute.xlu0 %6551
    %6555 = vset.pattern.permute.xlu0 0
    %6556 = vperm.xlu0 %6555, %v6414
    %v6557 = vpop.permute.xlu0 %6556
    %6560 = vset.pattern.permute.xlu0 0
    %6561 = vperm.xlu0 %6560, %v6415
    %v6562 = vpop.permute.xlu0 %6561
    %6565 = vset.pattern.permute.xlu0 0
    %6566 = vperm.xlu0 %6565, %v6416
    %v6567 = vpop.permute.xlu0 %6566
    %6570 = vset.pattern.permute.xlu0 0
    %6571 = vperm.xlu0 %6570, %v6417
    %v6572 = vpop.permute.xlu0 %6571
    %6575 = vset.pattern.permute.xlu0 0
    %6576 = vperm.xlu0 %6575, %v6418
    %v6577 = vpop.permute.xlu0 %6576
    %6580 = vset.pattern.permute.xlu0 0
    %6581 = vperm.xlu0 %6580, %v6419
    %v6582 = vpop.permute.xlu0 %6581
    %6585 = vset.pattern.permute.xlu0 0
    %6586 = vperm.xlu0 %6585, %v6420
    %v6587 = vpop.permute.xlu0 %6586
    %6590 = vset.pattern.permute.xlu0 0
    %6591 = vperm.xlu0 %6590, %v6421
    %v6592 = vpop.permute.xlu0 %6591
    %6595 = vset.pattern.permute.xlu0 0
    %6596 = vperm.xlu0 %6595, %v6422
    %v6597 = vpop.permute.xlu0 %6596
    %6600 = vset.pattern.permute.xlu0 0
    %6601 = vperm.xlu0 %6600, %v6423
    %v6602 = vpop.permute.xlu0 %6601
    %6605 = vset.pattern.permute.xlu0 0
    %6606 = vperm.xlu0 %6605, %v6424
    %v6607 = vpop.permute.xlu0 %6606
    %6610 = vset.pattern.permute.xlu0 0
    %6611 = vperm.xlu0 %6610, %v6425
    %v6612 = vpop.permute.xlu0 %6611
    %6615 = vset.pattern.permute.xlu0 0
    %6616 = vperm.xlu0 %6615, %v6426
    %v6617 = vpop.permute.xlu0 %6616
    %v6619 = vmul.f32 %v6523, %v6542
    %v6620 = vmul.f32 %v6524, %v6547
    %v6621 = vmul.f32 %v6525, %v6552
    %v6622 = vmul.f32 %v6526, %v6557
    %v6623 = vmul.f32 %v6527, %v6562
    %v6624 = vmul.f32 %v6528, %v6567
    %v6625 = vmul.f32 %v6529, %v6572
    %v6626 = vmul.f32 %v6530, %v6577
    %v6627 = vmul.f32 %v6531, %v6582
    %v6628 = vmul.f32 %v6532, %v6587
    %v6629 = vmul.f32 %v6533, %v6592
    %v6630 = vmul.f32 %v6534, %v6597
    %v6631 = vmul.f32 %v6535, %v6602
    %v6632 = vmul.f32 %v6536, %v6607
    %v6633 = vmul.f32 %v6537, %v6612
    %v6634 = vmul.f32 %v6538, %v6617
    %6635 = vmatpush.msra.mxu0 %v6426
    %6636 = vmatpush.msra.mxu0 %v6425
    %6637 = vmatpush.msra.mxu0 %v6424
    %6638 = vmatpush.msra.mxu0 %v6423
    %6639 = vmatpush.msra.mxu0 %v6422
    %6640 = vmatpush.msra.mxu0 %v6421
    %6641 = vmatpush.msra.mxu0 %v6420
    %6642 = vmatpush.msra.mxu0 %v6419
    %6643 = vmatpush.msra.mxu0 %v6418
    %6644 = vmatpush.msra.mxu0 %v6417
    %6645 = vmatpush.msra.mxu0 %v6416
    %6646 = vmatpush.msra.mxu0 %v6415
    %6647 = vmatpush.msra.mxu0 %v6414
    %6648 = vmatpush.msra.mxu0 %v6413
    %6649 = vmatpush.msra.mxu0 %v6412
    %6650 = vmatpush.msra.mxu0 %v6411
    %6651 = vmatmul.f32.gmra.mxu0 %v646
    %v6652 = vpop.f32.mrf.mxu0
    %v6653 = vadd.f32 0.0, %v6652
    %6654 = vmatmul.f32.gmra.mxu0 %v647
    %v6655 = vpop.f32.mrf.mxu0
    %v6656 = vadd.f32 0.0, %v6655
    %6657 = vmatmul.f32.gmra.mxu0 %v648
    %v6658 = vpop.f32.mrf.mxu0
    %v6659 = vadd.f32 0.0, %v6658
    %6660 = vmatmul.f32.gmra.mxu0 %v649
    %v6661 = vpop.f32.mrf.mxu0
    %v6662 = vadd.f32 0.0, %v6661
    %6663 = vmatmul.f32.gmra.mxu0 %v650
    %v6664 = vpop.f32.mrf.mxu0
    %v6665 = vadd.f32 0.0, %v6664
    %6666 = vmatmul.f32.gmra.mxu0 %v651
    %v6667 = vpop.f32.mrf.mxu0
    %v6668 = vadd.f32 0.0, %v6667
    %6669 = vmatmul.f32.gmra.mxu0 %v652
    %v6670 = vpop.f32.mrf.mxu0
    %v6671 = vadd.f32 0.0, %v6670
    %6672 = vmatmul.f32.gmra.mxu0 %v653
    %v6673 = vpop.f32.mrf.mxu0
    %v6674 = vadd.f32 0.0, %v6673
    %6675 = vmatmul.f32.gmra.mxu0 %v654
    %v6676 = vpop.f32.mrf.mxu0
    %v6677 = vadd.f32 0.0, %v6676
    %6678 = vmatmul.f32.gmra.mxu0 %v655
    %v6679 = vpop.f32.mrf.mxu0
    %v6680 = vadd.f32 0.0, %v6679
    %6681 = vmatmul.f32.gmra.mxu0 %v656
    %v6682 = vpop.f32.mrf.mxu0
    %v6683 = vadd.f32 0.0, %v6682
    %6684 = vmatmul.f32.gmra.mxu0 %v657
    %v6685 = vpop.f32.mrf.mxu0
    %v6686 = vadd.f32 0.0, %v6685
    %6687 = vmatmul.f32.gmra.mxu0 %v658
    %v6688 = vpop.f32.mrf.mxu0
    %v6689 = vadd.f32 0.0, %v6688
    %6690 = vmatmul.f32.gmra.mxu0 %v659
    %v6691 = vpop.f32.mrf.mxu0
    %v6692 = vadd.f32 0.0, %v6691
    %6693 = vmatmul.f32.gmra.mxu0 %v660
    %v6694 = vpop.f32.mrf.mxu0
    %v6695 = vadd.f32 0.0, %v6694
    %6696 = vmatmul.f32.gmra.mxu0 %v661
    %v6697 = vpop.f32.mrf.mxu0
    %v6698 = vadd.f32 0.0, %v6697
    %6699 = vdwg.mxu0
    %6700 = vmatpush.msra.mxu0 %v6426
    %6701 = vmatpush.msra.mxu0 %v6425
    %6702 = vmatpush.msra.mxu0 %v6424
    %6703 = vmatpush.msra.mxu0 %v6423
    %6704 = vmatpush.msra.mxu0 %v6422
    %6705 = vmatpush.msra.mxu0 %v6421
    %6706 = vmatpush.msra.mxu0 %v6420
    %6707 = vmatpush.msra.mxu0 %v6419
    %6708 = vmatpush.msra.mxu0 %v6418
    %6709 = vmatpush.msra.mxu0 %v6417
    %6710 = vmatpush.msra.mxu0 %v6416
    %6711 = vmatpush.msra.mxu0 %v6415
    %6712 = vmatpush.msra.mxu0 %v6414
    %6713 = vmatpush.msra.mxu0 %v6413
    %6714 = vmatpush.msra.mxu0 %v6412
    %6715 = vmatpush.msra.mxu0 %v6411
    %6716 = vmatmul.f32.gmra.mxu0 %v662
    %v6717 = vpop.f32.mrf.mxu0
    %v6718 = vadd.f32 0.0, %v6717
    %6719 = vmatmul.f32.gmra.mxu0 %v663
    %v6720 = vpop.f32.mrf.mxu0
    %v6721 = vadd.f32 0.0, %v6720
    %6722 = vmatmul.f32.gmra.mxu0 %v664
    %v6723 = vpop.f32.mrf.mxu0
    %v6724 = vadd.f32 0.0, %v6723
    %6725 = vmatmul.f32.gmra.mxu0 %v665
    %v6726 = vpop.f32.mrf.mxu0
    %v6727 = vadd.f32 0.0, %v6726
    %6728 = vmatmul.f32.gmra.mxu0 %v666
    %v6729 = vpop.f32.mrf.mxu0
    %v6730 = vadd.f32 0.0, %v6729
    %6731 = vmatmul.f32.gmra.mxu0 %v667
    %v6732 = vpop.f32.mrf.mxu0
    %v6733 = vadd.f32 0.0, %v6732
    %6734 = vmatmul.f32.gmra.mxu0 %v668
    %v6735 = vpop.f32.mrf.mxu0
    %v6736 = vadd.f32 0.0, %v6735
    %6737 = vmatmul.f32.gmra.mxu0 %v669
    %v6738 = vpop.f32.mrf.mxu0
    %v6739 = vadd.f32 0.0, %v6738
    %6740 = vmatmul.f32.gmra.mxu0 %v670
    %v6741 = vpop.f32.mrf.mxu0
    %v6742 = vadd.f32 0.0, %v6741
    %6743 = vmatmul.f32.gmra.mxu0 %v671
    %v6744 = vpop.f32.mrf.mxu0
    %v6745 = vadd.f32 0.0, %v6744
    %6746 = vmatmul.f32.gmra.mxu0 %v672
    %v6747 = vpop.f32.mrf.mxu0
    %v6748 = vadd.f32 0.0, %v6747
    %6749 = vmatmul.f32.gmra.mxu0 %v673
    %v6750 = vpop.f32.mrf.mxu0
    %v6751 = vadd.f32 0.0, %v6750
    %6752 = vmatmul.f32.gmra.mxu0 %v674
    %v6753 = vpop.f32.mrf.mxu0
    %v6754 = vadd.f32 0.0, %v6753
    %6755 = vmatmul.f32.gmra.mxu0 %v675
    %v6756 = vpop.f32.mrf.mxu0
    %v6757 = vadd.f32 0.0, %v6756
    %6758 = vmatmul.f32.gmra.mxu0 %v676
    %v6759 = vpop.f32.mrf.mxu0
    %v6760 = vadd.f32 0.0, %v6759
    %6761 = vmatmul.f32.gmra.mxu0 %v677
    %v6762 = vpop.f32.mrf.mxu0
    %v6763 = vadd.f32 0.0, %v6762
    %6764 = vdwg.mxu0
    %v6765 = vmul.f32 %v3708, %v6653
    %v6766 = vmul.f32 %v3709, %v6656
    %v6767 = vmul.f32 %v3710, %v6659
    %v6768 = vmul.f32 %v3711, %v6662
    %v6769 = vmul.f32 %v3712, %v6665
    %v6770 = vmul.f32 %v3713, %v6668
    %v6771 = vmul.f32 %v3714, %v6671
    %v6772 = vmul.f32 %v3715, %v6674
    %v6773 = vmul.f32 %v3716, %v6677
    %v6774 = vmul.f32 %v3717, %v6680
    %v6775 = vmul.f32 %v3718, %v6683
    %v6776 = vmul.f32 %v3719, %v6686
    %v6777 = vmul.f32 %v3720, %v6689
    %v6778 = vmul.f32 %v3721, %v6692
    %v6779 = vmul.f32 %v3722, %v6695
    %v6780 = vmul.f32 %v3723, %v6698
    %v6781 = vmul.f32 %v6765, %v6718
    %v6782 = vmul.f32 %v6766, %v6721
    %v6783 = vmul.f32 %v6767, %v6724
    %v6784 = vmul.f32 %v6768, %v6727
    %v6785 = vmul.f32 %v6769, %v6730
    %v6786 = vmul.f32 %v6770, %v6733
    %v6787 = vmul.f32 %v6771, %v6736
    %v6788 = vmul.f32 %v6772, %v6739
    %v6789 = vmul.f32 %v6773, %v6742
    %v6790 = vmul.f32 %v6774, %v6745
    %v6791 = vmul.f32 %v6775, %v6748
    %v6792 = vmul.f32 %v6776, %v6751
    %v6793 = vmul.f32 %v6777, %v6754
    %v6794 = vmul.f32 %v6778, %v6757
    %v6795 = vmul.f32 %v6779, %v6760
    %v6796 = vmul.f32 %v6780, %v6763
    %v6797 = vsel %vm2102, %v6411, 0.0
    %v6798 = vsel %vm2102, %v6412, 0.0
    %v6799 = vadd.f32 %v6797, %v6798
    %v6800 = vsel %vm2102, %v6413, 0.0
    %v6801 = vadd.f32 %v6799, %v6800
    %v6802 = vsel %vm2102, %v6414, 0.0
    %v6803 = vadd.f32 %v6801, %v6802
    %v6804 = vsel %vm2102, %v6415, 0.0
    %v6805 = vadd.f32 %v6803, %v6804
    %v6806 = vsel %vm2102, %v6416, 0.0
    %v6807 = vadd.f32 %v6805, %v6806
    %v6808 = vsel %vm2102, %v6417, 0.0
    %v6809 = vadd.f32 %v6807, %v6808
    %v6810 = vsel %vm2102, %v6418, 0.0
    %v6811 = vadd.f32 %v6809, %v6810
    %v6812 = vsel %vm2102, %v6419, 0.0
    %v6813 = vadd.f32 %v6811, %v6812
    %v6814 = vsel %vm2102, %v6420, 0.0
    %v6815 = vadd.f32 %v6813, %v6814
    %v6816 = vsel %vm2102, %v6421, 0.0
    %v6817 = vadd.f32 %v6815, %v6816
    %v6818 = vsel %vm2102, %v6422, 0.0
    %v6819 = vadd.f32 %v6817, %v6818
    %v6820 = vsel %vm2102, %v6423, 0.0
    %v6821 = vadd.f32 %v6819, %v6820
    %v6822 = vsel %vm2102, %v6424, 0.0
    %v6823 = vadd.f32 %v6821, %v6822
    %v6824 = vsel %vm2102, %v6425, 0.0
    %v6825 = vadd.f32 %v6823, %v6824
    %v6826 = vsel %vm2102, %v6426, 0.0
    %v6827 = vadd.f32 %v6825, %v6826
    %v6828 = vrot.slane %v6827, 4
    %v6829 = vadd.f32 %v6827, %v6828
    %v6830 = vrot.slane %v6829, 2
    %v6831 = vadd.f32 %v6829, %v6830
    %v6832 = vrot.slane %v6831, 1
    %v6833 = vadd.f32 %v6831, %v6832
    %vm6834 = vcmp.gt.f32.partialorder %v6411, 0.0
    %vm6835 = vcmp.gt.f32.partialorder %v6412, 0.0
    %vm6836 = vcmp.gt.f32.partialorder %v6413, 0.0
    %vm6837 = vcmp.gt.f32.partialorder %v6414, 0.0
    %vm6838 = vcmp.gt.f32.partialorder %v6415, 0.0
    %vm6839 = vcmp.gt.f32.partialorder %v6416, 0.0
    %vm6840 = vcmp.gt.f32.partialorder %v6417, 0.0
    %vm6841 = vcmp.gt.f32.partialorder %v6418, 0.0
    %vm6842 = vcmp.gt.f32.partialorder %v6419, 0.0
    %vm6843 = vcmp.gt.f32.partialorder %v6420, 0.0
    %vm6844 = vcmp.gt.f32.partialorder %v6421, 0.0
    %vm6845 = vcmp.gt.f32.partialorder %v6422, 0.0
    %vm6846 = vcmp.gt.f32.partialorder %v6423, 0.0
    %vm6847 = vcmp.gt.f32.partialorder %v6424, 0.0
    %vm6848 = vcmp.gt.f32.partialorder %v6425, 0.0
    %vm6849 = vcmp.gt.f32.partialorder %v6426, 0.0
    %v6850 = vsel %vm6834, 1, 0
    %v6851 = vsel %vm6835, 1, 0
    %v6852 = vsel %vm6836, 1, 0
    %v6853 = vsel %vm6837, 1, 0
    %v6854 = vsel %vm6838, 1, 0
    %v6855 = vsel %vm6839, 1, 0
    %v6856 = vsel %vm6840, 1, 0
    %v6857 = vsel %vm6841, 1, 0
    %v6858 = vsel %vm6842, 1, 0
    %v6859 = vsel %vm6843, 1, 0
    %v6860 = vsel %vm6844, 1, 0
    %v6861 = vsel %vm6845, 1, 0
    %v6862 = vsel %vm6846, 1, 0
    %v6863 = vsel %vm6847, 1, 0
    %v6864 = vsel %vm6848, 1, 0
    %v6865 = vsel %vm6849, 1, 0
    %6866 = vset.pattern.permute.xlu0 0
    %6867 = vperm.xlu0 %6866, %v6850
    %v6868 = vpop.permute.xlu0 %6867
    %6869 = vset.pattern.permute.xlu0 0
    %6870 = vperm.xlu0 %6869, %v6851
    %v6871 = vpop.permute.xlu0 %6870
    %6872 = vset.pattern.permute.xlu0 0
    %6873 = vperm.xlu0 %6872, %v6852
    %v6874 = vpop.permute.xlu0 %6873
    %6875 = vset.pattern.permute.xlu0 0
    %6876 = vperm.xlu0 %6875, %v6853
    %v6877 = vpop.permute.xlu0 %6876
    %6878 = vset.pattern.permute.xlu0 0
    %6879 = vperm.xlu0 %6878, %v6854
    %v6880 = vpop.permute.xlu0 %6879
    %6881 = vset.pattern.permute.xlu0 0
    %6882 = vperm.xlu0 %6881, %v6855
    %v6883 = vpop.permute.xlu0 %6882
    %6884 = vset.pattern.permute.xlu0 0
    %6885 = vperm.xlu0 %6884, %v6856
    %v6886 = vpop.permute.xlu0 %6885
    %6887 = vset.pattern.permute.xlu0 0
    %6888 = vperm.xlu0 %6887, %v6857
    %v6889 = vpop.permute.xlu0 %6888
    %6890 = vset.pattern.permute.xlu0 0
    %6891 = vperm.xlu0 %6890, %v6858
    %v6892 = vpop.permute.xlu0 %6891
    %6893 = vset.pattern.permute.xlu0 0
    %6894 = vperm.xlu0 %6893, %v6859
    %v6895 = vpop.permute.xlu0 %6894
    %6896 = vset.pattern.permute.xlu0 0
    %6897 = vperm.xlu0 %6896, %v6860
    %v6898 = vpop.permute.xlu0 %6897
    %6899 = vset.pattern.permute.xlu0 0
    %6900 = vperm.xlu0 %6899, %v6861
    %v6901 = vpop.permute.xlu0 %6900
    %6902 = vset.pattern.permute.xlu0 0
    %6903 = vperm.xlu0 %6902, %v6862
    %v6904 = vpop.permute.xlu0 %6903
    %6905 = vset.pattern.permute.xlu0 0
    %6906 = vperm.xlu0 %6905, %v6863
    %v6907 = vpop.permute.xlu0 %6906
    %6908 = vset.pattern.permute.xlu0 0
    %6909 = vperm.xlu0 %6908, %v6864
    %v6910 = vpop.permute.xlu0 %6909
    %6911 = vset.pattern.permute.xlu0 0
    %6912 = vperm.xlu0 %6911, %v6865
    %v6913 = vpop.permute.xlu0 %6912
    %vm6914 = vcmp.eq.s32.totalorder %v6868, 1
    %vm6915 = vcmp.eq.s32.totalorder %v6871, 1
    %vm6916 = vcmp.eq.s32.totalorder %v6874, 1
    %vm6917 = vcmp.eq.s32.totalorder %v6877, 1
    %vm6918 = vcmp.eq.s32.totalorder %v6880, 1
    %vm6919 = vcmp.eq.s32.totalorder %v6883, 1
    %vm6920 = vcmp.eq.s32.totalorder %v6886, 1
    %vm6921 = vcmp.eq.s32.totalorder %v6889, 1
    %vm6922 = vcmp.eq.s32.totalorder %v6892, 1
    %vm6923 = vcmp.eq.s32.totalorder %v6895, 1
    %vm6924 = vcmp.eq.s32.totalorder %v6898, 1
    %vm6925 = vcmp.eq.s32.totalorder %v6901, 1
    %vm6926 = vcmp.eq.s32.totalorder %v6904, 1
    %vm6927 = vcmp.eq.s32.totalorder %v6907, 1
    %vm6928 = vcmp.eq.s32.totalorder %v6910, 1
    %vm6929 = vcmp.eq.s32.totalorder %v6913, 1
    %v6930 = vsel %vm6914, %v6619, -1e+30
    %v6931 = vsel %vm6915, %v6620, -1e+30
    %v6932 = vsel %vm6916, %v6621, -1e+30
    %v6933 = vsel %vm6917, %v6622, -1e+30
    %v6934 = vsel %vm6918, %v6623, -1e+30
    %v6935 = vsel %vm6919, %v6624, -1e+30
    %v6936 = vsel %vm6920, %v6625, -1e+30
    %v6937 = vsel %vm6921, %v6626, -1e+30
    %v6938 = vsel %vm6922, %v6627, -1e+30
    %v6939 = vsel %vm6923, %v6628, -1e+30
    %v6940 = vsel %vm6924, %v6629, -1e+30
    %v6941 = vsel %vm6925, %v6630, -1e+30
    %v6942 = vsel %vm6926, %v6631, -1e+30
    %v6943 = vsel %vm6927, %v6632, -1e+30
    %v6944 = vsel %vm6928, %v6633, -1e+30
    %v6945 = vsel %vm6929, %v6634, -1e+30
    %v6946 = vmax.f32 %v6930, %v6934
    %v6947 = vmax.f32 %v6931, %v6935
    %v6948 = vmax.f32 %v6932, %v6936
    %v6949 = vmax.f32 %v6933, %v6937
    %v6950 = vmax.f32 %v6946, %v6938
    %v6951 = vmax.f32 %v6947, %v6939
    %v6952 = vmax.f32 %v6948, %v6940
    %v6953 = vmax.f32 %v6949, %v6941
    %v6954 = vmax.f32 %v6950, %v6942
    %v6955 = vmax.f32 %v6951, %v6943
    %v6956 = vmax.f32 %v6952, %v6944
    %v6957 = vmax.f32 %v6953, %v6945
    %v6958 = vmax.f32 %v6954, %v6955
    %v6959 = vmax.f32 %v6956, %v6957
    %v6960 = vmax.f32 %v6958, %v6959
    %v6961 = vrot.slane %v6960, 4
    %v6962 = vmax.f32 %v6960, %v6961
    %v6963 = vrot.slane %v6962, 2
    %v6964 = vmax.f32 %v6962, %v6963
    %v6965 = vrot.slane %v6964, 1
    %v6966 = vmax.f32 %v6964, %v6965
    %vm6967 = vcmp.gt.f32.partialorder %v6833, 0.0
    %v6968 = vsel %vm6967, 1, 0
    %6969 = vset.pattern.permute.xlu0 0
    %6970 = vperm.xlu0 %6969, %v6968
    %v6971 = vpop.permute.xlu0 %6970
    %vm6972 = vcmp.eq.s32.totalorder %v6971, 1
    %v6973 = vsel %vm6972, %v6966, 0.0
    %v6974 = vadd.f32 %v6619, %v6620
    %v6975 = vadd.f32 %v6974, %v6621
    %v6976 = vadd.f32 %v6975, %v6622
    %v6977 = vadd.f32 %v6976, %v6623
    %v6978 = vadd.f32 %v6977, %v6624
    %v6979 = vadd.f32 %v6978, %v6625
    %v6980 = vadd.f32 %v6979, %v6626
    %v6981 = vadd.f32 %v6980, %v6627
    %v6982 = vadd.f32 %v6981, %v6628
    %v6983 = vadd.f32 %v6982, %v6629
    %v6984 = vadd.f32 %v6983, %v6630
    %v6985 = vadd.f32 %v6984, %v6631
    %v6986 = vadd.f32 %v6985, %v6632
    %v6987 = vadd.f32 %v6986, %v6633
    %v6988 = vadd.f32 %v6987, %v6634
    %v6989 = vrot.slane %v6988, 4
    %v6990 = vadd.f32 %v6988, %v6989
    %v6991 = vrot.slane %v6990, 2
    %v6992 = vadd.f32 %v6990, %v6991
    %v6993 = vrot.slane %v6992, 1
    %v6994 = vadd.f32 %v6992, %v6993
    %v6995 = vmax.f32 %v6833, 1.0
    %6997 = vset.pattern.permute.xlu0 0
    %6998 = vperm.xlu0 %6997, %v6995
    %v6999 = vpop.permute.xlu0 %6998
    %v7001 = vrcp.pop %v6999
    %v7002 = vmul.f32 %v6999, %v7001
    %v7003 = vsub.f32 1.0, %v7002
    %v7004 = vmul.f32 %v7001, %v7003
    %v7005 = vadd.f32 %v7001, %v7004
    %vm7006 = vweird.f32 %v6999
    %vm7007 = vweird.f32 %v7001
    %vm7008 = vmor %vm7006, %vm7007
    %v7009 = vsel %vm7008, %v7001, %v7005
    %v7010 = vand.u32 2147483647, %v6999
    %vm7011 = vcmp.eq.f32.partialorder %v7010, 8.507059e+37
    %v7012 = vand.u32 %v6999, 2147483648
    %v7013 = vor.u32 1.1754944e-38, %v7012
    %v7014 = vsel %vm7011, %v7013, %v7009
    %v7015 = vmul.f32 %v6994, %v7014
    %v7016 = vadd.f32 %v3900, %v6973
    %v7017 = vadd.f32 %v3942, %v7015
    %7018 = vmatpush.msra.mxu0 %v6796
    %7019 = vmatpush.msra.mxu0 %v6795
    %7020 = vmatpush.msra.mxu0 %v6794
    %7021 = vmatpush.msra.mxu0 %v6793
    %7022 = vmatpush.msra.mxu0 %v6792
    %7023 = vmatpush.msra.mxu0 %v6791
    %7024 = vmatpush.msra.mxu0 %v6790
    %7025 = vmatpush.msra.mxu0 %v6789
    %7026 = vmatpush.msra.mxu0 %v6788
    %7027 = vmatpush.msra.mxu0 %v6787
    %7028 = vmatpush.msra.mxu0 %v6786
    %7029 = vmatpush.msra.mxu0 %v6785
    %7030 = vmatpush.msra.mxu0 %v6784
    %7031 = vmatpush.msra.mxu0 %v6783
    %7032 = vmatpush.msra.mxu0 %v6782
    %7033 = vmatpush.msra.mxu0 %v6781
    %7034 = vmatmul.f32.gmra.mxu0 %v130
    %v7035 = vpop.f32.mrf.mxu0
    %v7036 = vadd.f32 0.0, %v7035
    %7037 = vmatmul.f32.gmra.mxu0 %v131
    %v7038 = vpop.f32.mrf.mxu0
    %v7039 = vadd.f32 0.0, %v7038
    %7040 = vmatmul.f32.gmra.mxu0 %v132
    %v7041 = vpop.f32.mrf.mxu0
    %v7042 = vadd.f32 0.0, %v7041
    %7043 = vmatmul.f32.gmra.mxu0 %v133
    %v7044 = vpop.f32.mrf.mxu0
    %v7045 = vadd.f32 0.0, %v7044
    %7046 = vmatmul.f32.gmra.mxu0 %v134
    %v7047 = vpop.f32.mrf.mxu0
    %v7048 = vadd.f32 0.0, %v7047
    %7049 = vmatmul.f32.gmra.mxu0 %v135
    %v7050 = vpop.f32.mrf.mxu0
    %v7051 = vadd.f32 0.0, %v7050
    %7052 = vmatmul.f32.gmra.mxu0 %v136
    %v7053 = vpop.f32.mrf.mxu0
    %v7054 = vadd.f32 0.0, %v7053
    %7055 = vmatmul.f32.gmra.mxu0 %v137
    %v7056 = vpop.f32.mrf.mxu0
    %v7057 = vadd.f32 0.0, %v7056
    %7058 = vmatmul.f32.gmra.mxu0 %v138
    %v7059 = vpop.f32.mrf.mxu0
    %v7060 = vadd.f32 0.0, %v7059
    %7061 = vmatmul.f32.gmra.mxu0 %v139
    %v7062 = vpop.f32.mrf.mxu0
    %v7063 = vadd.f32 0.0, %v7062
    %7064 = vmatmul.f32.gmra.mxu0 %v140
    %v7065 = vpop.f32.mrf.mxu0
    %v7066 = vadd.f32 0.0, %v7065
    %7067 = vmatmul.f32.gmra.mxu0 %v141
    %v7068 = vpop.f32.mrf.mxu0
    %v7069 = vadd.f32 0.0, %v7068
    %7070 = vmatmul.f32.gmra.mxu0 %v142
    %v7071 = vpop.f32.mrf.mxu0
    %v7072 = vadd.f32 0.0, %v7071
    %7073 = vmatmul.f32.gmra.mxu0 %v143
    %v7074 = vpop.f32.mrf.mxu0
    %v7075 = vadd.f32 0.0, %v7074
    %7076 = vmatmul.f32.gmra.mxu0 %v144
    %v7077 = vpop.f32.mrf.mxu0
    %v7078 = vadd.f32 0.0, %v7077
    %7079 = vmatmul.f32.gmra.mxu0 %v145
    %v7080 = vpop.f32.mrf.mxu0
    %v7081 = vadd.f32 0.0, %v7080
    %7082 = vdwg.mxu0
    %v7083 = vmax.f32 %v7036, 1.0
    %v7084 = vmax.f32 %v7039, 1.0
    %v7085 = vmax.f32 %v7042, 1.0
    %v7086 = vmax.f32 %v7045, 1.0
    %v7087 = vmax.f32 %v7048, 1.0
    %v7088 = vmax.f32 %v7051, 1.0
    %v7089 = vmax.f32 %v7054, 1.0
    %v7090 = vmax.f32 %v7057, 1.0
    %v7091 = vmax.f32 %v7060, 1.0
    %v7092 = vmax.f32 %v7063, 1.0
    %v7093 = vmax.f32 %v7066, 1.0
    %v7094 = vmax.f32 %v7069, 1.0
    %v7095 = vmax.f32 %v7072, 1.0
    %v7096 = vmax.f32 %v7075, 1.0
    %v7097 = vmax.f32 %v7078, 1.0
    %v7098 = vmax.f32 %v7081, 1.0
    %v7099 = vrcp.pop %v7083
    %v7100 = vmul.f32 %v7083, %v7099
    %v7101 = vsub.f32 1.0, %v7100
    %v7102 = vmul.f32 %v7099, %v7101
    %v7103 = vadd.f32 %v7099, %v7102
    %vm7104 = vweird.f32 %v7083
    %vm7105 = vweird.f32 %v7099
    %vm7106 = vmor %vm7104, %vm7105
    %v7107 = vsel %vm7106, %v7099, %v7103
    %v7108 = vand.u32 2147483647, %v7083
    %vm7109 = vcmp.eq.f32.partialorder %v7108, 8.507059e+37
    %v7110 = vand.u32 %v7083, 2147483648
    %v7111 = vor.u32 1.1754944e-38, %v7110
    %v7112 = vsel %vm7109, %v7111, %v7107
    %v7113 = vmul.f32 1.0, %v7112
    %v7114 = vrcp.pop %v7084
    %v7115 = vmul.f32 %v7084, %v7114
    %v7116 = vsub.f32 1.0, %v7115
    %v7117 = vmul.f32 %v7114, %v7116
    %v7118 = vadd.f32 %v7114, %v7117
    %vm7119 = vweird.f32 %v7084
    %vm7120 = vweird.f32 %v7114
    %vm7121 = vmor %vm7119, %vm7120
    %v7122 = vsel %vm7121, %v7114, %v7118
    %v7123 = vand.u32 2147483647, %v7084
    %vm7124 = vcmp.eq.f32.partialorder %v7123, 8.507059e+37
    %v7125 = vand.u32 %v7084, 2147483648
    %v7126 = vor.u32 1.1754944e-38, %v7125
    %v7127 = vsel %vm7124, %v7126, %v7122
    %v7128 = vmul.f32 1.0, %v7127
    %v7129 = vrcp.pop %v7085
    %v7130 = vmul.f32 %v7085, %v7129
    %v7131 = vsub.f32 1.0, %v7130
    %v7132 = vmul.f32 %v7129, %v7131
    %v7133 = vadd.f32 %v7129, %v7132
    %vm7134 = vweird.f32 %v7085
    %vm7135 = vweird.f32 %v7129
    %vm7136 = vmor %vm7134, %vm7135
    %v7137 = vsel %vm7136, %v7129, %v7133
    %v7138 = vand.u32 2147483647, %v7085
    %vm7139 = vcmp.eq.f32.partialorder %v7138, 8.507059e+37
    %v7140 = vand.u32 %v7085, 2147483648
    %v7141 = vor.u32 1.1754944e-38, %v7140
    %v7142 = vsel %vm7139, %v7141, %v7137
    %v7143 = vmul.f32 1.0, %v7142
    %v7144 = vrcp.pop %v7086
    %v7145 = vmul.f32 %v7086, %v7144
    %v7146 = vsub.f32 1.0, %v7145
    %v7147 = vmul.f32 %v7144, %v7146
    %v7148 = vadd.f32 %v7144, %v7147
    %vm7149 = vweird.f32 %v7086
    %vm7150 = vweird.f32 %v7144
    %vm7151 = vmor %vm7149, %vm7150
    %v7152 = vsel %vm7151, %v7144, %v7148
    %v7153 = vand.u32 2147483647, %v7086
    %vm7154 = vcmp.eq.f32.partialorder %v7153, 8.507059e+37
    %v7155 = vand.u32 %v7086, 2147483648
    %v7156 = vor.u32 1.1754944e-38, %v7155
    %v7157 = vsel %vm7154, %v7156, %v7152
    %v7158 = vmul.f32 1.0, %v7157
    %v7159 = vrcp.pop %v7087
    %v7160 = vmul.f32 %v7087, %v7159
    %v7161 = vsub.f32 1.0, %v7160
    %v7162 = vmul.f32 %v7159, %v7161
    %v7163 = vadd.f32 %v7159, %v7162
    %vm7164 = vweird.f32 %v7087
    %vm7165 = vweird.f32 %v7159
    %vm7166 = vmor %vm7164, %vm7165
    %v7167 = vsel %vm7166, %v7159, %v7163
    %v7168 = vand.u32 2147483647, %v7087
    %vm7169 = vcmp.eq.f32.partialorder %v7168, 8.507059e+37
    %v7170 = vand.u32 %v7087, 2147483648
    %v7171 = vor.u32 1.1754944e-38, %v7170
    %v7172 = vsel %vm7169, %v7171, %v7167
    %v7173 = vmul.f32 1.0, %v7172
    %v7174 = vrcp.pop %v7088
    %v7175 = vmul.f32 %v7088, %v7174
    %v7176 = vsub.f32 1.0, %v7175
    %v7177 = vmul.f32 %v7174, %v7176
    %v7178 = vadd.f32 %v7174, %v7177
    %vm7179 = vweird.f32 %v7088
    %vm7180 = vweird.f32 %v7174
    %vm7181 = vmor %vm7179, %vm7180
    %v7182 = vsel %vm7181, %v7174, %v7178
    %v7183 = vand.u32 2147483647, %v7088
    %vm7184 = vcmp.eq.f32.partialorder %v7183, 8.507059e+37
    %v7185 = vand.u32 %v7088, 2147483648
    %v7186 = vor.u32 1.1754944e-38, %v7185
    %v7187 = vsel %vm7184, %v7186, %v7182
    %v7188 = vmul.f32 1.0, %v7187
    %v7189 = vrcp.pop %v7089
    %v7190 = vmul.f32 %v7089, %v7189
    %v7191 = vsub.f32 1.0, %v7190
    %v7192 = vmul.f32 %v7189, %v7191
    %v7193 = vadd.f32 %v7189, %v7192
    %vm7194 = vweird.f32 %v7089
    %vm7195 = vweird.f32 %v7189
    %vm7196 = vmor %vm7194, %vm7195
    %v7197 = vsel %vm7196, %v7189, %v7193
    %v7198 = vand.u32 2147483647, %v7089
    %vm7199 = vcmp.eq.f32.partialorder %v7198, 8.507059e+37
    %v7200 = vand.u32 %v7089, 2147483648
    %v7201 = vor.u32 1.1754944e-38, %v7200
    %v7202 = vsel %vm7199, %v7201, %v7197
    %v7203 = vmul.f32 1.0, %v7202
    %v7204 = vrcp.pop %v7090
    %v7205 = vmul.f32 %v7090, %v7204
    %v7206 = vsub.f32 1.0, %v7205
    %v7207 = vmul.f32 %v7204, %v7206
    %v7208 = vadd.f32 %v7204, %v7207
    %vm7209 = vweird.f32 %v7090
    %vm7210 = vweird.f32 %v7204
    %vm7211 = vmor %vm7209, %vm7210
    %v7212 = vsel %vm7211, %v7204, %v7208
    %v7213 = vand.u32 2147483647, %v7090
    %vm7214 = vcmp.eq.f32.partialorder %v7213, 8.507059e+37
    %v7215 = vand.u32 %v7090, 2147483648
    %v7216 = vor.u32 1.1754944e-38, %v7215
    %v7217 = vsel %vm7214, %v7216, %v7212
    %v7218 = vmul.f32 1.0, %v7217
    %v7219 = vrcp.pop %v7091
    %v7220 = vmul.f32 %v7091, %v7219
    %v7221 = vsub.f32 1.0, %v7220
    %v7222 = vmul.f32 %v7219, %v7221
    %v7223 = vadd.f32 %v7219, %v7222
    %vm7224 = vweird.f32 %v7091
    %vm7225 = vweird.f32 %v7219
    %vm7226 = vmor %vm7224, %vm7225
    %v7227 = vsel %vm7226, %v7219, %v7223
    %v7228 = vand.u32 2147483647, %v7091
    %vm7229 = vcmp.eq.f32.partialorder %v7228, 8.507059e+37
    %v7230 = vand.u32 %v7091, 2147483648
    %v7231 = vor.u32 1.1754944e-38, %v7230
    %v7232 = vsel %vm7229, %v7231, %v7227
    %v7233 = vmul.f32 1.0, %v7232
    %v7234 = vrcp.pop %v7092
    %v7235 = vmul.f32 %v7092, %v7234
    %v7236 = vsub.f32 1.0, %v7235
    %v7237 = vmul.f32 %v7234, %v7236
    %v7238 = vadd.f32 %v7234, %v7237
    %vm7239 = vweird.f32 %v7092
    %vm7240 = vweird.f32 %v7234
    %vm7241 = vmor %vm7239, %vm7240
    %v7242 = vsel %vm7241, %v7234, %v7238
    %v7243 = vand.u32 2147483647, %v7092
    %vm7244 = vcmp.eq.f32.partialorder %v7243, 8.507059e+37
    %v7245 = vand.u32 %v7092, 2147483648
    %v7246 = vor.u32 1.1754944e-38, %v7245
    %v7247 = vsel %vm7244, %v7246, %v7242
    %v7248 = vmul.f32 1.0, %v7247
    %v7249 = vrcp.pop %v7093
    %v7250 = vmul.f32 %v7093, %v7249
    %v7251 = vsub.f32 1.0, %v7250
    %v7252 = vmul.f32 %v7249, %v7251
    %v7253 = vadd.f32 %v7249, %v7252
    %vm7254 = vweird.f32 %v7093
    %vm7255 = vweird.f32 %v7249
    %vm7256 = vmor %vm7254, %vm7255
    %v7257 = vsel %vm7256, %v7249, %v7253
    %v7258 = vand.u32 2147483647, %v7093
    %vm7259 = vcmp.eq.f32.partialorder %v7258, 8.507059e+37
    %v7260 = vand.u32 %v7093, 2147483648
    %v7261 = vor.u32 1.1754944e-38, %v7260
    %v7262 = vsel %vm7259, %v7261, %v7257
    %v7263 = vmul.f32 1.0, %v7262
    %v7264 = vrcp.pop %v7094
    %v7265 = vmul.f32 %v7094, %v7264
    %v7266 = vsub.f32 1.0, %v7265
    %v7267 = vmul.f32 %v7264, %v7266
    %v7268 = vadd.f32 %v7264, %v7267
    %vm7269 = vweird.f32 %v7094
    %vm7270 = vweird.f32 %v7264
    %vm7271 = vmor %vm7269, %vm7270
    %v7272 = vsel %vm7271, %v7264, %v7268
    %v7273 = vand.u32 2147483647, %v7094
    %vm7274 = vcmp.eq.f32.partialorder %v7273, 8.507059e+37
    %v7275 = vand.u32 %v7094, 2147483648
    %v7276 = vor.u32 1.1754944e-38, %v7275
    %v7277 = vsel %vm7274, %v7276, %v7272
    %v7278 = vmul.f32 1.0, %v7277
    %v7279 = vrcp.pop %v7095
    %v7280 = vmul.f32 %v7095, %v7279
    %v7281 = vsub.f32 1.0, %v7280
    %v7282 = vmul.f32 %v7279, %v7281
    %v7283 = vadd.f32 %v7279, %v7282
    %vm7284 = vweird.f32 %v7095
    %vm7285 = vweird.f32 %v7279
    %vm7286 = vmor %vm7284, %vm7285
    %v7287 = vsel %vm7286, %v7279, %v7283
    %v7288 = vand.u32 2147483647, %v7095
    %vm7289 = vcmp.eq.f32.partialorder %v7288, 8.507059e+37
    %v7290 = vand.u32 %v7095, 2147483648
    %v7291 = vor.u32 1.1754944e-38, %v7290
    %v7292 = vsel %vm7289, %v7291, %v7287
    %v7293 = vmul.f32 1.0, %v7292
    %v7294 = vrcp.pop %v7096
    %v7295 = vmul.f32 %v7096, %v7294
    %v7296 = vsub.f32 1.0, %v7295
    %v7297 = vmul.f32 %v7294, %v7296
    %v7298 = vadd.f32 %v7294, %v7297
    %vm7299 = vweird.f32 %v7096
    %vm7300 = vweird.f32 %v7294
    %vm7301 = vmor %vm7299, %vm7300
    %v7302 = vsel %vm7301, %v7294, %v7298
    %v7303 = vand.u32 2147483647, %v7096
    %vm7304 = vcmp.eq.f32.partialorder %v7303, 8.507059e+37
    %v7305 = vand.u32 %v7096, 2147483648
    %v7306 = vor.u32 1.1754944e-38, %v7305
    %v7307 = vsel %vm7304, %v7306, %v7302
    %v7308 = vmul.f32 1.0, %v7307
    %v7309 = vrcp.pop %v7097
    %v7310 = vmul.f32 %v7097, %v7309
    %v7311 = vsub.f32 1.0, %v7310
    %v7312 = vmul.f32 %v7309, %v7311
    %v7313 = vadd.f32 %v7309, %v7312
    %vm7314 = vweird.f32 %v7097
    %vm7315 = vweird.f32 %v7309
    %vm7316 = vmor %vm7314, %vm7315
    %v7317 = vsel %vm7316, %v7309, %v7313
    %v7318 = vand.u32 2147483647, %v7097
    %vm7319 = vcmp.eq.f32.partialorder %v7318, 8.507059e+37
    %v7320 = vand.u32 %v7097, 2147483648
    %v7321 = vor.u32 1.1754944e-38, %v7320
    %v7322 = vsel %vm7319, %v7321, %v7317
    %v7323 = vmul.f32 1.0, %v7322
    %v7324 = vrcp.pop %v7098
    %v7325 = vmul.f32 %v7098, %v7324
    %v7326 = vsub.f32 1.0, %v7325
    %v7327 = vmul.f32 %v7324, %v7326
    %v7328 = vadd.f32 %v7324, %v7327
    %vm7329 = vweird.f32 %v7098
    %vm7330 = vweird.f32 %v7324
    %vm7331 = vmor %vm7329, %vm7330
    %v7332 = vsel %vm7331, %v7324, %v7328
    %v7333 = vand.u32 2147483647, %v7098
    %vm7334 = vcmp.eq.f32.partialorder %v7333, 8.507059e+37
    %v7335 = vand.u32 %v7098, 2147483648
    %v7336 = vor.u32 1.1754944e-38, %v7335
    %v7337 = vsel %vm7334, %v7336, %v7332
    %v7338 = vmul.f32 1.0, %v7337
    %v7339 = vld [vmem:[%s8 + $0x300] sm:$0xff]
    %v7340 = vld [vmem:[%s8 + $0x308] sm:$0xff]
    %v7341 = vld [vmem:[%s8 + $0x310] sm:$0xff]
    %v7342 = vld [vmem:[%s8 + $0x318] sm:$0xff]
    %v7343 = vld [vmem:[%s8 + $0x320] sm:$0xff]
    %v7344 = vld [vmem:[%s8 + $0x328] sm:$0xff]
    %v7345 = vld [vmem:[%s8 + $0x330] sm:$0xff]
    %v7346 = vld [vmem:[%s8 + $0x338] sm:$0xff]
    %v7347 = vld [vmem:[%s8 + $0x340] sm:$0xff]
    %v7348 = vld [vmem:[%s8 + $0x348] sm:$0xff]
    %v7349 = vld [vmem:[%s8 + $0x350] sm:$0xff]
    %v7350 = vld [vmem:[%s8 + $0x358] sm:$0xff]
    %v7351 = vld [vmem:[%s8 + $0x360] sm:$0xff]
    %v7352 = vld [vmem:[%s8 + $0x368] sm:$0xff]
    %v7353 = vld [vmem:[%s8 + $0x370] sm:$0xff]
    %v7354 = vld [vmem:[%s8 + $0x378] sm:$0xff]
    %v7355 = vld [vmem:[%s8 + $0x380] sm:$0xff]
    %v7356 = vld [vmem:[%s8 + $0x388] sm:$0xff]
    %v7357 = vld [vmem:[%s8 + $0x390] sm:$0xff]
    %v7358 = vld [vmem:[%s8 + $0x398] sm:$0xff]
    %v7359 = vld [vmem:[%s8 + $0x3a0] sm:$0xff]
    %v7360 = vld [vmem:[%s8 + $0x3a8] sm:$0xff]
    %v7361 = vld [vmem:[%s8 + $0x3b0] sm:$0xff]
    %v7362 = vld [vmem:[%s8 + $0x3b8] sm:$0xff]
    %v7363 = vld [vmem:[%s8 + $0x3c0] sm:$0xff]
    %v7364 = vld [vmem:[%s8 + $0x3c8] sm:$0xff]
    %v7365 = vld [vmem:[%s8 + $0x3d0] sm:$0xff]
    %v7366 = vld [vmem:[%s8 + $0x3d8] sm:$0xff]
    %v7367 = vld [vmem:[%s8 + $0x3e0] sm:$0xff]
    %v7368 = vld [vmem:[%s8 + $0x3e8] sm:$0xff]
    %v7369 = vld [vmem:[%s8 + $0x3f0] sm:$0xff]
    %v7370 = vld [vmem:[%s8 + $0x3f8] sm:$0xff]
    %v7371 = vld [vmem:[%s9 + $0x180] sm:$0xff]
    %v7372 = vld [vmem:[%s9 + $0x188] sm:$0xff]
    %v7373 = vld [vmem:[%s9 + $0x190] sm:$0xff]
    %v7374 = vld [vmem:[%s9 + $0x198] sm:$0xff]
    %v7375 = vld [vmem:[%s9 + $0x1a0] sm:$0xff]
    %v7376 = vld [vmem:[%s9 + $0x1a8] sm:$0xff]
    %v7377 = vld [vmem:[%s9 + $0x1b0] sm:$0xff]
    %v7378 = vld [vmem:[%s9 + $0x1b8] sm:$0xff]
    %v7379 = vld [vmem:[%s9 + $0x1c0] sm:$0xff]
    %v7380 = vld [vmem:[%s9 + $0x1c8] sm:$0xff]
    %v7381 = vld [vmem:[%s9 + $0x1d0] sm:$0xff]
    %v7382 = vld [vmem:[%s9 + $0x1d8] sm:$0xff]
    %v7383 = vld [vmem:[%s9 + $0x1e0] sm:$0xff]
    %v7384 = vld [vmem:[%s9 + $0x1e8] sm:$0xff]
    %v7385 = vld [vmem:[%s9 + $0x1f0] sm:$0xff]
    %v7386 = vld [vmem:[%s9 + $0x1f8] sm:$0xff]
    %v7387 = vld [vmem:[%s10 + $0x3] sm:$0x1]
    %7388 = vmatpush.msra.mxu0 %v7369
    %7389 = vmatpush.msra.mxu0 %v7367
    %7390 = vmatpush.msra.mxu0 %v7365
    %7391 = vmatpush.msra.mxu0 %v7363
    %7392 = vmatpush.msra.mxu0 %v7361
    %7393 = vmatpush.msra.mxu0 %v7359
    %7394 = vmatpush.msra.mxu0 %v7357
    %7395 = vmatpush.msra.mxu0 %v7355
    %7396 = vmatpush.msra.mxu0 %v7353
    %7397 = vmatpush.msra.mxu0 %v7351
    %7398 = vmatpush.msra.mxu0 %v7349
    %7399 = vmatpush.msra.mxu0 %v7347
    %7400 = vmatpush.msra.mxu0 %v7345
    %7401 = vmatpush.msra.mxu0 %v7343
    %7402 = vmatpush.msra.mxu0 %v7341
    %7403 = vmatpush.msra.mxu0 %v7339
    %7404 = vmatmul.f32.gmra.mxu0 %v6619
    %v7405 = vpop.f32.mrf.mxu0
    %v7406 = vadd.f32 0.0, %v7405
    %7407 = vmatmul.f32.gmra.mxu0 %v6620
    %v7408 = vpop.f32.mrf.mxu0
    %v7409 = vadd.f32 0.0, %v7408
    %7410 = vmatmul.f32.gmra.mxu0 %v6621
    %v7411 = vpop.f32.mrf.mxu0
    %v7412 = vadd.f32 0.0, %v7411
    %7413 = vmatmul.f32.gmra.mxu0 %v6622
    %v7414 = vpop.f32.mrf.mxu0
    %v7415 = vadd.f32 0.0, %v7414
    %7416 = vmatmul.f32.gmra.mxu0 %v6623
    %v7417 = vpop.f32.mrf.mxu0
    %v7418 = vadd.f32 0.0, %v7417
    %7419 = vmatmul.f32.gmra.mxu0 %v6624
    %v7420 = vpop.f32.mrf.mxu0
    %v7421 = vadd.f32 0.0, %v7420
    %7422 = vmatmul.f32.gmra.mxu0 %v6625
    %v7423 = vpop.f32.mrf.mxu0
    %v7424 = vadd.f32 0.0, %v7423
    %7425 = vmatmul.f32.gmra.mxu0 %v6626
    %v7426 = vpop.f32.mrf.mxu0
    %v7427 = vadd.f32 0.0, %v7426
    %7428 = vmatmul.f32.gmra.mxu0 %v6627
    %v7429 = vpop.f32.mrf.mxu0
    %v7430 = vadd.f32 0.0, %v7429
    %7431 = vmatmul.f32.gmra.mxu0 %v6628
    %v7432 = vpop.f32.mrf.mxu0
    %v7433 = vadd.f32 0.0, %v7432
    %7434 = vmatmul.f32.gmra.mxu0 %v6629
    %v7435 = vpop.f32.mrf.mxu0
    %v7436 = vadd.f32 0.0, %v7435
    %7437 = vmatmul.f32.gmra.mxu0 %v6630
    %v7438 = vpop.f32.mrf.mxu0
    %v7439 = vadd.f32 0.0, %v7438
    %7440 = vmatmul.f32.gmra.mxu0 %v6631
    %v7441 = vpop.f32.mrf.mxu0
    %v7442 = vadd.f32 0.0, %v7441
    %7443 = vmatmul.f32.gmra.mxu0 %v6632
    %v7444 = vpop.f32.mrf.mxu0
    %v7445 = vadd.f32 0.0, %v7444
    %7446 = vmatmul.f32.gmra.mxu0 %v6633
    %v7447 = vpop.f32.mrf.mxu0
    %v7448 = vadd.f32 0.0, %v7447
    %7449 = vmatmul.f32.gmra.mxu0 %v6634
    %v7450 = vpop.f32.mrf.mxu0
    %v7451 = vadd.f32 0.0, %v7450
    %7452 = vdwg.mxu0
    %7453 = vmatpush.msra.mxu0 %v7370
    %7454 = vmatpush.msra.mxu0 %v7368
    %7455 = vmatpush.msra.mxu0 %v7366
    %7456 = vmatpush.msra.mxu0 %v7364
    %7457 = vmatpush.msra.mxu0 %v7362
    %7458 = vmatpush.msra.mxu0 %v7360
    %7459 = vmatpush.msra.mxu0 %v7358
    %7460 = vmatpush.msra.mxu0 %v7356
    %7461 = vmatpush.msra.mxu0 %v7354
    %7462 = vmatpush.msra.mxu0 %v7352
    %7463 = vmatpush.msra.mxu0 %v7350
    %7464 = vmatpush.msra.mxu0 %v7348
    %7465 = vmatpush.msra.mxu0 %v7346
    %7466 = vmatpush.msra.mxu0 %v7344
    %7467 = vmatpush.msra.mxu0 %v7342
    %7468 = vmatpush.msra.mxu0 %v7340
    %7469 = vmatmul.f32.gmra.mxu0 %v6619
    %v7470 = vpop.f32.mrf.mxu0
    %v7471 = vadd.f32 0.0, %v7470
    %7472 = vmatmul.f32.gmra.mxu0 %v6620
    %v7473 = vpop.f32.mrf.mxu0
    %v7474 = vadd.f32 0.0, %v7473
    %7475 = vmatmul.f32.gmra.mxu0 %v6621
    %v7476 = vpop.f32.mrf.mxu0
    %v7477 = vadd.f32 0.0, %v7476
    %7478 = vmatmul.f32.gmra.mxu0 %v6622
    %v7479 = vpop.f32.mrf.mxu0
    %v7480 = vadd.f32 0.0, %v7479
    %7481 = vmatmul.f32.gmra.mxu0 %v6623
    %v7482 = vpop.f32.mrf.mxu0
    %v7483 = vadd.f32 0.0, %v7482
    %7484 = vmatmul.f32.gmra.mxu0 %v6624
    %v7485 = vpop.f32.mrf.mxu0
    %v7486 = vadd.f32 0.0, %v7485
    %7487 = vmatmul.f32.gmra.mxu0 %v6625
    %v7488 = vpop.f32.mrf.mxu0
    %v7489 = vadd.f32 0.0, %v7488
    %7490 = vmatmul.f32.gmra.mxu0 %v6626
    %v7491 = vpop.f32.mrf.mxu0
    %v7492 = vadd.f32 0.0, %v7491
    %7493 = vmatmul.f32.gmra.mxu0 %v6627
    %v7494 = vpop.f32.mrf.mxu0
    %v7495 = vadd.f32 0.0, %v7494
    %7496 = vmatmul.f32.gmra.mxu0 %v6628
    %v7497 = vpop.f32.mrf.mxu0
    %v7498 = vadd.f32 0.0, %v7497
    %7499 = vmatmul.f32.gmra.mxu0 %v6629
    %v7500 = vpop.f32.mrf.mxu0
    %v7501 = vadd.f32 0.0, %v7500
    %7502 = vmatmul.f32.gmra.mxu0 %v6630
    %v7503 = vpop.f32.mrf.mxu0
    %v7504 = vadd.f32 0.0, %v7503
    %7505 = vmatmul.f32.gmra.mxu0 %v6631
    %v7506 = vpop.f32.mrf.mxu0
    %v7507 = vadd.f32 0.0, %v7506
    %7508 = vmatmul.f32.gmra.mxu0 %v6632
    %v7509 = vpop.f32.mrf.mxu0
    %v7510 = vadd.f32 0.0, %v7509
    %7511 = vmatmul.f32.gmra.mxu0 %v6633
    %v7512 = vpop.f32.mrf.mxu0
    %v7513 = vadd.f32 0.0, %v7512
    %7514 = vmatmul.f32.gmra.mxu0 %v6634
    %v7515 = vpop.f32.mrf.mxu0
    %v7516 = vadd.f32 0.0, %v7515
    %7517 = vdwg.mxu0
    %7518 = vmatpush.msra.mxu0 %v7516
    %7519 = vmatpush.msra.mxu0 %v7513
    %7520 = vmatpush.msra.mxu0 %v7510
    %7521 = vmatpush.msra.mxu0 %v7507
    %7522 = vmatpush.msra.mxu0 %v7504
    %7523 = vmatpush.msra.mxu0 %v7501
    %7524 = vmatpush.msra.mxu0 %v7498
    %7525 = vmatpush.msra.mxu0 %v7495
    %7526 = vmatpush.msra.mxu0 %v7492
    %7527 = vmatpush.msra.mxu0 %v7489
    %7528 = vmatpush.msra.mxu0 %v7486
    %7529 = vmatpush.msra.mxu0 %v7483
    %7530 = vmatpush.msra.mxu0 %v7480
    %7531 = vmatpush.msra.mxu0 %v7477
    %7532 = vmatpush.msra.mxu0 %v7474
    %7533 = vmatpush.msra.mxu0 %v7471
    %7534 = vmatmul.f32.gmra.mxu0 %v662
    %v7535 = vpop.f32.mrf.mxu0
    %v7536 = vadd.f32 0.0, %v7535
    %7537 = vmatmul.f32.gmra.mxu0 %v663
    %v7538 = vpop.f32.mrf.mxu0
    %v7539 = vadd.f32 0.0, %v7538
    %7540 = vmatmul.f32.gmra.mxu0 %v664
    %v7541 = vpop.f32.mrf.mxu0
    %v7542 = vadd.f32 0.0, %v7541
    %7543 = vmatmul.f32.gmra.mxu0 %v665
    %v7544 = vpop.f32.mrf.mxu0
    %v7545 = vadd.f32 0.0, %v7544
    %7546 = vmatmul.f32.gmra.mxu0 %v666
    %v7547 = vpop.f32.mrf.mxu0
    %v7548 = vadd.f32 0.0, %v7547
    %7549 = vmatmul.f32.gmra.mxu0 %v667
    %v7550 = vpop.f32.mrf.mxu0
    %v7551 = vadd.f32 0.0, %v7550
    %7552 = vmatmul.f32.gmra.mxu0 %v668
    %v7553 = vpop.f32.mrf.mxu0
    %v7554 = vadd.f32 0.0, %v7553
    %7555 = vmatmul.f32.gmra.mxu0 %v669
    %v7556 = vpop.f32.mrf.mxu0
    %v7557 = vadd.f32 0.0, %v7556
    %7558 = vmatmul.f32.gmra.mxu0 %v670
    %v7559 = vpop.f32.mrf.mxu0
    %v7560 = vadd.f32 0.0, %v7559
    %7561 = vmatmul.f32.gmra.mxu0 %v671
    %v7562 = vpop.f32.mrf.mxu0
    %v7563 = vadd.f32 0.0, %v7562
    %7564 = vmatmul.f32.gmra.mxu0 %v672
    %v7565 = vpop.f32.mrf.mxu0
    %v7566 = vadd.f32 0.0, %v7565
    %7567 = vmatmul.f32.gmra.mxu0 %v673
    %v7568 = vpop.f32.mrf.mxu0
    %v7569 = vadd.f32 0.0, %v7568
    %7570 = vmatmul.f32.gmra.mxu0 %v674
    %v7571 = vpop.f32.mrf.mxu0
    %v7572 = vadd.f32 0.0, %v7571
    %7573 = vmatmul.f32.gmra.mxu0 %v675
    %v7574 = vpop.f32.mrf.mxu0
    %v7575 = vadd.f32 0.0, %v7574
    %7576 = vmatmul.f32.gmra.mxu0 %v676
    %v7577 = vpop.f32.mrf.mxu0
    %v7578 = vadd.f32 0.0, %v7577
    %7579 = vmatmul.f32.gmra.mxu0 %v677
    %v7580 = vpop.f32.mrf.mxu0
    %v7581 = vadd.f32 0.0, %v7580
    %7582 = vdwg.mxu0
    %7583 = vmatpush.msra.mxu0 %v7451
    %7584 = vmatpush.msra.mxu0 %v7448
    %7585 = vmatpush.msra.mxu0 %v7445
    %7586 = vmatpush.msra.mxu0 %v7442
    %7587 = vmatpush.msra.mxu0 %v7439
    %7588 = vmatpush.msra.mxu0 %v7436
    %7589 = vmatpush.msra.mxu0 %v7433
    %7590 = vmatpush.msra.mxu0 %v7430
    %7591 = vmatpush.msra.mxu0 %v7427
    %7592 = vmatpush.msra.mxu0 %v7424
    %7593 = vmatpush.msra.mxu0 %v7421
    %7594 = vmatpush.msra.mxu0 %v7418
    %7595 = vmatpush.msra.mxu0 %v7415
    %7596 = vmatpush.msra.mxu0 %v7412
    %7597 = vmatpush.msra.mxu0 %v7409
    %7598 = vmatpush.msra.mxu0 %v7406
    %7599 = vmatmul.f32.gmra.mxu0 %v646
    %v7600 = vpop.f32.mrf.mxu0
    %v7601 = vadd.f32 %v7536, %v7600
    %7602 = vmatmul.f32.gmra.mxu0 %v647
    %v7603 = vpop.f32.mrf.mxu0
    %v7604 = vadd.f32 %v7539, %v7603
    %7605 = vmatmul.f32.gmra.mxu0 %v648
    %v7606 = vpop.f32.mrf.mxu0
    %v7607 = vadd.f32 %v7542, %v7606
    %7608 = vmatmul.f32.gmra.mxu0 %v649
    %v7609 = vpop.f32.mrf.mxu0
    %v7610 = vadd.f32 %v7545, %v7609
    %7611 = vmatmul.f32.gmra.mxu0 %v650
    %v7612 = vpop.f32.mrf.mxu0
    %v7613 = vadd.f32 %v7548, %v7612
    %7614 = vmatmul.f32.gmra.mxu0 %v651
    %v7615 = vpop.f32.mrf.mxu0
    %v7616 = vadd.f32 %v7551, %v7615
    %7617 = vmatmul.f32.gmra.mxu0 %v652
    %v7618 = vpop.f32.mrf.mxu0
    %v7619 = vadd.f32 %v7554, %v7618
    %7620 = vmatmul.f32.gmra.mxu0 %v653
    %v7621 = vpop.f32.mrf.mxu0
    %v7622 = vadd.f32 %v7557, %v7621
    %7623 = vmatmul.f32.gmra.mxu0 %v654
    %v7624 = vpop.f32.mrf.mxu0
    %v7625 = vadd.f32 %v7560, %v7624
    %7626 = vmatmul.f32.gmra.mxu0 %v655
    %v7627 = vpop.f32.mrf.mxu0
    %v7628 = vadd.f32 %v7563, %v7627
    %7629 = vmatmul.f32.gmra.mxu0 %v656
    %v7630 = vpop.f32.mrf.mxu0
    %v7631 = vadd.f32 %v7566, %v7630
    %7632 = vmatmul.f32.gmra.mxu0 %v657
    %v7633 = vpop.f32.mrf.mxu0
    %v7634 = vadd.f32 %v7569, %v7633
    %7635 = vmatmul.f32.gmra.mxu0 %v658
    %v7636 = vpop.f32.mrf.mxu0
    %v7637 = vadd.f32 %v7572, %v7636
    %7638 = vmatmul.f32.gmra.mxu0 %v659
    %v7639 = vpop.f32.mrf.mxu0
    %v7640 = vadd.f32 %v7575, %v7639
    %7641 = vmatmul.f32.gmra.mxu0 %v660
    %v7642 = vpop.f32.mrf.mxu0
    %v7643 = vadd.f32 %v7578, %v7642
    %7644 = vmatmul.f32.gmra.mxu0 %v661
    %v7645 = vpop.f32.mrf.mxu0
    %v7646 = vadd.f32 %v7581, %v7645
    %7647 = vdwg.mxu0
    %7648 = vmatpush.msra.mxu0 %v7386
    %7649 = vmatpush.msra.mxu0 %v7385
    %7650 = vmatpush.msra.mxu0 %v7384
    %7651 = vmatpush.msra.mxu0 %v7383
    %7652 = vmatpush.msra.mxu0 %v7382
    %7653 = vmatpush.msra.mxu0 %v7381
    %7654 = vmatpush.msra.mxu0 %v7380
    %7655 = vmatpush.msra.mxu0 %v7379
    %7656 = vmatpush.msra.mxu0 %v7378
    %7657 = vmatpush.msra.mxu0 %v7377
    %7658 = vmatpush.msra.mxu0 %v7376
    %7659 = vmatpush.msra.mxu0 %v7375
    %7660 = vmatpush.msra.mxu0 %v7374
    %7661 = vmatpush.msra.mxu0 %v7373
    %7662 = vmatpush.msra.mxu0 %v7372
    %7663 = vmatpush.msra.mxu0 %v7371
    %7664 = vmatmul.f32.gmra.mxu0 %v4944
    %v7665 = vpop.f32.mrf.mxu0
    %v7666 = vadd.f32 0.0, %v7665
    %7667 = vmatmul.f32.gmra.mxu0 %v4945
    %v7668 = vpop.f32.mrf.mxu0
    %v7669 = vadd.f32 0.0, %v7668
    %7670 = vmatmul.f32.gmra.mxu0 %v4946
    %v7671 = vpop.f32.mrf.mxu0
    %v7672 = vadd.f32 0.0, %v7671
    %7673 = vmatmul.f32.gmra.mxu0 %v4947
    %v7674 = vpop.f32.mrf.mxu0
    %v7675 = vadd.f32 0.0, %v7674
    %7676 = vmatmul.f32.gmra.mxu0 %v4948
    %v7677 = vpop.f32.mrf.mxu0
    %v7678 = vadd.f32 0.0, %v7677
    %7679 = vmatmul.f32.gmra.mxu0 %v4949
    %v7680 = vpop.f32.mrf.mxu0
    %v7681 = vadd.f32 0.0, %v7680
    %7682 = vmatmul.f32.gmra.mxu0 %v4950
    %v7683 = vpop.f32.mrf.mxu0
    %v7684 = vadd.f32 0.0, %v7683
    %7685 = vmatmul.f32.gmra.mxu0 %v4951
    %v7686 = vpop.f32.mrf.mxu0
    %v7687 = vadd.f32 0.0, %v7686
    %7688 = vmatmul.f32.gmra.mxu0 %v4952
    %v7689 = vpop.f32.mrf.mxu0
    %v7690 = vadd.f32 0.0, %v7689
    %7691 = vmatmul.f32.gmra.mxu0 %v4953
    %v7692 = vpop.f32.mrf.mxu0
    %v7693 = vadd.f32 0.0, %v7692
    %7694 = vmatmul.f32.gmra.mxu0 %v4954
    %v7695 = vpop.f32.mrf.mxu0
    %v7696 = vadd.f32 0.0, %v7695
    %7697 = vmatmul.f32.gmra.mxu0 %v4955
    %v7698 = vpop.f32.mrf.mxu0
    %v7699 = vadd.f32 0.0, %v7698
    %7700 = vmatmul.f32.gmra.mxu0 %v4956
    %v7701 = vpop.f32.mrf.mxu0
    %v7702 = vadd.f32 0.0, %v7701
    %7703 = vmatmul.f32.gmra.mxu0 %v4957
    %v7704 = vpop.f32.mrf.mxu0
    %v7705 = vadd.f32 0.0, %v7704
    %7706 = vmatmul.f32.gmra.mxu0 %v4958
    %v7707 = vpop.f32.mrf.mxu0
    %v7708 = vadd.f32 0.0, %v7707
    %7709 = vmatmul.f32.gmra.mxu0 %v4959
    %v7710 = vpop.f32.mrf.mxu0
    %v7711 = vadd.f32 0.0, %v7710
    %7712 = vdwg.mxu0
    %v7713 = vadd.f32 %v7601, %v7666
    %v7714 = vadd.f32 %v7604, %v7669
    %v7715 = vadd.f32 %v7607, %v7672
    %v7716 = vadd.f32 %v7610, %v7675
    %v7717 = vadd.f32 %v7613, %v7678
    %v7718 = vadd.f32 %v7616, %v7681
    %v7719 = vadd.f32 %v7619, %v7684
    %v7720 = vadd.f32 %v7622, %v7687
    %v7721 = vadd.f32 %v7625, %v7690
    %v7722 = vadd.f32 %v7628, %v7693
    %v7723 = vadd.f32 %v7631, %v7696
    %v7724 = vadd.f32 %v7634, %v7699
    %v7725 = vadd.f32 %v7637, %v7702
    %v7726 = vadd.f32 %v7640, %v7705
    %v7727 = vadd.f32 %v7643, %v7708
    %v7728 = vadd.f32 %v7646, %v7711
    %v7729 = vperm.slane %v7387, 0
    %v7730 = vadd.f32 %v7713, %v7729
    %v7731 = vadd.f32 %v7714, %v7729
    %v7732 = vadd.f32 %v7715, %v7729
    %v7733 = vadd.f32 %v7716, %v7729
    %v7734 = vadd.f32 %v7717, %v7729
    %v7735 = vadd.f32 %v7718, %v7729
    %v7736 = vadd.f32 %v7719, %v7729
    %v7737 = vadd.f32 %v7720, %v7729
    %v7738 = vadd.f32 %v7721, %v7729
    %v7739 = vadd.f32 %v7722, %v7729
    %v7740 = vadd.f32 %v7723, %v7729
    %v7741 = vadd.f32 %v7724, %v7729
    %v7742 = vadd.f32 %v7725, %v7729
    %v7743 = vadd.f32 %v7726, %v7729
    %v7744 = vadd.f32 %v7727, %v7729
    %v7745 = vadd.f32 %v7728, %v7729
    %7747 = vset.pattern.permute.xlu0 0
    %7748 = vperm.xlu0 %7747, %v6781
    %v7749 = vpop.permute.xlu0 %7748
    %7752 = vset.pattern.permute.xlu0 0
    %7753 = vperm.xlu0 %7752, %v6782
    %v7754 = vpop.permute.xlu0 %7753
    %7757 = vset.pattern.permute.xlu0 0
    %7758 = vperm.xlu0 %7757, %v6783
    %v7759 = vpop.permute.xlu0 %7758
    %7762 = vset.pattern.permute.xlu0 0
    %7763 = vperm.xlu0 %7762, %v6784
    %v7764 = vpop.permute.xlu0 %7763
    %7767 = vset.pattern.permute.xlu0 0
    %7768 = vperm.xlu0 %7767, %v6785
    %v7769 = vpop.permute.xlu0 %7768
    %7772 = vset.pattern.permute.xlu0 0
    %7773 = vperm.xlu0 %7772, %v6786
    %v7774 = vpop.permute.xlu0 %7773
    %7777 = vset.pattern.permute.xlu0 0
    %7778 = vperm.xlu0 %7777, %v6787
    %v7779 = vpop.permute.xlu0 %7778
    %7782 = vset.pattern.permute.xlu0 0
    %7783 = vperm.xlu0 %7782, %v6788
    %v7784 = vpop.permute.xlu0 %7783
    %7787 = vset.pattern.permute.xlu0 0
    %7788 = vperm.xlu0 %7787, %v6789
    %v7789 = vpop.permute.xlu0 %7788
    %7792 = vset.pattern.permute.xlu0 0
    %7793 = vperm.xlu0 %7792, %v6790
    %v7794 = vpop.permute.xlu0 %7793
    %7797 = vset.pattern.permute.xlu0 0
    %7798 = vperm.xlu0 %7797, %v6791
    %v7799 = vpop.permute.xlu0 %7798
    %7802 = vset.pattern.permute.xlu0 0
    %7803 = vperm.xlu0 %7802, %v6792
    %v7804 = vpop.permute.xlu0 %7803
    %7807 = vset.pattern.permute.xlu0 0
    %7808 = vperm.xlu0 %7807, %v6793
    %v7809 = vpop.permute.xlu0 %7808
    %7812 = vset.pattern.permute.xlu0 0
    %7813 = vperm.xlu0 %7812, %v6794
    %v7814 = vpop.permute.xlu0 %7813
    %7817 = vset.pattern.permute.xlu0 0
    %7818 = vperm.xlu0 %7817, %v6795
    %v7819 = vpop.permute.xlu0 %7818
    %7822 = vset.pattern.permute.xlu0 0
    %7823 = vperm.xlu0 %7822, %v6796
    %v7824 = vpop.permute.xlu0 %7823
    %v7826 = vmul.f32 %v7730, %v7749
    %v7827 = vmul.f32 %v7731, %v7754
    %v7828 = vmul.f32 %v7732, %v7759
    %v7829 = vmul.f32 %v7733, %v7764
    %v7830 = vmul.f32 %v7734, %v7769
    %v7831 = vmul.f32 %v7735, %v7774
    %v7832 = vmul.f32 %v7736, %v7779
    %v7833 = vmul.f32 %v7737, %v7784
    %v7834 = vmul.f32 %v7738, %v7789
    %v7835 = vmul.f32 %v7739, %v7794
    %v7836 = vmul.f32 %v7740, %v7799
    %v7837 = vmul.f32 %v7741, %v7804
    %v7838 = vmul.f32 %v7742, %v7809
    %v7839 = vmul.f32 %v7743, %v7814
    %v7840 = vmul.f32 %v7744, %v7819
    %v7841 = vmul.f32 %v7745, %v7824
    %7842 = vmatpush.msra.mxu0 %v7841
    %7843 = vmatpush.msra.mxu0 %v7840
    %7844 = vmatpush.msra.mxu0 %v7839
    %7845 = vmatpush.msra.mxu0 %v7838
    %7846 = vmatpush.msra.mxu0 %v7837
    %7847 = vmatpush.msra.mxu0 %v7836
    %7848 = vmatpush.msra.mxu0 %v7835
    %7849 = vmatpush.msra.mxu0 %v7834
    %7850 = vmatpush.msra.mxu0 %v7833
    %7851 = vmatpush.msra.mxu0 %v7832
    %7852 = vmatpush.msra.mxu0 %v7831
    %7853 = vmatpush.msra.mxu0 %v7830
    %7854 = vmatpush.msra.mxu0 %v7829
    %7855 = vmatpush.msra.mxu0 %v7828
    %7856 = vmatpush.msra.mxu0 %v7827
    %7857 = vmatpush.msra.mxu0 %v7826
    %7858 = vmatmul.f32.gmra.mxu0 %v130
    %v7859 = vpop.f32.mrf.mxu0
    %v7860 = vadd.f32 0.0, %v7859
    %7861 = vmatmul.f32.gmra.mxu0 %v131
    %v7862 = vpop.f32.mrf.mxu0
    %v7863 = vadd.f32 0.0, %v7862
    %7864 = vmatmul.f32.gmra.mxu0 %v132
    %v7865 = vpop.f32.mrf.mxu0
    %v7866 = vadd.f32 0.0, %v7865
    %7867 = vmatmul.f32.gmra.mxu0 %v133
    %v7868 = vpop.f32.mrf.mxu0
    %v7869 = vadd.f32 0.0, %v7868
    %7870 = vmatmul.f32.gmra.mxu0 %v134
    %v7871 = vpop.f32.mrf.mxu0
    %v7872 = vadd.f32 0.0, %v7871
    %7873 = vmatmul.f32.gmra.mxu0 %v135
    %v7874 = vpop.f32.mrf.mxu0
    %v7875 = vadd.f32 0.0, %v7874
    %7876 = vmatmul.f32.gmra.mxu0 %v136
    %v7877 = vpop.f32.mrf.mxu0
    %v7878 = vadd.f32 0.0, %v7877
    %7879 = vmatmul.f32.gmra.mxu0 %v137
    %v7880 = vpop.f32.mrf.mxu0
    %v7881 = vadd.f32 0.0, %v7880
    %7882 = vmatmul.f32.gmra.mxu0 %v138
    %v7883 = vpop.f32.mrf.mxu0
    %v7884 = vadd.f32 0.0, %v7883
    %7885 = vmatmul.f32.gmra.mxu0 %v139
    %v7886 = vpop.f32.mrf.mxu0
    %v7887 = vadd.f32 0.0, %v7886
    %7888 = vmatmul.f32.gmra.mxu0 %v140
    %v7889 = vpop.f32.mrf.mxu0
    %v7890 = vadd.f32 0.0, %v7889
    %7891 = vmatmul.f32.gmra.mxu0 %v141
    %v7892 = vpop.f32.mrf.mxu0
    %v7893 = vadd.f32 0.0, %v7892
    %7894 = vmatmul.f32.gmra.mxu0 %v142
    %v7895 = vpop.f32.mrf.mxu0
    %v7896 = vadd.f32 0.0, %v7895
    %7897 = vmatmul.f32.gmra.mxu0 %v143
    %v7898 = vpop.f32.mrf.mxu0
    %v7899 = vadd.f32 0.0, %v7898
    %7900 = vmatmul.f32.gmra.mxu0 %v144
    %v7901 = vpop.f32.mrf.mxu0
    %v7902 = vadd.f32 0.0, %v7901
    %7903 = vmatmul.f32.gmra.mxu0 %v145
    %v7904 = vpop.f32.mrf.mxu0
    %v7905 = vadd.f32 0.0, %v7904
    %7906 = vdwg.mxu0
    %7908 = vset.pattern.permute.xlu0 0
    %7909 = vperm.xlu0 %7908, %v7113
    %v7910 = vpop.permute.xlu0 %7909
    %7913 = vset.pattern.permute.xlu0 0
    %7914 = vperm.xlu0 %7913, %v7128
    %v7915 = vpop.permute.xlu0 %7914
    %7918 = vset.pattern.permute.xlu0 0
    %7919 = vperm.xlu0 %7918, %v7143
    %v7920 = vpop.permute.xlu0 %7919
    %7923 = vset.pattern.permute.xlu0 0
    %7924 = vperm.xlu0 %7923, %v7158
    %v7925 = vpop.permute.xlu0 %7924
    %7928 = vset.pattern.permute.xlu0 0
    %7929 = vperm.xlu0 %7928, %v7173
    %v7930 = vpop.permute.xlu0 %7929
    %7933 = vset.pattern.permute.xlu0 0
    %7934 = vperm.xlu0 %7933, %v7188
    %v7935 = vpop.permute.xlu0 %7934
    %7938 = vset.pattern.permute.xlu0 0
    %7939 = vperm.xlu0 %7938, %v7203
    %v7940 = vpop.permute.xlu0 %7939
    %7943 = vset.pattern.permute.xlu0 0
    %7944 = vperm.xlu0 %7943, %v7218
    %v7945 = vpop.permute.xlu0 %7944
    %7948 = vset.pattern.permute.xlu0 0
    %7949 = vperm.xlu0 %7948, %v7233
    %v7950 = vpop.permute.xlu0 %7949
    %7953 = vset.pattern.permute.xlu0 0
    %7954 = vperm.xlu0 %7953, %v7248
    %v7955 = vpop.permute.xlu0 %7954
    %7958 = vset.pattern.permute.xlu0 0
    %7959 = vperm.xlu0 %7958, %v7263
    %v7960 = vpop.permute.xlu0 %7959
    %7963 = vset.pattern.permute.xlu0 0
    %7964 = vperm.xlu0 %7963, %v7278
    %v7965 = vpop.permute.xlu0 %7964
    %7968 = vset.pattern.permute.xlu0 0
    %7969 = vperm.xlu0 %7968, %v7293
    %v7970 = vpop.permute.xlu0 %7969
    %7973 = vset.pattern.permute.xlu0 0
    %7974 = vperm.xlu0 %7973, %v7308
    %v7975 = vpop.permute.xlu0 %7974
    %7978 = vset.pattern.permute.xlu0 0
    %7979 = vperm.xlu0 %7978, %v7323
    %v7980 = vpop.permute.xlu0 %7979
    %7983 = vset.pattern.permute.xlu0 0
    %7984 = vperm.xlu0 %7983, %v7338
    %v7985 = vpop.permute.xlu0 %7984
    %v7987 = vmul.f32 %v7860, %v7910
    %v7988 = vmul.f32 %v7863, %v7915
    %v7989 = vmul.f32 %v7866, %v7920
    %v7990 = vmul.f32 %v7869, %v7925
    %v7991 = vmul.f32 %v7872, %v7930
    %v7992 = vmul.f32 %v7875, %v7935
    %v7993 = vmul.f32 %v7878, %v7940
    %v7994 = vmul.f32 %v7881, %v7945
    %v7995 = vmul.f32 %v7884, %v7950
    %v7996 = vmul.f32 %v7887, %v7955
    %v7997 = vmul.f32 %v7890, %v7960
    %v7998 = vmul.f32 %v7893, %v7965
    %v7999 = vmul.f32 %v7896, %v7970
    %v8000 = vmul.f32 %v7899, %v7975
    %v8001 = vmul.f32 %v7902, %v7980
    %v8002 = vmul.f32 %v7905, %v7985
    %v8003 = vmax.f32 %v7987, 0.0
    %v8004 = vmax.f32 %v7988, 0.0
    %v8005 = vmax.f32 %v7989, 0.0
    %v8006 = vmax.f32 %v7990, 0.0
    %v8007 = vmax.f32 %v7991, 0.0
    %v8008 = vmax.f32 %v7992, 0.0
    %v8009 = vmax.f32 %v7993, 0.0
    %v8010 = vmax.f32 %v7994, 0.0
    %v8011 = vmax.f32 %v7995, 0.0
    %v8012 = vmax.f32 %v7996, 0.0
    %v8013 = vmax.f32 %v7997, 0.0
    %v8014 = vmax.f32 %v7998, 0.0
    %v8015 = vmax.f32 %v7999, 0.0
    %v8016 = vmax.f32 %v8000, 0.0
    %v8017 = vmax.f32 %v8001, 0.0
    %v8018 = vmax.f32 %v8002, 0.0
    %8019 = vmatpush.msra.mxu0 %v1746
    %8020 = vmatpush.msra.mxu0 %v1745
    %8021 = vmatpush.msra.mxu0 %v1744
    %8022 = vmatpush.msra.mxu0 %v1743
    %8023 = vmatpush.msra.mxu0 %v1742
    %8024 = vmatpush.msra.mxu0 %v1741
    %8025 = vmatpush.msra.mxu0 %v1740
    %8026 = vmatpush.msra.mxu0 %v1739
    %8027 = vmatpush.msra.mxu0 %v1738
    %8028 = vmatpush.msra.mxu0 %v1737
    %8029 = vmatpush.msra.mxu0 %v1736
    %8030 = vmatpush.msra.mxu0 %v1735
    %8031 = vmatpush.msra.mxu0 %v1734
    %8032 = vmatpush.msra.mxu0 %v1733
    %8033 = vmatpush.msra.mxu0 %v1732
    %8034 = vmatpush.msra.mxu0 %v1731
    %8035 = vmatmul.f32.gmra.mxu0 %v8003
    %v8036 = vpop.f32.mrf.mxu0
    %v8037 = vadd.f32 0.0, %v8036
    %8038 = vmatmul.f32.gmra.mxu0 %v8004
    %v8039 = vpop.f32.mrf.mxu0
    %v8040 = vadd.f32 0.0, %v8039
    %8041 = vmatmul.f32.gmra.mxu0 %v8005
    %v8042 = vpop.f32.mrf.mxu0
    %v8043 = vadd.f32 0.0, %v8042
    %8044 = vmatmul.f32.gmra.mxu0 %v8006
    %v8045 = vpop.f32.mrf.mxu0
    %v8046 = vadd.f32 0.0, %v8045
    %8047 = vmatmul.f32.gmra.mxu0 %v8007
    %v8048 = vpop.f32.mrf.mxu0
    %v8049 = vadd.f32 0.0, %v8048
    %8050 = vmatmul.f32.gmra.mxu0 %v8008
    %v8051 = vpop.f32.mrf.mxu0
    %v8052 = vadd.f32 0.0, %v8051
    %8053 = vmatmul.f32.gmra.mxu0 %v8009
    %v8054 = vpop.f32.mrf.mxu0
    %v8055 = vadd.f32 0.0, %v8054
    %8056 = vmatmul.f32.gmra.mxu0 %v8010
    %v8057 = vpop.f32.mrf.mxu0
    %v8058 = vadd.f32 0.0, %v8057
    %8059 = vmatmul.f32.gmra.mxu0 %v8011
    %v8060 = vpop.f32.mrf.mxu0
    %v8061 = vadd.f32 0.0, %v8060
    %8062 = vmatmul.f32.gmra.mxu0 %v8012
    %v8063 = vpop.f32.mrf.mxu0
    %v8064 = vadd.f32 0.0, %v8063
    %8065 = vmatmul.f32.gmra.mxu0 %v8013
    %v8066 = vpop.f32.mrf.mxu0
    %v8067 = vadd.f32 0.0, %v8066
    %8068 = vmatmul.f32.gmra.mxu0 %v8014
    %v8069 = vpop.f32.mrf.mxu0
    %v8070 = vadd.f32 0.0, %v8069
    %8071 = vmatmul.f32.gmra.mxu0 %v8015
    %v8072 = vpop.f32.mrf.mxu0
    %v8073 = vadd.f32 0.0, %v8072
    %8074 = vmatmul.f32.gmra.mxu0 %v8016
    %v8075 = vpop.f32.mrf.mxu0
    %v8076 = vadd.f32 0.0, %v8075
    %8077 = vmatmul.f32.gmra.mxu0 %v8017
    %v8078 = vpop.f32.mrf.mxu0
    %v8079 = vadd.f32 0.0, %v8078
    %8080 = vmatmul.f32.gmra.mxu0 %v8018
    %v8081 = vpop.f32.mrf.mxu0
    %v8082 = vadd.f32 0.0, %v8081
    %8083 = vdwg.mxu0
    %v8084 = vld [vmem:[%s12 + $0x2] sm:$0x1]
    %v8085 = vmul.f32 %v646, %v7749
    %v8086 = vmul.f32 %v647, %v7754
    %v8087 = vmul.f32 %v648, %v7759
    %v8088 = vmul.f32 %v649, %v7764
    %v8089 = vmul.f32 %v650, %v7769
    %v8090 = vmul.f32 %v651, %v7774
    %v8091 = vmul.f32 %v652, %v7779
    %v8092 = vmul.f32 %v653, %v7784
    %v8093 = vmul.f32 %v654, %v7789
    %v8094 = vmul.f32 %v655, %v7794
    %v8095 = vmul.f32 %v656, %v7799
    %v8096 = vmul.f32 %v657, %v7804
    %v8097 = vmul.f32 %v658, %v7809
    %v8098 = vmul.f32 %v659, %v7814
    %v8099 = vmul.f32 %v660, %v7819
    %v8100 = vmul.f32 %v661, %v7824
    %8101 = vmatpush.msra.mxu0 %v8100
    %8102 = vmatpush.msra.mxu0 %v8099
    %8103 = vmatpush.msra.mxu0 %v8098
    %8104 = vmatpush.msra.mxu0 %v8097
    %8105 = vmatpush.msra.mxu0 %v8096
    %8106 = vmatpush.msra.mxu0 %v8095
    %8107 = vmatpush.msra.mxu0 %v8094
    %8108 = vmatpush.msra.mxu0 %v8093
    %8109 = vmatpush.msra.mxu0 %v8092
    %8110 = vmatpush.msra.mxu0 %v8091
    %8111 = vmatpush.msra.mxu0 %v8090
    %8112 = vmatpush.msra.mxu0 %v8089
    %8113 = vmatpush.msra.mxu0 %v8088
    %8114 = vmatpush.msra.mxu0 %v8087
    %8115 = vmatpush.msra.mxu0 %v8086
    %8116 = vmatpush.msra.mxu0 %v8085
    %8117 = vmatmul.f32.gmra.mxu0 %v130
    %v8118 = vpop.f32.mrf.mxu0
    %v8119 = vadd.f32 0.0, %v8118
    %8120 = vmatmul.f32.gmra.mxu0 %v131
    %v8121 = vpop.f32.mrf.mxu0
    %v8122 = vadd.f32 0.0, %v8121
    %8123 = vmatmul.f32.gmra.mxu0 %v132
    %v8124 = vpop.f32.mrf.mxu0
    %v8125 = vadd.f32 0.0, %v8124
    %8126 = vmatmul.f32.gmra.mxu0 %v133
    %v8127 = vpop.f32.mrf.mxu0
    %v8128 = vadd.f32 0.0, %v8127
    %8129 = vmatmul.f32.gmra.mxu0 %v134
    %v8130 = vpop.f32.mrf.mxu0
    %v8131 = vadd.f32 0.0, %v8130
    %8132 = vmatmul.f32.gmra.mxu0 %v135
    %v8133 = vpop.f32.mrf.mxu0
    %v8134 = vadd.f32 0.0, %v8133
    %8135 = vmatmul.f32.gmra.mxu0 %v136
    %v8136 = vpop.f32.mrf.mxu0
    %v8137 = vadd.f32 0.0, %v8136
    %8138 = vmatmul.f32.gmra.mxu0 %v137
    %v8139 = vpop.f32.mrf.mxu0
    %v8140 = vadd.f32 0.0, %v8139
    %8141 = vmatmul.f32.gmra.mxu0 %v138
    %v8142 = vpop.f32.mrf.mxu0
    %v8143 = vadd.f32 0.0, %v8142
    %8144 = vmatmul.f32.gmra.mxu0 %v139
    %v8145 = vpop.f32.mrf.mxu0
    %v8146 = vadd.f32 0.0, %v8145
    %8147 = vmatmul.f32.gmra.mxu0 %v140
    %v8148 = vpop.f32.mrf.mxu0
    %v8149 = vadd.f32 0.0, %v8148
    %8150 = vmatmul.f32.gmra.mxu0 %v141
    %v8151 = vpop.f32.mrf.mxu0
    %v8152 = vadd.f32 0.0, %v8151
    %8153 = vmatmul.f32.gmra.mxu0 %v142
    %v8154 = vpop.f32.mrf.mxu0
    %v8155 = vadd.f32 0.0, %v8154
    %8156 = vmatmul.f32.gmra.mxu0 %v143
    %v8157 = vpop.f32.mrf.mxu0
    %v8158 = vadd.f32 0.0, %v8157
    %8159 = vmatmul.f32.gmra.mxu0 %v144
    %v8160 = vpop.f32.mrf.mxu0
    %v8161 = vadd.f32 0.0, %v8160
    %8162 = vmatmul.f32.gmra.mxu0 %v145
    %v8163 = vpop.f32.mrf.mxu0
    %v8164 = vadd.f32 0.0, %v8163
    %8165 = vdwg.mxu0
    %v8166 = vmul.f32 %v8119, %v1910
    %v8167 = vmul.f32 %v8122, %v1911
    %v8168 = vmul.f32 %v8125, %v1912
    %v8169 = vmul.f32 %v8128, %v1913
    %v8170 = vmul.f32 %v8131, %v1914
    %v8171 = vmul.f32 %v8134, %v1915
    %v8172 = vmul.f32 %v8137, %v1916
    %v8173 = vmul.f32 %v8140, %v1917
    %v8174 = vmul.f32 %v8143, %v1918
    %v8175 = vmul.f32 %v8146, %v1919
    %v8176 = vmul.f32 %v8149, %v1920
    %v8177 = vmul.f32 %v8152, %v1921
    %v8178 = vmul.f32 %v8155, %v1922
    %v8179 = vmul.f32 %v8158, %v1923
    %v8180 = vmul.f32 %v8161, %v1924
    %v8181 = vmul.f32 %v8164, %v1925
    %v8182 = vmul.f32 %v1813, %v6542
    %v8183 = vmul.f32 %v1814, %v6547
    %v8184 = vmul.f32 %v1815, %v6552
    %v8185 = vmul.f32 %v1816, %v6557
    %v8186 = vmul.f32 %v1817, %v6562
    %v8187 = vmul.f32 %v1818, %v6567
    %v8188 = vmul.f32 %v1819, %v6572
    %v8189 = vmul.f32 %v1820, %v6577
    %v8190 = vmul.f32 %v1821, %v6582
    %v8191 = vmul.f32 %v1822, %v6587
    %v8192 = vmul.f32 %v1823, %v6592
    %v8193 = vmul.f32 %v1824, %v6597
    %v8194 = vmul.f32 %v1825, %v6602
    %v8195 = vmul.f32 %v1826, %v6607
    %v8196 = vmul.f32 %v1827, %v6612
    %v8197 = vmul.f32 %v1828, %v6617
    %v8198 = vadd.f32 %v8166, %v8182
    %v8199 = vadd.f32 %v8167, %v8183
    %v8200 = vadd.f32 %v8168, %v8184
    %v8201 = vadd.f32 %v8169, %v8185
    %v8202 = vadd.f32 %v8170, %v8186
    %v8203 = vadd.f32 %v8171, %v8187
    %v8204 = vadd.f32 %v8172, %v8188
    %v8205 = vadd.f32 %v8173, %v8189
    %v8206 = vadd.f32 %v8174, %v8190
    %v8207 = vadd.f32 %v8175, %v8191
    %v8208 = vadd.f32 %v8176, %v8192
    %v8209 = vadd.f32 %v8177, %v8193
    %v8210 = vadd.f32 %v8178, %v8194
    %v8211 = vadd.f32 %v8179, %v8195
    %v8212 = vadd.f32 %v8180, %v8196
    %v8213 = vadd.f32 %v8181, %v8197
    %8230 = vrot.lane.b32.xlu0 %v8037, 111
    %v8231 = vpop.permute.xlu0 %8230
    %8232 = vrot.lane.b32.xlu0 %v8040, 111
    %v8233 = vpop.permute.xlu0 %8232
    %8234 = vrot.lane.b32.xlu0 %v8043, 111
    %v8235 = vpop.permute.xlu0 %8234
    %8236 = vrot.lane.b32.xlu0 %v8046, 111
    %v8237 = vpop.permute.xlu0 %8236
    %8238 = vrot.lane.b32.xlu0 %v8049, 111
    %v8239 = vpop.permute.xlu0 %8238
    %8240 = vrot.lane.b32.xlu0 %v8052, 111
    %v8241 = vpop.permute.xlu0 %8240
    %8242 = vrot.lane.b32.xlu0 %v8055, 111
    %v8243 = vpop.permute.xlu0 %8242
    %8244 = vrot.lane.b32.xlu0 %v8058, 111
    %v8245 = vpop.permute.xlu0 %8244
    %8246 = vrot.lane.b32.xlu0 %v8061, 111
    %v8247 = vpop.permute.xlu0 %8246
    %8248 = vrot.lane.b32.xlu0 %v8064, 111
    %v8249 = vpop.permute.xlu0 %8248
    %8250 = vrot.lane.b32.xlu0 %v8067, 111
    %v8251 = vpop.permute.xlu0 %8250
    %8252 = vrot.lane.b32.xlu0 %v8070, 111
    %v8253 = vpop.permute.xlu0 %8252
    %8254 = vrot.lane.b32.xlu0 %v8073, 111
    %v8255 = vpop.permute.xlu0 %8254
    %8256 = vrot.lane.b32.xlu0 %v8076, 111
    %v8257 = vpop.permute.xlu0 %8256
    %8258 = vrot.lane.b32.xlu0 %v8079, 111
    %v8259 = vpop.permute.xlu0 %8258
    %8260 = vrot.lane.b32.xlu0 %v8082, 111
    %v8261 = vpop.permute.xlu0 %8260
    %v8262 = vsel %vm2102, %v8231, 0
    %v8264 = vsel %vm2102, %v8233, 0
    %v8266 = vsel %vm2102, %v8235, 0
    %v8268 = vsel %vm2102, %v8237, 0
    %v8270 = vsel %vm2102, %v8239, 0
    %v8272 = vsel %vm2102, %v8241, 0
    %v8274 = vsel %vm2102, %v8243, 0
    %v8276 = vsel %vm2102, %v8245, 0
    %v8278 = vsel %vm2102, %v8247, 0
    %v8280 = vsel %vm2102, %v8249, 0
    %v8282 = vsel %vm2102, %v8251, 0
    %v8284 = vsel %vm2102, %v8253, 0
    %v8286 = vsel %vm2102, %v8255, 0
    %v8288 = vsel %vm2102, %v8257, 0
    %v8290 = vsel %vm2102, %v8259, 0
    %v8292 = vsel %vm2102, %v8261, 0
    %8294 = vmatpush.xpose.msra.mxu0 %v8292
    %8295 = vmatpush.xpose.msra.mxu0 %v8290
    %8296 = vmatpush.xpose.msra.mxu0 %v8288
    %8297 = vmatpush.xpose.msra.mxu0 %v8286
    %8298 = vmatpush.xpose.msra.mxu0 %v8284
    %8299 = vmatpush.xpose.msra.mxu0 %v8282
    %8300 = vmatpush.xpose.msra.mxu0 %v8280
    %8301 = vmatpush.xpose.msra.mxu0 %v8278
    %8302 = vmatpush.xpose.msra.mxu0 %v8276
    %8303 = vmatpush.xpose.msra.mxu0 %v8274
    %8304 = vmatpush.xpose.msra.mxu0 %v8272
    %8305 = vmatpush.xpose.msra.mxu0 %v8270
    %8306 = vmatpush.xpose.msra.mxu0 %v8268
    %8307 = vmatpush.xpose.msra.mxu0 %v8266
    %8308 = vmatpush.xpose.msra.mxu0 %v8264
    %8309 = vmatpush.xpose.msra.mxu0 %v8262
    %8310 = vmatmul.f32.gmra.mxu0 %v2104
    %v8311 = vpop.f32.mrf.mxu0
    %v8312 = vadd.f32 0.0, %v8311
    %8313 = vmatmul.f32.gmra.mxu0 %v2104
    %v8314 = vpop.f32.mrf.mxu0
    %v8315 = vadd.f32 0.0, %v8314
    %8316 = vmatmul.f32.gmra.mxu0 %v2104
    %v8317 = vpop.f32.mrf.mxu0
    %v8318 = vadd.f32 0.0, %v8317
    %8319 = vmatmul.f32.gmra.mxu0 %v2104
    %v8320 = vpop.f32.mrf.mxu0
    %v8321 = vadd.f32 0.0, %v8320
    %8322 = vmatmul.f32.gmra.mxu0 %v2104
    %v8323 = vpop.f32.mrf.mxu0
    %v8324 = vadd.f32 0.0, %v8323
    %8325 = vmatmul.f32.gmra.mxu0 %v2104
    %v8326 = vpop.f32.mrf.mxu0
    %v8327 = vadd.f32 0.0, %v8326
    %8328 = vmatmul.f32.gmra.mxu0 %v2104
    %v8329 = vpop.f32.mrf.mxu0
    %v8330 = vadd.f32 0.0, %v8329
    %8331 = vmatmul.f32.gmra.mxu0 %v2104
    %v8332 = vpop.f32.mrf.mxu0
    %v8333 = vadd.f32 0.0, %v8332
    %8334 = vmatmul.f32.gmra.mxu0 %v2104
    %v8335 = vpop.f32.mrf.mxu0
    %v8336 = vadd.f32 0.0, %v8335
    %8337 = vmatmul.f32.gmra.mxu0 %v2104
    %v8338 = vpop.f32.mrf.mxu0
    %v8339 = vadd.f32 0.0, %v8338
    %8340 = vmatmul.f32.gmra.mxu0 %v2104
    %v8341 = vpop.f32.mrf.mxu0
    %v8342 = vadd.f32 0.0, %v8341
    %8343 = vmatmul.f32.gmra.mxu0 %v2104
    %v8344 = vpop.f32.mrf.mxu0
    %v8345 = vadd.f32 0.0, %v8344
    %8346 = vmatmul.f32.gmra.mxu0 %v2104
    %v8347 = vpop.f32.mrf.mxu0
    %v8348 = vadd.f32 0.0, %v8347
    %8349 = vmatmul.f32.gmra.mxu0 %v2104
    %v8350 = vpop.f32.mrf.mxu0
    %v8351 = vadd.f32 0.0, %v8350
    %8352 = vmatmul.f32.gmra.mxu0 %v2104
    %v8353 = vpop.f32.mrf.mxu0
    %v8354 = vadd.f32 0.0, %v8353
    %8355 = vmatmul.f32.gmra.mxu0 %v2104
    %v8356 = vpop.f32.mrf.mxu0
    %v8357 = vadd.f32 0.0, %v8356
    %8358 = vdwg.mxu0
    %8359 = vset.pattern.permute.xlu0 18
    %8360 = vperm.xlu0 %8359, %v8037
    %v8361 = vpop.permute.xlu0 %8360
    %8363 = vset.pattern.permute.xlu0 18
    %8364 = vperm.xlu0 %8363, %v8040
    %v8365 = vpop.permute.xlu0 %8364
    %8367 = vset.pattern.permute.xlu0 18
    %8368 = vperm.xlu0 %8367, %v8043
    %v8369 = vpop.permute.xlu0 %8368
    %8371 = vset.pattern.permute.xlu0 18
    %8372 = vperm.xlu0 %8371, %v8046
    %v8373 = vpop.permute.xlu0 %8372
    %8375 = vset.pattern.permute.xlu0 18
    %8376 = vperm.xlu0 %8375, %v8049
    %v8377 = vpop.permute.xlu0 %8376
    %8379 = vset.pattern.permute.xlu0 18
    %8380 = vperm.xlu0 %8379, %v8052
    %v8381 = vpop.permute.xlu0 %8380
    %8383 = vset.pattern.permute.xlu0 18
    %8384 = vperm.xlu0 %8383, %v8055
    %v8385 = vpop.permute.xlu0 %8384
    %8387 = vset.pattern.permute.xlu0 18
    %8388 = vperm.xlu0 %8387, %v8058
    %v8389 = vpop.permute.xlu0 %8388
    %8391 = vset.pattern.permute.xlu0 18
    %8392 = vperm.xlu0 %8391, %v8061
    %v8393 = vpop.permute.xlu0 %8392
    %8395 = vset.pattern.permute.xlu0 18
    %8396 = vperm.xlu0 %8395, %v8064
    %v8397 = vpop.permute.xlu0 %8396
    %8399 = vset.pattern.permute.xlu0 18
    %8400 = vperm.xlu0 %8399, %v8067
    %v8401 = vpop.permute.xlu0 %8400
    %8403 = vset.pattern.permute.xlu0 18
    %8404 = vperm.xlu0 %8403, %v8070
    %v8405 = vpop.permute.xlu0 %8404
    %8407 = vset.pattern.permute.xlu0 18
    %8408 = vperm.xlu0 %8407, %v8073
    %v8409 = vpop.permute.xlu0 %8408
    %8411 = vset.pattern.permute.xlu0 18
    %8412 = vperm.xlu0 %8411, %v8076
    %v8413 = vpop.permute.xlu0 %8412
    %8415 = vset.pattern.permute.xlu0 18
    %8416 = vperm.xlu0 %8415, %v8079
    %v8417 = vpop.permute.xlu0 %8416
    %8419 = vset.pattern.permute.xlu0 18
    %8420 = vperm.xlu0 %8419, %v8082
    %v8421 = vpop.permute.xlu0 %8420
    %v8423 = vadd.f32 %v8361, %v8312
    %v8424 = vadd.f32 %v8365, %v8315
    %v8425 = vadd.f32 %v8369, %v8318
    %v8426 = vadd.f32 %v8373, %v8321
    %v8427 = vadd.f32 %v8377, %v8324
    %v8428 = vadd.f32 %v8381, %v8327
    %v8429 = vadd.f32 %v8385, %v8330
    %v8430 = vadd.f32 %v8389, %v8333
    %v8431 = vadd.f32 %v8393, %v8336
    %v8432 = vadd.f32 %v8397, %v8339
    %v8433 = vadd.f32 %v8401, %v8342
    %v8434 = vadd.f32 %v8405, %v8345
    %v8435 = vadd.f32 %v8409, %v8348
    %v8436 = vadd.f32 %v8413, %v8351
    %v8437 = vadd.f32 %v8417, %v8354
    %v8438 = vadd.f32 %v8421, %v8357
    %vm8439 = vcmp.gt.f32.partialorder %v8423, 0.0
    %vm8440 = vcmp.gt.f32.partialorder %v8424, 0.0
    %vm8441 = vcmp.gt.f32.partialorder %v8425, 0.0
    %vm8442 = vcmp.gt.f32.partialorder %v8426, 0.0
    %vm8443 = vcmp.gt.f32.partialorder %v8427, 0.0
    %vm8444 = vcmp.gt.f32.partialorder %v8428, 0.0
    %vm8445 = vcmp.gt.f32.partialorder %v8429, 0.0
    %vm8446 = vcmp.gt.f32.partialorder %v8430, 0.0
    %vm8447 = vcmp.gt.f32.partialorder %v8431, 0.0
    %vm8448 = vcmp.gt.f32.partialorder %v8432, 0.0
    %vm8449 = vcmp.gt.f32.partialorder %v8433, 0.0
    %vm8450 = vcmp.gt.f32.partialorder %v8434, 0.0
    %vm8451 = vcmp.gt.f32.partialorder %v8435, 0.0
    %vm8452 = vcmp.gt.f32.partialorder %v8436, 0.0
    %vm8453 = vcmp.gt.f32.partialorder %v8437, 0.0
    %vm8454 = vcmp.gt.f32.partialorder %v8438, 0.0
    %v8455 = vmul.f32 %v8423, 0.2
    %v8456 = vmul.f32 %v8424, 0.2
    %v8457 = vmul.f32 %v8425, 0.2
    %v8458 = vmul.f32 %v8426, 0.2
    %v8459 = vmul.f32 %v8427, 0.2
    %v8460 = vmul.f32 %v8428, 0.2
    %v8461 = vmul.f32 %v8429, 0.2
    %v8462 = vmul.f32 %v8430, 0.2
    %v8463 = vmul.f32 %v8431, 0.2
    %v8464 = vmul.f32 %v8432, 0.2
    %v8465 = vmul.f32 %v8433, 0.2
    %v8466 = vmul.f32 %v8434, 0.2
    %v8467 = vmul.f32 %v8435, 0.2
    %v8468 = vmul.f32 %v8436, 0.2
    %v8469 = vmul.f32 %v8437, 0.2
    %v8470 = vmul.f32 %v8438, 0.2
    %v8471 = vsel %vm8439, %v8423, %v8455
    %v8472 = vsel %vm8440, %v8424, %v8456
    %v8473 = vsel %vm8441, %v8425, %v8457
    %v8474 = vsel %vm8442, %v8426, %v8458
    %v8475 = vsel %vm8443, %v8427, %v8459
    %v8476 = vsel %vm8444, %v8428, %v8460
    %v8477 = vsel %vm8445, %v8429, %v8461
    %v8478 = vsel %vm8446, %v8430, %v8462
    %v8479 = vsel %vm8447, %v8431, %v8463
    %v8480 = vsel %vm8448, %v8432, %v8464
    %v8481 = vsel %vm8449, %v8433, %v8465
    %v8482 = vsel %vm8450, %v8434, %v8466
    %v8483 = vsel %vm8451, %v8435, %v8467
    %v8484 = vsel %vm8452, %v8436, %v8468
    %v8485 = vsel %vm8453, %v8437, %v8469
    %v8486 = vsel %vm8454, %v8438, %v8470
    %vm8487 = vcmp.gt.f32.partialorder %v8198, 0.0
    %vm8488 = vcmp.gt.f32.partialorder %v8199, 0.0
    %vm8489 = vcmp.gt.f32.partialorder %v8200, 0.0
    %vm8490 = vcmp.gt.f32.partialorder %v8201, 0.0
    %vm8491 = vcmp.gt.f32.partialorder %v8202, 0.0
    %vm8492 = vcmp.gt.f32.partialorder %v8203, 0.0
    %vm8493 = vcmp.gt.f32.partialorder %v8204, 0.0
    %vm8494 = vcmp.gt.f32.partialorder %v8205, 0.0
    %vm8495 = vcmp.gt.f32.partialorder %v8206, 0.0
    %vm8496 = vcmp.gt.f32.partialorder %v8207, 0.0
    %vm8497 = vcmp.gt.f32.partialorder %v8208, 0.0
    %vm8498 = vcmp.gt.f32.partialorder %v8209, 0.0
    %vm8499 = vcmp.gt.f32.partialorder %v8210, 0.0
    %vm8500 = vcmp.gt.f32.partialorder %v8211, 0.0
    %vm8501 = vcmp.gt.f32.partialorder %v8212, 0.0
    %vm8502 = vcmp.gt.f32.partialorder %v8213, 0.0
    %v8503 = vsel %vm8487, %v8471, -1e+30
    %v8504 = vsel %vm8488, %v8472, -1e+30
    %v8505 = vsel %vm8489, %v8473, -1e+30
    %v8506 = vsel %vm8490, %v8474, -1e+30
    %v8507 = vsel %vm8491, %v8475, -1e+30
    %v8508 = vsel %vm8492, %v8476, -1e+30
    %v8509 = vsel %vm8493, %v8477, -1e+30
    %v8510 = vsel %vm8494, %v8478, -1e+30
    %v8511 = vsel %vm8495, %v8479, -1e+30
    %v8512 = vsel %vm8496, %v8480, -1e+30
    %v8513 = vsel %vm8497, %v8481, -1e+30
    %v8514 = vsel %vm8498, %v8482, -1e+30
    %v8515 = vsel %vm8499, %v8483, -1e+30
    %v8516 = vsel %vm8500, %v8484, -1e+30
    %v8517 = vsel %vm8501, %v8485, -1e+30
    %v8518 = vsel %vm8502, %v8486, -1e+30
    %8519 = vmax.xlane.f32.xlu0 %v8503
    %v8520 = vpop.xlane.xlu0 %8519
    %8521 = vmax.xlane.f32.xlu0 %v8504
    %v8522 = vpop.xlane.xlu0 %8521
    %8523 = vmax.xlane.f32.xlu0 %v8505
    %v8524 = vpop.xlane.xlu0 %8523
    %8525 = vmax.xlane.f32.xlu0 %v8506
    %v8526 = vpop.xlane.xlu0 %8525
    %8527 = vmax.xlane.f32.xlu0 %v8507
    %v8528 = vpop.xlane.xlu0 %8527
    %8529 = vmax.xlane.f32.xlu0 %v8508
    %v8530 = vpop.xlane.xlu0 %8529
    %8531 = vmax.xlane.f32.xlu0 %v8509
    %v8532 = vpop.xlane.xlu0 %8531
    %8533 = vmax.xlane.f32.xlu0 %v8510
    %v8534 = vpop.xlane.xlu0 %8533
    %8535 = vmax.xlane.f32.xlu0 %v8511
    %v8536 = vpop.xlane.xlu0 %8535
    %8537 = vmax.xlane.f32.xlu0 %v8512
    %v8538 = vpop.xlane.xlu0 %8537
    %8539 = vmax.xlane.f32.xlu0 %v8513
    %v8540 = vpop.xlane.xlu0 %8539
    %8541 = vmax.xlane.f32.xlu0 %v8514
    %v8542 = vpop.xlane.xlu0 %8541
    %8543 = vmax.xlane.f32.xlu0 %v8515
    %v8544 = vpop.xlane.xlu0 %8543
    %8545 = vmax.xlane.f32.xlu0 %v8516
    %v8546 = vpop.xlane.xlu0 %8545
    %8547 = vmax.xlane.f32.xlu0 %v8517
    %v8548 = vpop.xlane.xlu0 %8547
    %8549 = vmax.xlane.f32.xlu0 %v8518
    %v8550 = vpop.xlane.xlu0 %8549
    %v8551 = vsub.f32 %v8503, %v8520
    %v8552 = vsub.f32 %v8504, %v8522
    %v8553 = vsub.f32 %v8505, %v8524
    %v8554 = vsub.f32 %v8506, %v8526
    %v8555 = vsub.f32 %v8507, %v8528
    %v8556 = vsub.f32 %v8508, %v8530
    %v8557 = vsub.f32 %v8509, %v8532
    %v8558 = vsub.f32 %v8510, %v8534
    %v8559 = vsub.f32 %v8511, %v8536
    %v8560 = vsub.f32 %v8512, %v8538
    %v8561 = vsub.f32 %v8513, %v8540
    %v8562 = vsub.f32 %v8514, %v8542
    %v8563 = vsub.f32 %v8515, %v8544
    %v8564 = vsub.f32 %v8516, %v8546
    %v8565 = vsub.f32 %v8517, %v8548
    %v8566 = vsub.f32 %v8518, %v8550
    %v8567 = vmul.f32 %v8551, 1.442695
    %v8568 = vpow.pop %v8567
    %v8569 = vmul.f32 %v8552, 1.442695
    %v8570 = vpow.pop %v8569
    %v8571 = vmul.f32 %v8553, 1.442695
    %v8572 = vpow.pop %v8571
    %v8573 = vmul.f32 %v8554, 1.442695
    %v8574 = vpow.pop %v8573
    %v8575 = vmul.f32 %v8555, 1.442695
    %v8576 = vpow.pop %v8575
    %v8577 = vmul.f32 %v8556, 1.442695
    %v8578 = vpow.pop %v8577
    %v8579 = vmul.f32 %v8557, 1.442695
    %v8580 = vpow.pop %v8579
    %v8581 = vmul.f32 %v8558, 1.442695
    %v8582 = vpow.pop %v8581
    %v8583 = vmul.f32 %v8559, 1.442695
    %v8584 = vpow.pop %v8583
    %v8585 = vmul.f32 %v8560, 1.442695
    %v8586 = vpow.pop %v8585
    %v8587 = vmul.f32 %v8561, 1.442695
    %v8588 = vpow.pop %v8587
    %v8589 = vmul.f32 %v8562, 1.442695
    %v8590 = vpow.pop %v8589
    %v8591 = vmul.f32 %v8563, 1.442695
    %v8592 = vpow.pop %v8591
    %v8593 = vmul.f32 %v8564, 1.442695
    %v8594 = vpow.pop %v8593
    %v8595 = vmul.f32 %v8565, 1.442695
    %v8596 = vpow.pop %v8595
    %v8597 = vmul.f32 %v8566, 1.442695
    %v8598 = vpow.pop %v8597
    %v8599 = vmul.f32 %v8198, %v8568
    %v8600 = vmul.f32 %v8199, %v8570
    %v8601 = vmul.f32 %v8200, %v8572
    %v8602 = vmul.f32 %v8201, %v8574
    %v8603 = vmul.f32 %v8202, %v8576
    %v8604 = vmul.f32 %v8203, %v8578
    %v8605 = vmul.f32 %v8204, %v8580
    %v8606 = vmul.f32 %v8205, %v8582
    %v8607 = vmul.f32 %v8206, %v8584
    %v8608 = vmul.f32 %v8207, %v8586
    %v8609 = vmul.f32 %v8208, %v8588
    %v8610 = vmul.f32 %v8209, %v8590
    %v8611 = vmul.f32 %v8210, %v8592
    %v8612 = vmul.f32 %v8211, %v8594
    %v8613 = vmul.f32 %v8212, %v8596
    %v8614 = vmul.f32 %v8213, %v8598
    %8615 = vrot.lane.b32.xlu0 %v8037, 112
    %v8616 = vpop.permute.xlu0 %8615
    %8617 = vrot.lane.b32.xlu0 %v8040, 112
    %v8618 = vpop.permute.xlu0 %8617
    %8619 = vrot.lane.b32.xlu0 %v8043, 112
    %v8620 = vpop.permute.xlu0 %8619
    %8621 = vrot.lane.b32.xlu0 %v8046, 112
    %v8622 = vpop.permute.xlu0 %8621
    %8623 = vrot.lane.b32.xlu0 %v8049, 112
    %v8624 = vpop.permute.xlu0 %8623
    %8625 = vrot.lane.b32.xlu0 %v8052, 112
    %v8626 = vpop.permute.xlu0 %8625
    %8627 = vrot.lane.b32.xlu0 %v8055, 112
    %v8628 = vpop.permute.xlu0 %8627
    %8629 = vrot.lane.b32.xlu0 %v8058, 112
    %v8630 = vpop.permute.xlu0 %8629
    %8631 = vrot.lane.b32.xlu0 %v8061, 112
    %v8632 = vpop.permute.xlu0 %8631
    %8633 = vrot.lane.b32.xlu0 %v8064, 112
    %v8634 = vpop.permute.xlu0 %8633
    %8635 = vrot.lane.b32.xlu0 %v8067, 112
    %v8636 = vpop.permute.xlu0 %8635
    %8637 = vrot.lane.b32.xlu0 %v8070, 112
    %v8638 = vpop.permute.xlu0 %8637
    %8639 = vrot.lane.b32.xlu0 %v8073, 112
    %v8640 = vpop.permute.xlu0 %8639
    %8641 = vrot.lane.b32.xlu0 %v8076, 112
    %v8642 = vpop.permute.xlu0 %8641
    %8643 = vrot.lane.b32.xlu0 %v8079, 112
    %v8644 = vpop.permute.xlu0 %8643
    %8645 = vrot.lane.b32.xlu0 %v8082, 112
    %v8646 = vpop.permute.xlu0 %8645
    %v8663 = vsel %vm2102, %v8616, 1.0
    %v8664 = vsel %vm2102, %v8618, 1.0
    %v8665 = vsel %vm2102, %v8620, 1.0
    %v8666 = vsel %vm2102, %v8622, 1.0
    %v8667 = vsel %vm2102, %v8624, 1.0
    %v8668 = vsel %vm2102, %v8626, 1.0
    %v8669 = vsel %vm2102, %v8628, 1.0
    %v8670 = vsel %vm2102, %v8630, 1.0
    %v8671 = vsel %vm2102, %v8632, 1.0
    %v8672 = vsel %vm2102, %v8634, 1.0
    %v8673 = vsel %vm2102, %v8636, 1.0
    %v8674 = vsel %vm2102, %v8638, 1.0
    %v8675 = vsel %vm2102, %v8640, 1.0
    %v8676 = vsel %vm2102, %v8642, 1.0
    %v8677 = vsel %vm2102, %v8644, 1.0
    %v8678 = vsel %vm2102, %v8646, 1.0
    %8679 = vmatpush.msra.mxu0 %v8678
    %8680 = vmatpush.msra.mxu0 %v8677
    %8681 = vmatpush.msra.mxu0 %v8676
    %8682 = vmatpush.msra.mxu0 %v8675
    %8683 = vmatpush.msra.mxu0 %v8674
    %8684 = vmatpush.msra.mxu0 %v8673
    %8685 = vmatpush.msra.mxu0 %v8672
    %8686 = vmatpush.msra.mxu0 %v8671
    %8687 = vmatpush.msra.mxu0 %v8670
    %8688 = vmatpush.msra.mxu0 %v8669
    %8689 = vmatpush.msra.mxu0 %v8668
    %8690 = vmatpush.msra.mxu0 %v8667
    %8691 = vmatpush.msra.mxu0 %v8666
    %8692 = vmatpush.msra.mxu0 %v8665
    %8693 = vmatpush.msra.mxu0 %v8664
    %8694 = vmatpush.msra.mxu0 %v8663
    %8695 = vmatmul.f32.gmra.mxu0 %v8599
    %v8696 = vpop.f32.mrf.mxu0
    %v8697 = vadd.f32 0.0, %v8696
    %8698 = vmatmul.f32.gmra.mxu0 %v8600
    %v8699 = vpop.f32.mrf.mxu0
    %v8700 = vadd.f32 0.0, %v8699
    %8701 = vmatmul.f32.gmra.mxu0 %v8601
    %v8702 = vpop.f32.mrf.mxu0
    %v8703 = vadd.f32 0.0, %v8702
    %8704 = vmatmul.f32.gmra.mxu0 %v8602
    %v8705 = vpop.f32.mrf.mxu0
    %v8706 = vadd.f32 0.0, %v8705
    %8707 = vmatmul.f32.gmra.mxu0 %v8603
    %v8708 = vpop.f32.mrf.mxu0
    %v8709 = vadd.f32 0.0, %v8708
    %8710 = vmatmul.f32.gmra.mxu0 %v8604
    %v8711 = vpop.f32.mrf.mxu0
    %v8712 = vadd.f32 0.0, %v8711
    %8713 = vmatmul.f32.gmra.mxu0 %v8605
    %v8714 = vpop.f32.mrf.mxu0
    %v8715 = vadd.f32 0.0, %v8714
    %8716 = vmatmul.f32.gmra.mxu0 %v8606
    %v8717 = vpop.f32.mrf.mxu0
    %v8718 = vadd.f32 0.0, %v8717
    %8719 = vmatmul.f32.gmra.mxu0 %v8607
    %v8720 = vpop.f32.mrf.mxu0
    %v8721 = vadd.f32 0.0, %v8720
    %8722 = vmatmul.f32.gmra.mxu0 %v8608
    %v8723 = vpop.f32.mrf.mxu0
    %v8724 = vadd.f32 0.0, %v8723
    %8725 = vmatmul.f32.gmra.mxu0 %v8609
    %v8726 = vpop.f32.mrf.mxu0
    %v8727 = vadd.f32 0.0, %v8726
    %8728 = vmatmul.f32.gmra.mxu0 %v8610
    %v8729 = vpop.f32.mrf.mxu0
    %v8730 = vadd.f32 0.0, %v8729
    %8731 = vmatmul.f32.gmra.mxu0 %v8611
    %v8732 = vpop.f32.mrf.mxu0
    %v8733 = vadd.f32 0.0, %v8732
    %8734 = vmatmul.f32.gmra.mxu0 %v8612
    %v8735 = vpop.f32.mrf.mxu0
    %v8736 = vadd.f32 0.0, %v8735
    %8737 = vmatmul.f32.gmra.mxu0 %v8613
    %v8738 = vpop.f32.mrf.mxu0
    %v8739 = vadd.f32 0.0, %v8738
    %8740 = vmatmul.f32.gmra.mxu0 %v8614
    %v8741 = vpop.f32.mrf.mxu0
    %v8742 = vadd.f32 0.0, %v8741
    %8743 = vdwg.mxu0
    %v8744 = vmax.f32 %v8697, 1e-12
    %v8745 = vmax.f32 %v8700, 1e-12
    %v8746 = vmax.f32 %v8703, 1e-12
    %v8747 = vmax.f32 %v8706, 1e-12
    %v8748 = vmax.f32 %v8709, 1e-12
    %v8749 = vmax.f32 %v8712, 1e-12
    %v8750 = vmax.f32 %v8715, 1e-12
    %v8751 = vmax.f32 %v8718, 1e-12
    %v8752 = vmax.f32 %v8721, 1e-12
    %v8753 = vmax.f32 %v8724, 1e-12
    %v8754 = vmax.f32 %v8727, 1e-12
    %v8755 = vmax.f32 %v8730, 1e-12
    %v8756 = vmax.f32 %v8733, 1e-12
    %v8757 = vmax.f32 %v8736, 1e-12
    %v8758 = vmax.f32 %v8739, 1e-12
    %v8759 = vmax.f32 %v8742, 1e-12
    %8776 = vrot.lane.b32.xlu0 %v8744, 127
    %v8777 = vpop.permute.xlu0 %8776
    %8778 = vrot.lane.b32.xlu0 %v8745, 127
    %v8779 = vpop.permute.xlu0 %8778
    %8780 = vrot.lane.b32.xlu0 %v8746, 127
    %v8781 = vpop.permute.xlu0 %8780
    %8782 = vrot.lane.b32.xlu0 %v8747, 127
    %v8783 = vpop.permute.xlu0 %8782
    %8784 = vrot.lane.b32.xlu0 %v8748, 127
    %v8785 = vpop.permute.xlu0 %8784
    %8786 = vrot.lane.b32.xlu0 %v8749, 127
    %v8787 = vpop.permute.xlu0 %8786
    %8788 = vrot.lane.b32.xlu0 %v8750, 127
    %v8789 = vpop.permute.xlu0 %8788
    %8790 = vrot.lane.b32.xlu0 %v8751, 127
    %v8791 = vpop.permute.xlu0 %8790
    %8792 = vrot.lane.b32.xlu0 %v8752, 127
    %v8793 = vpop.permute.xlu0 %8792
    %8794 = vrot.lane.b32.xlu0 %v8753, 127
    %v8795 = vpop.permute.xlu0 %8794
    %8796 = vrot.lane.b32.xlu0 %v8754, 127
    %v8797 = vpop.permute.xlu0 %8796
    %8798 = vrot.lane.b32.xlu0 %v8755, 127
    %v8799 = vpop.permute.xlu0 %8798
    %8800 = vrot.lane.b32.xlu0 %v8756, 127
    %v8801 = vpop.permute.xlu0 %8800
    %8802 = vrot.lane.b32.xlu0 %v8757, 127
    %v8803 = vpop.permute.xlu0 %8802
    %8804 = vrot.lane.b32.xlu0 %v8758, 127
    %v8805 = vpop.permute.xlu0 %8804
    %8806 = vrot.lane.b32.xlu0 %v8759, 127
    %v8807 = vpop.permute.xlu0 %8806
    %v8824 = vrcp.pop %v8777
    %v8825 = vmul.f32 %v8777, %v8824
    %v8826 = vsub.f32 1.0, %v8825
    %v8827 = vmul.f32 %v8824, %v8826
    %v8828 = vadd.f32 %v8824, %v8827
    %vm8829 = vweird.f32 %v8777
    %vm8830 = vweird.f32 %v8824
    %vm8831 = vmor %vm8829, %vm8830
    %v8832 = vsel %vm8831, %v8824, %v8828
    %v8833 = vand.u32 2147483647, %v8777
    %vm8834 = vcmp.eq.f32.partialorder %v8833, 8.507059e+37
    %v8835 = vand.u32 %v8777, 2147483648
    %v8836 = vor.u32 1.1754944e-38, %v8835
    %v8837 = vsel %vm8834, %v8836, %v8832
    %v8838 = vmul.f32 %v8697, %v8837
    %v8839 = vrcp.pop %v8779
    %v8840 = vmul.f32 %v8779, %v8839
    %v8841 = vsub.f32 1.0, %v8840
    %v8842 = vmul.f32 %v8839, %v8841
    %v8843 = vadd.f32 %v8839, %v8842
    %vm8844 = vweird.f32 %v8779
    %vm8845 = vweird.f32 %v8839
    %vm8846 = vmor %vm8844, %vm8845
    %v8847 = vsel %vm8846, %v8839, %v8843
    %v8848 = vand.u32 2147483647, %v8779
    %vm8849 = vcmp.eq.f32.partialorder %v8848, 8.507059e+37
    %v8850 = vand.u32 %v8779, 2147483648
    %v8851 = vor.u32 1.1754944e-38, %v8850
    %v8852 = vsel %vm8849, %v8851, %v8847
    %v8853 = vmul.f32 %v8700, %v8852
    %v8854 = vrcp.pop %v8781
    %v8855 = vmul.f32 %v8781, %v8854
    %v8856 = vsub.f32 1.0, %v8855
    %v8857 = vmul.f32 %v8854, %v8856
    %v8858 = vadd.f32 %v8854, %v8857
    %vm8859 = vweird.f32 %v8781
    %vm8860 = vweird.f32 %v8854
    %vm8861 = vmor %vm8859, %vm8860
    %v8862 = vsel %vm8861, %v8854, %v8858
    %v8863 = vand.u32 2147483647, %v8781
    %vm8864 = vcmp.eq.f32.partialorder %v8863, 8.507059e+37
    %v8865 = vand.u32 %v8781, 2147483648
    %v8866 = vor.u32 1.1754944e-38, %v8865
    %v8867 = vsel %vm8864, %v8866, %v8862
    %v8868 = vmul.f32 %v8703, %v8867
    %v8869 = vrcp.pop %v8783
    %v8870 = vmul.f32 %v8783, %v8869
    %v8871 = vsub.f32 1.0, %v8870
    %v8872 = vmul.f32 %v8869, %v8871
    %v8873 = vadd.f32 %v8869, %v8872
    %vm8874 = vweird.f32 %v8783
    %vm8875 = vweird.f32 %v8869
    %vm8876 = vmor %vm8874, %vm8875
    %v8877 = vsel %vm8876, %v8869, %v8873
    %v8878 = vand.u32 2147483647, %v8783
    %vm8879 = vcmp.eq.f32.partialorder %v8878, 8.507059e+37
    %v8880 = vand.u32 %v8783, 2147483648
    %v8881 = vor.u32 1.1754944e-38, %v8880
    %v8882 = vsel %vm8879, %v8881, %v8877
    %v8883 = vmul.f32 %v8706, %v8882
    %v8884 = vrcp.pop %v8785
    %v8885 = vmul.f32 %v8785, %v8884
    %v8886 = vsub.f32 1.0, %v8885
    %v8887 = vmul.f32 %v8884, %v8886
    %v8888 = vadd.f32 %v8884, %v8887
    %vm8889 = vweird.f32 %v8785
    %vm8890 = vweird.f32 %v8884
    %vm8891 = vmor %vm8889, %vm8890
    %v8892 = vsel %vm8891, %v8884, %v8888
    %v8893 = vand.u32 2147483647, %v8785
    %vm8894 = vcmp.eq.f32.partialorder %v8893, 8.507059e+37
    %v8895 = vand.u32 %v8785, 2147483648
    %v8896 = vor.u32 1.1754944e-38, %v8895
    %v8897 = vsel %vm8894, %v8896, %v8892
    %v8898 = vmul.f32 %v8709, %v8897
    %v8899 = vrcp.pop %v8787
    %v8900 = vmul.f32 %v8787, %v8899
    %v8901 = vsub.f32 1.0, %v8900
    %v8902 = vmul.f32 %v8899, %v8901
    %v8903 = vadd.f32 %v8899, %v8902
    %vm8904 = vweird.f32 %v8787
    %vm8905 = vweird.f32 %v8899
    %vm8906 = vmor %vm8904, %vm8905
    %v8907 = vsel %vm8906, %v8899, %v8903
    %v8908 = vand.u32 2147483647, %v8787
    %vm8909 = vcmp.eq.f32.partialorder %v8908, 8.507059e+37
    %v8910 = vand.u32 %v8787, 2147483648
    %v8911 = vor.u32 1.1754944e-38, %v8910
    %v8912 = vsel %vm8909, %v8911, %v8907
    %v8913 = vmul.f32 %v8712, %v8912
    %v8914 = vrcp.pop %v8789
    %v8915 = vmul.f32 %v8789, %v8914
    %v8916 = vsub.f32 1.0, %v8915
    %v8917 = vmul.f32 %v8914, %v8916
    %v8918 = vadd.f32 %v8914, %v8917
    %vm8919 = vweird.f32 %v8789
    %vm8920 = vweird.f32 %v8914
    %vm8921 = vmor %vm8919, %vm8920
    %v8922 = vsel %vm8921, %v8914, %v8918
    %v8923 = vand.u32 2147483647, %v8789
    %vm8924 = vcmp.eq.f32.partialorder %v8923, 8.507059e+37
    %v8925 = vand.u32 %v8789, 2147483648
    %v8926 = vor.u32 1.1754944e-38, %v8925
    %v8927 = vsel %vm8924, %v8926, %v8922
    %v8928 = vmul.f32 %v8715, %v8927
    %v8929 = vrcp.pop %v8791
    %v8930 = vmul.f32 %v8791, %v8929
    %v8931 = vsub.f32 1.0, %v8930
    %v8932 = vmul.f32 %v8929, %v8931
    %v8933 = vadd.f32 %v8929, %v8932
    %vm8934 = vweird.f32 %v8791
    %vm8935 = vweird.f32 %v8929
    %vm8936 = vmor %vm8934, %vm8935
    %v8937 = vsel %vm8936, %v8929, %v8933
    %v8938 = vand.u32 2147483647, %v8791
    %vm8939 = vcmp.eq.f32.partialorder %v8938, 8.507059e+37
    %v8940 = vand.u32 %v8791, 2147483648
    %v8941 = vor.u32 1.1754944e-38, %v8940
    %v8942 = vsel %vm8939, %v8941, %v8937
    %v8943 = vmul.f32 %v8718, %v8942
    %v8944 = vrcp.pop %v8793
    %v8945 = vmul.f32 %v8793, %v8944
    %v8946 = vsub.f32 1.0, %v8945
    %v8947 = vmul.f32 %v8944, %v8946
    %v8948 = vadd.f32 %v8944, %v8947
    %vm8949 = vweird.f32 %v8793
    %vm8950 = vweird.f32 %v8944
    %vm8951 = vmor %vm8949, %vm8950
    %v8952 = vsel %vm8951, %v8944, %v8948
    %v8953 = vand.u32 2147483647, %v8793
    %vm8954 = vcmp.eq.f32.partialorder %v8953, 8.507059e+37
    %v8955 = vand.u32 %v8793, 2147483648
    %v8956 = vor.u32 1.1754944e-38, %v8955
    %v8957 = vsel %vm8954, %v8956, %v8952
    %v8958 = vmul.f32 %v8721, %v8957
    %v8959 = vrcp.pop %v8795
    %v8960 = vmul.f32 %v8795, %v8959
    %v8961 = vsub.f32 1.0, %v8960
    %v8962 = vmul.f32 %v8959, %v8961
    %v8963 = vadd.f32 %v8959, %v8962
    %vm8964 = vweird.f32 %v8795
    %vm8965 = vweird.f32 %v8959
    %vm8966 = vmor %vm8964, %vm8965
    %v8967 = vsel %vm8966, %v8959, %v8963
    %v8968 = vand.u32 2147483647, %v8795
    %vm8969 = vcmp.eq.f32.partialorder %v8968, 8.507059e+37
    %v8970 = vand.u32 %v8795, 2147483648
    %v8971 = vor.u32 1.1754944e-38, %v8970
    %v8972 = vsel %vm8969, %v8971, %v8967
    %v8973 = vmul.f32 %v8724, %v8972
    %v8974 = vrcp.pop %v8797
    %v8975 = vmul.f32 %v8797, %v8974
    %v8976 = vsub.f32 1.0, %v8975
    %v8977 = vmul.f32 %v8974, %v8976
    %v8978 = vadd.f32 %v8974, %v8977
    %vm8979 = vweird.f32 %v8797
    %vm8980 = vweird.f32 %v8974
    %vm8981 = vmor %vm8979, %vm8980
    %v8982 = vsel %vm8981, %v8974, %v8978
    %v8983 = vand.u32 2147483647, %v8797
    %vm8984 = vcmp.eq.f32.partialorder %v8983, 8.507059e+37
    %v8985 = vand.u32 %v8797, 2147483648
    %v8986 = vor.u32 1.1754944e-38, %v8985
    %v8987 = vsel %vm8984, %v8986, %v8982
    %v8988 = vmul.f32 %v8727, %v8987
    %v8989 = vrcp.pop %v8799
    %v8990 = vmul.f32 %v8799, %v8989
    %v8991 = vsub.f32 1.0, %v8990
    %v8992 = vmul.f32 %v8989, %v8991
    %v8993 = vadd.f32 %v8989, %v8992
    %vm8994 = vweird.f32 %v8799
    %vm8995 = vweird.f32 %v8989
    %vm8996 = vmor %vm8994, %vm8995
    %v8997 = vsel %vm8996, %v8989, %v8993
    %v8998 = vand.u32 2147483647, %v8799
    %vm8999 = vcmp.eq.f32.partialorder %v8998, 8.507059e+37
    %v9000 = vand.u32 %v8799, 2147483648
    %v9001 = vor.u32 1.1754944e-38, %v9000
    %v9002 = vsel %vm8999, %v9001, %v8997
    %v9003 = vmul.f32 %v8730, %v9002
    %v9004 = vrcp.pop %v8801
    %v9005 = vmul.f32 %v8801, %v9004
    %v9006 = vsub.f32 1.0, %v9005
    %v9007 = vmul.f32 %v9004, %v9006
    %v9008 = vadd.f32 %v9004, %v9007
    %vm9009 = vweird.f32 %v8801
    %vm9010 = vweird.f32 %v9004
    %vm9011 = vmor %vm9009, %vm9010
    %v9012 = vsel %vm9011, %v9004, %v9008
    %v9013 = vand.u32 2147483647, %v8801
    %vm9014 = vcmp.eq.f32.partialorder %v9013, 8.507059e+37
    %v9015 = vand.u32 %v8801, 2147483648
    %v9016 = vor.u32 1.1754944e-38, %v9015
    %v9017 = vsel %vm9014, %v9016, %v9012
    %v9018 = vmul.f32 %v8733, %v9017
    %v9019 = vrcp.pop %v8803
    %v9020 = vmul.f32 %v8803, %v9019
    %v9021 = vsub.f32 1.0, %v9020
    %v9022 = vmul.f32 %v9019, %v9021
    %v9023 = vadd.f32 %v9019, %v9022
    %vm9024 = vweird.f32 %v8803
    %vm9025 = vweird.f32 %v9019
    %vm9026 = vmor %vm9024, %vm9025
    %v9027 = vsel %vm9026, %v9019, %v9023
    %v9028 = vand.u32 2147483647, %v8803
    %vm9029 = vcmp.eq.f32.partialorder %v9028, 8.507059e+37
    %v9030 = vand.u32 %v8803, 2147483648
    %v9031 = vor.u32 1.1754944e-38, %v9030
    %v9032 = vsel %vm9029, %v9031, %v9027
    %v9033 = vmul.f32 %v8736, %v9032
    %v9034 = vrcp.pop %v8805
    %v9035 = vmul.f32 %v8805, %v9034
    %v9036 = vsub.f32 1.0, %v9035
    %v9037 = vmul.f32 %v9034, %v9036
    %v9038 = vadd.f32 %v9034, %v9037
    %vm9039 = vweird.f32 %v8805
    %vm9040 = vweird.f32 %v9034
    %vm9041 = vmor %vm9039, %vm9040
    %v9042 = vsel %vm9041, %v9034, %v9038
    %v9043 = vand.u32 2147483647, %v8805
    %vm9044 = vcmp.eq.f32.partialorder %v9043, 8.507059e+37
    %v9045 = vand.u32 %v8805, 2147483648
    %v9046 = vor.u32 1.1754944e-38, %v9045
    %v9047 = vsel %vm9044, %v9046, %v9042
    %v9048 = vmul.f32 %v8739, %v9047
    %v9049 = vrcp.pop %v8807
    %v9050 = vmul.f32 %v8807, %v9049
    %v9051 = vsub.f32 1.0, %v9050
    %v9052 = vmul.f32 %v9049, %v9051
    %v9053 = vadd.f32 %v9049, %v9052
    %vm9054 = vweird.f32 %v8807
    %vm9055 = vweird.f32 %v9049
    %vm9056 = vmor %vm9054, %vm9055
    %v9057 = vsel %vm9056, %v9049, %v9053
    %v9058 = vand.u32 2147483647, %v8807
    %vm9059 = vcmp.eq.f32.partialorder %v9058, 8.507059e+37
    %v9060 = vand.u32 %v8807, 2147483648
    %v9061 = vor.u32 1.1754944e-38, %v9060
    %v9062 = vsel %vm9059, %v9061, %v9057
    %v9063 = vmul.f32 %v8742, %v9062
    %v9064 = vperm.slane %v8084, 0
    %v9065 = vadd.f32 %v8838, %v9064
    %v9066 = vadd.f32 %v8853, %v9064
    %v9067 = vadd.f32 %v8868, %v9064
    %v9068 = vadd.f32 %v8883, %v9064
    %v9069 = vadd.f32 %v8898, %v9064
    %v9070 = vadd.f32 %v8913, %v9064
    %v9071 = vadd.f32 %v8928, %v9064
    %v9072 = vadd.f32 %v8943, %v9064
    %v9073 = vadd.f32 %v8958, %v9064
    %v9074 = vadd.f32 %v8973, %v9064
    %v9075 = vadd.f32 %v8988, %v9064
    %v9076 = vadd.f32 %v9003, %v9064
    %v9077 = vadd.f32 %v9018, %v9064
    %v9078 = vadd.f32 %v9033, %v9064
    %v9079 = vadd.f32 %v9048, %v9064
    %v9080 = vadd.f32 %v9063, %v9064
    %v9081 = vadd.f32 %v6833, 1.0
    %v9082 = vmul.f32 %v9081, 0.5
    %v9083 = vfloor.f32 %v9082
    %v9085 = vsel %vm2102, %v9065, 0
    %v9088 = vsel %vm2102, %v9066, 0
    %v9091 = vsel %vm2102, %v9067, 0
    %v9094 = vsel %vm2102, %v9068, 0
    %v9097 = vsel %vm2102, %v9069, 0
    %v9100 = vsel %vm2102, %v9070, 0
    %v9103 = vsel %vm2102, %v9071, 0
    %v9106 = vsel %vm2102, %v9072, 0
    %v9109 = vsel %vm2102, %v9073, 0
    %v9112 = vsel %vm2102, %v9074, 0
    %v9115 = vsel %vm2102, %v9075, 0
    %v9118 = vsel %vm2102, %v9076, 0
    %v9121 = vsel %vm2102, %v9077, 0
    %v9124 = vsel %vm2102, %v9078, 0
    %v9127 = vsel %vm2102, %v9079, 0
    %v9130 = vsel %vm2102, %v9080, 0
    %9132 = vmatpush.xpose.msra.mxu0 %v9130
    %9133 = vmatpush.xpose.msra.mxu0 %v9127
    %9134 = vmatpush.xpose.msra.mxu0 %v9124
    %9135 = vmatpush.xpose.msra.mxu0 %v9121
    %9136 = vmatpush.xpose.msra.mxu0 %v9118
    %9137 = vmatpush.xpose.msra.mxu0 %v9115
    %9138 = vmatpush.xpose.msra.mxu0 %v9112
    %9139 = vmatpush.xpose.msra.mxu0 %v9109
    %9140 = vmatpush.xpose.msra.mxu0 %v9106
    %9141 = vmatpush.xpose.msra.mxu0 %v9103
    %9142 = vmatpush.xpose.msra.mxu0 %v9100
    %9143 = vmatpush.xpose.msra.mxu0 %v9097
    %9144 = vmatpush.xpose.msra.mxu0 %v9094
    %9145 = vmatpush.xpose.msra.mxu0 %v9091
    %9146 = vmatpush.xpose.msra.mxu0 %v9088
    %9147 = vmatpush.xpose.msra.mxu0 %v9085
    %9148 = vmatmul.f32.gmra.mxu0 %v2104
    %v9149 = vpop.f32.mrf.mxu0
    %v9150 = vadd.f32 0.0, %v9149
    %9151 = vmatmul.f32.gmra.mxu0 %v2104
    %v9152 = vpop.f32.mrf.mxu0
    %v9153 = vadd.f32 0.0, %v9152
    %9154 = vmatmul.f32.gmra.mxu0 %v2104
    %v9155 = vpop.f32.mrf.mxu0
    %v9156 = vadd.f32 0.0, %v9155
    %9157 = vmatmul.f32.gmra.mxu0 %v2104
    %v9158 = vpop.f32.mrf.mxu0
    %v9159 = vadd.f32 0.0, %v9158
    %9160 = vmatmul.f32.gmra.mxu0 %v2104
    %v9161 = vpop.f32.mrf.mxu0
    %v9162 = vadd.f32 0.0, %v9161
    %9163 = vmatmul.f32.gmra.mxu0 %v2104
    %v9164 = vpop.f32.mrf.mxu0
    %v9165 = vadd.f32 0.0, %v9164
    %9166 = vmatmul.f32.gmra.mxu0 %v2104
    %v9167 = vpop.f32.mrf.mxu0
    %v9168 = vadd.f32 0.0, %v9167
    %9169 = vmatmul.f32.gmra.mxu0 %v2104
    %v9170 = vpop.f32.mrf.mxu0
    %v9171 = vadd.f32 0.0, %v9170
    %9172 = vmatmul.f32.gmra.mxu0 %v2104
    %v9173 = vpop.f32.mrf.mxu0
    %v9174 = vadd.f32 0.0, %v9173
    %9175 = vmatmul.f32.gmra.mxu0 %v2104
    %v9176 = vpop.f32.mrf.mxu0
    %v9177 = vadd.f32 0.0, %v9176
    %9178 = vmatmul.f32.gmra.mxu0 %v2104
    %v9179 = vpop.f32.mrf.mxu0
    %v9180 = vadd.f32 0.0, %v9179
    %9181 = vmatmul.f32.gmra.mxu0 %v2104
    %v9182 = vpop.f32.mrf.mxu0
    %v9183 = vadd.f32 0.0, %v9182
    %9184 = vmatmul.f32.gmra.mxu0 %v2104
    %v9185 = vpop.f32.mrf.mxu0
    %v9186 = vadd.f32 0.0, %v9185
    %9187 = vmatmul.f32.gmra.mxu0 %v2104
    %v9188 = vpop.f32.mrf.mxu0
    %v9189 = vadd.f32 0.0, %v9188
    %9190 = vmatmul.f32.gmra.mxu0 %v2104
    %v9191 = vpop.f32.mrf.mxu0
    %v9192 = vadd.f32 0.0, %v9191
    %9193 = vmatmul.f32.gmra.mxu0 %v2104
    %v9194 = vpop.f32.mrf.mxu0
    %v9195 = vadd.f32 0.0, %v9194
    %9196 = vdwg.mxu0
    %9197 = vset.pattern.permute.xlu0 0
    %9198 = vperm.xlu0 %9197, %v9065
    %v9199 = vpop.permute.xlu0 %9198
    %9201 = vset.pattern.permute.xlu0 0
    %9202 = vperm.xlu0 %9201, %v9066
    %v9203 = vpop.permute.xlu0 %9202
    %9205 = vset.pattern.permute.xlu0 0
    %9206 = vperm.xlu0 %9205, %v9067
    %v9207 = vpop.permute.xlu0 %9206
    %9209 = vset.pattern.permute.xlu0 0
    %9210 = vperm.xlu0 %9209, %v9068
    %v9211 = vpop.permute.xlu0 %9210
    %9213 = vset.pattern.permute.xlu0 0
    %9214 = vperm.xlu0 %9213, %v9069
    %v9215 = vpop.permute.xlu0 %9214
    %9217 = vset.pattern.permute.xlu0 0
    %9218 = vperm.xlu0 %9217, %v9070
    %v9219 = vpop.permute.xlu0 %9218
    %9221 = vset.pattern.permute.xlu0 0
    %9222 = vperm.xlu0 %9221, %v9071
    %v9223 = vpop.permute.xlu0 %9222
    %9225 = vset.pattern.permute.xlu0 0
    %9226 = vperm.xlu0 %9225, %v9072
    %v9227 = vpop.permute.xlu0 %9226
    %9229 = vset.pattern.permute.xlu0 0
    %9230 = vperm.xlu0 %9229, %v9073
    %v9231 = vpop.permute.xlu0 %9230
    %9233 = vset.pattern.permute.xlu0 0
    %9234 = vperm.xlu0 %9233, %v9074
    %v9235 = vpop.permute.xlu0 %9234
    %9237 = vset.pattern.permute.xlu0 0
    %9238 = vperm.xlu0 %9237, %v9075
    %v9239 = vpop.permute.xlu0 %9238
    %9241 = vset.pattern.permute.xlu0 0
    %9242 = vperm.xlu0 %9241, %v9076
    %v9243 = vpop.permute.xlu0 %9242
    %9245 = vset.pattern.permute.xlu0 0
    %9246 = vperm.xlu0 %9245, %v9077
    %v9247 = vpop.permute.xlu0 %9246
    %9249 = vset.pattern.permute.xlu0 0
    %9250 = vperm.xlu0 %9249, %v9078
    %v9251 = vpop.permute.xlu0 %9250
    %9253 = vset.pattern.permute.xlu0 0
    %9254 = vperm.xlu0 %9253, %v9079
    %v9255 = vpop.permute.xlu0 %9254
    %9257 = vset.pattern.permute.xlu0 0
    %9258 = vperm.xlu0 %9257, %v9080
    %v9259 = vpop.permute.xlu0 %9258
    %vm9261 = vcmp.gt.f32.partialorder %v9150, %v9199
    %vm9262 = vcmp.gt.f32.partialorder %v9153, %v9203
    %vm9263 = vcmp.gt.f32.partialorder %v9156, %v9207
    %vm9264 = vcmp.gt.f32.partialorder %v9159, %v9211
    %vm9265 = vcmp.gt.f32.partialorder %v9162, %v9215
    %vm9266 = vcmp.gt.f32.partialorder %v9165, %v9219
    %vm9267 = vcmp.gt.f32.partialorder %v9168, %v9223
    %vm9268 = vcmp.gt.f32.partialorder %v9171, %v9227
    %vm9269 = vcmp.gt.f32.partialorder %v9174, %v9231
    %vm9270 = vcmp.gt.f32.partialorder %v9177, %v9235
    %vm9271 = vcmp.gt.f32.partialorder %v9180, %v9239
    %vm9272 = vcmp.gt.f32.partialorder %v9183, %v9243
    %vm9273 = vcmp.gt.f32.partialorder %v9186, %v9247
    %vm9274 = vcmp.gt.f32.partialorder %v9189, %v9251
    %vm9275 = vcmp.gt.f32.partialorder %v9192, %v9255
    %vm9276 = vcmp.gt.f32.partialorder %v9195, %v9259
    %vm9277 = vcmp.eq.f32.partialorder %v9150, %v9199
    %vm9278 = vcmp.eq.f32.partialorder %v9153, %v9203
    %vm9279 = vcmp.eq.f32.partialorder %v9156, %v9207
    %vm9280 = vcmp.eq.f32.partialorder %v9159, %v9211
    %vm9281 = vcmp.eq.f32.partialorder %v9162, %v9215
    %vm9282 = vcmp.eq.f32.partialorder %v9165, %v9219
    %vm9283 = vcmp.eq.f32.partialorder %v9168, %v9223
    %vm9284 = vcmp.eq.f32.partialorder %v9171, %v9227
    %vm9285 = vcmp.eq.f32.partialorder %v9174, %v9231
    %vm9286 = vcmp.eq.f32.partialorder %v9177, %v9235
    %vm9287 = vcmp.eq.f32.partialorder %v9180, %v9239
    %vm9288 = vcmp.eq.f32.partialorder %v9183, %v9243
    %vm9289 = vcmp.eq.f32.partialorder %v9186, %v9247
    %vm9290 = vcmp.eq.f32.partialorder %v9189, %v9251
    %vm9291 = vcmp.eq.f32.partialorder %v9192, %v9255
    %vm9292 = vcmp.eq.f32.partialorder %v9195, %v9259
    %vm9293 = vmand %vm9277, %vm3145
    %vm9294 = vmand %vm9278, %vm3146
    %vm9295 = vmand %vm9279, %vm3147
    %vm9296 = vmand %vm9280, %vm3148
    %vm9297 = vmand %vm9281, %vm3149
    %vm9298 = vmand %vm9282, %vm3150
    %vm9299 = vmand %vm9283, %vm3151
    %vm9300 = vmand %vm9284, %vm3152
    %vm9301 = vmand %vm9285, %vm3153
    %vm9302 = vmand %vm9286, %vm3154
    %vm9303 = vmand %vm9287, %vm3155
    %vm9304 = vmand %vm9288, %vm3156
    %vm9305 = vmand %vm9289, %vm3157
    %vm9306 = vmand %vm9290, %vm3158
    %vm9307 = vmand %vm9291, %vm3159
    %vm9308 = vmand %vm9292, %vm3160
    %vm9309 = vmor %vm9261, %vm9293
    %vm9310 = vmor %vm9262, %vm9294
    %vm9311 = vmor %vm9263, %vm9295
    %vm9312 = vmor %vm9264, %vm9296
    %vm9313 = vmor %vm9265, %vm9297
    %vm9314 = vmor %vm9266, %vm9298
    %vm9315 = vmor %vm9267, %vm9299
    %vm9316 = vmor %vm9268, %vm9300
    %vm9317 = vmor %vm9269, %vm9301
    %vm9318 = vmor %vm9270, %vm9302
    %vm9319 = vmor %vm9271, %vm9303
    %vm9320 = vmor %vm9272, %vm9304
    %vm9321 = vmor %vm9273, %vm9305
    %vm9322 = vmor %vm9274, %vm9306
    %vm9323 = vmor %vm9275, %vm9307
    %vm9324 = vmor %vm9276, %vm9308
    %v9325 = vsel %vm9309, 1, 0
    %v9326 = vsel %vm9310, 1, 0
    %v9327 = vsel %vm9311, 1, 0
    %v9328 = vsel %vm9312, 1, 0
    %v9329 = vsel %vm9313, 1, 0
    %v9330 = vsel %vm9314, 1, 0
    %v9331 = vsel %vm9315, 1, 0
    %v9332 = vsel %vm9316, 1, 0
    %v9333 = vsel %vm9317, 1, 0
    %v9334 = vsel %vm9318, 1, 0
    %v9335 = vsel %vm9319, 1, 0
    %v9336 = vsel %vm9320, 1, 0
    %v9337 = vsel %vm9321, 1, 0
    %v9338 = vsel %vm9322, 1, 0
    %v9339 = vsel %vm9323, 1, 0
    %v9340 = vsel %vm9324, 1, 0
    %v9341 = vcvt.s32.f32 %v9325
    %v9342 = vcvt.s32.f32 %v9326
    %v9343 = vcvt.s32.f32 %v9327
    %v9344 = vcvt.s32.f32 %v9328
    %v9345 = vcvt.s32.f32 %v9329
    %v9346 = vcvt.s32.f32 %v9330
    %v9347 = vcvt.s32.f32 %v9331
    %v9348 = vcvt.s32.f32 %v9332
    %v9349 = vcvt.s32.f32 %v9333
    %v9350 = vcvt.s32.f32 %v9334
    %v9351 = vcvt.s32.f32 %v9335
    %v9352 = vcvt.s32.f32 %v9336
    %v9353 = vcvt.s32.f32 %v9337
    %v9354 = vcvt.s32.f32 %v9338
    %v9355 = vcvt.s32.f32 %v9339
    %v9356 = vcvt.s32.f32 %v9340
    %9357 = vmatpush.msra.mxu0 %v6426
    %9358 = vmatpush.msra.mxu0 %v6425
    %9359 = vmatpush.msra.mxu0 %v6424
    %9360 = vmatpush.msra.mxu0 %v6423
    %9361 = vmatpush.msra.mxu0 %v6422
    %9362 = vmatpush.msra.mxu0 %v6421
    %9363 = vmatpush.msra.mxu0 %v6420
    %9364 = vmatpush.msra.mxu0 %v6419
    %9365 = vmatpush.msra.mxu0 %v6418
    %9366 = vmatpush.msra.mxu0 %v6417
    %9367 = vmatpush.msra.mxu0 %v6416
    %9368 = vmatpush.msra.mxu0 %v6415
    %9369 = vmatpush.msra.mxu0 %v6414
    %9370 = vmatpush.msra.mxu0 %v6413
    %9371 = vmatpush.msra.mxu0 %v6412
    %9372 = vmatpush.msra.mxu0 %v6411
    %9373 = vmatmul.f32.gmra.mxu0 %v9341
    %v9374 = vpop.f32.mrf.mxu0
    %v9375 = vadd.f32 0.0, %v9374
    %9376 = vmatmul.f32.gmra.mxu0 %v9342
    %v9377 = vpop.f32.mrf.mxu0
    %v9378 = vadd.f32 0.0, %v9377
    %9379 = vmatmul.f32.gmra.mxu0 %v9343
    %v9380 = vpop.f32.mrf.mxu0
    %v9381 = vadd.f32 0.0, %v9380
    %9382 = vmatmul.f32.gmra.mxu0 %v9344
    %v9383 = vpop.f32.mrf.mxu0
    %v9384 = vadd.f32 0.0, %v9383
    %9385 = vmatmul.f32.gmra.mxu0 %v9345
    %v9386 = vpop.f32.mrf.mxu0
    %v9387 = vadd.f32 0.0, %v9386
    %9388 = vmatmul.f32.gmra.mxu0 %v9346
    %v9389 = vpop.f32.mrf.mxu0
    %v9390 = vadd.f32 0.0, %v9389
    %9391 = vmatmul.f32.gmra.mxu0 %v9347
    %v9392 = vpop.f32.mrf.mxu0
    %v9393 = vadd.f32 0.0, %v9392
    %9394 = vmatmul.f32.gmra.mxu0 %v9348
    %v9395 = vpop.f32.mrf.mxu0
    %v9396 = vadd.f32 0.0, %v9395
    %9397 = vmatmul.f32.gmra.mxu0 %v9349
    %v9398 = vpop.f32.mrf.mxu0
    %v9399 = vadd.f32 0.0, %v9398
    %9400 = vmatmul.f32.gmra.mxu0 %v9350
    %v9401 = vpop.f32.mrf.mxu0
    %v9402 = vadd.f32 0.0, %v9401
    %9403 = vmatmul.f32.gmra.mxu0 %v9351
    %v9404 = vpop.f32.mrf.mxu0
    %v9405 = vadd.f32 0.0, %v9404
    %9406 = vmatmul.f32.gmra.mxu0 %v9352
    %v9407 = vpop.f32.mrf.mxu0
    %v9408 = vadd.f32 0.0, %v9407
    %9409 = vmatmul.f32.gmra.mxu0 %v9353
    %v9410 = vpop.f32.mrf.mxu0
    %v9411 = vadd.f32 0.0, %v9410
    %9412 = vmatmul.f32.gmra.mxu0 %v9354
    %v9413 = vpop.f32.mrf.mxu0
    %v9414 = vadd.f32 0.0, %v9413
    %9415 = vmatmul.f32.gmra.mxu0 %v9355
    %v9416 = vpop.f32.mrf.mxu0
    %v9417 = vadd.f32 0.0, %v9416
    %9418 = vmatmul.f32.gmra.mxu0 %v9356
    %v9419 = vpop.f32.mrf.mxu0
    %v9420 = vadd.f32 0.0, %v9419
    %9421 = vdwg.mxu0
    %vm9422 = vcmp.lt.f32.partialorder %v9375, %v9083
    %vm9423 = vcmp.lt.f32.partialorder %v9378, %v9083
    %vm9424 = vcmp.lt.f32.partialorder %v9381, %v9083
    %vm9425 = vcmp.lt.f32.partialorder %v9384, %v9083
    %vm9426 = vcmp.lt.f32.partialorder %v9387, %v9083
    %vm9427 = vcmp.lt.f32.partialorder %v9390, %v9083
    %vm9428 = vcmp.lt.f32.partialorder %v9393, %v9083
    %vm9429 = vcmp.lt.f32.partialorder %v9396, %v9083
    %vm9430 = vcmp.lt.f32.partialorder %v9399, %v9083
    %vm9431 = vcmp.lt.f32.partialorder %v9402, %v9083
    %vm9432 = vcmp.lt.f32.partialorder %v9405, %v9083
    %vm9433 = vcmp.lt.f32.partialorder %v9408, %v9083
    %vm9434 = vcmp.lt.f32.partialorder %v9411, %v9083
    %vm9435 = vcmp.lt.f32.partialorder %v9414, %v9083
    %vm9436 = vcmp.lt.f32.partialorder %v9417, %v9083
    %vm9437 = vcmp.lt.f32.partialorder %v9420, %v9083
    %v9438 = vsel %vm9422, 1, 0
    %v9439 = vsel %vm9423, 1, 0
    %v9440 = vsel %vm9424, 1, 0
    %v9441 = vsel %vm9425, 1, 0
    %v9442 = vsel %vm9426, 1, 0
    %v9443 = vsel %vm9427, 1, 0
    %v9444 = vsel %vm9428, 1, 0
    %v9445 = vsel %vm9429, 1, 0
    %v9446 = vsel %vm9430, 1, 0
    %v9447 = vsel %vm9431, 1, 0
    %v9448 = vsel %vm9432, 1, 0
    %v9449 = vsel %vm9433, 1, 0
    %v9450 = vsel %vm9434, 1, 0
    %v9451 = vsel %vm9435, 1, 0
    %v9452 = vsel %vm9436, 1, 0
    %v9453 = vsel %vm9437, 1, 0
    %v9454 = vcvt.s32.f32 %v9438
    %v9455 = vcvt.s32.f32 %v9439
    %v9456 = vcvt.s32.f32 %v9440
    %v9457 = vcvt.s32.f32 %v9441
    %v9458 = vcvt.s32.f32 %v9442
    %v9459 = vcvt.s32.f32 %v9443
    %v9460 = vcvt.s32.f32 %v9444
    %v9461 = vcvt.s32.f32 %v9445
    %v9462 = vcvt.s32.f32 %v9446
    %v9463 = vcvt.s32.f32 %v9447
    %v9464 = vcvt.s32.f32 %v9448
    %v9465 = vcvt.s32.f32 %v9449
    %v9466 = vcvt.s32.f32 %v9450
    %v9467 = vcvt.s32.f32 %v9451
    %v9468 = vcvt.s32.f32 %v9452
    %v9469 = vcvt.s32.f32 %v9453
    %v9470 = vmul.f32 %v6411, %v9454
    %v9471 = vmul.f32 %v6412, %v9455
    %v9472 = vmul.f32 %v6413, %v9456
    %v9473 = vmul.f32 %v6414, %v9457
    %v9474 = vmul.f32 %v6415, %v9458
    %v9475 = vmul.f32 %v6416, %v9459
    %v9476 = vmul.f32 %v6417, %v9460
    %v9477 = vmul.f32 %v6418, %v9461
    %v9478 = vmul.f32 %v6419, %v9462
    %v9479 = vmul.f32 %v6420, %v9463
    %v9480 = vmul.f32 %v6421, %v9464
    %v9481 = vmul.f32 %v6422, %v9465
    %v9482 = vmul.f32 %v6423, %v9466
    %v9483 = vmul.f32 %v6424, %v9467
    %v9484 = vmul.f32 %v6425, %v9468
    %v9485 = vmul.f32 %v6426, %v9469
    %v9486 = vtanh.pop %v9065
    %v9487 = vtanh.pop %v9066
    %v9488 = vtanh.pop %v9067
    %v9489 = vtanh.pop %v9068
    %v9490 = vtanh.pop %v9069
    %v9491 = vtanh.pop %v9070
    %v9492 = vtanh.pop %v9071
    %v9493 = vtanh.pop %v9072
    %v9494 = vtanh.pop %v9073
    %v9495 = vtanh.pop %v9074
    %v9496 = vtanh.pop %v9075
    %v9497 = vtanh.pop %v9076
    %v9498 = vtanh.pop %v9077
    %v9499 = vtanh.pop %v9078
    %v9500 = vtanh.pop %v9079
    %v9501 = vtanh.pop %v9080
    %9503 = vset.pattern.permute.xlu0 0
    %9504 = vperm.xlu0 %9503, %v9486
    %v9505 = vpop.permute.xlu0 %9504
    %9508 = vset.pattern.permute.xlu0 0
    %9509 = vperm.xlu0 %9508, %v9487
    %v9510 = vpop.permute.xlu0 %9509
    %9513 = vset.pattern.permute.xlu0 0
    %9514 = vperm.xlu0 %9513, %v9488
    %v9515 = vpop.permute.xlu0 %9514
    %9518 = vset.pattern.permute.xlu0 0
    %9519 = vperm.xlu0 %9518, %v9489
    %v9520 = vpop.permute.xlu0 %9519
    %9523 = vset.pattern.permute.xlu0 0
    %9524 = vperm.xlu0 %9523, %v9490
    %v9525 = vpop.permute.xlu0 %9524
    %9528 = vset.pattern.permute.xlu0 0
    %9529 = vperm.xlu0 %9528, %v9491
    %v9530 = vpop.permute.xlu0 %9529
    %9533 = vset.pattern.permute.xlu0 0
    %9534 = vperm.xlu0 %9533, %v9492
    %v9535 = vpop.permute.xlu0 %9534
    %9538 = vset.pattern.permute.xlu0 0
    %9539 = vperm.xlu0 %9538, %v9493
    %v9540 = vpop.permute.xlu0 %9539
    %9543 = vset.pattern.permute.xlu0 0
    %9544 = vperm.xlu0 %9543, %v9494
    %v9545 = vpop.permute.xlu0 %9544
    %9548 = vset.pattern.permute.xlu0 0
    %9549 = vperm.xlu0 %9548, %v9495
    %v9550 = vpop.permute.xlu0 %9549
    %9553 = vset.pattern.permute.xlu0 0
    %9554 = vperm.xlu0 %9553, %v9496
    %v9555 = vpop.permute.xlu0 %9554
    %9558 = vset.pattern.permute.xlu0 0
    %9559 = vperm.xlu0 %9558, %v9497
    %v9560 = vpop.permute.xlu0 %9559
    %9563 = vset.pattern.permute.xlu0 0
    %9564 = vperm.xlu0 %9563, %v9498
    %v9565 = vpop.permute.xlu0 %9564
    %9568 = vset.pattern.permute.xlu0 0
    %9569 = vperm.xlu0 %9568, %v9499
    %v9570 = vpop.permute.xlu0 %9569
    %9573 = vset.pattern.permute.xlu0 0
    %9574 = vperm.xlu0 %9573, %v9500
    %v9575 = vpop.permute.xlu0 %9574
    %9578 = vset.pattern.permute.xlu0 0
    %9579 = vperm.xlu0 %9578, %v9501
    %v9580 = vpop.permute.xlu0 %9579
    %v9582 = vmul.f32 %v8003, %v9505
    %v9583 = vmul.f32 %v8004, %v9510
    %v9584 = vmul.f32 %v8005, %v9515
    %v9585 = vmul.f32 %v8006, %v9520
    %v9586 = vmul.f32 %v8007, %v9525
    %v9587 = vmul.f32 %v8008, %v9530
    %v9588 = vmul.f32 %v8009, %v9535
    %v9589 = vmul.f32 %v8010, %v9540
    %v9590 = vmul.f32 %v8011, %v9545
    %v9591 = vmul.f32 %v8012, %v9550
    %v9592 = vmul.f32 %v8013, %v9555
    %v9593 = vmul.f32 %v8014, %v9560
    %v9594 = vmul.f32 %v8015, %v9565
    %v9595 = vmul.f32 %v8016, %v9570
    %v9596 = vmul.f32 %v8017, %v9575
    %v9597 = vmul.f32 %v8018, %v9580
    %9599 = vset.pattern.permute.xlu0 0
    %9600 = vperm.xlu0 %9599, %v9470
    %v9601 = vpop.permute.xlu0 %9600
    %9604 = vset.pattern.permute.xlu0 0
    %9605 = vperm.xlu0 %9604, %v9471
    %v9606 = vpop.permute.xlu0 %9605
    %9609 = vset.pattern.permute.xlu0 0
    %9610 = vperm.xlu0 %9609, %v9472
    %v9611 = vpop.permute.xlu0 %9610
    %9614 = vset.pattern.permute.xlu0 0
    %9615 = vperm.xlu0 %9614, %v9473
    %v9616 = vpop.permute.xlu0 %9615
    %9619 = vset.pattern.permute.xlu0 0
    %9620 = vperm.xlu0 %9619, %v9474
    %v9621 = vpop.permute.xlu0 %9620
    %9624 = vset.pattern.permute.xlu0 0
    %9625 = vperm.xlu0 %9624, %v9475
    %v9626 = vpop.permute.xlu0 %9625
    %9629 = vset.pattern.permute.xlu0 0
    %9630 = vperm.xlu0 %9629, %v9476
    %v9631 = vpop.permute.xlu0 %9630
    %9634 = vset.pattern.permute.xlu0 0
    %9635 = vperm.xlu0 %9634, %v9477
    %v9636 = vpop.permute.xlu0 %9635
    %9639 = vset.pattern.permute.xlu0 0
    %9640 = vperm.xlu0 %9639, %v9478
    %v9641 = vpop.permute.xlu0 %9640
    %9644 = vset.pattern.permute.xlu0 0
    %9645 = vperm.xlu0 %9644, %v9479
    %v9646 = vpop.permute.xlu0 %9645
    %9649 = vset.pattern.permute.xlu0 0
    %9650 = vperm.xlu0 %9649, %v9480
    %v9651 = vpop.permute.xlu0 %9650
    %9654 = vset.pattern.permute.xlu0 0
    %9655 = vperm.xlu0 %9654, %v9481
    %v9656 = vpop.permute.xlu0 %9655
    %9659 = vset.pattern.permute.xlu0 0
    %9660 = vperm.xlu0 %9659, %v9482
    %v9661 = vpop.permute.xlu0 %9660
    %9664 = vset.pattern.permute.xlu0 0
    %9665 = vperm.xlu0 %9664, %v9483
    %v9666 = vpop.permute.xlu0 %9665
    %9669 = vset.pattern.permute.xlu0 0
    %9670 = vperm.xlu0 %9669, %v9484
    %v9671 = vpop.permute.xlu0 %9670
    %9674 = vset.pattern.permute.xlu0 0
    %9675 = vperm.xlu0 %9674, %v9485
    %v9676 = vpop.permute.xlu0 %9675
    %v9678 = vmul.f32 %v9582, %v9601
    %v9679 = vmul.f32 %v9583, %v9606
    %v9680 = vmul.f32 %v9584, %v9611
    %v9681 = vmul.f32 %v9585, %v9616
    %v9682 = vmul.f32 %v9586, %v9621
    %v9683 = vmul.f32 %v9587, %v9626
    %v9684 = vmul.f32 %v9588, %v9631
    %v9685 = vmul.f32 %v9589, %v9636
    %v9686 = vmul.f32 %v9590, %v9641
    %v9687 = vmul.f32 %v9591, %v9646
    %v9688 = vmul.f32 %v9592, %v9651
    %v9689 = vmul.f32 %v9593, %v9656
    %v9690 = vmul.f32 %v9594, %v9661
    %v9691 = vmul.f32 %v9595, %v9666
    %v9692 = vmul.f32 %v9596, %v9671
    %v9693 = vmul.f32 %v9597, %v9676
    %v9694 = vsel %vm2102, %v9470, 0.0
    %v9695 = vsel %vm2102, %v9471, 0.0
    %v9696 = vadd.f32 %v9694, %v9695
    %v9697 = vsel %vm2102, %v9472, 0.0
    %v9698 = vadd.f32 %v9696, %v9697
    %v9699 = vsel %vm2102, %v9473, 0.0
    %v9700 = vadd.f32 %v9698, %v9699
    %v9701 = vsel %vm2102, %v9474, 0.0
    %v9702 = vadd.f32 %v9700, %v9701
    %v9703 = vsel %vm2102, %v9475, 0.0
    %v9704 = vadd.f32 %v9702, %v9703
    %v9705 = vsel %vm2102, %v9476, 0.0
    %v9706 = vadd.f32 %v9704, %v9705
    %v9707 = vsel %vm2102, %v9477, 0.0
    %v9708 = vadd.f32 %v9706, %v9707
    %v9709 = vsel %vm2102, %v9478, 0.0
    %v9710 = vadd.f32 %v9708, %v9709
    %v9711 = vsel %vm2102, %v9479, 0.0
    %v9712 = vadd.f32 %v9710, %v9711
    %v9713 = vsel %vm2102, %v9480, 0.0
    %v9714 = vadd.f32 %v9712, %v9713
    %v9715 = vsel %vm2102, %v9481, 0.0
    %v9716 = vadd.f32 %v9714, %v9715
    %v9717 = vsel %vm2102, %v9482, 0.0
    %v9718 = vadd.f32 %v9716, %v9717
    %v9719 = vsel %vm2102, %v9483, 0.0
    %v9720 = vadd.f32 %v9718, %v9719
    %v9721 = vsel %vm2102, %v9484, 0.0
    %v9722 = vadd.f32 %v9720, %v9721
    %v9723 = vsel %vm2102, %v9485, 0.0
    %v9724 = vadd.f32 %v9722, %v9723
    %v9725 = vrot.slane %v9724, 4
    %v9726 = vadd.f32 %v9724, %v9725
    %v9727 = vrot.slane %v9726, 2
    %v9728 = vadd.f32 %v9726, %v9727
    %v9729 = vrot.slane %v9728, 1
    %v9730 = vadd.f32 %v9728, %v9729
    %vm9731 = vcmp.gt.f32.partialorder %v9470, 0.0
    %vm9732 = vcmp.gt.f32.partialorder %v9471, 0.0
    %vm9733 = vcmp.gt.f32.partialorder %v9472, 0.0
    %vm9734 = vcmp.gt.f32.partialorder %v9473, 0.0
    %vm9735 = vcmp.gt.f32.partialorder %v9474, 0.0
    %vm9736 = vcmp.gt.f32.partialorder %v9475, 0.0
    %vm9737 = vcmp.gt.f32.partialorder %v9476, 0.0
    %vm9738 = vcmp.gt.f32.partialorder %v9477, 0.0
    %vm9739 = vcmp.gt.f32.partialorder %v9478, 0.0
    %vm9740 = vcmp.gt.f32.partialorder %v9479, 0.0
    %vm9741 = vcmp.gt.f32.partialorder %v9480, 0.0
    %vm9742 = vcmp.gt.f32.partialorder %v9481, 0.0
    %vm9743 = vcmp.gt.f32.partialorder %v9482, 0.0
    %vm9744 = vcmp.gt.f32.partialorder %v9483, 0.0
    %vm9745 = vcmp.gt.f32.partialorder %v9484, 0.0
    %vm9746 = vcmp.gt.f32.partialorder %v9485, 0.0
    %v9747 = vsel %vm9731, 1, 0
    %v9748 = vsel %vm9732, 1, 0
    %v9749 = vsel %vm9733, 1, 0
    %v9750 = vsel %vm9734, 1, 0
    %v9751 = vsel %vm9735, 1, 0
    %v9752 = vsel %vm9736, 1, 0
    %v9753 = vsel %vm9737, 1, 0
    %v9754 = vsel %vm9738, 1, 0
    %v9755 = vsel %vm9739, 1, 0
    %v9756 = vsel %vm9740, 1, 0
    %v9757 = vsel %vm9741, 1, 0
    %v9758 = vsel %vm9742, 1, 0
    %v9759 = vsel %vm9743, 1, 0
    %v9760 = vsel %vm9744, 1, 0
    %v9761 = vsel %vm9745, 1, 0
    %v9762 = vsel %vm9746, 1, 0
    %9763 = vset.pattern.permute.xlu0 0
    %9764 = vperm.xlu0 %9763, %v9747
    %v9765 = vpop.permute.xlu0 %9764
    %9766 = vset.pattern.permute.xlu0 0
    %9767 = vperm.xlu0 %9766, %v9748
    %v9768 = vpop.permute.xlu0 %9767
    %9769 = vset.pattern.permute.xlu0 0
    %9770 = vperm.xlu0 %9769, %v9749
    %v9771 = vpop.permute.xlu0 %9770
    %9772 = vset.pattern.permute.xlu0 0
    %9773 = vperm.xlu0 %9772, %v9750
    %v9774 = vpop.permute.xlu0 %9773
    %9775 = vset.pattern.permute.xlu0 0
    %9776 = vperm.xlu0 %9775, %v9751
    %v9777 = vpop.permute.xlu0 %9776
    %9778 = vset.pattern.permute.xlu0 0
    %9779 = vperm.xlu0 %9778, %v9752
    %v9780 = vpop.permute.xlu0 %9779
    %9781 = vset.pattern.permute.xlu0 0
    %9782 = vperm.xlu0 %9781, %v9753
    %v9783 = vpop.permute.xlu0 %9782
    %9784 = vset.pattern.permute.xlu0 0
    %9785 = vperm.xlu0 %9784, %v9754
    %v9786 = vpop.permute.xlu0 %9785
    %9787 = vset.pattern.permute.xlu0 0
    %9788 = vperm.xlu0 %9787, %v9755
    %v9789 = vpop.permute.xlu0 %9788
    %9790 = vset.pattern.permute.xlu0 0
    %9791 = vperm.xlu0 %9790, %v9756
    %v9792 = vpop.permute.xlu0 %9791
    %9793 = vset.pattern.permute.xlu0 0
    %9794 = vperm.xlu0 %9793, %v9757
    %v9795 = vpop.permute.xlu0 %9794
    %9796 = vset.pattern.permute.xlu0 0
    %9797 = vperm.xlu0 %9796, %v9758
    %v9798 = vpop.permute.xlu0 %9797
    %9799 = vset.pattern.permute.xlu0 0
    %9800 = vperm.xlu0 %9799, %v9759
    %v9801 = vpop.permute.xlu0 %9800
    %9802 = vset.pattern.permute.xlu0 0
    %9803 = vperm.xlu0 %9802, %v9760
    %v9804 = vpop.permute.xlu0 %9803
    %9805 = vset.pattern.permute.xlu0 0
    %9806 = vperm.xlu0 %9805, %v9761
    %v9807 = vpop.permute.xlu0 %9806
    %9808 = vset.pattern.permute.xlu0 0
    %9809 = vperm.xlu0 %9808, %v9762
    %v9810 = vpop.permute.xlu0 %9809
    %vm9811 = vcmp.eq.s32.totalorder %v9765, 1
    %vm9812 = vcmp.eq.s32.totalorder %v9768, 1
    %vm9813 = vcmp.eq.s32.totalorder %v9771, 1
    %vm9814 = vcmp.eq.s32.totalorder %v9774, 1
    %vm9815 = vcmp.eq.s32.totalorder %v9777, 1
    %vm9816 = vcmp.eq.s32.totalorder %v9780, 1
    %vm9817 = vcmp.eq.s32.totalorder %v9783, 1
    %vm9818 = vcmp.eq.s32.totalorder %v9786, 1
    %vm9819 = vcmp.eq.s32.totalorder %v9789, 1
    %vm9820 = vcmp.eq.s32.totalorder %v9792, 1
    %vm9821 = vcmp.eq.s32.totalorder %v9795, 1
    %vm9822 = vcmp.eq.s32.totalorder %v9798, 1
    %vm9823 = vcmp.eq.s32.totalorder %v9801, 1
    %vm9824 = vcmp.eq.s32.totalorder %v9804, 1
    %vm9825 = vcmp.eq.s32.totalorder %v9807, 1
    %vm9826 = vcmp.eq.s32.totalorder %v9810, 1
    %v9827 = vsel %vm9811, %v9678, -1e+30
    %v9828 = vsel %vm9812, %v9679, -1e+30
    %v9829 = vsel %vm9813, %v9680, -1e+30
    %v9830 = vsel %vm9814, %v9681, -1e+30
    %v9831 = vsel %vm9815, %v9682, -1e+30
    %v9832 = vsel %vm9816, %v9683, -1e+30
    %v9833 = vsel %vm9817, %v9684, -1e+30
    %v9834 = vsel %vm9818, %v9685, -1e+30
    %v9835 = vsel %vm9819, %v9686, -1e+30
    %v9836 = vsel %vm9820, %v9687, -1e+30
    %v9837 = vsel %vm9821, %v9688, -1e+30
    %v9838 = vsel %vm9822, %v9689, -1e+30
    %v9839 = vsel %vm9823, %v9690, -1e+30
    %v9840 = vsel %vm9824, %v9691, -1e+30
    %v9841 = vsel %vm9825, %v9692, -1e+30
    %v9842 = vsel %vm9826, %v9693, -1e+30
    %v9843 = vmax.f32 %v9827, %v9831
    %v9844 = vmax.f32 %v9828, %v9832
    %v9845 = vmax.f32 %v9829, %v9833
    %v9846 = vmax.f32 %v9830, %v9834
    %v9847 = vmax.f32 %v9843, %v9835
    %v9848 = vmax.f32 %v9844, %v9836
    %v9849 = vmax.f32 %v9845, %v9837
    %v9850 = vmax.f32 %v9846, %v9838
    %v9851 = vmax.f32 %v9847, %v9839
    %v9852 = vmax.f32 %v9848, %v9840
    %v9853 = vmax.f32 %v9849, %v9841
    %v9854 = vmax.f32 %v9850, %v9842
    %v9855 = vmax.f32 %v9851, %v9852
    %v9856 = vmax.f32 %v9853, %v9854
    %v9857 = vmax.f32 %v9855, %v9856
    %v9858 = vrot.slane %v9857, 4
    %v9859 = vmax.f32 %v9857, %v9858
    %v9860 = vrot.slane %v9859, 2
    %v9861 = vmax.f32 %v9859, %v9860
    %v9862 = vrot.slane %v9861, 1
    %v9863 = vmax.f32 %v9861, %v9862
    %vm9864 = vcmp.gt.f32.partialorder %v9730, 0.0
    %v9865 = vsel %vm9864, 1, 0
    %9866 = vset.pattern.permute.xlu0 0
    %9867 = vperm.xlu0 %9866, %v9865
    %v9868 = vpop.permute.xlu0 %9867
    %vm9869 = vcmp.eq.s32.totalorder %v9868, 1
    %v9870 = vsel %vm9869, %v9863, 0.0
    %v9871 = vadd.f32 %v9678, %v9679
    %v9872 = vadd.f32 %v9871, %v9680
    %v9873 = vadd.f32 %v9872, %v9681
    %v9874 = vadd.f32 %v9873, %v9682
    %v9875 = vadd.f32 %v9874, %v9683
    %v9876 = vadd.f32 %v9875, %v9684
    %v9877 = vadd.f32 %v9876, %v9685
    %v9878 = vadd.f32 %v9877, %v9686
    %v9879 = vadd.f32 %v9878, %v9687
    %v9880 = vadd.f32 %v9879, %v9688
    %v9881 = vadd.f32 %v9880, %v9689
    %v9882 = vadd.f32 %v9881, %v9690
    %v9883 = vadd.f32 %v9882, %v9691
    %v9884 = vadd.f32 %v9883, %v9692
    %v9885 = vadd.f32 %v9884, %v9693
    %v9886 = vrot.slane %v9885, 4
    %v9887 = vadd.f32 %v9885, %v9886
    %v9888 = vrot.slane %v9887, 2
    %v9889 = vadd.f32 %v9887, %v9888
    %v9890 = vrot.slane %v9889, 1
    %v9891 = vadd.f32 %v9889, %v9890
    %v9892 = vmax.f32 %v9730, 1.0
    %9894 = vset.pattern.permute.xlu0 0
    %9895 = vperm.xlu0 %9894, %v9892
    %v9896 = vpop.permute.xlu0 %9895
    %v9898 = vrcp.pop %v9896
    %v9899 = vmul.f32 %v9896, %v9898
    %v9900 = vsub.f32 1.0, %v9899
    %v9901 = vmul.f32 %v9898, %v9900
    %v9902 = vadd.f32 %v9898, %v9901
    %vm9903 = vweird.f32 %v9896
    %vm9904 = vweird.f32 %v9898
    %vm9905 = vmor %vm9903, %vm9904
    %v9906 = vsel %vm9905, %v9898, %v9902
    %v9907 = vand.u32 2147483647, %v9896
    %vm9908 = vcmp.eq.f32.partialorder %v9907, 8.507059e+37
    %v9909 = vand.u32 %v9896, 2147483648
    %v9910 = vor.u32 1.1754944e-38, %v9909
    %v9911 = vsel %vm9908, %v9910, %v9906
    %v9912 = vmul.f32 %v9891, %v9911
    %v9913 = vadd.f32 %v7016, %v9870
    %v9914 = vadd.f32 %v7017, %v9912
    %v9915 = vperm.slane %v9913, 0
    %v9916 = vperm.slane %v9914, 0
    %v9917 = vld [vmem:[#allocation2] sm:$0xff]
    %v9918 = vld [vmem:[#allocation2 + $0x8] sm:$0xff]
    %v9919 = vld [vmem:[#allocation2 + $0x10] sm:$0xff]
    %v9920 = vld [vmem:[#allocation2 + $0x18] sm:$0xff]
    %v9921 = vld [vmem:[#allocation2 + $0x20] sm:$0xff]
    %v9922 = vld [vmem:[#allocation2 + $0x28] sm:$0xff]
    %v9923 = vld [vmem:[#allocation2 + $0x30] sm:$0xff]
    %v9924 = vld [vmem:[#allocation2 + $0x38] sm:$0xff]
    %v9925 = vld [vmem:[#allocation2 + $0x40] sm:$0xff]
    %v9926 = vld [vmem:[#allocation2 + $0x48] sm:$0xff]
    %v9927 = vld [vmem:[#allocation2 + $0x50] sm:$0xff]
    %v9928 = vld [vmem:[#allocation2 + $0x58] sm:$0xff]
    %v9929 = vld [vmem:[#allocation2 + $0x60] sm:$0xff]
    %v9930 = vld [vmem:[#allocation2 + $0x68] sm:$0xff]
    %v9931 = vld [vmem:[#allocation2 + $0x70] sm:$0xff]
    %v9932 = vld [vmem:[#allocation2 + $0x78] sm:$0xff]
    %v9933 = vld [vmem:[#allocation2 + $0x80] sm:$0xff]
    %v9934 = vld [vmem:[#allocation2 + $0x88] sm:$0xff]
    %v9935 = vld [vmem:[#allocation2 + $0x90] sm:$0xff]
    %v9936 = vld [vmem:[#allocation2 + $0x98] sm:$0xff]
    %v9937 = vld [vmem:[#allocation2 + $0xa0] sm:$0xff]
    %v9938 = vld [vmem:[#allocation2 + $0xa8] sm:$0xff]
    %v9939 = vld [vmem:[#allocation2 + $0xb0] sm:$0xff]
    %v9940 = vld [vmem:[#allocation2 + $0xb8] sm:$0xff]
    %v9941 = vld [vmem:[#allocation2 + $0xc0] sm:$0xff]
    %v9942 = vld [vmem:[#allocation2 + $0xc8] sm:$0xff]
    %v9943 = vld [vmem:[#allocation2 + $0xd0] sm:$0xff]
    %v9944 = vld [vmem:[#allocation2 + $0xd8] sm:$0xff]
    %v9945 = vld [vmem:[#allocation2 + $0xe0] sm:$0xff]
    %v9946 = vld [vmem:[#allocation2 + $0xe8] sm:$0xff]
    %v9947 = vld [vmem:[#allocation2 + $0xf0] sm:$0xff]
    %v9948 = vld [vmem:[#allocation2 + $0xf8] sm:$0xff]
    %v9949 = vld [vmem:[#allocation2 + $0x100] sm:$0xff]
    %v9950 = vld [vmem:[#allocation2 + $0x108] sm:$0xff]
    %v9951 = vld [vmem:[#allocation2 + $0x110] sm:$0xff]
    %v9952 = vld [vmem:[#allocation2 + $0x118] sm:$0xff]
    %v9953 = vld [vmem:[#allocation2 + $0x120] sm:$0xff]
    %v9954 = vld [vmem:[#allocation2 + $0x128] sm:$0xff]
    %v9955 = vld [vmem:[#allocation2 + $0x130] sm:$0xff]
    %v9956 = vld [vmem:[#allocation2 + $0x138] sm:$0xff]
    %v9957 = vld [vmem:[#allocation2 + $0x140] sm:$0xff]
    %v9958 = vld [vmem:[#allocation2 + $0x148] sm:$0xff]
    %v9959 = vld [vmem:[#allocation2 + $0x150] sm:$0xff]
    %v9960 = vld [vmem:[#allocation2 + $0x158] sm:$0xff]
    %v9961 = vld [vmem:[#allocation2 + $0x160] sm:$0xff]
    %v9962 = vld [vmem:[#allocation2 + $0x168] sm:$0xff]
    %v9963 = vld [vmem:[#allocation2 + $0x170] sm:$0xff]
    %v9964 = vld [vmem:[#allocation2 + $0x178] sm:$0xff]
    %v9965 = vld [vmem:[#allocation2 + $0x180] sm:$0xff]
    %v9966 = vld [vmem:[#allocation2 + $0x188] sm:$0xff]
    %v9967 = vld [vmem:[#allocation2 + $0x190] sm:$0xff]
    %v9968 = vld [vmem:[#allocation2 + $0x198] sm:$0xff]
    %v9969 = vld [vmem:[#allocation2 + $0x1a0] sm:$0xff]
    %v9970 = vld [vmem:[#allocation2 + $0x1a8] sm:$0xff]
    %v9971 = vld [vmem:[#allocation2 + $0x1b0] sm:$0xff]
    %v9972 = vld [vmem:[#allocation2 + $0x1b8] sm:$0xff]
    %v9973 = vld [vmem:[#allocation2 + $0x1c0] sm:$0xff]
    %v9974 = vld [vmem:[#allocation2 + $0x1c8] sm:$0xff]
    %v9975 = vld [vmem:[#allocation2 + $0x1d0] sm:$0xff]
    %v9976 = vld [vmem:[#allocation2 + $0x1d8] sm:$0xff]
    %v9977 = vld [vmem:[#allocation2 + $0x1e0] sm:$0xff]
    %v9978 = vld [vmem:[#allocation2 + $0x1e8] sm:$0xff]
    %v9979 = vld [vmem:[#allocation2 + $0x1f0] sm:$0xff]
    %v9980 = vld [vmem:[#allocation2 + $0x1f8] sm:$0xff]
    %v9981 = vld [vmem:[%s14] sm:$0x1]
    %v9982 = vld [vmem:[%s14 + $0x1] sm:$0x1]
    %v9983 = vld [vmem:[%s14 + $0x2] sm:$0x1]
    %v9984 = vperm.slane %v9981, 0
    %9985 = vmatpush.msra.mxu0 %v9932
    %9986 = vmatpush.msra.mxu0 %v9931
    %9987 = vmatpush.msra.mxu0 %v9930
    %9988 = vmatpush.msra.mxu0 %v9929
    %9989 = vmatpush.msra.mxu0 %v9928
    %9990 = vmatpush.msra.mxu0 %v9927
    %9991 = vmatpush.msra.mxu0 %v9926
    %9992 = vmatpush.msra.mxu0 %v9925
    %9993 = vmatpush.msra.mxu0 %v9924
    %9994 = vmatpush.msra.mxu0 %v9923
    %9995 = vmatpush.msra.mxu0 %v9922
    %9996 = vmatpush.msra.mxu0 %v9921
    %9997 = vmatpush.msra.mxu0 %v9920
    %9998 = vmatpush.msra.mxu0 %v9919
    %9999 = vmatpush.msra.mxu0 %v9918
    %10000 = vmatpush.msra.mxu0 %v9917
    %10001 = vmatmul.f32.gmra.mxu0 %v9915
    %v10002 = vpop.f32.mrf.mxu0
    %v10003 = vadd.f32 %v9984, %v10002
    %10004 = vdwg.mxu0
    %10005 = vmatpush.msra.mxu0 %v9948
    %10006 = vmatpush.msra.mxu0 %v9947
    %10007 = vmatpush.msra.mxu0 %v9946
    %10008 = vmatpush.msra.mxu0 %v9945
    %10009 = vmatpush.msra.mxu0 %v9944
    %10010 = vmatpush.msra.mxu0 %v9943
    %10011 = vmatpush.msra.mxu0 %v9942
    %10012 = vmatpush.msra.mxu0 %v9941
    %10013 = vmatpush.msra.mxu0 %v9940
    %10014 = vmatpush.msra.mxu0 %v9939
    %10015 = vmatpush.msra.mxu0 %v9938
    %10016 = vmatpush.msra.mxu0 %v9937
    %10017 = vmatpush.msra.mxu0 %v9936
    %10018 = vmatpush.msra.mxu0 %v9935
    %10019 = vmatpush.msra.mxu0 %v9934
    %10020 = vmatpush.msra.mxu0 %v9933
    %10021 = vmatmul.f32.gmra.mxu0 %v9916
    %v10022 = vpop.f32.mrf.mxu0
    %v10023 = vadd.f32 %v10003, %v10022
    %10024 = vdwg.mxu0
    %v10025 = vmax.f32 %v10023, 0.0
    %v10026 = vperm.slane %v9982, 0
    %10027 = vmatpush.msra.mxu0 %v9964
    %10028 = vmatpush.msra.mxu0 %v9963
    %10029 = vmatpush.msra.mxu0 %v9962
    %10030 = vmatpush.msra.mxu0 %v9961
    %10031 = vmatpush.msra.mxu0 %v9960
    %10032 = vmatpush.msra.mxu0 %v9959
    %10033 = vmatpush.msra.mxu0 %v9958
    %10034 = vmatpush.msra.mxu0 %v9957
    %10035 = vmatpush.msra.mxu0 %v9956
    %10036 = vmatpush.msra.mxu0 %v9955
    %10037 = vmatpush.msra.mxu0 %v9954
    %10038 = vmatpush.msra.mxu0 %v9953
    %10039 = vmatpush.msra.mxu0 %v9952
    %10040 = vmatpush.msra.mxu0 %v9951
    %10041 = vmatpush.msra.mxu0 %v9950
    %10042 = vmatpush.msra.mxu0 %v9949
    %10043 = vmatmul.f32.gmra.mxu0 %v10025
    %v10044 = vpop.f32.mrf.mxu0
    %v10045 = vadd.f32 %v10026, %v10044
    %10046 = vdwg.mxu0
    %v10047 = vmax.f32 %v10045, 0.0
    %v10048 = vperm.slane %v9983, 0
    %10049 = vmatpush.msra.mxu0 %v9980
    %10050 = vmatpush.msra.mxu0 %v9979
    %10051 = vmatpush.msra.mxu0 %v9978
    %10052 = vmatpush.msra.mxu0 %v9977
    %10053 = vmatpush.msra.mxu0 %v9976
    %10054 = vmatpush.msra.mxu0 %v9975
    %10055 = vmatpush.msra.mxu0 %v9974
    %10056 = vmatpush.msra.mxu0 %v9973
    %10057 = vmatpush.msra.mxu0 %v9972
    %10058 = vmatpush.msra.mxu0 %v9971
    %10059 = vmatpush.msra.mxu0 %v9970
    %10060 = vmatpush.msra.mxu0 %v9969
    %10061 = vmatpush.msra.mxu0 %v9968
    %10062 = vmatpush.msra.mxu0 %v9967
    %10063 = vmatpush.msra.mxu0 %v9966
    %10064 = vmatpush.msra.mxu0 %v9965
    %10065 = vmatmul.f32.gmra.mxu0 %v10047
    %v10066 = vpop.f32.mrf.mxu0
    %v10067 = vadd.f32 %v10048, %v10066
    %10068 = vdwg.mxu0
    %10069 = vst [vmem:[%s15] sm:$0xff] %v10067
    // Predicated region
    $region66: #{score_network_forward.1} parent=1 // pred_check
      _
    $region67: #{score_network_forward.1} parent=1 // pred_check_branch
      %10071 = sbr.rel (0) target = $region69
    $region68: #{score_network_forward.1} parent=1 // pred_region
      _
    $region69: #{score_network_forward.1} parent=1 // pred_fallthru
      _
    // Predicated region
    $region70: #{score_network_forward.1} parent=1 // pred_check
      _
    $region71: #{score_network_forward.1} parent=1 // pred_check_branch
      %10073 = sbr.rel (0) target = $region73
    $region72: #{score_network_forward.1} parent=1 // pred_region
      _
    $region73: #{score_network_forward.1} parent=1 // pred_fallthru
      _
    %10074 = vsyncpa [#allocation3], 1

</llo_original>
